<compile_context>
chip_gen: v7x
topology: tpu7x:2x2x1
jax: 0.10.0
libtpu: 0.0.40
codegen_flags: <defaults>
</compile_context>

<pallas_src>
import jax
import jax.numpy as jnp
from jax.experimental import pallas as pl
from jax.experimental.pallas import tpu as pltpu


_MASK_VALUE = -1e30   # finite "-inf": exp(_MASK_VALUE - m) == 0 for any real score m
_LANE = 128


def _round_up(v, m):
    return ((v + m - 1) // m) * m


def attention_pooling_kernel(x_ref, wf_ref, bf_ref, wa_ref, mask_ref,
                             out_ref, m_sc, l_sc, acc_sc):
    """Grid = (batch_tiles, seq_tiles); online softmax over the sequence axis.

    Block shapes seen by the kernel:
      x_ref    (TB, TS, E)   token embeddings, native dtype
      wf_ref   (E, H)        fc weight (activation dtype)
      bf_ref   (1, H)        fc bias (f32)
      wa_ref   (1, 1, H)     attention weight row (f32)
      mask_ref (TB, 1, TS)   int32, 0 = masked out
      out_ref  (TB, 1, E)
      scratch: m_sc/l_sc (TB,1,1) f32, acc_sc (TB,1,E) f32
    """
    s_idx = pl.program_id(1)
    tb, ts, e = x_ref.shape
    h_dim = wf_ref.shape[1]

    @pl.when(s_idx == 0)
    def _init():
        m_sc[...] = jnp.full(m_sc.shape, _MASK_VALUE, jnp.float32)
        l_sc[...] = jnp.zeros(l_sc.shape, jnp.float32)
        acc_sc[...] = jnp.zeros(acc_sc.shape, jnp.float32)

    x = x_ref[...]                                   # (TB, TS, E), native dtype

    # fc + tanh on the merged (TB*TS, E) view: one big-M MXU matmul instead of
    # TB tiny ones.  TS is a multiple of the sublane tile (wrapper guarantees
    # it), so both reshapes below are layout-trivial.
    x2 = x.reshape(tb * ts, e)
    h2 = jnp.tanh(
        jnp.dot(x2, wf_ref[...], preferred_element_type=jnp.float32)
        + bf_ref[...]
    )                                                # (TB*TS, H) f32
    h3 = h2.reshape(tb, ts, h_dim)                   # (TB, TS, H)

    # Attention projection, lane-major scores: single-query flash-attention
    # pattern (q = 1):  (TB,1,H) x (TB,TS,H)^T -> (TB, 1, TS).
    wa_b = jnp.broadcast_to(wa_ref[...], (tb, 1, h_dim))
    scores = jnp.einsum('bqh,bkh->bqk', wa_b, h3,
                        preferred_element_type=jnp.float32)   # (TB, 1, TS)

    # masked_fill(mask == 0, -inf) with a finite sentinel (keeps the online
    # softmax recurrence NaN-free on fully masked tiles; exact otherwise).
    scores = jnp.where(mask_ref[...] == 0, _MASK_VALUE, scores)

    # --- online softmax over the sequence (lane) axis ---
    m_prev = m_sc[...]                               # (TB, 1, 1)
    m_new = jnp.maximum(m_prev, jnp.max(scores, axis=-1, keepdims=True))
    alpha = jnp.exp(m_prev - m_new)                  # (TB, 1, 1)
    p = jnp.exp(scores - m_new)                      # (TB, 1, TS)

    l_sc[...] = alpha * l_sc[...] + jnp.sum(p, axis=-1, keepdims=True)
    # Weighted sum over S as an MXU contraction: (TB,1,TS) @ (TB,TS,E).
    # p is cast to x's dtype for the MXU; exact for f32, ~1e-3 rel for bf16.
    acc_sc[...] = alpha * acc_sc[...] + jnp.einsum(
        'bqk,bkd->bqd', p.astype(x.dtype), x,
        preferred_element_type=jnp.float32)
    m_sc[...] = m_new

    @pl.when(s_idx == pl.num_programs(1) - 1)
    def _finalize():
        l = l_sc[...]
        inv = pl.reciprocal(l, approx=True)          # EUP slot (idle in epilogue)
        inv = inv * (2.0 - l * inv)                  # one Newton step -> ~f32 accuracy
        pooled = acc_sc[...] * inv                   # (TB, 1, E)
        # Fully-masked sequence: torch's softmax over all -inf yields NaN.
        pooled = jnp.where(m_sc[...] <= _MASK_VALUE, jnp.nan, pooled)
        out_ref[...] = pooled.astype(out_ref.dtype)


def _choose_tiles(B, S, E, H, itemsize, block_s=None, block_b=None):
    """Pick (TB, block_s, S_pad) from a DMA bytes target under a VMEM budget.

    Budget is ~12 MiB so the kernel fits v5e's 16 MiB default scoped VMEM; the
    same config leaves ample headroom on v6e (32 MiB default) and v7x (64 MiB
    physical).  The per-step x tile targets ~2 MiB per buffer (MiB-scale DMA is
    ~85% of HBM roofline); TB then soaks up the remaining budget so short
    sequences are batched together and the fixed per-grid-step cost is
    amortized.
    """
    sub = max(8, 32 // itemsize)                 # sublane packing of x's dtype
    row_bytes = E * itemsize
    r128 = lambda v: _round_up(v, _LANE)

    vmem_budget = 12 * 1024 * 1024
    x_tile_target = 2 * 1024 * 1024
    weight_bytes = 2 * (E * H * itemsize + 2 * r128(H) * 4)   # wf/bf/wa (<= 2 bufs)
    avail = max(1 << 20, vmem_budget - weight_bytes - (1 << 20))
    rows_budget = max(sub, min(x_tile_target, avail // 2) // max(1, row_bytes))

    S_sub = _round_up(S, sub)
    # --- sequence tile ---
    if block_s is not None:
        bs = _round_up(max(1, int(block_s)), sub)
        if bs < S_sub:
            bs = max(_LANE, (bs // _LANE) * _LANE)   # tiled masks need lane-aligned TS
    else:
        if S_sub <= rows_budget or S_sub <= _LANE:
            bs = S_sub                               # whole (padded) sequence per step
        else:
            bs = max(_LANE, (rows_budget // _LANE) * _LANE)
    if bs >= S_sub:
        bs, S_pad = S_sub, S_sub
    else:
        S_pad = _round_up(S, bs)
    # TODO(synk): for extremely large E*H the resident weights alone can exceed
    # the scoped-VMEM budget; that regime would need an H/E-tiled variant.

    # --- batch tile: fill the remaining budget (counting the 8-sublane padding
    # of the per-sequence (.,1,.) blocks and scratch), capped at 128 sequences.
    per_b = (2 * bs * E * itemsize               # x tile, double-buffered
             + 2 * 8 * r128(bs) * 4              # mask tile, double-buffered
             + 3 * 8 * r128(E) * 4               # acc scratch + out tile (2 bufs)
             + 2 * bs * r128(H) * 4              # fc activations (f32 transients)
             + 3 * 8 * r128(bs) * 4              # scores / p transients
             + 2 * 8 * _LANE * 4)                # m, l scratch
    if block_b is not None:
        tb_cap = max(1, min(B, int(block_b)))
    else:
        tb_cap = int(max(1, min(B, 128, avail // per_b)))
    n_b = -(-B // tb_cap)
    tb = -(-B // n_b)                            # rebalance: batch padding < n_b rows
    return tb, bs, S_pad


def attention_pooling(token_embeddings, w_fc, b_fc, w_attn, b_attn=None,
                      mask=None, *, block_s=None, block_b=None):
    """AttentionPooling forward.

    token_embeddings: (S, E) or batched (B, S, E)
    w_fc: (E, H), b_fc: (H,), w_attn: (H, 1) -- transposed w.r.t. torch Linear.
    b_attn: unused (a constant shift of every score cancels under softmax).
    mask: optional (S,) / (B, S); positions where mask == 0 are excluded.
    Returns (E,) / (B, E).  A fully-masked sequence returns NaN (as torch does).
    """
    x = token_embeddings
    squeeze_batch = False
    if x.ndim == 2:
        x = x[None]
        if mask is not None and mask.ndim == 1:
            mask = mask[None]
        squeeze_batch = True

    B, S, E = x.shape
    H = w_fc.shape[1]
    itemsize = jnp.dtype(x.dtype).itemsize

    tb, bs, S_pad = _choose_tiles(B, S, E, H, itemsize, block_s, block_b)
    n_s = S_pad // bs
    n_b = -(-B // tb)
    B_pad = n_b * tb

    if mask is None:
        mask_i = jnp.ones((B, S), jnp.int32)
    else:
        mask_i = (jnp.reshape(mask, (B, S)) != 0).astype(jnp.int32)

    pad_b, pad_s = B_pad - B, S_pad - S
    if pad_b or pad_s:
        x = jnp.pad(x, ((0, pad_b), (0, pad_s), (0, 0)))
        mask_i = jnp.pad(mask_i, ((0, pad_b), (0, pad_s)))   # padding is masked out
    mask3 = mask_i.reshape(B_pad, 1, S_pad)

    wf = w_fc.astype(x.dtype)                     # MXU operand in activation dtype
    bf = b_fc.reshape(1, H).astype(jnp.float32)
    wa = w_attn.reshape(1, 1, H).astype(jnp.float32)

    def build_call(single_buffer_weights):
        def const_spec(shape, index_map):
            # Weight blocks never change index; a single buffer halves their
            # VMEM footprint.  Fall back to default double buffering if this
            # JAX build does not support pipeline_mode / pl.Buffered.
            if single_buffer_weights:
                return pl.BlockSpec(shape, index_map, pipeline_mode=pl.Buffered(1))
            return pl.BlockSpec(shape, index_map)

        return pl.pallas_call(
            attention_pooling_kernel,
            out_shape=jax.ShapeDtypeStruct((B_pad, 1, E), x.dtype),
            grid_spec=pltpu.PrefetchScalarGridSpec(
                num_scalar_prefetch=0,
                grid=(n_b, n_s),
                in_specs=[
                    pl.BlockSpec((tb, bs, E), lambda b, s: (b, s, 0)),   # x tile
                    const_spec((E, H), lambda b, s: (0, 0)),             # fc weight
                    const_spec((1, H), lambda b, s: (0, 0)),             # fc bias
                    const_spec((1, 1, H), lambda b, s: (0, 0, 0)),       # attn weight
                    pl.BlockSpec((tb, 1, bs), lambda b, s: (b, 0, s)),   # mask
                ],
                out_specs=pl.BlockSpec((tb, 1, E), lambda b, s: (b, 0, 0)),
                scratch_shapes=[
                    pltpu.VMEM((tb, 1, 1), jnp.float32),   # running max m
                    pltpu.VMEM((tb, 1, 1), jnp.float32),   # running denom l
                    pltpu.VMEM((tb, 1, E), jnp.float32),   # running weighted sum
                ],
            ),
            compiler_params=pltpu.CompilerParams(
                dimension_semantics=("parallel", "arbitrary"),
                vmem_limit_bytes=32 * 1024 * 1024),
        )

    try:
        out = build_call(True)(x, wf, bf, wa, mask3)
    except Exception:   # pipeline_mode / pl.Buffered not supported in this build
        out = build_call(False)(x, wf, bf, wa, mask3)

    out = out.reshape(B_pad, E)[:B]
    return out[0] if squeeze_batch else out


def _reference(x, w_fc, b_fc, w_attn, b_attn, mask=None):
    scores = jnp.tanh(x @ w_fc + b_fc)
    scores = (scores @ w_attn + b_attn).squeeze(-1)
    if mask is not None:
        scores = jnp.where(mask == 0, -jnp.inf, scores)
    attn_w = jax.nn.softmax(scores, axis=-1)
    return jnp.sum(x * attn_w[:, None], axis=0)


if __name__ == "__main__":
    # Small shapes consistent with the module: embedding_dim=32, hidden_dim=16,
    # seq=8, batched over 16 sequences.
    B, S, E, H = 16, 8, 32, 16

    key = jax.random.PRNGKey(0)
    kx, kwf, kbf, kwa, kba, km, kx2 = jax.random.split(key, 7)

    x = jax.random.normal(kx, (B, S, E), dtype=jnp.float32)
    # Deterministic parameter init (synthetic, not a checkpoint load).
    w_fc = jax.random.normal(kwf, (E, H), dtype=jnp.float32) * 0.1
    b_fc = jax.random.normal(kbf, (H,), dtype=jnp.float32) * 0.1
    w_attn = jax.random.normal(kwa, (H, 1), dtype=jnp.float32) * 0.1
    b_attn = jax.random.normal(kba, (1,), dtype=jnp.float32) * 0.1
    # Mask with some positions zeroed; keep >= 1 valid token per sequence.
    mask = (jax.random.uniform(km, (B, S)) > 0.25).astype(jnp.float32)
    mask = mask.at[:, 0].set(1.0)

    # Batched (B, S, E) path == vmap of the torch module over sequences.
    pooled = attention_pooling(x, w_fc, b_fc, w_attn, b_attn, mask=mask)
    pooled = jax.block_until_ready(pooled)
    ref = jax.vmap(
        lambda xi, mi: _reference(xi, w_fc, b_fc, w_attn, b_attn, mi))(x, mask)
    assert pooled.shape == (B, E)
    assert jnp.allclose(pooled, ref, atol=1e-4, rtol=1e-4), (pooled, ref)

    # Unbatched path, matching the torch module's (S, E) -> (E,) signature.
    p1 = jax.block_until_ready(
        attention_pooling(x[0], w_fc, b_fc, w_attn, b_attn, mask=mask[0]))
    assert p1.shape == (E,)
    assert jnp.allclose(p1, ref[0], atol=1e-4, rtol=1e-4), (p1, ref[0])

    # Ragged sequence length (exercises the padding path), mask=None.
    B2, S2 = 4, 13
    x2 = jax.random.normal(kx2, (B2, S2, E), dtype=jnp.float32)
    p2 = jax.block_until_ready(attention_pooling(x2, w_fc, b_fc, w_attn, b_attn))
    ref2 = jax.vmap(lambda xi: _reference(xi, w_fc, b_fc, w_attn, b_attn))(x2)
    assert p2.shape == (B2, E)
    assert jnp.allclose(p2, ref2, atol=1e-4, rtol=1e-4), (p2, ref2)

    print("KERNEL_OK")
</pallas_src>

<mosaic_0001>
module attributes {stable_mosaic.version = 11 : i64} {
  func.func @attention_pooling_kernel(%arg0: i32, %arg1: i32, %arg2: memref<16x8x32xf32, #tpu.memory_space<vmem>>, %arg3: memref<32x16xf32, #tpu.memory_space<vmem>>, %arg4: memref<1x16xf32, #tpu.memory_space<vmem>>, %arg5: memref<1x1x16xf32, #tpu.memory_space<vmem>>, %arg6: memref<16x1x8xi32, #tpu.memory_space<vmem>>, %arg7: memref<16x1x32xf32, #tpu.memory_space<vmem>>, %arg8: memref<16x1x1xf32, #tpu.memory_space<vmem>>, %arg9: memref<16x1x1xf32, #tpu.memory_space<vmem>>, %arg10: memref<16x1x32xf32, #tpu.memory_space<vmem>>) attributes {dimension_semantics = [#tpu.dimension_semantics<parallel>, #tpu.dimension_semantics<arbitrary>], iteration_bounds = array<i64: 1, 1>, scalar_prefetch = 0 : i64, scratch_operands = 3 : i64, tpu.core_type = #tpu.core_type<tc>, window_params = [{transform_indices = @transform_0, window_bounds = array<i64: 16, 8, 32>}, {pipeline_mode = #tpu.pipeline_mode<synchronous>, transform_indices = @transform_1, window_bounds = array<i64: 32, 16>}, {pipeline_mode = #tpu.pipeline_mode<synchronous>, transform_indices = @transform_2, window_bounds = array<i64: 1, 16>}, {pipeline_mode = #tpu.pipeline_mode<synchronous>, transform_indices = @transform_3, window_bounds = array<i64: 1, 1, 16>}, {transform_indices = @transform_4, window_bounds = array<i64: 16, 1, 8>}, {transform_indices = @transform_5, window_bounds = array<i64: 16, 1, 32>}]} {
    %c0_i32 = arith.constant 0 : i32
    %0 = arith.cmpi eq, %arg1, %c0_i32 : i32
    %1 = arith.extui %0 : i1 to i32
    %c0_i32_0 = arith.constant 0 : i32
    %2 = arith.cmpi ne, %1, %c0_i32_0 : i32
    scf.if %2 {
      %cst_39 = arith.constant -1.000000e+30 : f32
      %46 = vector.broadcast %cst_39 : f32 to vector<16x1x1xf32>
      %c0_40 = arith.constant 0 : index
      %c0_41 = arith.constant 0 : index
      %c0_42 = arith.constant 0 : index
      %47 = vector.load %arg8[%c0_40, %c0_41, %c0_42] : memref<16x1x1xf32, #tpu.memory_space<vmem>>, vector<16x1x1xf32>
      tpu.vector_store %arg8[%c0_40, %c0_41, %c0_42], %46 {strides = array<i32>} : memref<16x1x1xf32, #tpu.memory_space<vmem>>, vector<16x1x1xf32>,
      %cst_43 = arith.constant 0.000000e+00 : f32
      %48 = vector.broadcast %cst_43 : f32 to vector<16x1x1xf32>
      %c0_44 = arith.constant 0 : index
      %c0_45 = arith.constant 0 : index
      %c0_46 = arith.constant 0 : index
      %49 = vector.load %arg9[%c0_44, %c0_45, %c0_46] : memref<16x1x1xf32, #tpu.memory_space<vmem>>, vector<16x1x1xf32>
      tpu.vector_store %arg9[%c0_44, %c0_45, %c0_46], %48 {strides = array<i32>} : memref<16x1x1xf32, #tpu.memory_space<vmem>>, vector<16x1x1xf32>,
      %cst_47 = arith.constant 0.000000e+00 : f32
      %50 = vector.broadcast %cst_47 : f32 to vector<16x1x32xf32>
      %c0_48 = arith.constant 0 : index
      %c0_49 = arith.constant 0 : index
      %c0_50 = arith.constant 0 : index
      %51 = vector.load %arg10[%c0_48, %c0_49, %c0_50] : memref<16x1x32xf32, #tpu.memory_space<vmem>>, vector<16x1x32xf32>
      tpu.vector_store %arg10[%c0_48, %c0_49, %c0_50], %50 {strides = array<i32>} : memref<16x1x32xf32, #tpu.memory_space<vmem>>, vector<16x1x32xf32>,
    } else {
    }
    %c0 = arith.constant 0 : index
    %c0_1 = arith.constant 0 : index
    %c0_2 = arith.constant 0 : index
    %3 = vector.load %arg2[%c0, %c0_1, %c0_2] : memref<16x8x32xf32, #tpu.memory_space<vmem>>, vector<16x8x32xf32>
    %4 = vector.shape_cast %3 : vector<16x8x32xf32> to vector<128x32xf32>
    %c0_3 = arith.constant 0 : index
    %c0_4 = arith.constant 0 : index
    %5 = vector.load %arg3[%c0_3, %c0_4] : memref<32x16xf32, #tpu.memory_space<vmem>>, vector<32x16xf32>
    %cst = arith.constant dense<0.000000e+00> : vector<128x16xf32>
    %6 = tpu.matmul %4, %5, %cst {dimension_numbers = #tpu.dot_dimension_numbers<[1], [0], [0], [1], [0, 0, 1, 1], [], []>} : vector<128x32xf32>, vector<32x16xf32>, vector<128x16xf32> -> vector<128x16xf32>
    %c0_5 = arith.constant 0 : index
    %c0_6 = arith.constant 0 : index
    %7 = vector.load %arg4[%c0_5, %c0_6] : memref<1x16xf32, #tpu.memory_space<vmem>>, vector<1x16xf32>
    %8 = vector.broadcast %7 : vector<1x16xf32> to vector<128x16xf32>
    %9 = arith.addf %6, %8 : vector<128x16xf32>
    %10 = math.tanh %9 : vector<128x16xf32>
    %11 = vector.shape_cast %10 : vector<128x16xf32> to vector<16x8x16xf32>
    %c0_7 = arith.constant 0 : index
    %c0_8 = arith.constant 0 : index
    %c0_9 = arith.constant 0 : index
    %12 = vector.load %arg5[%c0_7, %c0_8, %c0_9] : memref<1x1x16xf32, #tpu.memory_space<vmem>>, vector<1x1x16xf32>
    %13 = vector.shape_cast %12 : vector<1x1x16xf32> to vector<1x1x16xf32>
    %14 = vector.broadcast %13 : vector<1x1x16xf32> to vector<16x1x16xf32>
    "tpu.trace_start"() <{level = 10 : i32, message = "bqh,bkh->bqk"}> : () -> ()
    %cst_10 = arith.constant dense<0.000000e+00> : vector<16x1x8xf32>
    %15 = tpu.matmul %14, %11, %cst_10 {dimension_numbers = #tpu.dot_dimension_numbers<[2], [2], [1], [1], [0, 0, 0, 1, 1, 1], [0], [0]>} : vector<16x1x16xf32>, vector<16x8x16xf32>, vector<16x1x8xf32> -> vector<16x1x8xf32>
    "tpu.trace_stop"() : () -> ()
    %c0_11 = arith.constant 0 : index
    %c0_12 = arith.constant 0 : index
    %c0_13 = arith.constant 0 : index
    %16 = vector.load %arg6[%c0_11, %c0_12, %c0_13] : memref<16x1x8xi32, #tpu.memory_space<vmem>>, vector<16x1x8xi32>
    %c0_i32_14 = arith.constant 0 : i32
    %17 = vector.broadcast %c0_i32_14 : i32 to vector<16x1x8xi32>
    %18 = arith.cmpi eq, %16, %17 : vector<16x1x8xi32>
    %cst_15 = arith.constant -1.000000e+30 : f32
    %19 = vector.broadcast %cst_15 : f32 to vector<16x1x8xf32>
    %20 = arith.select %18, %19, %15 : vector<16x1x8xi1>, vector<16x1x8xf32>
    %c0_16 = arith.constant 0 : index
    %c0_17 = arith.constant 0 : index
    %c0_18 = arith.constant 0 : index
    %21 = vector.load %arg8[%c0_16, %c0_17, %c0_18] : memref<16x1x1xf32, #tpu.memory_space<vmem>>, vector<16x1x1xf32>
    %cst_19 = arith.constant dense<0xFF800000> : vector<16x1xf32>
    %22 = vector.multi_reduction <maximumf>, %20, %cst_19 [2] : vector<16x1x8xf32> to vector<16x1xf32>
    %23 = vector.shape_cast %22 : vector<16x1xf32> to vector<16x1x1xf32>
    %24 = arith.maximumf %21, %23 : vector<16x1x1xf32>
    %25 = arith.subf %21, %24 : vector<16x1x1xf32>
    %26 = math.exp %25 : vector<16x1x1xf32>
    %27 = vector.broadcast %24 : vector<16x1x1xf32> to vector<16x1x8xf32>
    %28 = arith.subf %20, %27 : vector<16x1x8xf32>
    %29 = math.exp %28 : vector<16x1x8xf32>
    %c0_20 = arith.constant 0 : index
    %c0_21 = arith.constant 0 : index
    %c0_22 = arith.constant 0 : index
    %30 = vector.load %arg9[%c0_20, %c0_21, %c0_22] : memref<16x1x1xf32, #tpu.memory_space<vmem>>, vector<16x1x1xf32>
    %31 = arith.mulf %26, %30 : vector<16x1x1xf32>
    %cst_23 = arith.constant dense<0.000000e+00> : vector<16x1xf32>
    %32 = vector.multi_reduction <add>, %29, %cst_23 [2] : vector<16x1x8xf32> to vector<16x1xf32>
    %33 = vector.shape_cast %32 : vector<16x1xf32> to vector<16x1x1xf32>
    %34 = arith.addf %31, %33 : vector<16x1x1xf32>
    %c0_24 = arith.constant 0 : index
    %c0_25 = arith.constant 0 : index
    %c0_26 = arith.constant 0 : index
    %35 = vector.load %arg9[%c0_24, %c0_25, %c0_26] : memref<16x1x1xf32, #tpu.memory_space<vmem>>, vector<16x1x1xf32>
    tpu.vector_store %arg9[%c0_24, %c0_25, %c0_26], %34 {strides = array<i32>} : memref<16x1x1xf32, #tpu.memory_space<vmem>>, vector<16x1x1xf32>,
    %c0_27 = arith.constant 0 : index
    %c0_28 = arith.constant 0 : index
    %c0_29 = arith.constant 0 : index
    %36 = vector.load %arg10[%c0_27, %c0_28, %c0_29] : memref<16x1x32xf32, #tpu.memory_space<vmem>>, vector<16x1x32xf32>
    %37 = vector.broadcast %26 : vector<16x1x1xf32> to vector<16x1x32xf32>
    %38 = arith.mulf %37, %36 : vector<16x1x32xf32>
    "tpu.trace_start"() <{level = 10 : i32, message = "bqk,bkd->bqd"}> : () -> ()
    %cst_30 = arith.constant dense<0.000000e+00> : vector<16x1x32xf32>
    %39 = tpu.matmul %29, %3, %cst_30 {dimension_numbers = #tpu.dot_dimension_numbers<[2], [1], [1], [2], [0, 0, 0, 1, 1, 2], [0], [0]>} : vector<16x1x8xf32>, vector<16x8x32xf32>, vector<16x1x32xf32> -> vector<16x1x32xf32>
    "tpu.trace_stop"() : () -> ()
    %40 = arith.addf %38, %39 : vector<16x1x32xf32>
    %c0_31 = arith.constant 0 : index
    %c0_32 = arith.constant 0 : index
    %c0_33 = arith.constant 0 : index
    %41 = vector.load %arg10[%c0_31, %c0_32, %c0_33] : memref<16x1x32xf32, #tpu.memory_space<vmem>>, vector<16x1x32xf32>
    tpu.vector_store %arg10[%c0_31, %c0_32, %c0_33], %40 {strides = array<i32>} : memref<16x1x32xf32, #tpu.memory_space<vmem>>, vector<16x1x32xf32>,
    %c0_34 = arith.constant 0 : index
    %c0_35 = arith.constant 0 : index
    %c0_36 = arith.constant 0 : index
    %42 = vector.load %arg8[%c0_34, %c0_35, %c0_36] : memref<16x1x1xf32, #tpu.memory_space<vmem>>, vector<16x1x1xf32>
    tpu.vector_store %arg8[%c0_34, %c0_35, %c0_36], %24 {strides = array<i32>} : memref<16x1x1xf32, #tpu.memory_space<vmem>>, vector<16x1x1xf32>,
    %c0_i32_37 = arith.constant 0 : i32
    %43 = arith.cmpi eq, %arg1, %c0_i32_37 : i32
    %44 = arith.extui %43 : i1 to i32
    %c0_i32_38 = arith.constant 0 : i32
    %45 = arith.cmpi ne, %44, %c0_i32_38 : i32
    scf.if %45 {
      %c0_39 = arith.constant 0 : index
      %c0_40 = arith.constant 0 : index
      %c0_41 = arith.constant 0 : index
      %46 = vector.load %arg9[%c0_39, %c0_40, %c0_41] : memref<16x1x1xf32, #tpu.memory_space<vmem>>, vector<16x1x1xf32>
      %47 = tpu.reciprocal %46 {approx = true} : vector<16x1x1xf32> -> vector<16x1x1xf32>
      %48 = arith.mulf %46, %47 : vector<16x1x1xf32>
      %cst_42 = arith.constant 2.000000e+00 : f32
      %49 = vector.broadcast %cst_42 : f32 to vector<16x1x1xf32>
      %50 = arith.subf %49, %48 : vector<16x1x1xf32>
      %51 = arith.mulf %47, %50 : vector<16x1x1xf32>
      %c0_43 = arith.constant 0 : index
      %c0_44 = arith.constant 0 : index
      %c0_45 = arith.constant 0 : index
      %52 = vector.load %arg10[%c0_43, %c0_44, %c0_45] : memref<16x1x32xf32, #tpu.memory_space<vmem>>, vector<16x1x32xf32>
      %53 = vector.broadcast %51 : vector<16x1x1xf32> to vector<16x1x32xf32>
      %54 = arith.mulf %52, %53 : vector<16x1x32xf32>
      %c0_46 = arith.constant 0 : index
      %c0_47 = arith.constant 0 : index
      %c0_48 = arith.constant 0 : index
      %55 = vector.load %arg8[%c0_46, %c0_47, %c0_48] : memref<16x1x1xf32, #tpu.memory_space<vmem>>, vector<16x1x1xf32>
      %cst_49 = arith.constant -1.000000e+30 : f32
      %56 = vector.broadcast %cst_49 : f32 to vector<16x1x1xf32>
      %57 = arith.cmpf ole, %55, %56 : vector<16x1x1xf32>
      %cst_50 = arith.constant 0x7FC00000 : f32
      %58 = vector.shape_cast %57 : vector<16x1x1xi1> to vector<16x1x1xi1>
      %59 = vector.broadcast %58 : vector<16x1x1xi1> to vector<16x1x32xi1>
      %60 = vector.broadcast %cst_50 : f32 to vector<16x1x32xf32>
      %61 = arith.select %59, %60, %54 : vector<16x1x32xi1>, vector<16x1x32xf32>
      %c0_51 = arith.constant 0 : index
      %c0_52 = arith.constant 0 : index
      %c0_53 = arith.constant 0 : index
      %62 = vector.load %arg7[%c0_51, %c0_52, %c0_53] : memref<16x1x32xf32, #tpu.memory_space<vmem>>, vector<16x1x32xf32>
      tpu.vector_store %arg7[%c0_51, %c0_52, %c0_53], %61 {strides = array<i32>} : memref<16x1x32xf32, #tpu.memory_space<vmem>>, vector<16x1x32xf32>,
    } else {
    }
    return
  }
  func.func @transform_0(%arg0: i32, %arg1: i32) -> (i32, i32, i32) {
    %c0_i32 = arith.constant 0 : i32
    %c0_i32_0 = arith.constant 0 : i32
    return %arg0, %arg1, %c0_i32 : i32, i32, i32
  }
  func.func @transform_1(%arg0: i32, %arg1: i32) -> (i32, i32) {
    %c0_i32 = arith.constant 0 : i32
    %c0_i32_0 = arith.constant 0 : i32
    %c0_i32_1 = arith.constant 0 : i32
    return %c0_i32, %c0_i32_0 : i32, i32
  }
  func.func @transform_2(%arg0: i32, %arg1: i32) -> (i32, i32) {
    %c0_i32 = arith.constant 0 : i32
    %c0_i32_0 = arith.constant 0 : i32
    %c0_i32_1 = arith.constant 0 : i32
    return %c0_i32, %c0_i32_0 : i32, i32
  }
  func.func @transform_3(%arg0: i32, %arg1: i32) -> (i32, i32, i32) {
    %c0_i32 = arith.constant 0 : i32
    %c0_i32_0 = arith.constant 0 : i32
    %c0_i32_1 = arith.constant 0 : i32
    %c0_i32_2 = arith.constant 0 : i32
    return %c0_i32, %c0_i32_0, %c0_i32_1 : i32, i32, i32
  }
  func.func @transform_4(%arg0: i32, %arg1: i32) -> (i32, i32, i32) {
    %c0_i32 = arith.constant 0 : i32
    %c0_i32_0 = arith.constant 0 : i32
    return %arg0, %c0_i32, %arg1 : i32, i32, i32
  }
  func.func @transform_5(%arg0: i32, %arg1: i32) -> (i32, i32, i32) {
    %c0_i32 = arith.constant 0 : i32
    %c0_i32_0 = arith.constant 0 : i32
    %c0_i32_1 = arith.constant 0 : i32
    return %arg0, %c0_i32, %c0_i32_0 : i32, i32, i32
  }
}

module attributes {stable_mosaic.version = 11 : i64} {
  func.func @attention_pooling_kernel(%arg0: i32, %arg1: i32, %arg2: memref<16x8x32xf32, #tpu.memory_space<vmem>>, %arg3: memref<32x16xf32, #tpu.memory_space<vmem>>, %arg4: memref<1x16xf32, #tpu.memory_space<vmem>>, %arg5: memref<1x1x16xf32, #tpu.memory_space<vmem>>, %arg6: memref<16x1x8xi32, #tpu.memory_space<vmem>>, %arg7: memref<16x1x32xf32, #tpu.memory_space<vmem>>, %arg8: memref<16x1x1xf32, #tpu.memory_space<vmem>>, %arg9: memref<16x1x1xf32, #tpu.memory_space<vmem>>, %arg10: memref<16x1x32xf32, #tpu.memory_space<vmem>>) attributes {dimension_semantics = [#tpu.dimension_semantics<parallel>, #tpu.dimension_semantics<arbitrary>], iteration_bounds = array<i64: 1, 1>, scalar_prefetch = 0 : i64, scratch_operands = 3 : i64, tpu.core_type = #tpu.core_type<tc>, window_params = [{transform_indices = @transform_0, window_bounds = array<i64: 16, 8, 32>}, {pipeline_mode = #tpu.pipeline_mode<synchronous>, transform_indices = @transform_1, window_bounds = array<i64: 32, 16>}, {pipeline_mode = #tpu.pipeline_mode<synchronous>, transform_indices = @transform_2, window_bounds = array<i64: 1, 16>}, {pipeline_mode = #tpu.pipeline_mode<synchronous>, transform_indices = @transform_3, window_bounds = array<i64: 1, 1, 16>}, {transform_indices = @transform_4, window_bounds = array<i64: 16, 1, 8>}, {transform_indices = @transform_5, window_bounds = array<i64: 16, 1, 32>}]} {
    %c0_i32 = arith.constant 0 : i32
    %0 = arith.cmpi eq, %arg1, %c0_i32 : i32
    %1 = arith.extui %0 : i1 to i32
    %c0_i32_0 = arith.constant 0 : i32
    %2 = arith.cmpi ne, %1, %c0_i32_0 : i32
    scf.if %2 {
      %cst_39 = arith.constant -1.000000e+30 : f32
      %46 = vector.broadcast %cst_39 : f32 to vector<16x1x1xf32>
      %c0_40 = arith.constant 0 : index
      %c0_41 = arith.constant 0 : index
      %c0_42 = arith.constant 0 : index
      %47 = vector.load %arg8[%c0_40, %c0_41, %c0_42] : memref<16x1x1xf32, #tpu.memory_space<vmem>>, vector<16x1x1xf32>
      tpu.vector_store %arg8[%c0_40, %c0_41, %c0_42], %46 {strides = array<i32>} : memref<16x1x1xf32, #tpu.memory_space<vmem>>, vector<16x1x1xf32>,
      %cst_43 = arith.constant 0.000000e+00 : f32
      %48 = vector.broadcast %cst_43 : f32 to vector<16x1x1xf32>
      %c0_44 = arith.constant 0 : index
      %c0_45 = arith.constant 0 : index
      %c0_46 = arith.constant 0 : index
      %49 = vector.load %arg9[%c0_44, %c0_45, %c0_46] : memref<16x1x1xf32, #tpu.memory_space<vmem>>, vector<16x1x1xf32>
      tpu.vector_store %arg9[%c0_44, %c0_45, %c0_46], %48 {strides = array<i32>} : memref<16x1x1xf32, #tpu.memory_space<vmem>>, vector<16x1x1xf32>,
      %cst_47 = arith.constant 0.000000e+00 : f32
      %50 = vector.broadcast %cst_47 : f32 to vector<16x1x32xf32>
      %c0_48 = arith.constant 0 : index
      %c0_49 = arith.constant 0 : index
      %c0_50 = arith.constant 0 : index
      %51 = vector.load %arg10[%c0_48, %c0_49, %c0_50] : memref<16x1x32xf32, #tpu.memory_space<vmem>>, vector<16x1x32xf32>
      tpu.vector_store %arg10[%c0_48, %c0_49, %c0_50], %50 {strides = array<i32>} : memref<16x1x32xf32, #tpu.memory_space<vmem>>, vector<16x1x32xf32>,
    } else {
    }
    %c0 = arith.constant 0 : index
    %c0_1 = arith.constant 0 : index
    %c0_2 = arith.constant 0 : index
    %3 = vector.load %arg2[%c0, %c0_1, %c0_2] : memref<16x8x32xf32, #tpu.memory_space<vmem>>, vector<16x8x32xf32>
    %4 = vector.shape_cast %3 : vector<16x8x32xf32> to vector<128x32xf32>
    %c0_3 = arith.constant 0 : index
    %c0_4 = arith.constant 0 : index
    %5 = vector.load %arg3[%c0_3, %c0_4] : memref<32x16xf32, #tpu.memory_space<vmem>>, vector<32x16xf32>
    %cst = arith.constant dense<0.000000e+00> : vector<128x16xf32>
    %6 = tpu.matmul %4, %5, %cst {dimension_numbers = #tpu.dot_dimension_numbers<[1], [0], [0], [1], [0, 0, 1, 1], [], []>} : vector<128x32xf32>, vector<32x16xf32>, vector<128x16xf32> -> vector<128x16xf32>
    %c0_5 = arith.constant 0 : index
    %c0_6 = arith.constant 0 : index
    %7 = vector.load %arg4[%c0_5, %c0_6] : memref<1x16xf32, #tpu.memory_space<vmem>>, vector<1x16xf32>
    %8 = vector.broadcast %7 : vector<1x16xf32> to vector<128x16xf32>
    %9 = arith.addf %6, %8 : vector<128x16xf32>
    %10 = math.tanh %9 : vector<128x16xf32>
    %11 = vector.shape_cast %10 : vector<128x16xf32> to vector<16x8x16xf32>
    %c0_7 = arith.constant 0 : index
    %c0_8 = arith.constant 0 : index
    %c0_9 = arith.constant 0 : index
    %12 = vector.load %arg5[%c0_7, %c0_8, %c0_9] : memref<1x1x16xf32, #tpu.memory_space<vmem>>, vector<1x1x16xf32>
    %13 = vector.shape_cast %12 : vector<1x1x16xf32> to vector<1x1x16xf32>
    %14 = vector.broadcast %13 : vector<1x1x16xf32> to vector<16x1x16xf32>
    "tpu.trace_start"() <{level = 10 : i32, message = "bqh,bkh->bqk"}> : () -> ()
    %cst_10 = arith.constant dense<0.000000e+00> : vector<16x1x8xf32>
    %15 = tpu.matmul %14, %11, %cst_10 {dimension_numbers = #tpu.dot_dimension_numbers<[2], [2], [1], [1], [0, 0, 0, 1, 1, 1], [0], [0]>} : vector<16x1x16xf32>, vector<16x8x16xf32>, vector<16x1x8xf32> -> vector<16x1x8xf32>
    "tpu.trace_stop"() : () -> ()
    %c0_11 = arith.constant 0 : index
    %c0_12 = arith.constant 0 : index
    %c0_13 = arith.constant 0 : index
    %16 = vector.load %arg6[%c0_11, %c0_12, %c0_13] : memref<16x1x8xi32, #tpu.memory_space<vmem>>, vector<16x1x8xi32>
    %c0_i32_14 = arith.constant 0 : i32
    %17 = vector.broadcast %c0_i32_14 : i32 to vector<16x1x8xi32>
    %18 = arith.cmpi eq, %16, %17 : vector<16x1x8xi32>
    %cst_15 = arith.constant -1.000000e+30 : f32
    %19 = vector.broadcast %cst_15 : f32 to vector<16x1x8xf32>
    %20 = arith.select %18, %19, %15 : vector<16x1x8xi1>, vector<16x1x8xf32>
    %c0_16 = arith.constant 0 : index
    %c0_17 = arith.constant 0 : index
    %c0_18 = arith.constant 0 : index
    %21 = vector.load %arg8[%c0_16, %c0_17, %c0_18] : memref<16x1x1xf32, #tpu.memory_space<vmem>>, vector<16x1x1xf32>
    %cst_19 = arith.constant dense<0xFF800000> : vector<16x1xf32>
    %22 = vector.multi_reduction <maximumf>, %20, %cst_19 [2] : vector<16x1x8xf32> to vector<16x1xf32>
    %23 = vector.shape_cast %22 : vector<16x1xf32> to vector<16x1x1xf32>
    %24 = arith.maximumf %21, %23 : vector<16x1x1xf32>
    %25 = arith.subf %21, %24 : vector<16x1x1xf32>
    %26 = math.exp %25 : vector<16x1x1xf32>
    %27 = vector.broadcast %24 : vector<16x1x1xf32> to vector<16x1x8xf32>
    %28 = arith.subf %20, %27 : vector<16x1x8xf32>
    %29 = math.exp %28 : vector<16x1x8xf32>
    %c0_20 = arith.constant 0 : index
    %c0_21 = arith.constant 0 : index
    %c0_22 = arith.constant 0 : index
    %30 = vector.load %arg9[%c0_20, %c0_21, %c0_22] : memref<16x1x1xf32, #tpu.memory_space<vmem>>, vector<16x1x1xf32>
    %31 = arith.mulf %26, %30 : vector<16x1x1xf32>
    %cst_23 = arith.constant dense<0.000000e+00> : vector<16x1xf32>
    %32 = vector.multi_reduction <add>, %29, %cst_23 [2] : vector<16x1x8xf32> to vector<16x1xf32>
    %33 = vector.shape_cast %32 : vector<16x1xf32> to vector<16x1x1xf32>
    %34 = arith.addf %31, %33 : vector<16x1x1xf32>
    %c0_24 = arith.constant 0 : index
    %c0_25 = arith.constant 0 : index
    %c0_26 = arith.constant 0 : index
    %35 = vector.load %arg9[%c0_24, %c0_25, %c0_26] : memref<16x1x1xf32, #tpu.memory_space<vmem>>, vector<16x1x1xf32>
    tpu.vector_store %arg9[%c0_24, %c0_25, %c0_26], %34 {strides = array<i32>} : memref<16x1x1xf32, #tpu.memory_space<vmem>>, vector<16x1x1xf32>,
    %c0_27 = arith.constant 0 : index
    %c0_28 = arith.constant 0 : index
    %c0_29 = arith.constant 0 : index
    %36 = vector.load %arg10[%c0_27, %c0_28, %c0_29] : memref<16x1x32xf32, #tpu.memory_space<vmem>>, vector<16x1x32xf32>
    %37 = vector.broadcast %26 : vector<16x1x1xf32> to vector<16x1x32xf32>
    %38 = arith.mulf %37, %36 : vector<16x1x32xf32>
    "tpu.trace_start"() <{level = 10 : i32, message = "bqk,bkd->bqd"}> : () -> ()
    %cst_30 = arith.constant dense<0.000000e+00> : vector<16x1x32xf32>
    %39 = tpu.matmul %29, %3, %cst_30 {dimension_numbers = #tpu.dot_dimension_numbers<[2], [1], [1], [2], [0, 0, 0, 1, 1, 2], [0], [0]>} : vector<16x1x8xf32>, vector<16x8x32xf32>, vector<16x1x32xf32> -> vector<16x1x32xf32>
    "tpu.trace_stop"() : () -> ()
    %40 = arith.addf %38, %39 : vector<16x1x32xf32>
    %c0_31 = arith.constant 0 : index
    %c0_32 = arith.constant 0 : index
    %c0_33 = arith.constant 0 : index
    %41 = vector.load %arg10[%c0_31, %c0_32, %c0_33] : memref<16x1x32xf32, #tpu.memory_space<vmem>>, vector<16x1x32xf32>
    tpu.vector_store %arg10[%c0_31, %c0_32, %c0_33], %40 {strides = array<i32>} : memref<16x1x32xf32, #tpu.memory_space<vmem>>, vector<16x1x32xf32>,
    %c0_34 = arith.constant 0 : index
    %c0_35 = arith.constant 0 : index
    %c0_36 = arith.constant 0 : index
    %42 = vector.load %arg8[%c0_34, %c0_35, %c0_36] : memref<16x1x1xf32, #tpu.memory_space<vmem>>, vector<16x1x1xf32>
    tpu.vector_store %arg8[%c0_34, %c0_35, %c0_36], %24 {strides = array<i32>} : memref<16x1x1xf32, #tpu.memory_space<vmem>>, vector<16x1x1xf32>,
    %c0_i32_37 = arith.constant 0 : i32
    %43 = arith.cmpi eq, %arg1, %c0_i32_37 : i32
    %44 = arith.extui %43 : i1 to i32
    %c0_i32_38 = arith.constant 0 : i32
    %45 = arith.cmpi ne, %44, %c0_i32_38 : i32
    scf.if %45 {
      %c0_39 = arith.constant 0 : index
      %c0_40 = arith.constant 0 : index
      %c0_41 = arith.constant 0 : index
      %46 = vector.load %arg9[%c0_39, %c0_40, %c0_41] : memref<16x1x1xf32, #tpu.memory_space<vmem>>, vector<16x1x1xf32>
      %47 = tpu.reciprocal %46 {approx = true} : vector<16x1x1xf32> -> vector<16x1x1xf32>
      %48 = arith.mulf %46, %47 : vector<16x1x1xf32>
      %cst_42 = arith.constant 2.000000e+00 : f32
      %49 = vector.broadcast %cst_42 : f32 to vector<16x1x1xf32>
      %50 = arith.subf %49, %48 : vector<16x1x1xf32>
      %51 = arith.mulf %47, %50 : vector<16x1x1xf32>
      %c0_43 = arith.constant 0 : index
      %c0_44 = arith.constant 0 : index
      %c0_45 = arith.constant 0 : index
      %52 = vector.load %arg10[%c0_43, %c0_44, %c0_45] : memref<16x1x32xf32, #tpu.memory_space<vmem>>, vector<16x1x32xf32>
      %53 = vector.broadcast %51 : vector<16x1x1xf32> to vector<16x1x32xf32>
      %54 = arith.mulf %52, %53 : vector<16x1x32xf32>
      %c0_46 = arith.constant 0 : index
      %c0_47 = arith.constant 0 : index
      %c0_48 = arith.constant 0 : index
      %55 = vector.load %arg8[%c0_46, %c0_47, %c0_48] : memref<16x1x1xf32, #tpu.memory_space<vmem>>, vector<16x1x1xf32>
      %cst_49 = arith.constant -1.000000e+30 : f32
      %56 = vector.broadcast %cst_49 : f32 to vector<16x1x1xf32>
      %57 = arith.cmpf ole, %55, %56 : vector<16x1x1xf32>
      %cst_50 = arith.constant 0x7FC00000 : f32
      %58 = vector.shape_cast %57 : vector<16x1x1xi1> to vector<16x1x1xi1>
      %59 = vector.broadcast %58 : vector<16x1x1xi1> to vector<16x1x32xi1>
      %60 = vector.broadcast %cst_50 : f32 to vector<16x1x32xf32>
      %61 = arith.select %59, %60, %54 : vector<16x1x32xi1>, vector<16x1x32xf32>
      %c0_51 = arith.constant 0 : index
      %c0_52 = arith.constant 0 : index
      %c0_53 = arith.constant 0 : index
      %62 = vector.load %arg7[%c0_51, %c0_52, %c0_53] : memref<16x1x32xf32, #tpu.memory_space<vmem>>, vector<16x1x32xf32>
      tpu.vector_store %arg7[%c0_51, %c0_52, %c0_53], %61 {strides = array<i32>} : memref<16x1x32xf32, #tpu.memory_space<vmem>>, vector<16x1x32xf32>,
    } else {
    }
    return
  }
  func.func @transform_0(%arg0: i32, %arg1: i32) -> (i32, i32, i32) {
    %c0_i32 = arith.constant 0 : i32
    %c0_i32_0 = arith.constant 0 : i32
    return %arg0, %arg1, %c0_i32 : i32, i32, i32
  }
  func.func @transform_1(%arg0: i32, %arg1: i32) -> (i32, i32) {
    %c0_i32 = arith.constant 0 : i32
    %c0_i32_0 = arith.constant 0 : i32
    %c0_i32_1 = arith.constant 0 : i32
    return %c0_i32, %c0_i32_0 : i32, i32
  }
  func.func @transform_2(%arg0: i32, %arg1: i32) -> (i32, i32) {
    %c0_i32 = arith.constant 0 : i32
    %c0_i32_0 = arith.constant 0 : i32
    %c0_i32_1 = arith.constant 0 : i32
    return %c0_i32, %c0_i32_0 : i32, i32
  }
  func.func @transform_3(%arg0: i32, %arg1: i32) -> (i32, i32, i32) {
    %c0_i32 = arith.constant 0 : i32
    %c0_i32_0 = arith.constant 0 : i32
    %c0_i32_1 = arith.constant 0 : i32
    %c0_i32_2 = arith.constant 0 : i32
    return %c0_i32, %c0_i32_0, %c0_i32_1 : i32, i32, i32
  }
  func.func @transform_4(%arg0: i32, %arg1: i32) -> (i32, i32, i32) {
    %c0_i32 = arith.constant 0 : i32
    %c0_i32_0 = arith.constant 0 : i32
    return %arg0, %c0_i32, %arg1 : i32, i32, i32
  }
  func.func @transform_5(%arg0: i32, %arg1: i32) -> (i32, i32, i32) {
    %c0_i32 = arith.constant 0 : i32
    %c0_i32_0 = arith.constant 0 : i32
    %c0_i32_1 = arith.constant 0 : i32
    return %arg0, %c0_i32, %c0_i32_0 : i32, i32, i32
  }
}

</mosaic_0001>

<llo_original>
// kernel: tpu_custom_call.1
$region0: #{tpu_custom_call.1}
  #allocation0 [shape = 'u32[]', space=smem, size = 0x4, offset = 0x4, fixed_abs, tag = 'smem constant byte address 0x4 - core index']
  #allocation1 [shape = 'u32[144,128]{1,0:T(1,128)}', space=vmem, size = 0x12000, scoped, tag = 'internal scratch']
  #allocation2 [shape = 'f32[16,1,1]{2,1,0:T(1,128)}', space=vmem, size = 0x2000, scoped, tag = 'scratch operand']
  #allocation3 [shape = 'f32[16,1,1]{2,1,0:T(1,128)}', space=vmem, size = 0x2000, scoped, tag = 'scratch operand']
  #allocation4 [shape = 'f32[16,1,32]{2,1,0:T(1,128)}', space=vmem, size = 0x2000, scoped, tag = 'scratch operand']
  %s0 = inlined_call_operand.hbm [shape: f32[16,8,32], index: 0, kind: input, shape index: {}]
  %s1 = inlined_call_operand.vmem [shape: f32[32,16], index: 1, kind: input, shape index: {}]
  %s2 = inlined_call_operand.vmem [shape: f32[1,16], index: 2, kind: input, shape index: {}]
  %s3 = inlined_call_operand.vmem [shape: f32[1,1,16], index: 3, kind: input, shape index: {}]
  %s4 = inlined_call_operand.vmem [shape: s32[16,1,8], index: 4, kind: input, shape index: {}]
  %s5 = inlined_call_operand.hbm [shape: f32[16,1,32], index: 5, kind: output, shape index: {}]
  %s6 = sld [smem:[#allocation0]]
  $region42: #{tpu_custom_call.1} parent=0
    _
  %s8 = ssub.s32 1, %s6
  %s9 = scalar_select 0, %s8, %s6
  $region1: #{tpu_custom_call.1} parent=0
    #allocation5 [shape = 'u8[65536]{0}', space=vmem, size = 0x10000, scoped, tag = 'input window, operand 0, single buffered']
    #allocation6 [shape = 's32[1]{0}', space=sflag, size = 0x4, scoped, tag = 'scoped memory for tpu_custom_call.1']
    #allocation7 [shape = 's32[1]{0}', space=sflag, size = 0x4, scoped, tag = 'scoped memory for tpu_custom_call.1']
    #allocation8 [shape = 'u8[8192]{0}', space=vmem, size = 0x2000, scoped, tag = 'output window, operand 0, single buffered']
    %10 = vsyncpa [#allocation6], 0
    %11 = vsyncpa [#allocation7], 0
    // Predicated region
    $region2: #{tpu_custom_call.1} parent=1 // pred_check
      _
    $region3: #{tpu_custom_call.1} parent=1 // pred_check_branch
      %13 = sbr.rel (0) target = $region5
    $region4: #{tpu_custom_call.1} parent=1 // pred_region
      %s15 = ssub.s32 2048, 2048
      %16 = vsyncadd [#allocation6], %s15
      %s17 = sshll.u32 [#allocation5], 4
      %s18 = int_to_ptr.vmem [resolvable:$true] %s17
      %23 = dma.hbm_to_vmem [thread:$0]  %s0, 2048, %s18, [#allocation6], 128, 128, 8
    $region5: #{tpu_custom_call.1} parent=1 // pred_fallthru
      _
    // Predicated region
    $region6: #{tpu_custom_call.1} parent=1 // pred_check
      _
    $region7: #{tpu_custom_call.1} parent=1 // pred_check_branch
      %25 = sbr.rel (0) target = $region9
    $region8: #{tpu_custom_call.1} parent=1 // pred_region
      _
    $region9: #{tpu_custom_call.1} parent=1 // pred_fallthru
      _
    // Predicated region
    $region10: #{tpu_custom_call.1} parent=1 // pred_check
      _
    $region11: #{tpu_custom_call.1} parent=1 // pred_check_branch
      %27 = sbr.rel (0) target = $region13
    $region12: #{tpu_custom_call.1} parent=1 // pred_region
      _
    $region13: #{tpu_custom_call.1} parent=1 // pred_fallthru
      _
    // Predicated region
    $region14: #{tpu_custom_call.1} parent=1 // pred_check
      _
    $region15: #{tpu_custom_call.1} parent=1 // pred_check_branch
      %29 = sbr.rel (0) target = $region17
    $region16: #{tpu_custom_call.1} parent=1 // pred_region
      _
    $region17: #{tpu_custom_call.1} parent=1 // pred_fallthru
      _
    // Predicated region
    $region18: #{tpu_custom_call.1} parent=1 // pred_check
      _
    $region19: #{tpu_custom_call.1} parent=1 // pred_check_branch
      %31 = sbr.rel (0) target = $region21
    $region20: #{tpu_custom_call.1} parent=1 // pred_region
      _
    $region21: #{tpu_custom_call.1} parent=1 // pred_fallthru
      _
    // Predicated region
    $region22: #{tpu_custom_call.1} parent=1 // pred_check
      _
    $region23: #{tpu_custom_call.1} parent=1 // pred_check_branch
      %33 = sbr.rel (0) target = $region25
    $region24: #{tpu_custom_call.1} parent=1 // pred_region
      %34 = dma.done [#allocation6], 2048
    $region25: #{tpu_custom_call.1} parent=1 // pred_fallthru
      _
    %p35 = scmp.eq.s32.totalorder 0, 0
    // Predicated region
    $region26: #{tpu_custom_call.1} parent=1 // pred_check
      %p36 = pneg %p35
    $region27: #{tpu_custom_call.1} parent=1 // pred_check_branch
      %38 = sbr.rel (%p36) target = $region29
    $region28: #{tpu_custom_call.1} parent=1 // pred_region
      %vm39 = vcmask 0
      %40 = vst.msk [vmem:[#allocation2] sm:$0x1] %vm39, -1e+30
      %41 = vst.msk [vmem:[#allocation2 + $0x1] sm:$0x1] %vm39, -1e+30
      %42 = vst.msk [vmem:[#allocation2 + $0x2] sm:$0x1] %vm39, -1e+30
      %43 = vst.msk [vmem:[#allocation2 + $0x3] sm:$0x1] %vm39, -1e+30
      %44 = vst.msk [vmem:[#allocation2 + $0x4] sm:$0x1] %vm39, -1e+30
      %45 = vst.msk [vmem:[#allocation2 + $0x5] sm:$0x1] %vm39, -1e+30
      %46 = vst.msk [vmem:[#allocation2 + $0x6] sm:$0x1] %vm39, -1e+30
      %47 = vst.msk [vmem:[#allocation2 + $0x7] sm:$0x1] %vm39, -1e+30
      %48 = vst.msk [vmem:[#allocation2 + $0x8] sm:$0x1] %vm39, -1e+30
      %49 = vst.msk [vmem:[#allocation2 + $0x9] sm:$0x1] %vm39, -1e+30
      %50 = vst.msk [vmem:[#allocation2 + $0xa] sm:$0x1] %vm39, -1e+30
      %51 = vst.msk [vmem:[#allocation2 + $0xb] sm:$0x1] %vm39, -1e+30
      %52 = vst.msk [vmem:[#allocation2 + $0xc] sm:$0x1] %vm39, -1e+30
      %53 = vst.msk [vmem:[#allocation2 + $0xd] sm:$0x1] %vm39, -1e+30
      %54 = vst.msk [vmem:[#allocation2 + $0xe] sm:$0x1] %vm39, -1e+30
      %55 = vst.msk [vmem:[#allocation2 + $0xf] sm:$0x1] %vm39, -1e+30
      %56 = vst.msk [vmem:[#allocation3] sm:$0x1] %vm39, 0.0
      %57 = vst.msk [vmem:[#allocation3 + $0x1] sm:$0x1] %vm39, 0.0
      %58 = vst.msk [vmem:[#allocation3 + $0x2] sm:$0x1] %vm39, 0.0
      %59 = vst.msk [vmem:[#allocation3 + $0x3] sm:$0x1] %vm39, 0.0
      %60 = vst.msk [vmem:[#allocation3 + $0x4] sm:$0x1] %vm39, 0.0
      %61 = vst.msk [vmem:[#allocation3 + $0x5] sm:$0x1] %vm39, 0.0
      %62 = vst.msk [vmem:[#allocation3 + $0x6] sm:$0x1] %vm39, 0.0
      %63 = vst.msk [vmem:[#allocation3 + $0x7] sm:$0x1] %vm39, 0.0
      %64 = vst.msk [vmem:[#allocation3 + $0x8] sm:$0x1] %vm39, 0.0
      %65 = vst.msk [vmem:[#allocation3 + $0x9] sm:$0x1] %vm39, 0.0
      %66 = vst.msk [vmem:[#allocation3 + $0xa] sm:$0x1] %vm39, 0.0
      %67 = vst.msk [vmem:[#allocation3 + $0xb] sm:$0x1] %vm39, 0.0
      %68 = vst.msk [vmem:[#allocation3 + $0xc] sm:$0x1] %vm39, 0.0
      %69 = vst.msk [vmem:[#allocation3 + $0xd] sm:$0x1] %vm39, 0.0
      %70 = vst.msk [vmem:[#allocation3 + $0xe] sm:$0x1] %vm39, 0.0
      %71 = vst.msk [vmem:[#allocation3 + $0xf] sm:$0x1] %vm39, 0.0
      %vm72 = vcmask 253952
      %73 = vst.msk [vmem:[#allocation4] sm:$0x1] %vm72, 0.0
      %74 = vst.msk [vmem:[#allocation4 + $0x1] sm:$0x1] %vm72, 0.0
      %75 = vst.msk [vmem:[#allocation4 + $0x2] sm:$0x1] %vm72, 0.0
      %76 = vst.msk [vmem:[#allocation4 + $0x3] sm:$0x1] %vm72, 0.0
      %77 = vst.msk [vmem:[#allocation4 + $0x4] sm:$0x1] %vm72, 0.0
      %78 = vst.msk [vmem:[#allocation4 + $0x5] sm:$0x1] %vm72, 0.0
      %79 = vst.msk [vmem:[#allocation4 + $0x6] sm:$0x1] %vm72, 0.0
      %80 = vst.msk [vmem:[#allocation4 + $0x7] sm:$0x1] %vm72, 0.0
      %81 = vst.msk [vmem:[#allocation4 + $0x8] sm:$0x1] %vm72, 0.0
      %82 = vst.msk [vmem:[#allocation4 + $0x9] sm:$0x1] %vm72, 0.0
      %83 = vst.msk [vmem:[#allocation4 + $0xa] sm:$0x1] %vm72, 0.0
      %84 = vst.msk [vmem:[#allocation4 + $0xb] sm:$0x1] %vm72, 0.0
      %85 = vst.msk [vmem:[#allocation4 + $0xc] sm:$0x1] %vm72, 0.0
      %86 = vst.msk [vmem:[#allocation4 + $0xd] sm:$0x1] %vm72, 0.0
      %87 = vst.msk [vmem:[#allocation4 + $0xe] sm:$0x1] %vm72, 0.0
      %88 = vst.msk [vmem:[#allocation4 + $0xf] sm:$0x1] %vm72, 0.0
    $region29: #{tpu_custom_call.1} parent=1 // pred_fallthru
      _
    %v89 = vld [vmem:[#allocation5] sm:$0xff]
    %v90 = vld [vmem:[#allocation5 + $0x8] sm:$0xff]
    %v91 = vld [vmem:[#allocation5 + $0x10] sm:$0xff]
    %v92 = vld [vmem:[#allocation5 + $0x18] sm:$0xff]
    %v93 = vld [vmem:[#allocation5 + $0x20] sm:$0xff]
    %v94 = vld [vmem:[#allocation5 + $0x28] sm:$0xff]
    %v95 = vld [vmem:[#allocation5 + $0x30] sm:$0xff]
    %v96 = vld [vmem:[#allocation5 + $0x38] sm:$0xff]
    %v97 = vld [vmem:[#allocation5 + $0x40] sm:$0xff]
    %v98 = vld [vmem:[#allocation5 + $0x48] sm:$0xff]
    %v99 = vld [vmem:[#allocation5 + $0x50] sm:$0xff]
    %v100 = vld [vmem:[#allocation5 + $0x58] sm:$0xff]
    %v101 = vld [vmem:[#allocation5 + $0x60] sm:$0xff]
    %v102 = vld [vmem:[#allocation5 + $0x68] sm:$0xff]
    %v103 = vld [vmem:[#allocation5 + $0x70] sm:$0xff]
    %v104 = vld [vmem:[#allocation5 + $0x78] sm:$0xff]
    %v105 = vld [vmem:[%s1] sm:$0xff]
    %v106 = vld [vmem:[%s1 + $0x8] sm:$0xff]
    %v107 = vld [vmem:[%s1 + $0x10] sm:$0xff]
    %v108 = vld [vmem:[%s1 + $0x18] sm:$0xff]
    %v109 = vld [vmem:[%s2] sm:$0x1]
    %v111 = vlaneseq
    %v112 = vshrl.u32 %v111, 7
    %v113 = vsub.s32 0, %v112
    %v114 = vrot.slane %v109, %v113
    %vm116 = vcmask 261120
    %v118 = vsel %vm116, %v89, 0
    %v121 = vsel %vm116, %v90, 0
    %v124 = vsel %vm116, %v91, 0
    %v127 = vsel %vm116, %v92, 0
    %v130 = vsel %vm116, %v93, 0
    %v133 = vsel %vm116, %v94, 0
    %v136 = vsel %vm116, %v95, 0
    %v139 = vsel %vm116, %v96, 0
    %v142 = vsel %vm116, %v97, 0
    %v145 = vsel %vm116, %v98, 0
    %v148 = vsel %vm116, %v99, 0
    %v151 = vsel %vm116, %v100, 0
    %v154 = vsel %vm116, %v101, 0
    %v157 = vsel %vm116, %v102, 0
    %v160 = vsel %vm116, %v103, 0
    %v163 = vsel %vm116, %v104, 0
    %165 = vmatprep.subr.mxu0 0.0
    %166 = vmatpush1.msra.mxu0 %v105
    %167 = vmatprep.subr.mxu0 0.0
    %168 = vmatpush1.msra.mxu0 %v106
    %169 = vmatprep.subr.mxu0 0.0
    %170 = vmatpush1.msra.mxu0 %v107
    %171 = vmatprep.subr.mxu0 0.0
    %172 = vmatpush1.msra.mxu0 %v108
    %173 = vmatprep.subr.mxu0 0.0
    %174 = vmatpush1.msra.mxu0 0.0
    %175 = vmatprep.subr.mxu0 0.0
    %176 = vmatpush1.msra.mxu0 0.0
    %177 = vmatprep.subr.mxu0 0.0
    %178 = vmatpush1.msra.mxu0 0.0
    %179 = vmatprep.subr.mxu0 0.0
    %180 = vmatpush1.msra.mxu0 0.0
    %181 = vmatprep.subr.mxu0 0.0
    %182 = vmatpush1.msra.mxu0 0.0
    %183 = vmatprep.subr.mxu0 0.0
    %184 = vmatpush1.msra.mxu0 0.0
    %185 = vmatprep.subr.mxu0 0.0
    %186 = vmatpush1.msra.mxu0 0.0
    %187 = vmatprep.subr.mxu0 0.0
    %188 = vmatpush1.msra.mxu0 0.0
    %189 = vmatprep.subr.mxu0 0.0
    %190 = vmatpush1.msra.mxu0 0.0
    %191 = vmatprep.subr.mxu0 0.0
    %192 = vmatpush1.msra.mxu0 0.0
    %193 = vmatprep.subr.mxu0 0.0
    %194 = vmatpush1.msra.mxu0 0.0
    %195 = vmatprep.subr.mxu0 0.0
    %196 = vmatpush1.msra.mxu0 0.0
    %197 = vmatprep.subr.mxu0 0.0
    %198 = vmatpush1.msra.mxu0 0.0
    %199 = vmatprep.subr.mxu0 0.0
    %200 = vmatpush1.msra.mxu0 0.0
    %201 = vmatprep.subr.mxu0 0.0
    %202 = vmatpush1.msra.mxu0 0.0
    %203 = vmatprep.subr.mxu0 0.0
    %204 = vmatpush1.msra.mxu0 0.0
    %205 = vmatprep.subr.mxu0 0.0
    %206 = vmatpush1.msra.mxu0 0.0
    %207 = vmatprep.subr.mxu0 0.0
    %208 = vmatpush1.msra.mxu0 0.0
    %209 = vmatprep.subr.mxu0 0.0
    %210 = vmatpush1.msra.mxu0 0.0
    %211 = vmatprep.subr.mxu0 0.0
    %212 = vmatpush1.msra.mxu0 0.0
    %213 = vmatprep.subr.mxu0 0.0
    %214 = vmatpush1.msra.mxu0 0.0
    %215 = vmatprep.subr.mxu0 0.0
    %216 = vmatpush1.msra.mxu0 0.0
    %217 = vmatprep.subr.mxu0 0.0
    %218 = vmatpush1.msra.mxu0 0.0
    %219 = vmatprep.subr.mxu0 0.0
    %220 = vmatpush1.msra.mxu0 0.0
    %221 = vmatprep.subr.mxu0 0.0
    %222 = vmatpush1.msra.mxu0 0.0
    %223 = vmatprep.subr.mxu0 0.0
    %224 = vmatpush1.msra.mxu0 0.0
    %225 = vmatprep.subr.mxu0 0.0
    %226 = vmatpush1.msra.mxu0 0.0
    %227 = vmatprep.subr.mxu0 0.0
    %228 = vmatpush1.msra.mxu0 0.0
    %229 = vmatprep.mubr.f32.mxu0 0.0
    %230 = vmatmul.mubr.f32.gmra.mrb[0].mxu0 %v118
    %v231 = vpop.f32.mrb[0].mxu0
    %v232 = vadd.f32 %v114, %v231
    %v233 = vpop.f32.mrb[0].mxu0
    %234 = vmatprep.mubr.f32.mxu0 0.0
    %235 = vmatmul.mubr.f32.gmra.mrb[0].mxu0 %v121
    %v236 = vpop.f32.mrb[0].mxu0
    %v237 = vadd.f32 %v114, %v236
    %v238 = vpop.f32.mrb[0].mxu0
    %239 = vmatprep.mubr.f32.mxu0 0.0
    %240 = vmatmul.mubr.f32.gmra.mrb[0].mxu0 %v124
    %v241 = vpop.f32.mrb[0].mxu0
    %v242 = vadd.f32 %v114, %v241
    %v243 = vpop.f32.mrb[0].mxu0
    %244 = vmatprep.mubr.f32.mxu0 0.0
    %245 = vmatmul.mubr.f32.gmra.mrb[0].mxu0 %v127
    %v246 = vpop.f32.mrb[0].mxu0
    %v247 = vadd.f32 %v114, %v246
    %v248 = vpop.f32.mrb[0].mxu0
    %249 = vmatprep.mubr.f32.mxu0 0.0
    %250 = vmatmul.mubr.f32.gmra.mrb[0].mxu0 %v130
    %v251 = vpop.f32.mrb[0].mxu0
    %v252 = vadd.f32 %v114, %v251
    %v253 = vpop.f32.mrb[0].mxu0
    %254 = vmatprep.mubr.f32.mxu0 0.0
    %255 = vmatmul.mubr.f32.gmra.mrb[0].mxu0 %v133
    %v256 = vpop.f32.mrb[0].mxu0
    %v257 = vadd.f32 %v114, %v256
    %v258 = vpop.f32.mrb[0].mxu0
    %259 = vmatprep.mubr.f32.mxu0 0.0
    %260 = vmatmul.mubr.f32.gmra.mrb[0].mxu0 %v136
    %v261 = vpop.f32.mrb[0].mxu0
    %v262 = vadd.f32 %v114, %v261
    %v263 = vpop.f32.mrb[0].mxu0
    %264 = vmatprep.mubr.f32.mxu0 0.0
    %265 = vmatmul.mubr.f32.gmra.mrb[0].mxu0 %v139
    %v266 = vpop.f32.mrb[0].mxu0
    %v267 = vadd.f32 %v114, %v266
    %v268 = vpop.f32.mrb[0].mxu0
    %269 = vmatprep.mubr.f32.mxu0 0.0
    %270 = vmatmul.mubr.f32.gmra.mrb[0].mxu0 %v142
    %v271 = vpop.f32.mrb[0].mxu0
    %v272 = vadd.f32 %v114, %v271
    %v273 = vpop.f32.mrb[0].mxu0
    %274 = vmatprep.mubr.f32.mxu0 0.0
    %275 = vmatmul.mubr.f32.gmra.mrb[0].mxu0 %v145
    %v276 = vpop.f32.mrb[0].mxu0
    %v277 = vadd.f32 %v114, %v276
    %v278 = vpop.f32.mrb[0].mxu0
    %279 = vmatprep.mubr.f32.mxu0 0.0
    %280 = vmatmul.mubr.f32.gmra.mrb[0].mxu0 %v148
    %v281 = vpop.f32.mrb[0].mxu0
    %v282 = vadd.f32 %v114, %v281
    %v283 = vpop.f32.mrb[0].mxu0
    %284 = vmatprep.mubr.f32.mxu0 0.0
    %285 = vmatmul.mubr.f32.gmra.mrb[0].mxu0 %v151
    %v286 = vpop.f32.mrb[0].mxu0
    %v287 = vadd.f32 %v114, %v286
    %v288 = vpop.f32.mrb[0].mxu0
    %289 = vmatprep.mubr.f32.mxu0 0.0
    %290 = vmatmul.mubr.f32.gmra.mrb[0].mxu0 %v154
    %v291 = vpop.f32.mrb[0].mxu0
    %v292 = vadd.f32 %v114, %v291
    %v293 = vpop.f32.mrb[0].mxu0
    %294 = vmatprep.mubr.f32.mxu0 0.0
    %295 = vmatmul.mubr.f32.gmra.mrb[0].mxu0 %v157
    %v296 = vpop.f32.mrb[0].mxu0
    %v297 = vadd.f32 %v114, %v296
    %v298 = vpop.f32.mrb[0].mxu0
    %299 = vmatprep.mubr.f32.mxu0 0.0
    %300 = vmatmul.mubr.f32.gmra.mrb[0].mxu0 %v160
    %v301 = vpop.f32.mrb[0].mxu0
    %v302 = vadd.f32 %v114, %v301
    %v303 = vpop.f32.mrb[0].mxu0
    %304 = vmatprep.mubr.f32.mxu0 0.0
    %305 = vmatmul.mubr.f32.gmra.mrb[0].mxu0 %v163
    %v306 = vpop.f32.mrb[0].mxu0
    %v307 = vadd.f32 %v114, %v306
    %v308 = vpop.f32.mrb[0].mxu0
    %309 = vdwg.mxu0
    %v310 = vtanh.pop %v232
    %v311 = vtanh.pop %v237
    %v312 = vtanh.pop %v242
    %v313 = vtanh.pop %v247
    %v314 = vtanh.pop %v252
    %v315 = vtanh.pop %v257
    %v316 = vtanh.pop %v262
    %v317 = vtanh.pop %v267
    %v318 = vtanh.pop %v272
    %v319 = vtanh.pop %v277
    %v320 = vtanh.pop %v282
    %v321 = vtanh.pop %v287
    %v322 = vtanh.pop %v292
    %v323 = vtanh.pop %v297
    %v324 = vtanh.pop %v302
    %v325 = vtanh.pop %v307
    %v326 = vld [vmem:[%s3] sm:$0x1]
    %vm327 = vcmask 130048
    %v329 = vsel %vm327, %v326, 0
    %v332 = vsel %vm327, %v310, 0
    %334 = vmatprep.subr.mxu0 0.0
    %335 = vmatpush1.xpose.msra.mxu0 %v332
    %336 = vmatprep.subr.mxu0 0.0
    %337 = vmatpush1.xpose.msra.mxu0 0.0
    %338 = vmatprep.subr.mxu0 0.0
    %339 = vmatpush1.xpose.msra.mxu0 0.0
    %340 = vmatprep.subr.mxu0 0.0
    %341 = vmatpush1.xpose.msra.mxu0 0.0
    %342 = vmatprep.subr.mxu0 0.0
    %343 = vmatpush1.xpose.msra.mxu0 0.0
    %344 = vmatprep.subr.mxu0 0.0
    %345 = vmatpush1.xpose.msra.mxu0 0.0
    %346 = vmatprep.subr.mxu0 0.0
    %347 = vmatpush1.xpose.msra.mxu0 0.0
    %348 = vmatprep.subr.mxu0 0.0
    %349 = vmatpush1.xpose.msra.mxu0 0.0
    %350 = vmatprep.subr.mxu0 0.0
    %351 = vmatpush1.xpose.msra.mxu0 0.0
    %352 = vmatprep.subr.mxu0 0.0
    %353 = vmatpush1.xpose.msra.mxu0 0.0
    %354 = vmatprep.subr.mxu0 0.0
    %355 = vmatpush1.xpose.msra.mxu0 0.0
    %356 = vmatprep.subr.mxu0 0.0
    %357 = vmatpush1.xpose.msra.mxu0 0.0
    %358 = vmatprep.subr.mxu0 0.0
    %359 = vmatpush1.xpose.msra.mxu0 0.0
    %360 = vmatprep.subr.mxu0 0.0
    %361 = vmatpush1.xpose.msra.mxu0 0.0
    %362 = vmatprep.subr.mxu0 0.0
    %363 = vmatpush1.xpose.msra.mxu0 0.0
    %364 = vmatprep.subr.mxu0 0.0
    %365 = vmatpush1.xpose.msra.mxu0 0.0
    %366 = vmatprep.subr.mxu0 0.0
    %367 = vmatpush1.xpose.msra.mxu0 0.0
    %368 = vmatprep.subr.mxu0 0.0
    %369 = vmatpush1.xpose.msra.mxu0 0.0
    %370 = vmatprep.subr.mxu0 0.0
    %371 = vmatpush1.xpose.msra.mxu0 0.0
    %372 = vmatprep.subr.mxu0 0.0
    %373 = vmatpush1.xpose.msra.mxu0 0.0
    %374 = vmatprep.subr.mxu0 0.0
    %375 = vmatpush1.xpose.msra.mxu0 0.0
    %376 = vmatprep.subr.mxu0 0.0
    %377 = vmatpush1.xpose.msra.mxu0 0.0
    %378 = vmatprep.subr.mxu0 0.0
    %379 = vmatpush1.xpose.msra.mxu0 0.0
    %380 = vmatprep.subr.mxu0 0.0
    %381 = vmatpush1.xpose.msra.mxu0 0.0
    %382 = vmatprep.subr.mxu0 0.0
    %383 = vmatpush1.xpose.msra.mxu0 0.0
    %384 = vmatprep.subr.mxu0 0.0
    %385 = vmatpush1.xpose.msra.mxu0 0.0
    %386 = vmatprep.subr.mxu0 0.0
    %387 = vmatpush1.xpose.msra.mxu0 0.0
    %388 = vmatprep.subr.mxu0 0.0
    %389 = vmatpush1.xpose.msra.mxu0 0.0
    %390 = vmatprep.subr.mxu0 0.0
    %391 = vmatpush1.xpose.msra.mxu0 0.0
    %392 = vmatprep.subr.mxu0 0.0
    %393 = vmatpush1.xpose.msra.mxu0 0.0
    %394 = vmatprep.subr.mxu0 0.0
    %395 = vmatpush1.xpose.msra.mxu0 0.0
    %396 = vmatprep.subr.mxu0 0.0
    %397 = vmatpush1.xpose.msra.mxu0 0.0
    %398 = vmatprep.mubr.f32.mxu0 0.0
    %399 = vmatmul.mubr.f32.gmra.mrb[0].mxu0 %v329
    %v400 = vpop.f32.mrb[0].mxu0
    %v401 = vadd.f32 0.0, %v400
    %v402 = vpop.f32.mrb[0].mxu0
    %403 = vdwg.mxu0
    %v405 = vsel %vm327, %v311, 0
    %407 = vmatprep.subr.mxu0 0.0
    %408 = vmatpush1.xpose.msra.mxu0 %v405
    %409 = vmatprep.subr.mxu0 0.0
    %410 = vmatpush1.xpose.msra.mxu0 0.0
    %411 = vmatprep.subr.mxu0 0.0
    %412 = vmatpush1.xpose.msra.mxu0 0.0
    %413 = vmatprep.subr.mxu0 0.0
    %414 = vmatpush1.xpose.msra.mxu0 0.0
    %415 = vmatprep.subr.mxu0 0.0
    %416 = vmatpush1.xpose.msra.mxu0 0.0
    %417 = vmatprep.subr.mxu0 0.0
    %418 = vmatpush1.xpose.msra.mxu0 0.0
    %419 = vmatprep.subr.mxu0 0.0
    %420 = vmatpush1.xpose.msra.mxu0 0.0
    %421 = vmatprep.subr.mxu0 0.0
    %422 = vmatpush1.xpose.msra.mxu0 0.0
    %423 = vmatprep.subr.mxu0 0.0
    %424 = vmatpush1.xpose.msra.mxu0 0.0
    %425 = vmatprep.subr.mxu0 0.0
    %426 = vmatpush1.xpose.msra.mxu0 0.0
    %427 = vmatprep.subr.mxu0 0.0
    %428 = vmatpush1.xpose.msra.mxu0 0.0
    %429 = vmatprep.subr.mxu0 0.0
    %430 = vmatpush1.xpose.msra.mxu0 0.0
    %431 = vmatprep.subr.mxu0 0.0
    %432 = vmatpush1.xpose.msra.mxu0 0.0
    %433 = vmatprep.subr.mxu0 0.0
    %434 = vmatpush1.xpose.msra.mxu0 0.0
    %435 = vmatprep.subr.mxu0 0.0
    %436 = vmatpush1.xpose.msra.mxu0 0.0
    %437 = vmatprep.subr.mxu0 0.0
    %438 = vmatpush1.xpose.msra.mxu0 0.0
    %439 = vmatprep.subr.mxu0 0.0
    %440 = vmatpush1.xpose.msra.mxu0 0.0
    %441 = vmatprep.subr.mxu0 0.0
    %442 = vmatpush1.xpose.msra.mxu0 0.0
    %443 = vmatprep.subr.mxu0 0.0
    %444 = vmatpush1.xpose.msra.mxu0 0.0
    %445 = vmatprep.subr.mxu0 0.0
    %446 = vmatpush1.xpose.msra.mxu0 0.0
    %447 = vmatprep.subr.mxu0 0.0
    %448 = vmatpush1.xpose.msra.mxu0 0.0
    %449 = vmatprep.subr.mxu0 0.0
    %450 = vmatpush1.xpose.msra.mxu0 0.0
    %451 = vmatprep.subr.mxu0 0.0
    %452 = vmatpush1.xpose.msra.mxu0 0.0
    %453 = vmatprep.subr.mxu0 0.0
    %454 = vmatpush1.xpose.msra.mxu0 0.0
    %455 = vmatprep.subr.mxu0 0.0
    %456 = vmatpush1.xpose.msra.mxu0 0.0
    %457 = vmatprep.subr.mxu0 0.0
    %458 = vmatpush1.xpose.msra.mxu0 0.0
    %459 = vmatprep.subr.mxu0 0.0
    %460 = vmatpush1.xpose.msra.mxu0 0.0
    %461 = vmatprep.subr.mxu0 0.0
    %462 = vmatpush1.xpose.msra.mxu0 0.0
    %463 = vmatprep.subr.mxu0 0.0
    %464 = vmatpush1.xpose.msra.mxu0 0.0
    %465 = vmatprep.subr.mxu0 0.0
    %466 = vmatpush1.xpose.msra.mxu0 0.0
    %467 = vmatprep.subr.mxu0 0.0
    %468 = vmatpush1.xpose.msra.mxu0 0.0
    %469 = vmatprep.subr.mxu0 0.0
    %470 = vmatpush1.xpose.msra.mxu0 0.0
    %471 = vmatprep.mubr.f32.mxu0 0.0
    %472 = vmatmul.mubr.f32.gmra.mrb[0].mxu0 %v329
    %v473 = vpop.f32.mrb[0].mxu0
    %v474 = vadd.f32 0.0, %v473
    %v475 = vpop.f32.mrb[0].mxu0
    %476 = vdwg.mxu0
    %v478 = vsel %vm327, %v312, 0
    %480 = vmatprep.subr.mxu0 0.0
    %481 = vmatpush1.xpose.msra.mxu0 %v478
    %482 = vmatprep.subr.mxu0 0.0
    %483 = vmatpush1.xpose.msra.mxu0 0.0
    %484 = vmatprep.subr.mxu0 0.0
    %485 = vmatpush1.xpose.msra.mxu0 0.0
    %486 = vmatprep.subr.mxu0 0.0
    %487 = vmatpush1.xpose.msra.mxu0 0.0
    %488 = vmatprep.subr.mxu0 0.0
    %489 = vmatpush1.xpose.msra.mxu0 0.0
    %490 = vmatprep.subr.mxu0 0.0
    %491 = vmatpush1.xpose.msra.mxu0 0.0
    %492 = vmatprep.subr.mxu0 0.0
    %493 = vmatpush1.xpose.msra.mxu0 0.0
    %494 = vmatprep.subr.mxu0 0.0
    %495 = vmatpush1.xpose.msra.mxu0 0.0
    %496 = vmatprep.subr.mxu0 0.0
    %497 = vmatpush1.xpose.msra.mxu0 0.0
    %498 = vmatprep.subr.mxu0 0.0
    %499 = vmatpush1.xpose.msra.mxu0 0.0
    %500 = vmatprep.subr.mxu0 0.0
    %501 = vmatpush1.xpose.msra.mxu0 0.0
    %502 = vmatprep.subr.mxu0 0.0
    %503 = vmatpush1.xpose.msra.mxu0 0.0
    %504 = vmatprep.subr.mxu0 0.0
    %505 = vmatpush1.xpose.msra.mxu0 0.0
    %506 = vmatprep.subr.mxu0 0.0
    %507 = vmatpush1.xpose.msra.mxu0 0.0
    %508 = vmatprep.subr.mxu0 0.0
    %509 = vmatpush1.xpose.msra.mxu0 0.0
    %510 = vmatprep.subr.mxu0 0.0
    %511 = vmatpush1.xpose.msra.mxu0 0.0
    %512 = vmatprep.subr.mxu0 0.0
    %513 = vmatpush1.xpose.msra.mxu0 0.0
    %514 = vmatprep.subr.mxu0 0.0
    %515 = vmatpush1.xpose.msra.mxu0 0.0
    %516 = vmatprep.subr.mxu0 0.0
    %517 = vmatpush1.xpose.msra.mxu0 0.0
    %518 = vmatprep.subr.mxu0 0.0
    %519 = vmatpush1.xpose.msra.mxu0 0.0
    %520 = vmatprep.subr.mxu0 0.0
    %521 = vmatpush1.xpose.msra.mxu0 0.0
    %522 = vmatprep.subr.mxu0 0.0
    %523 = vmatpush1.xpose.msra.mxu0 0.0
    %524 = vmatprep.subr.mxu0 0.0
    %525 = vmatpush1.xpose.msra.mxu0 0.0
    %526 = vmatprep.subr.mxu0 0.0
    %527 = vmatpush1.xpose.msra.mxu0 0.0
    %528 = vmatprep.subr.mxu0 0.0
    %529 = vmatpush1.xpose.msra.mxu0 0.0
    %530 = vmatprep.subr.mxu0 0.0
    %531 = vmatpush1.xpose.msra.mxu0 0.0
    %532 = vmatprep.subr.mxu0 0.0
    %533 = vmatpush1.xpose.msra.mxu0 0.0
    %534 = vmatprep.subr.mxu0 0.0
    %535 = vmatpush1.xpose.msra.mxu0 0.0
    %536 = vmatprep.subr.mxu0 0.0
    %537 = vmatpush1.xpose.msra.mxu0 0.0
    %538 = vmatprep.subr.mxu0 0.0
    %539 = vmatpush1.xpose.msra.mxu0 0.0
    %540 = vmatprep.subr.mxu0 0.0
    %541 = vmatpush1.xpose.msra.mxu0 0.0
    %542 = vmatprep.subr.mxu0 0.0
    %543 = vmatpush1.xpose.msra.mxu0 0.0
    %544 = vmatprep.mubr.f32.mxu0 0.0
    %545 = vmatmul.mubr.f32.gmra.mrb[0].mxu0 %v329
    %v546 = vpop.f32.mrb[0].mxu0
    %v547 = vadd.f32 0.0, %v546
    %v548 = vpop.f32.mrb[0].mxu0
    %549 = vdwg.mxu0
    %v551 = vsel %vm327, %v313, 0
    %553 = vmatprep.subr.mxu0 0.0
    %554 = vmatpush1.xpose.msra.mxu0 %v551
    %555 = vmatprep.subr.mxu0 0.0
    %556 = vmatpush1.xpose.msra.mxu0 0.0
    %557 = vmatprep.subr.mxu0 0.0
    %558 = vmatpush1.xpose.msra.mxu0 0.0
    %559 = vmatprep.subr.mxu0 0.0
    %560 = vmatpush1.xpose.msra.mxu0 0.0
    %561 = vmatprep.subr.mxu0 0.0
    %562 = vmatpush1.xpose.msra.mxu0 0.0
    %563 = vmatprep.subr.mxu0 0.0
    %564 = vmatpush1.xpose.msra.mxu0 0.0
    %565 = vmatprep.subr.mxu0 0.0
    %566 = vmatpush1.xpose.msra.mxu0 0.0
    %567 = vmatprep.subr.mxu0 0.0
    %568 = vmatpush1.xpose.msra.mxu0 0.0
    %569 = vmatprep.subr.mxu0 0.0
    %570 = vmatpush1.xpose.msra.mxu0 0.0
    %571 = vmatprep.subr.mxu0 0.0
    %572 = vmatpush1.xpose.msra.mxu0 0.0
    %573 = vmatprep.subr.mxu0 0.0
    %574 = vmatpush1.xpose.msra.mxu0 0.0
    %575 = vmatprep.subr.mxu0 0.0
    %576 = vmatpush1.xpose.msra.mxu0 0.0
    %577 = vmatprep.subr.mxu0 0.0
    %578 = vmatpush1.xpose.msra.mxu0 0.0
    %579 = vmatprep.subr.mxu0 0.0
    %580 = vmatpush1.xpose.msra.mxu0 0.0
    %581 = vmatprep.subr.mxu0 0.0
    %582 = vmatpush1.xpose.msra.mxu0 0.0
    %583 = vmatprep.subr.mxu0 0.0
    %584 = vmatpush1.xpose.msra.mxu0 0.0
    %585 = vmatprep.subr.mxu0 0.0
    %586 = vmatpush1.xpose.msra.mxu0 0.0
    %587 = vmatprep.subr.mxu0 0.0
    %588 = vmatpush1.xpose.msra.mxu0 0.0
    %589 = vmatprep.subr.mxu0 0.0
    %590 = vmatpush1.xpose.msra.mxu0 0.0
    %591 = vmatprep.subr.mxu0 0.0
    %592 = vmatpush1.xpose.msra.mxu0 0.0
    %593 = vmatprep.subr.mxu0 0.0
    %594 = vmatpush1.xpose.msra.mxu0 0.0
    %595 = vmatprep.subr.mxu0 0.0
    %596 = vmatpush1.xpose.msra.mxu0 0.0
    %597 = vmatprep.subr.mxu0 0.0
    %598 = vmatpush1.xpose.msra.mxu0 0.0
    %599 = vmatprep.subr.mxu0 0.0
    %600 = vmatpush1.xpose.msra.mxu0 0.0
    %601 = vmatprep.subr.mxu0 0.0
    %602 = vmatpush1.xpose.msra.mxu0 0.0
    %603 = vmatprep.subr.mxu0 0.0
    %604 = vmatpush1.xpose.msra.mxu0 0.0
    %605 = vmatprep.subr.mxu0 0.0
    %606 = vmatpush1.xpose.msra.mxu0 0.0
    %607 = vmatprep.subr.mxu0 0.0
    %608 = vmatpush1.xpose.msra.mxu0 0.0
    %609 = vmatprep.subr.mxu0 0.0
    %610 = vmatpush1.xpose.msra.mxu0 0.0
    %611 = vmatprep.subr.mxu0 0.0
    %612 = vmatpush1.xpose.msra.mxu0 0.0
    %613 = vmatprep.subr.mxu0 0.0
    %614 = vmatpush1.xpose.msra.mxu0 0.0
    %615 = vmatprep.subr.mxu0 0.0
    %616 = vmatpush1.xpose.msra.mxu0 0.0
    %617 = vmatprep.mubr.f32.mxu0 0.0
    %618 = vmatmul.mubr.f32.gmra.mrb[0].mxu0 %v329
    %v619 = vpop.f32.mrb[0].mxu0
    %v620 = vadd.f32 0.0, %v619
    %v621 = vpop.f32.mrb[0].mxu0
    %622 = vdwg.mxu0
    %v624 = vsel %vm327, %v314, 0
    %626 = vmatprep.subr.mxu0 0.0
    %627 = vmatpush1.xpose.msra.mxu0 %v624
    %628 = vmatprep.subr.mxu0 0.0
    %629 = vmatpush1.xpose.msra.mxu0 0.0
    %630 = vmatprep.subr.mxu0 0.0
    %631 = vmatpush1.xpose.msra.mxu0 0.0
    %632 = vmatprep.subr.mxu0 0.0
    %633 = vmatpush1.xpose.msra.mxu0 0.0
    %634 = vmatprep.subr.mxu0 0.0
    %635 = vmatpush1.xpose.msra.mxu0 0.0
    %636 = vmatprep.subr.mxu0 0.0
    %637 = vmatpush1.xpose.msra.mxu0 0.0
    %638 = vmatprep.subr.mxu0 0.0
    %639 = vmatpush1.xpose.msra.mxu0 0.0
    %640 = vmatprep.subr.mxu0 0.0
    %641 = vmatpush1.xpose.msra.mxu0 0.0
    %642 = vmatprep.subr.mxu0 0.0
    %643 = vmatpush1.xpose.msra.mxu0 0.0
    %644 = vmatprep.subr.mxu0 0.0
    %645 = vmatpush1.xpose.msra.mxu0 0.0
    %646 = vmatprep.subr.mxu0 0.0
    %647 = vmatpush1.xpose.msra.mxu0 0.0
    %648 = vmatprep.subr.mxu0 0.0
    %649 = vmatpush1.xpose.msra.mxu0 0.0
    %650 = vmatprep.subr.mxu0 0.0
    %651 = vmatpush1.xpose.msra.mxu0 0.0
    %652 = vmatprep.subr.mxu0 0.0
    %653 = vmatpush1.xpose.msra.mxu0 0.0
    %654 = vmatprep.subr.mxu0 0.0
    %655 = vmatpush1.xpose.msra.mxu0 0.0
    %656 = vmatprep.subr.mxu0 0.0
    %657 = vmatpush1.xpose.msra.mxu0 0.0
    %658 = vmatprep.subr.mxu0 0.0
    %659 = vmatpush1.xpose.msra.mxu0 0.0
    %660 = vmatprep.subr.mxu0 0.0
    %661 = vmatpush1.xpose.msra.mxu0 0.0
    %662 = vmatprep.subr.mxu0 0.0
    %663 = vmatpush1.xpose.msra.mxu0 0.0
    %664 = vmatprep.subr.mxu0 0.0
    %665 = vmatpush1.xpose.msra.mxu0 0.0
    %666 = vmatprep.subr.mxu0 0.0
    %667 = vmatpush1.xpose.msra.mxu0 0.0
    %668 = vmatprep.subr.mxu0 0.0
    %669 = vmatpush1.xpose.msra.mxu0 0.0
    %670 = vmatprep.subr.mxu0 0.0
    %671 = vmatpush1.xpose.msra.mxu0 0.0
    %672 = vmatprep.subr.mxu0 0.0
    %673 = vmatpush1.xpose.msra.mxu0 0.0
    %674 = vmatprep.subr.mxu0 0.0
    %675 = vmatpush1.xpose.msra.mxu0 0.0
    %676 = vmatprep.subr.mxu0 0.0
    %677 = vmatpush1.xpose.msra.mxu0 0.0
    %678 = vmatprep.subr.mxu0 0.0
    %679 = vmatpush1.xpose.msra.mxu0 0.0
    %680 = vmatprep.subr.mxu0 0.0
    %681 = vmatpush1.xpose.msra.mxu0 0.0
    %682 = vmatprep.subr.mxu0 0.0
    %683 = vmatpush1.xpose.msra.mxu0 0.0
    %684 = vmatprep.subr.mxu0 0.0
    %685 = vmatpush1.xpose.msra.mxu0 0.0
    %686 = vmatprep.subr.mxu0 0.0
    %687 = vmatpush1.xpose.msra.mxu0 0.0
    %688 = vmatprep.subr.mxu0 0.0
    %689 = vmatpush1.xpose.msra.mxu0 0.0
    %690 = vmatprep.mubr.f32.mxu0 0.0
    %691 = vmatmul.mubr.f32.gmra.mrb[0].mxu0 %v329
    %v692 = vpop.f32.mrb[0].mxu0
    %v693 = vadd.f32 0.0, %v692
    %v694 = vpop.f32.mrb[0].mxu0
    %695 = vdwg.mxu0
    %v697 = vsel %vm327, %v315, 0
    %699 = vmatprep.subr.mxu0 0.0
    %700 = vmatpush1.xpose.msra.mxu0 %v697
    %701 = vmatprep.subr.mxu0 0.0
    %702 = vmatpush1.xpose.msra.mxu0 0.0
    %703 = vmatprep.subr.mxu0 0.0
    %704 = vmatpush1.xpose.msra.mxu0 0.0
    %705 = vmatprep.subr.mxu0 0.0
    %706 = vmatpush1.xpose.msra.mxu0 0.0
    %707 = vmatprep.subr.mxu0 0.0
    %708 = vmatpush1.xpose.msra.mxu0 0.0
    %709 = vmatprep.subr.mxu0 0.0
    %710 = vmatpush1.xpose.msra.mxu0 0.0
    %711 = vmatprep.subr.mxu0 0.0
    %712 = vmatpush1.xpose.msra.mxu0 0.0
    %713 = vmatprep.subr.mxu0 0.0
    %714 = vmatpush1.xpose.msra.mxu0 0.0
    %715 = vmatprep.subr.mxu0 0.0
    %716 = vmatpush1.xpose.msra.mxu0 0.0
    %717 = vmatprep.subr.mxu0 0.0
    %718 = vmatpush1.xpose.msra.mxu0 0.0
    %719 = vmatprep.subr.mxu0 0.0
    %720 = vmatpush1.xpose.msra.mxu0 0.0
    %721 = vmatprep.subr.mxu0 0.0
    %722 = vmatpush1.xpose.msra.mxu0 0.0
    %723 = vmatprep.subr.mxu0 0.0
    %724 = vmatpush1.xpose.msra.mxu0 0.0
    %725 = vmatprep.subr.mxu0 0.0
    %726 = vmatpush1.xpose.msra.mxu0 0.0
    %727 = vmatprep.subr.mxu0 0.0
    %728 = vmatpush1.xpose.msra.mxu0 0.0
    %729 = vmatprep.subr.mxu0 0.0
    %730 = vmatpush1.xpose.msra.mxu0 0.0
    %731 = vmatprep.subr.mxu0 0.0
    %732 = vmatpush1.xpose.msra.mxu0 0.0
    %733 = vmatprep.subr.mxu0 0.0
    %734 = vmatpush1.xpose.msra.mxu0 0.0
    %735 = vmatprep.subr.mxu0 0.0
    %736 = vmatpush1.xpose.msra.mxu0 0.0
    %737 = vmatprep.subr.mxu0 0.0
    %738 = vmatpush1.xpose.msra.mxu0 0.0
    %739 = vmatprep.subr.mxu0 0.0
    %740 = vmatpush1.xpose.msra.mxu0 0.0
    %741 = vmatprep.subr.mxu0 0.0
    %742 = vmatpush1.xpose.msra.mxu0 0.0
    %743 = vmatprep.subr.mxu0 0.0
    %744 = vmatpush1.xpose.msra.mxu0 0.0
    %745 = vmatprep.subr.mxu0 0.0
    %746 = vmatpush1.xpose.msra.mxu0 0.0
    %747 = vmatprep.subr.mxu0 0.0
    %748 = vmatpush1.xpose.msra.mxu0 0.0
    %749 = vmatprep.subr.mxu0 0.0
    %750 = vmatpush1.xpose.msra.mxu0 0.0
    %751 = vmatprep.subr.mxu0 0.0
    %752 = vmatpush1.xpose.msra.mxu0 0.0
    %753 = vmatprep.subr.mxu0 0.0
    %754 = vmatpush1.xpose.msra.mxu0 0.0
    %755 = vmatprep.subr.mxu0 0.0
    %756 = vmatpush1.xpose.msra.mxu0 0.0
    %757 = vmatprep.subr.mxu0 0.0
    %758 = vmatpush1.xpose.msra.mxu0 0.0
    %759 = vmatprep.subr.mxu0 0.0
    %760 = vmatpush1.xpose.msra.mxu0 0.0
    %761 = vmatprep.subr.mxu0 0.0
    %762 = vmatpush1.xpose.msra.mxu0 0.0
    %763 = vmatprep.mubr.f32.mxu0 0.0
    %764 = vmatmul.mubr.f32.gmra.mrb[0].mxu0 %v329
    %v765 = vpop.f32.mrb[0].mxu0
    %v766 = vadd.f32 0.0, %v765
    %v767 = vpop.f32.mrb[0].mxu0
    %768 = vdwg.mxu0
    %v770 = vsel %vm327, %v316, 0
    %772 = vmatprep.subr.mxu0 0.0
    %773 = vmatpush1.xpose.msra.mxu0 %v770
    %774 = vmatprep.subr.mxu0 0.0
    %775 = vmatpush1.xpose.msra.mxu0 0.0
    %776 = vmatprep.subr.mxu0 0.0
    %777 = vmatpush1.xpose.msra.mxu0 0.0
    %778 = vmatprep.subr.mxu0 0.0
    %779 = vmatpush1.xpose.msra.mxu0 0.0
    %780 = vmatprep.subr.mxu0 0.0
    %781 = vmatpush1.xpose.msra.mxu0 0.0
    %782 = vmatprep.subr.mxu0 0.0
    %783 = vmatpush1.xpose.msra.mxu0 0.0
    %784 = vmatprep.subr.mxu0 0.0
    %785 = vmatpush1.xpose.msra.mxu0 0.0
    %786 = vmatprep.subr.mxu0 0.0
    %787 = vmatpush1.xpose.msra.mxu0 0.0
    %788 = vmatprep.subr.mxu0 0.0
    %789 = vmatpush1.xpose.msra.mxu0 0.0
    %790 = vmatprep.subr.mxu0 0.0
    %791 = vmatpush1.xpose.msra.mxu0 0.0
    %792 = vmatprep.subr.mxu0 0.0
    %793 = vmatpush1.xpose.msra.mxu0 0.0
    %794 = vmatprep.subr.mxu0 0.0
    %795 = vmatpush1.xpose.msra.mxu0 0.0
    %796 = vmatprep.subr.mxu0 0.0
    %797 = vmatpush1.xpose.msra.mxu0 0.0
    %798 = vmatprep.subr.mxu0 0.0
    %799 = vmatpush1.xpose.msra.mxu0 0.0
    %800 = vmatprep.subr.mxu0 0.0
    %801 = vmatpush1.xpose.msra.mxu0 0.0
    %802 = vmatprep.subr.mxu0 0.0
    %803 = vmatpush1.xpose.msra.mxu0 0.0
    %804 = vmatprep.subr.mxu0 0.0
    %805 = vmatpush1.xpose.msra.mxu0 0.0
    %806 = vmatprep.subr.mxu0 0.0
    %807 = vmatpush1.xpose.msra.mxu0 0.0
    %808 = vmatprep.subr.mxu0 0.0
    %809 = vmatpush1.xpose.msra.mxu0 0.0
    %810 = vmatprep.subr.mxu0 0.0
    %811 = vmatpush1.xpose.msra.mxu0 0.0
    %812 = vmatprep.subr.mxu0 0.0
    %813 = vmatpush1.xpose.msra.mxu0 0.0
    %814 = vmatprep.subr.mxu0 0.0
    %815 = vmatpush1.xpose.msra.mxu0 0.0
    %816 = vmatprep.subr.mxu0 0.0
    %817 = vmatpush1.xpose.msra.mxu0 0.0
    %818 = vmatprep.subr.mxu0 0.0
    %819 = vmatpush1.xpose.msra.mxu0 0.0
    %820 = vmatprep.subr.mxu0 0.0
    %821 = vmatpush1.xpose.msra.mxu0 0.0
    %822 = vmatprep.subr.mxu0 0.0
    %823 = vmatpush1.xpose.msra.mxu0 0.0
    %824 = vmatprep.subr.mxu0 0.0
    %825 = vmatpush1.xpose.msra.mxu0 0.0
    %826 = vmatprep.subr.mxu0 0.0
    %827 = vmatpush1.xpose.msra.mxu0 0.0
    %828 = vmatprep.subr.mxu0 0.0
    %829 = vmatpush1.xpose.msra.mxu0 0.0
    %830 = vmatprep.subr.mxu0 0.0
    %831 = vmatpush1.xpose.msra.mxu0 0.0
    %832 = vmatprep.subr.mxu0 0.0
    %833 = vmatpush1.xpose.msra.mxu0 0.0
    %834 = vmatprep.subr.mxu0 0.0
    %835 = vmatpush1.xpose.msra.mxu0 0.0
    %836 = vmatprep.mubr.f32.mxu0 0.0
    %837 = vmatmul.mubr.f32.gmra.mrb[0].mxu0 %v329
    %v838 = vpop.f32.mrb[0].mxu0
    %v839 = vadd.f32 0.0, %v838
    %v840 = vpop.f32.mrb[0].mxu0
    %841 = vdwg.mxu0
    %v843 = vsel %vm327, %v317, 0
    %845 = vmatprep.subr.mxu0 0.0
    %846 = vmatpush1.xpose.msra.mxu0 %v843
    %847 = vmatprep.subr.mxu0 0.0
    %848 = vmatpush1.xpose.msra.mxu0 0.0
    %849 = vmatprep.subr.mxu0 0.0
    %850 = vmatpush1.xpose.msra.mxu0 0.0
    %851 = vmatprep.subr.mxu0 0.0
    %852 = vmatpush1.xpose.msra.mxu0 0.0
    %853 = vmatprep.subr.mxu0 0.0
    %854 = vmatpush1.xpose.msra.mxu0 0.0
    %855 = vmatprep.subr.mxu0 0.0
    %856 = vmatpush1.xpose.msra.mxu0 0.0
    %857 = vmatprep.subr.mxu0 0.0
    %858 = vmatpush1.xpose.msra.mxu0 0.0
    %859 = vmatprep.subr.mxu0 0.0
    %860 = vmatpush1.xpose.msra.mxu0 0.0
    %861 = vmatprep.subr.mxu0 0.0
    %862 = vmatpush1.xpose.msra.mxu0 0.0
    %863 = vmatprep.subr.mxu0 0.0
    %864 = vmatpush1.xpose.msra.mxu0 0.0
    %865 = vmatprep.subr.mxu0 0.0
    %866 = vmatpush1.xpose.msra.mxu0 0.0
    %867 = vmatprep.subr.mxu0 0.0
    %868 = vmatpush1.xpose.msra.mxu0 0.0
    %869 = vmatprep.subr.mxu0 0.0
    %870 = vmatpush1.xpose.msra.mxu0 0.0
    %871 = vmatprep.subr.mxu0 0.0
    %872 = vmatpush1.xpose.msra.mxu0 0.0
    %873 = vmatprep.subr.mxu0 0.0
    %874 = vmatpush1.xpose.msra.mxu0 0.0
    %875 = vmatprep.subr.mxu0 0.0
    %876 = vmatpush1.xpose.msra.mxu0 0.0
    %877 = vmatprep.subr.mxu0 0.0
    %878 = vmatpush1.xpose.msra.mxu0 0.0
    %879 = vmatprep.subr.mxu0 0.0
    %880 = vmatpush1.xpose.msra.mxu0 0.0
    %881 = vmatprep.subr.mxu0 0.0
    %882 = vmatpush1.xpose.msra.mxu0 0.0
    %883 = vmatprep.subr.mxu0 0.0
    %884 = vmatpush1.xpose.msra.mxu0 0.0
    %885 = vmatprep.subr.mxu0 0.0
    %886 = vmatpush1.xpose.msra.mxu0 0.0
    %887 = vmatprep.subr.mxu0 0.0
    %888 = vmatpush1.xpose.msra.mxu0 0.0
    %889 = vmatprep.subr.mxu0 0.0
    %890 = vmatpush1.xpose.msra.mxu0 0.0
    %891 = vmatprep.subr.mxu0 0.0
    %892 = vmatpush1.xpose.msra.mxu0 0.0
    %893 = vmatprep.subr.mxu0 0.0
    %894 = vmatpush1.xpose.msra.mxu0 0.0
    %895 = vmatprep.subr.mxu0 0.0
    %896 = vmatpush1.xpose.msra.mxu0 0.0
    %897 = vmatprep.subr.mxu0 0.0
    %898 = vmatpush1.xpose.msra.mxu0 0.0
    %899 = vmatprep.subr.mxu0 0.0
    %900 = vmatpush1.xpose.msra.mxu0 0.0
    %901 = vmatprep.subr.mxu0 0.0
    %902 = vmatpush1.xpose.msra.mxu0 0.0
    %903 = vmatprep.subr.mxu0 0.0
    %904 = vmatpush1.xpose.msra.mxu0 0.0
    %905 = vmatprep.subr.mxu0 0.0
    %906 = vmatpush1.xpose.msra.mxu0 0.0
    %907 = vmatprep.subr.mxu0 0.0
    %908 = vmatpush1.xpose.msra.mxu0 0.0
    %909 = vmatprep.mubr.f32.mxu0 0.0
    %910 = vmatmul.mubr.f32.gmra.mrb[0].mxu0 %v329
    %v911 = vpop.f32.mrb[0].mxu0
    %v912 = vadd.f32 0.0, %v911
    %v913 = vpop.f32.mrb[0].mxu0
    %914 = vdwg.mxu0
    %v916 = vsel %vm327, %v318, 0
    %918 = vmatprep.subr.mxu0 0.0
    %919 = vmatpush1.xpose.msra.mxu0 %v916
    %920 = vmatprep.subr.mxu0 0.0
    %921 = vmatpush1.xpose.msra.mxu0 0.0
    %922 = vmatprep.subr.mxu0 0.0
    %923 = vmatpush1.xpose.msra.mxu0 0.0
    %924 = vmatprep.subr.mxu0 0.0
    %925 = vmatpush1.xpose.msra.mxu0 0.0
    %926 = vmatprep.subr.mxu0 0.0
    %927 = vmatpush1.xpose.msra.mxu0 0.0
    %928 = vmatprep.subr.mxu0 0.0
    %929 = vmatpush1.xpose.msra.mxu0 0.0
    %930 = vmatprep.subr.mxu0 0.0
    %931 = vmatpush1.xpose.msra.mxu0 0.0
    %932 = vmatprep.subr.mxu0 0.0
    %933 = vmatpush1.xpose.msra.mxu0 0.0
    %934 = vmatprep.subr.mxu0 0.0
    %935 = vmatpush1.xpose.msra.mxu0 0.0
    %936 = vmatprep.subr.mxu0 0.0
    %937 = vmatpush1.xpose.msra.mxu0 0.0
    %938 = vmatprep.subr.mxu0 0.0
    %939 = vmatpush1.xpose.msra.mxu0 0.0
    %940 = vmatprep.subr.mxu0 0.0
    %941 = vmatpush1.xpose.msra.mxu0 0.0
    %942 = vmatprep.subr.mxu0 0.0
    %943 = vmatpush1.xpose.msra.mxu0 0.0
    %944 = vmatprep.subr.mxu0 0.0
    %945 = vmatpush1.xpose.msra.mxu0 0.0
    %946 = vmatprep.subr.mxu0 0.0
    %947 = vmatpush1.xpose.msra.mxu0 0.0
    %948 = vmatprep.subr.mxu0 0.0
    %949 = vmatpush1.xpose.msra.mxu0 0.0
    %950 = vmatprep.subr.mxu0 0.0
    %951 = vmatpush1.xpose.msra.mxu0 0.0
    %952 = vmatprep.subr.mxu0 0.0
    %953 = vmatpush1.xpose.msra.mxu0 0.0
    %954 = vmatprep.subr.mxu0 0.0
    %955 = vmatpush1.xpose.msra.mxu0 0.0
    %956 = vmatprep.subr.mxu0 0.0
    %957 = vmatpush1.xpose.msra.mxu0 0.0
    %958 = vmatprep.subr.mxu0 0.0
    %959 = vmatpush1.xpose.msra.mxu0 0.0
    %960 = vmatprep.subr.mxu0 0.0
    %961 = vmatpush1.xpose.msra.mxu0 0.0
    %962 = vmatprep.subr.mxu0 0.0
    %963 = vmatpush1.xpose.msra.mxu0 0.0
    %964 = vmatprep.subr.mxu0 0.0
    %965 = vmatpush1.xpose.msra.mxu0 0.0
    %966 = vmatprep.subr.mxu0 0.0
    %967 = vmatpush1.xpose.msra.mxu0 0.0
    %968 = vmatprep.subr.mxu0 0.0
    %969 = vmatpush1.xpose.msra.mxu0 0.0
    %970 = vmatprep.subr.mxu0 0.0
    %971 = vmatpush1.xpose.msra.mxu0 0.0
    %972 = vmatprep.subr.mxu0 0.0
    %973 = vmatpush1.xpose.msra.mxu0 0.0
    %974 = vmatprep.subr.mxu0 0.0
    %975 = vmatpush1.xpose.msra.mxu0 0.0
    %976 = vmatprep.subr.mxu0 0.0
    %977 = vmatpush1.xpose.msra.mxu0 0.0
    %978 = vmatprep.subr.mxu0 0.0
    %979 = vmatpush1.xpose.msra.mxu0 0.0
    %980 = vmatprep.subr.mxu0 0.0
    %981 = vmatpush1.xpose.msra.mxu0 0.0
    %982 = vmatprep.mubr.f32.mxu0 0.0
    %983 = vmatmul.mubr.f32.gmra.mrb[0].mxu0 %v329
    %v984 = vpop.f32.mrb[0].mxu0
    %v985 = vadd.f32 0.0, %v984
    %v986 = vpop.f32.mrb[0].mxu0
    %987 = vdwg.mxu0
    %v989 = vsel %vm327, %v319, 0
    %991 = vmatprep.subr.mxu0 0.0
    %992 = vmatpush1.xpose.msra.mxu0 %v989
    %993 = vmatprep.subr.mxu0 0.0
    %994 = vmatpush1.xpose.msra.mxu0 0.0
    %995 = vmatprep.subr.mxu0 0.0
    %996 = vmatpush1.xpose.msra.mxu0 0.0
    %997 = vmatprep.subr.mxu0 0.0
    %998 = vmatpush1.xpose.msra.mxu0 0.0
    %999 = vmatprep.subr.mxu0 0.0
    %1000 = vmatpush1.xpose.msra.mxu0 0.0
    %1001 = vmatprep.subr.mxu0 0.0
    %1002 = vmatpush1.xpose.msra.mxu0 0.0
    %1003 = vmatprep.subr.mxu0 0.0
    %1004 = vmatpush1.xpose.msra.mxu0 0.0
    %1005 = vmatprep.subr.mxu0 0.0
    %1006 = vmatpush1.xpose.msra.mxu0 0.0
    %1007 = vmatprep.subr.mxu0 0.0
    %1008 = vmatpush1.xpose.msra.mxu0 0.0
    %1009 = vmatprep.subr.mxu0 0.0
    %1010 = vmatpush1.xpose.msra.mxu0 0.0
    %1011 = vmatprep.subr.mxu0 0.0
    %1012 = vmatpush1.xpose.msra.mxu0 0.0
    %1013 = vmatprep.subr.mxu0 0.0
    %1014 = vmatpush1.xpose.msra.mxu0 0.0
    %1015 = vmatprep.subr.mxu0 0.0
    %1016 = vmatpush1.xpose.msra.mxu0 0.0
    %1017 = vmatprep.subr.mxu0 0.0
    %1018 = vmatpush1.xpose.msra.mxu0 0.0
    %1019 = vmatprep.subr.mxu0 0.0
    %1020 = vmatpush1.xpose.msra.mxu0 0.0
    %1021 = vmatprep.subr.mxu0 0.0
    %1022 = vmatpush1.xpose.msra.mxu0 0.0
    %1023 = vmatprep.subr.mxu0 0.0
    %1024 = vmatpush1.xpose.msra.mxu0 0.0
    %1025 = vmatprep.subr.mxu0 0.0
    %1026 = vmatpush1.xpose.msra.mxu0 0.0
    %1027 = vmatprep.subr.mxu0 0.0
    %1028 = vmatpush1.xpose.msra.mxu0 0.0
    %1029 = vmatprep.subr.mxu0 0.0
    %1030 = vmatpush1.xpose.msra.mxu0 0.0
    %1031 = vmatprep.subr.mxu0 0.0
    %1032 = vmatpush1.xpose.msra.mxu0 0.0
    %1033 = vmatprep.subr.mxu0 0.0
    %1034 = vmatpush1.xpose.msra.mxu0 0.0
    %1035 = vmatprep.subr.mxu0 0.0
    %1036 = vmatpush1.xpose.msra.mxu0 0.0
    %1037 = vmatprep.subr.mxu0 0.0
    %1038 = vmatpush1.xpose.msra.mxu0 0.0
    %1039 = vmatprep.subr.mxu0 0.0
    %1040 = vmatpush1.xpose.msra.mxu0 0.0
    %1041 = vmatprep.subr.mxu0 0.0
    %1042 = vmatpush1.xpose.msra.mxu0 0.0
    %1043 = vmatprep.subr.mxu0 0.0
    %1044 = vmatpush1.xpose.msra.mxu0 0.0
    %1045 = vmatprep.subr.mxu0 0.0
    %1046 = vmatpush1.xpose.msra.mxu0 0.0
    %1047 = vmatprep.subr.mxu0 0.0
    %1048 = vmatpush1.xpose.msra.mxu0 0.0
    %1049 = vmatprep.subr.mxu0 0.0
    %1050 = vmatpush1.xpose.msra.mxu0 0.0
    %1051 = vmatprep.subr.mxu0 0.0
    %1052 = vmatpush1.xpose.msra.mxu0 0.0
    %1053 = vmatprep.subr.mxu0 0.0
    %1054 = vmatpush1.xpose.msra.mxu0 0.0
    %1055 = vmatprep.mubr.f32.mxu0 0.0
    %1056 = vmatmul.mubr.f32.gmra.mrb[0].mxu0 %v329
    %v1057 = vpop.f32.mrb[0].mxu0
    %v1058 = vadd.f32 0.0, %v1057
    %v1059 = vpop.f32.mrb[0].mxu0
    %1060 = vdwg.mxu0
    %v1062 = vsel %vm327, %v320, 0
    %1064 = vmatprep.subr.mxu0 0.0
    %1065 = vmatpush1.xpose.msra.mxu0 %v1062
    %1066 = vmatprep.subr.mxu0 0.0
    %1067 = vmatpush1.xpose.msra.mxu0 0.0
    %1068 = vmatprep.subr.mxu0 0.0
    %1069 = vmatpush1.xpose.msra.mxu0 0.0
    %1070 = vmatprep.subr.mxu0 0.0
    %1071 = vmatpush1.xpose.msra.mxu0 0.0
    %1072 = vmatprep.subr.mxu0 0.0
    %1073 = vmatpush1.xpose.msra.mxu0 0.0
    %1074 = vmatprep.subr.mxu0 0.0
    %1075 = vmatpush1.xpose.msra.mxu0 0.0
    %1076 = vmatprep.subr.mxu0 0.0
    %1077 = vmatpush1.xpose.msra.mxu0 0.0
    %1078 = vmatprep.subr.mxu0 0.0
    %1079 = vmatpush1.xpose.msra.mxu0 0.0
    %1080 = vmatprep.subr.mxu0 0.0
    %1081 = vmatpush1.xpose.msra.mxu0 0.0
    %1082 = vmatprep.subr.mxu0 0.0
    %1083 = vmatpush1.xpose.msra.mxu0 0.0
    %1084 = vmatprep.subr.mxu0 0.0
    %1085 = vmatpush1.xpose.msra.mxu0 0.0
    %1086 = vmatprep.subr.mxu0 0.0
    %1087 = vmatpush1.xpose.msra.mxu0 0.0
    %1088 = vmatprep.subr.mxu0 0.0
    %1089 = vmatpush1.xpose.msra.mxu0 0.0
    %1090 = vmatprep.subr.mxu0 0.0
    %1091 = vmatpush1.xpose.msra.mxu0 0.0
    %1092 = vmatprep.subr.mxu0 0.0
    %1093 = vmatpush1.xpose.msra.mxu0 0.0
    %1094 = vmatprep.subr.mxu0 0.0
    %1095 = vmatpush1.xpose.msra.mxu0 0.0
    %1096 = vmatprep.subr.mxu0 0.0
    %1097 = vmatpush1.xpose.msra.mxu0 0.0
    %1098 = vmatprep.subr.mxu0 0.0
    %1099 = vmatpush1.xpose.msra.mxu0 0.0
    %1100 = vmatprep.subr.mxu0 0.0
    %1101 = vmatpush1.xpose.msra.mxu0 0.0
    %1102 = vmatprep.subr.mxu0 0.0
    %1103 = vmatpush1.xpose.msra.mxu0 0.0
    %1104 = vmatprep.subr.mxu0 0.0
    %1105 = vmatpush1.xpose.msra.mxu0 0.0
    %1106 = vmatprep.subr.mxu0 0.0
    %1107 = vmatpush1.xpose.msra.mxu0 0.0
    %1108 = vmatprep.subr.mxu0 0.0
    %1109 = vmatpush1.xpose.msra.mxu0 0.0
    %1110 = vmatprep.subr.mxu0 0.0
    %1111 = vmatpush1.xpose.msra.mxu0 0.0
    %1112 = vmatprep.subr.mxu0 0.0
    %1113 = vmatpush1.xpose.msra.mxu0 0.0
    %1114 = vmatprep.subr.mxu0 0.0
    %1115 = vmatpush1.xpose.msra.mxu0 0.0
    %1116 = vmatprep.subr.mxu0 0.0
    %1117 = vmatpush1.xpose.msra.mxu0 0.0
    %1118 = vmatprep.subr.mxu0 0.0
    %1119 = vmatpush1.xpose.msra.mxu0 0.0
    %1120 = vmatprep.subr.mxu0 0.0
    %1121 = vmatpush1.xpose.msra.mxu0 0.0
    %1122 = vmatprep.subr.mxu0 0.0
    %1123 = vmatpush1.xpose.msra.mxu0 0.0
    %1124 = vmatprep.subr.mxu0 0.0
    %1125 = vmatpush1.xpose.msra.mxu0 0.0
    %1126 = vmatprep.subr.mxu0 0.0
    %1127 = vmatpush1.xpose.msra.mxu0 0.0
    %1128 = vmatprep.mubr.f32.mxu0 0.0
    %1129 = vmatmul.mubr.f32.gmra.mrb[0].mxu0 %v329
    %v1130 = vpop.f32.mrb[0].mxu0
    %v1131 = vadd.f32 0.0, %v1130
    %v1132 = vpop.f32.mrb[0].mxu0
    %1133 = vdwg.mxu0
    %v1135 = vsel %vm327, %v321, 0
    %1137 = vmatprep.subr.mxu0 0.0
    %1138 = vmatpush1.xpose.msra.mxu0 %v1135
    %1139 = vmatprep.subr.mxu0 0.0
    %1140 = vmatpush1.xpose.msra.mxu0 0.0
    %1141 = vmatprep.subr.mxu0 0.0
    %1142 = vmatpush1.xpose.msra.mxu0 0.0
    %1143 = vmatprep.subr.mxu0 0.0
    %1144 = vmatpush1.xpose.msra.mxu0 0.0
    %1145 = vmatprep.subr.mxu0 0.0
    %1146 = vmatpush1.xpose.msra.mxu0 0.0
    %1147 = vmatprep.subr.mxu0 0.0
    %1148 = vmatpush1.xpose.msra.mxu0 0.0
    %1149 = vmatprep.subr.mxu0 0.0
    %1150 = vmatpush1.xpose.msra.mxu0 0.0
    %1151 = vmatprep.subr.mxu0 0.0
    %1152 = vmatpush1.xpose.msra.mxu0 0.0
    %1153 = vmatprep.subr.mxu0 0.0
    %1154 = vmatpush1.xpose.msra.mxu0 0.0
    %1155 = vmatprep.subr.mxu0 0.0
    %1156 = vmatpush1.xpose.msra.mxu0 0.0
    %1157 = vmatprep.subr.mxu0 0.0
    %1158 = vmatpush1.xpose.msra.mxu0 0.0
    %1159 = vmatprep.subr.mxu0 0.0
    %1160 = vmatpush1.xpose.msra.mxu0 0.0
    %1161 = vmatprep.subr.mxu0 0.0
    %1162 = vmatpush1.xpose.msra.mxu0 0.0
    %1163 = vmatprep.subr.mxu0 0.0
    %1164 = vmatpush1.xpose.msra.mxu0 0.0
    %1165 = vmatprep.subr.mxu0 0.0
    %1166 = vmatpush1.xpose.msra.mxu0 0.0
    %1167 = vmatprep.subr.mxu0 0.0
    %1168 = vmatpush1.xpose.msra.mxu0 0.0
    %1169 = vmatprep.subr.mxu0 0.0
    %1170 = vmatpush1.xpose.msra.mxu0 0.0
    %1171 = vmatprep.subr.mxu0 0.0
    %1172 = vmatpush1.xpose.msra.mxu0 0.0
    %1173 = vmatprep.subr.mxu0 0.0
    %1174 = vmatpush1.xpose.msra.mxu0 0.0
    %1175 = vmatprep.subr.mxu0 0.0
    %1176 = vmatpush1.xpose.msra.mxu0 0.0
    %1177 = vmatprep.subr.mxu0 0.0
    %1178 = vmatpush1.xpose.msra.mxu0 0.0
    %1179 = vmatprep.subr.mxu0 0.0
    %1180 = vmatpush1.xpose.msra.mxu0 0.0
    %1181 = vmatprep.subr.mxu0 0.0
    %1182 = vmatpush1.xpose.msra.mxu0 0.0
    %1183 = vmatprep.subr.mxu0 0.0
    %1184 = vmatpush1.xpose.msra.mxu0 0.0
    %1185 = vmatprep.subr.mxu0 0.0
    %1186 = vmatpush1.xpose.msra.mxu0 0.0
    %1187 = vmatprep.subr.mxu0 0.0
    %1188 = vmatpush1.xpose.msra.mxu0 0.0
    %1189 = vmatprep.subr.mxu0 0.0
    %1190 = vmatpush1.xpose.msra.mxu0 0.0
    %1191 = vmatprep.subr.mxu0 0.0
    %1192 = vmatpush1.xpose.msra.mxu0 0.0
    %1193 = vmatprep.subr.mxu0 0.0
    %1194 = vmatpush1.xpose.msra.mxu0 0.0
    %1195 = vmatprep.subr.mxu0 0.0
    %1196 = vmatpush1.xpose.msra.mxu0 0.0
    %1197 = vmatprep.subr.mxu0 0.0
    %1198 = vmatpush1.xpose.msra.mxu0 0.0
    %1199 = vmatprep.subr.mxu0 0.0
    %1200 = vmatpush1.xpose.msra.mxu0 0.0
    %1201 = vmatprep.mubr.f32.mxu0 0.0
    %1202 = vmatmul.mubr.f32.gmra.mrb[0].mxu0 %v329
    %v1203 = vpop.f32.mrb[0].mxu0
    %v1204 = vadd.f32 0.0, %v1203
    %v1205 = vpop.f32.mrb[0].mxu0
    %1206 = vdwg.mxu0
    %v1208 = vsel %vm327, %v322, 0
    %1210 = vmatprep.subr.mxu0 0.0
    %1211 = vmatpush1.xpose.msra.mxu0 %v1208
    %1212 = vmatprep.subr.mxu0 0.0
    %1213 = vmatpush1.xpose.msra.mxu0 0.0
    %1214 = vmatprep.subr.mxu0 0.0
    %1215 = vmatpush1.xpose.msra.mxu0 0.0
    %1216 = vmatprep.subr.mxu0 0.0
    %1217 = vmatpush1.xpose.msra.mxu0 0.0
    %1218 = vmatprep.subr.mxu0 0.0
    %1219 = vmatpush1.xpose.msra.mxu0 0.0
    %1220 = vmatprep.subr.mxu0 0.0
    %1221 = vmatpush1.xpose.msra.mxu0 0.0
    %1222 = vmatprep.subr.mxu0 0.0
    %1223 = vmatpush1.xpose.msra.mxu0 0.0
    %1224 = vmatprep.subr.mxu0 0.0
    %1225 = vmatpush1.xpose.msra.mxu0 0.0
    %1226 = vmatprep.subr.mxu0 0.0
    %1227 = vmatpush1.xpose.msra.mxu0 0.0
    %1228 = vmatprep.subr.mxu0 0.0
    %1229 = vmatpush1.xpose.msra.mxu0 0.0
    %1230 = vmatprep.subr.mxu0 0.0
    %1231 = vmatpush1.xpose.msra.mxu0 0.0
    %1232 = vmatprep.subr.mxu0 0.0
    %1233 = vmatpush1.xpose.msra.mxu0 0.0
    %1234 = vmatprep.subr.mxu0 0.0
    %1235 = vmatpush1.xpose.msra.mxu0 0.0
    %1236 = vmatprep.subr.mxu0 0.0
    %1237 = vmatpush1.xpose.msra.mxu0 0.0
    %1238 = vmatprep.subr.mxu0 0.0
    %1239 = vmatpush1.xpose.msra.mxu0 0.0
    %1240 = vmatprep.subr.mxu0 0.0
    %1241 = vmatpush1.xpose.msra.mxu0 0.0
    %1242 = vmatprep.subr.mxu0 0.0
    %1243 = vmatpush1.xpose.msra.mxu0 0.0
    %1244 = vmatprep.subr.mxu0 0.0
    %1245 = vmatpush1.xpose.msra.mxu0 0.0
    %1246 = vmatprep.subr.mxu0 0.0
    %1247 = vmatpush1.xpose.msra.mxu0 0.0
    %1248 = vmatprep.subr.mxu0 0.0
    %1249 = vmatpush1.xpose.msra.mxu0 0.0
    %1250 = vmatprep.subr.mxu0 0.0
    %1251 = vmatpush1.xpose.msra.mxu0 0.0
    %1252 = vmatprep.subr.mxu0 0.0
    %1253 = vmatpush1.xpose.msra.mxu0 0.0
    %1254 = vmatprep.subr.mxu0 0.0
    %1255 = vmatpush1.xpose.msra.mxu0 0.0
    %1256 = vmatprep.subr.mxu0 0.0
    %1257 = vmatpush1.xpose.msra.mxu0 0.0
    %1258 = vmatprep.subr.mxu0 0.0
    %1259 = vmatpush1.xpose.msra.mxu0 0.0
    %1260 = vmatprep.subr.mxu0 0.0
    %1261 = vmatpush1.xpose.msra.mxu0 0.0
    %1262 = vmatprep.subr.mxu0 0.0
    %1263 = vmatpush1.xpose.msra.mxu0 0.0
    %1264 = vmatprep.subr.mxu0 0.0
    %1265 = vmatpush1.xpose.msra.mxu0 0.0
    %1266 = vmatprep.subr.mxu0 0.0
    %1267 = vmatpush1.xpose.msra.mxu0 0.0
    %1268 = vmatprep.subr.mxu0 0.0
    %1269 = vmatpush1.xpose.msra.mxu0 0.0
    %1270 = vmatprep.subr.mxu0 0.0
    %1271 = vmatpush1.xpose.msra.mxu0 0.0
    %1272 = vmatprep.subr.mxu0 0.0
    %1273 = vmatpush1.xpose.msra.mxu0 0.0
    %1274 = vmatprep.mubr.f32.mxu0 0.0
    %1275 = vmatmul.mubr.f32.gmra.mrb[0].mxu0 %v329
    %v1276 = vpop.f32.mrb[0].mxu0
    %v1277 = vadd.f32 0.0, %v1276
    %v1278 = vpop.f32.mrb[0].mxu0
    %1279 = vdwg.mxu0
    %v1281 = vsel %vm327, %v323, 0
    %1283 = vmatprep.subr.mxu0 0.0
    %1284 = vmatpush1.xpose.msra.mxu0 %v1281
    %1285 = vmatprep.subr.mxu0 0.0
    %1286 = vmatpush1.xpose.msra.mxu0 0.0
    %1287 = vmatprep.subr.mxu0 0.0
    %1288 = vmatpush1.xpose.msra.mxu0 0.0
    %1289 = vmatprep.subr.mxu0 0.0
    %1290 = vmatpush1.xpose.msra.mxu0 0.0
    %1291 = vmatprep.subr.mxu0 0.0
    %1292 = vmatpush1.xpose.msra.mxu0 0.0
    %1293 = vmatprep.subr.mxu0 0.0
    %1294 = vmatpush1.xpose.msra.mxu0 0.0
    %1295 = vmatprep.subr.mxu0 0.0
    %1296 = vmatpush1.xpose.msra.mxu0 0.0
    %1297 = vmatprep.subr.mxu0 0.0
    %1298 = vmatpush1.xpose.msra.mxu0 0.0
    %1299 = vmatprep.subr.mxu0 0.0
    %1300 = vmatpush1.xpose.msra.mxu0 0.0
    %1301 = vmatprep.subr.mxu0 0.0
    %1302 = vmatpush1.xpose.msra.mxu0 0.0
    %1303 = vmatprep.subr.mxu0 0.0
    %1304 = vmatpush1.xpose.msra.mxu0 0.0
    %1305 = vmatprep.subr.mxu0 0.0
    %1306 = vmatpush1.xpose.msra.mxu0 0.0
    %1307 = vmatprep.subr.mxu0 0.0
    %1308 = vmatpush1.xpose.msra.mxu0 0.0
    %1309 = vmatprep.subr.mxu0 0.0
    %1310 = vmatpush1.xpose.msra.mxu0 0.0
    %1311 = vmatprep.subr.mxu0 0.0
    %1312 = vmatpush1.xpose.msra.mxu0 0.0
    %1313 = vmatprep.subr.mxu0 0.0
    %1314 = vmatpush1.xpose.msra.mxu0 0.0
    %1315 = vmatprep.subr.mxu0 0.0
    %1316 = vmatpush1.xpose.msra.mxu0 0.0
    %1317 = vmatprep.subr.mxu0 0.0
    %1318 = vmatpush1.xpose.msra.mxu0 0.0
    %1319 = vmatprep.subr.mxu0 0.0
    %1320 = vmatpush1.xpose.msra.mxu0 0.0
    %1321 = vmatprep.subr.mxu0 0.0
    %1322 = vmatpush1.xpose.msra.mxu0 0.0
    %1323 = vmatprep.subr.mxu0 0.0
    %1324 = vmatpush1.xpose.msra.mxu0 0.0
    %1325 = vmatprep.subr.mxu0 0.0
    %1326 = vmatpush1.xpose.msra.mxu0 0.0
    %1327 = vmatprep.subr.mxu0 0.0
    %1328 = vmatpush1.xpose.msra.mxu0 0.0
    %1329 = vmatprep.subr.mxu0 0.0
    %1330 = vmatpush1.xpose.msra.mxu0 0.0
    %1331 = vmatprep.subr.mxu0 0.0
    %1332 = vmatpush1.xpose.msra.mxu0 0.0
    %1333 = vmatprep.subr.mxu0 0.0
    %1334 = vmatpush1.xpose.msra.mxu0 0.0
    %1335 = vmatprep.subr.mxu0 0.0
    %1336 = vmatpush1.xpose.msra.mxu0 0.0
    %1337 = vmatprep.subr.mxu0 0.0
    %1338 = vmatpush1.xpose.msra.mxu0 0.0
    %1339 = vmatprep.subr.mxu0 0.0
    %1340 = vmatpush1.xpose.msra.mxu0 0.0
    %1341 = vmatprep.subr.mxu0 0.0
    %1342 = vmatpush1.xpose.msra.mxu0 0.0
    %1343 = vmatprep.subr.mxu0 0.0
    %1344 = vmatpush1.xpose.msra.mxu0 0.0
    %1345 = vmatprep.subr.mxu0 0.0
    %1346 = vmatpush1.xpose.msra.mxu0 0.0
    %1347 = vmatprep.mubr.f32.mxu0 0.0
    %1348 = vmatmul.mubr.f32.gmra.mrb[0].mxu0 %v329
    %v1349 = vpop.f32.mrb[0].mxu0
    %v1350 = vadd.f32 0.0, %v1349
    %v1351 = vpop.f32.mrb[0].mxu0
    %1352 = vdwg.mxu0
    %v1354 = vsel %vm327, %v324, 0
    %1356 = vmatprep.subr.mxu0 0.0
    %1357 = vmatpush1.xpose.msra.mxu0 %v1354
    %1358 = vmatprep.subr.mxu0 0.0
    %1359 = vmatpush1.xpose.msra.mxu0 0.0
    %1360 = vmatprep.subr.mxu0 0.0
    %1361 = vmatpush1.xpose.msra.mxu0 0.0
    %1362 = vmatprep.subr.mxu0 0.0
    %1363 = vmatpush1.xpose.msra.mxu0 0.0
    %1364 = vmatprep.subr.mxu0 0.0
    %1365 = vmatpush1.xpose.msra.mxu0 0.0
    %1366 = vmatprep.subr.mxu0 0.0
    %1367 = vmatpush1.xpose.msra.mxu0 0.0
    %1368 = vmatprep.subr.mxu0 0.0
    %1369 = vmatpush1.xpose.msra.mxu0 0.0
    %1370 = vmatprep.subr.mxu0 0.0
    %1371 = vmatpush1.xpose.msra.mxu0 0.0
    %1372 = vmatprep.subr.mxu0 0.0
    %1373 = vmatpush1.xpose.msra.mxu0 0.0
    %1374 = vmatprep.subr.mxu0 0.0
    %1375 = vmatpush1.xpose.msra.mxu0 0.0
    %1376 = vmatprep.subr.mxu0 0.0
    %1377 = vmatpush1.xpose.msra.mxu0 0.0
    %1378 = vmatprep.subr.mxu0 0.0
    %1379 = vmatpush1.xpose.msra.mxu0 0.0
    %1380 = vmatprep.subr.mxu0 0.0
    %1381 = vmatpush1.xpose.msra.mxu0 0.0
    %1382 = vmatprep.subr.mxu0 0.0
    %1383 = vmatpush1.xpose.msra.mxu0 0.0
    %1384 = vmatprep.subr.mxu0 0.0
    %1385 = vmatpush1.xpose.msra.mxu0 0.0
    %1386 = vmatprep.subr.mxu0 0.0
    %1387 = vmatpush1.xpose.msra.mxu0 0.0
    %1388 = vmatprep.subr.mxu0 0.0
    %1389 = vmatpush1.xpose.msra.mxu0 0.0
    %1390 = vmatprep.subr.mxu0 0.0
    %1391 = vmatpush1.xpose.msra.mxu0 0.0
    %1392 = vmatprep.subr.mxu0 0.0
    %1393 = vmatpush1.xpose.msra.mxu0 0.0
    %1394 = vmatprep.subr.mxu0 0.0
    %1395 = vmatpush1.xpose.msra.mxu0 0.0
    %1396 = vmatprep.subr.mxu0 0.0
    %1397 = vmatpush1.xpose.msra.mxu0 0.0
    %1398 = vmatprep.subr.mxu0 0.0
    %1399 = vmatpush1.xpose.msra.mxu0 0.0
    %1400 = vmatprep.subr.mxu0 0.0
    %1401 = vmatpush1.xpose.msra.mxu0 0.0
    %1402 = vmatprep.subr.mxu0 0.0
    %1403 = vmatpush1.xpose.msra.mxu0 0.0
    %1404 = vmatprep.subr.mxu0 0.0
    %1405 = vmatpush1.xpose.msra.mxu0 0.0
    %1406 = vmatprep.subr.mxu0 0.0
    %1407 = vmatpush1.xpose.msra.mxu0 0.0
    %1408 = vmatprep.subr.mxu0 0.0
    %1409 = vmatpush1.xpose.msra.mxu0 0.0
    %1410 = vmatprep.subr.mxu0 0.0
    %1411 = vmatpush1.xpose.msra.mxu0 0.0
    %1412 = vmatprep.subr.mxu0 0.0
    %1413 = vmatpush1.xpose.msra.mxu0 0.0
    %1414 = vmatprep.subr.mxu0 0.0
    %1415 = vmatpush1.xpose.msra.mxu0 0.0
    %1416 = vmatprep.subr.mxu0 0.0
    %1417 = vmatpush1.xpose.msra.mxu0 0.0
    %1418 = vmatprep.subr.mxu0 0.0
    %1419 = vmatpush1.xpose.msra.mxu0 0.0
    %1420 = vmatprep.mubr.f32.mxu0 0.0
    %1421 = vmatmul.mubr.f32.gmra.mrb[0].mxu0 %v329
    %v1422 = vpop.f32.mrb[0].mxu0
    %v1423 = vadd.f32 0.0, %v1422
    %v1424 = vpop.f32.mrb[0].mxu0
    %1425 = vdwg.mxu0
    %v1427 = vsel %vm327, %v325, 0
    %1429 = vmatprep.subr.mxu0 0.0
    %1430 = vmatpush1.xpose.msra.mxu0 %v1427
    %1431 = vmatprep.subr.mxu0 0.0
    %1432 = vmatpush1.xpose.msra.mxu0 0.0
    %1433 = vmatprep.subr.mxu0 0.0
    %1434 = vmatpush1.xpose.msra.mxu0 0.0
    %1435 = vmatprep.subr.mxu0 0.0
    %1436 = vmatpush1.xpose.msra.mxu0 0.0
    %1437 = vmatprep.subr.mxu0 0.0
    %1438 = vmatpush1.xpose.msra.mxu0 0.0
    %1439 = vmatprep.subr.mxu0 0.0
    %1440 = vmatpush1.xpose.msra.mxu0 0.0
    %1441 = vmatprep.subr.mxu0 0.0
    %1442 = vmatpush1.xpose.msra.mxu0 0.0
    %1443 = vmatprep.subr.mxu0 0.0
    %1444 = vmatpush1.xpose.msra.mxu0 0.0
    %1445 = vmatprep.subr.mxu0 0.0
    %1446 = vmatpush1.xpose.msra.mxu0 0.0
    %1447 = vmatprep.subr.mxu0 0.0
    %1448 = vmatpush1.xpose.msra.mxu0 0.0
    %1449 = vmatprep.subr.mxu0 0.0
    %1450 = vmatpush1.xpose.msra.mxu0 0.0
    %1451 = vmatprep.subr.mxu0 0.0
    %1452 = vmatpush1.xpose.msra.mxu0 0.0
    %1453 = vmatprep.subr.mxu0 0.0
    %1454 = vmatpush1.xpose.msra.mxu0 0.0
    %1455 = vmatprep.subr.mxu0 0.0
    %1456 = vmatpush1.xpose.msra.mxu0 0.0
    %1457 = vmatprep.subr.mxu0 0.0
    %1458 = vmatpush1.xpose.msra.mxu0 0.0
    %1459 = vmatprep.subr.mxu0 0.0
    %1460 = vmatpush1.xpose.msra.mxu0 0.0
    %1461 = vmatprep.subr.mxu0 0.0
    %1462 = vmatpush1.xpose.msra.mxu0 0.0
    %1463 = vmatprep.subr.mxu0 0.0
    %1464 = vmatpush1.xpose.msra.mxu0 0.0
    %1465 = vmatprep.subr.mxu0 0.0
    %1466 = vmatpush1.xpose.msra.mxu0 0.0
    %1467 = vmatprep.subr.mxu0 0.0
    %1468 = vmatpush1.xpose.msra.mxu0 0.0
    %1469 = vmatprep.subr.mxu0 0.0
    %1470 = vmatpush1.xpose.msra.mxu0 0.0
    %1471 = vmatprep.subr.mxu0 0.0
    %1472 = vmatpush1.xpose.msra.mxu0 0.0
    %1473 = vmatprep.subr.mxu0 0.0
    %1474 = vmatpush1.xpose.msra.mxu0 0.0
    %1475 = vmatprep.subr.mxu0 0.0
    %1476 = vmatpush1.xpose.msra.mxu0 0.0
    %1477 = vmatprep.subr.mxu0 0.0
    %1478 = vmatpush1.xpose.msra.mxu0 0.0
    %1479 = vmatprep.subr.mxu0 0.0
    %1480 = vmatpush1.xpose.msra.mxu0 0.0
    %1481 = vmatprep.subr.mxu0 0.0
    %1482 = vmatpush1.xpose.msra.mxu0 0.0
    %1483 = vmatprep.subr.mxu0 0.0
    %1484 = vmatpush1.xpose.msra.mxu0 0.0
    %1485 = vmatprep.subr.mxu0 0.0
    %1486 = vmatpush1.xpose.msra.mxu0 0.0
    %1487 = vmatprep.subr.mxu0 0.0
    %1488 = vmatpush1.xpose.msra.mxu0 0.0
    %1489 = vmatprep.subr.mxu0 0.0
    %1490 = vmatpush1.xpose.msra.mxu0 0.0
    %1491 = vmatprep.subr.mxu0 0.0
    %1492 = vmatpush1.xpose.msra.mxu0 0.0
    %1493 = vmatprep.mubr.f32.mxu0 0.0
    %1494 = vmatmul.mubr.f32.gmra.mrb[0].mxu0 %v329
    %v1495 = vpop.f32.mrb[0].mxu0
    %v1496 = vadd.f32 0.0, %v1495
    %v1497 = vpop.f32.mrb[0].mxu0
    %1498 = vdwg.mxu0
    %v1499 = vld [vmem:[%s4] sm:$0x1]
    %v1500 = vld [vmem:[%s4 + $0x1] sm:$0x1]
    %v1501 = vld [vmem:[%s4 + $0x2] sm:$0x1]
    %v1502 = vld [vmem:[%s4 + $0x3] sm:$0x1]
    %v1503 = vld [vmem:[%s4 + $0x4] sm:$0x1]
    %v1504 = vld [vmem:[%s4 + $0x5] sm:$0x1]
    %v1505 = vld [vmem:[%s4 + $0x6] sm:$0x1]
    %v1506 = vld [vmem:[%s4 + $0x7] sm:$0x1]
    %v1507 = vld [vmem:[%s4 + $0x8] sm:$0x1]
    %v1508 = vld [vmem:[%s4 + $0x9] sm:$0x1]
    %v1509 = vld [vmem:[%s4 + $0xa] sm:$0x1]
    %v1510 = vld [vmem:[%s4 + $0xb] sm:$0x1]
    %v1511 = vld [vmem:[%s4 + $0xc] sm:$0x1]
    %v1512 = vld [vmem:[%s4 + $0xd] sm:$0x1]
    %v1513 = vld [vmem:[%s4 + $0xe] sm:$0x1]
    %v1514 = vld [vmem:[%s4 + $0xf] sm:$0x1]
    %vm1515 = vcmp.eq.s32.totalorder %v1499, 0
    %vm1516 = vcmp.eq.s32.totalorder %v1500, 0
    %vm1517 = vcmp.eq.s32.totalorder %v1501, 0
    %vm1518 = vcmp.eq.s32.totalorder %v1502, 0
    %vm1519 = vcmp.eq.s32.totalorder %v1503, 0
    %vm1520 = vcmp.eq.s32.totalorder %v1504, 0
    %vm1521 = vcmp.eq.s32.totalorder %v1505, 0
    %vm1522 = vcmp.eq.s32.totalorder %v1506, 0
    %vm1523 = vcmp.eq.s32.totalorder %v1507, 0
    %vm1524 = vcmp.eq.s32.totalorder %v1508, 0
    %vm1525 = vcmp.eq.s32.totalorder %v1509, 0
    %vm1526 = vcmp.eq.s32.totalorder %v1510, 0
    %vm1527 = vcmp.eq.s32.totalorder %v1511, 0
    %vm1528 = vcmp.eq.s32.totalorder %v1512, 0
    %vm1529 = vcmp.eq.s32.totalorder %v1513, 0
    %vm1530 = vcmp.eq.s32.totalorder %v1514, 0
    %v1531 = vsel %vm1515, -1e+30, %v401
    %v1532 = vsel %vm1516, -1e+30, %v474
    %v1533 = vsel %vm1517, -1e+30, %v547
    %v1534 = vsel %vm1518, -1e+30, %v620
    %v1535 = vsel %vm1519, -1e+30, %v693
    %v1536 = vsel %vm1520, -1e+30, %v766
    %v1537 = vsel %vm1521, -1e+30, %v839
    %v1538 = vsel %vm1522, -1e+30, %v912
    %v1539 = vsel %vm1523, -1e+30, %v985
    %v1540 = vsel %vm1524, -1e+30, %v1058
    %v1541 = vsel %vm1525, -1e+30, %v1131
    %v1542 = vsel %vm1526, -1e+30, %v1204
    %v1543 = vsel %vm1527, -1e+30, %v1277
    %v1544 = vsel %vm1528, -1e+30, %v1350
    %v1545 = vsel %vm1529, -1e+30, %v1423
    %v1546 = vsel %vm1530, -1e+30, %v1496
    %v1547 = vld [vmem:[#allocation2] sm:$0x1]
    %v1548 = vld [vmem:[#allocation2 + $0x1] sm:$0x1]
    %v1549 = vld [vmem:[#allocation2 + $0x2] sm:$0x1]
    %v1550 = vld [vmem:[#allocation2 + $0x3] sm:$0x1]
    %v1551 = vld [vmem:[#allocation2 + $0x4] sm:$0x1]
    %v1552 = vld [vmem:[#allocation2 + $0x5] sm:$0x1]
    %v1553 = vld [vmem:[#allocation2 + $0x6] sm:$0x1]
    %v1554 = vld [vmem:[#allocation2 + $0x7] sm:$0x1]
    %v1555 = vld [vmem:[#allocation2 + $0x8] sm:$0x1]
    %v1556 = vld [vmem:[#allocation2 + $0x9] sm:$0x1]
    %v1557 = vld [vmem:[#allocation2 + $0xa] sm:$0x1]
    %v1558 = vld [vmem:[#allocation2 + $0xb] sm:$0x1]
    %v1559 = vld [vmem:[#allocation2 + $0xc] sm:$0x1]
    %v1560 = vld [vmem:[#allocation2 + $0xd] sm:$0x1]
    %v1561 = vld [vmem:[#allocation2 + $0xe] sm:$0x1]
    %v1562 = vld [vmem:[#allocation2 + $0xf] sm:$0x1]
    %vm1563 = vcmask 57344
    %v1564 = vsel %vm1563, %v1531, -inf
    %1565 = vmax.xlane.f32.xlu0 %v1564
    %v1566 = vpop.xlane.xlu0 %1565
    %v1567 = vsel %vm1563, %v1532, -inf
    %1568 = vmax.xlane.f32.xlu0 %v1567
    %v1569 = vpop.xlane.xlu0 %1568
    %v1570 = vsel %vm1563, %v1533, -inf
    %1571 = vmax.xlane.f32.xlu0 %v1570
    %v1572 = vpop.xlane.xlu0 %1571
    %v1573 = vsel %vm1563, %v1534, -inf
    %1574 = vmax.xlane.f32.xlu0 %v1573
    %v1575 = vpop.xlane.xlu0 %1574
    %v1576 = vsel %vm1563, %v1535, -inf
    %1577 = vmax.xlane.f32.xlu0 %v1576
    %v1578 = vpop.xlane.xlu0 %1577
    %v1579 = vsel %vm1563, %v1536, -inf
    %1580 = vmax.xlane.f32.xlu0 %v1579
    %v1581 = vpop.xlane.xlu0 %1580
    %v1582 = vsel %vm1563, %v1537, -inf
    %1583 = vmax.xlane.f32.xlu0 %v1582
    %v1584 = vpop.xlane.xlu0 %1583
    %v1585 = vsel %vm1563, %v1538, -inf
    %1586 = vmax.xlane.f32.xlu0 %v1585
    %v1587 = vpop.xlane.xlu0 %1586
    %v1588 = vsel %vm1563, %v1539, -inf
    %1589 = vmax.xlane.f32.xlu0 %v1588
    %v1590 = vpop.xlane.xlu0 %1589
    %v1591 = vsel %vm1563, %v1540, -inf
    %1592 = vmax.xlane.f32.xlu0 %v1591
    %v1593 = vpop.xlane.xlu0 %1592
    %v1594 = vsel %vm1563, %v1541, -inf
    %1595 = vmax.xlane.f32.xlu0 %v1594
    %v1596 = vpop.xlane.xlu0 %1595
    %v1597 = vsel %vm1563, %v1542, -inf
    %1598 = vmax.xlane.f32.xlu0 %v1597
    %v1599 = vpop.xlane.xlu0 %1598
    %v1600 = vsel %vm1563, %v1543, -inf
    %1601 = vmax.xlane.f32.xlu0 %v1600
    %v1602 = vpop.xlane.xlu0 %1601
    %v1603 = vsel %vm1563, %v1544, -inf
    %1604 = vmax.xlane.f32.xlu0 %v1603
    %v1605 = vpop.xlane.xlu0 %1604
    %v1606 = vsel %vm1563, %v1545, -inf
    %1607 = vmax.xlane.f32.xlu0 %v1606
    %v1608 = vpop.xlane.xlu0 %1607
    %v1609 = vsel %vm1563, %v1546, -inf
    %1610 = vmax.xlane.f32.xlu0 %v1609
    %v1611 = vpop.xlane.xlu0 %1610
    %v1612 = vmax.f32 %v1547, %v1566
    %v1613 = vmax.f32 %v1548, %v1569
    %v1614 = vmax.f32 %v1549, %v1572
    %v1615 = vmax.f32 %v1550, %v1575
    %v1616 = vmax.f32 %v1551, %v1578
    %v1617 = vmax.f32 %v1552, %v1581
    %v1618 = vmax.f32 %v1553, %v1584
    %v1619 = vmax.f32 %v1554, %v1587
    %v1620 = vmax.f32 %v1555, %v1590
    %v1621 = vmax.f32 %v1556, %v1593
    %v1622 = vmax.f32 %v1557, %v1596
    %v1623 = vmax.f32 %v1558, %v1599
    %v1624 = vmax.f32 %v1559, %v1602
    %v1625 = vmax.f32 %v1560, %v1605
    %v1626 = vmax.f32 %v1561, %v1608
    %v1627 = vmax.f32 %v1562, %v1611
    %v1628 = vsub.f32 %v1547, %v1612
    %v1629 = vsub.f32 %v1548, %v1613
    %v1630 = vsub.f32 %v1549, %v1614
    %v1631 = vsub.f32 %v1550, %v1615
    %v1632 = vsub.f32 %v1551, %v1616
    %v1633 = vsub.f32 %v1552, %v1617
    %v1634 = vsub.f32 %v1553, %v1618
    %v1635 = vsub.f32 %v1554, %v1619
    %v1636 = vsub.f32 %v1555, %v1620
    %v1637 = vsub.f32 %v1556, %v1621
    %v1638 = vsub.f32 %v1557, %v1622
    %v1639 = vsub.f32 %v1558, %v1623
    %v1640 = vsub.f32 %v1559, %v1624
    %v1641 = vsub.f32 %v1560, %v1625
    %v1642 = vsub.f32 %v1561, %v1626
    %v1643 = vsub.f32 %v1562, %v1627
    %v1644 = vmul.f32 %v1628, 1.442695
    %v1645 = vpow.pop %v1644
    %v1646 = vmul.f32 %v1629, 1.442695
    %v1647 = vpow.pop %v1646
    %v1648 = vmul.f32 %v1630, 1.442695
    %v1649 = vpow.pop %v1648
    %v1650 = vmul.f32 %v1631, 1.442695
    %v1651 = vpow.pop %v1650
    %v1652 = vmul.f32 %v1632, 1.442695
    %v1653 = vpow.pop %v1652
    %v1654 = vmul.f32 %v1633, 1.442695
    %v1655 = vpow.pop %v1654
    %v1656 = vmul.f32 %v1634, 1.442695
    %v1657 = vpow.pop %v1656
    %v1658 = vmul.f32 %v1635, 1.442695
    %v1659 = vpow.pop %v1658
    %v1660 = vmul.f32 %v1636, 1.442695
    %v1661 = vpow.pop %v1660
    %v1662 = vmul.f32 %v1637, 1.442695
    %v1663 = vpow.pop %v1662
    %v1664 = vmul.f32 %v1638, 1.442695
    %v1665 = vpow.pop %v1664
    %v1666 = vmul.f32 %v1639, 1.442695
    %v1667 = vpow.pop %v1666
    %v1668 = vmul.f32 %v1640, 1.442695
    %v1669 = vpow.pop %v1668
    %v1670 = vmul.f32 %v1641, 1.442695
    %v1671 = vpow.pop %v1670
    %v1672 = vmul.f32 %v1642, 1.442695
    %v1673 = vpow.pop %v1672
    %v1674 = vmul.f32 %v1643, 1.442695
    %v1675 = vpow.pop %v1674
    %1677 = vset.pattern.permute.xlu0 0
    %1678 = vperm.xlu0 %1677, %v1612
    %v1679 = vpop.permute.xlu0 %1678
    %v1681 = vlaneseq
    %v1682 = vshrl.u32 %v1681, 7
    %v1683 = vsub.s32 0, %v1682
    %v1684 = vrot.slane %v1679, %v1683
    %1686 = vset.pattern.permute.xlu0 0
    %1687 = vperm.xlu0 %1686, %v1613
    %v1688 = vpop.permute.xlu0 %1687
    %v1690 = vlaneseq
    %v1691 = vshrl.u32 %v1690, 7
    %v1692 = vsub.s32 0, %v1691
    %v1693 = vrot.slane %v1688, %v1692
    %1695 = vset.pattern.permute.xlu0 0
    %1696 = vperm.xlu0 %1695, %v1614
    %v1697 = vpop.permute.xlu0 %1696
    %v1699 = vlaneseq
    %v1700 = vshrl.u32 %v1699, 7
    %v1701 = vsub.s32 0, %v1700
    %v1702 = vrot.slane %v1697, %v1701
    %1704 = vset.pattern.permute.xlu0 0
    %1705 = vperm.xlu0 %1704, %v1615
    %v1706 = vpop.permute.xlu0 %1705
    %v1708 = vlaneseq
    %v1709 = vshrl.u32 %v1708, 7
    %v1710 = vsub.s32 0, %v1709
    %v1711 = vrot.slane %v1706, %v1710
    %1713 = vset.pattern.permute.xlu0 0
    %1714 = vperm.xlu0 %1713, %v1616
    %v1715 = vpop.permute.xlu0 %1714
    %v1717 = vlaneseq
    %v1718 = vshrl.u32 %v1717, 7
    %v1719 = vsub.s32 0, %v1718
    %v1720 = vrot.slane %v1715, %v1719
    %1722 = vset.pattern.permute.xlu0 0
    %1723 = vperm.xlu0 %1722, %v1617
    %v1724 = vpop.permute.xlu0 %1723
    %v1726 = vlaneseq
    %v1727 = vshrl.u32 %v1726, 7
    %v1728 = vsub.s32 0, %v1727
    %v1729 = vrot.slane %v1724, %v1728
    %1731 = vset.pattern.permute.xlu0 0
    %1732 = vperm.xlu0 %1731, %v1618
    %v1733 = vpop.permute.xlu0 %1732
    %v1735 = vlaneseq
    %v1736 = vshrl.u32 %v1735, 7
    %v1737 = vsub.s32 0, %v1736
    %v1738 = vrot.slane %v1733, %v1737
    %1740 = vset.pattern.permute.xlu0 0
    %1741 = vperm.xlu0 %1740, %v1619
    %v1742 = vpop.permute.xlu0 %1741
    %v1744 = vlaneseq
    %v1745 = vshrl.u32 %v1744, 7
    %v1746 = vsub.s32 0, %v1745
    %v1747 = vrot.slane %v1742, %v1746
    %1749 = vset.pattern.permute.xlu0 0
    %1750 = vperm.xlu0 %1749, %v1620
    %v1751 = vpop.permute.xlu0 %1750
    %v1753 = vlaneseq
    %v1754 = vshrl.u32 %v1753, 7
    %v1755 = vsub.s32 0, %v1754
    %v1756 = vrot.slane %v1751, %v1755
    %1758 = vset.pattern.permute.xlu0 0
    %1759 = vperm.xlu0 %1758, %v1621
    %v1760 = vpop.permute.xlu0 %1759
    %v1762 = vlaneseq
    %v1763 = vshrl.u32 %v1762, 7
    %v1764 = vsub.s32 0, %v1763
    %v1765 = vrot.slane %v1760, %v1764
    %1767 = vset.pattern.permute.xlu0 0
    %1768 = vperm.xlu0 %1767, %v1622
    %v1769 = vpop.permute.xlu0 %1768
    %v1771 = vlaneseq
    %v1772 = vshrl.u32 %v1771, 7
    %v1773 = vsub.s32 0, %v1772
    %v1774 = vrot.slane %v1769, %v1773
    %1776 = vset.pattern.permute.xlu0 0
    %1777 = vperm.xlu0 %1776, %v1623
    %v1778 = vpop.permute.xlu0 %1777
    %v1780 = vlaneseq
    %v1781 = vshrl.u32 %v1780, 7
    %v1782 = vsub.s32 0, %v1781
    %v1783 = vrot.slane %v1778, %v1782
    %1785 = vset.pattern.permute.xlu0 0
    %1786 = vperm.xlu0 %1785, %v1624
    %v1787 = vpop.permute.xlu0 %1786
    %v1789 = vlaneseq
    %v1790 = vshrl.u32 %v1789, 7
    %v1791 = vsub.s32 0, %v1790
    %v1792 = vrot.slane %v1787, %v1791
    %1794 = vset.pattern.permute.xlu0 0
    %1795 = vperm.xlu0 %1794, %v1625
    %v1796 = vpop.permute.xlu0 %1795
    %v1798 = vlaneseq
    %v1799 = vshrl.u32 %v1798, 7
    %v1800 = vsub.s32 0, %v1799
    %v1801 = vrot.slane %v1796, %v1800
    %1803 = vset.pattern.permute.xlu0 0
    %1804 = vperm.xlu0 %1803, %v1626
    %v1805 = vpop.permute.xlu0 %1804
    %v1807 = vlaneseq
    %v1808 = vshrl.u32 %v1807, 7
    %v1809 = vsub.s32 0, %v1808
    %v1810 = vrot.slane %v1805, %v1809
    %1812 = vset.pattern.permute.xlu0 0
    %1813 = vperm.xlu0 %1812, %v1627
    %v1814 = vpop.permute.xlu0 %1813
    %v1816 = vlaneseq
    %v1817 = vshrl.u32 %v1816, 7
    %v1818 = vsub.s32 0, %v1817
    %v1819 = vrot.slane %v1814, %v1818
    %v1820 = vsub.f32 %v1531, %v1684
    %v1821 = vsub.f32 %v1532, %v1693
    %v1822 = vsub.f32 %v1533, %v1702
    %v1823 = vsub.f32 %v1534, %v1711
    %v1824 = vsub.f32 %v1535, %v1720
    %v1825 = vsub.f32 %v1536, %v1729
    %v1826 = vsub.f32 %v1537, %v1738
    %v1827 = vsub.f32 %v1538, %v1747
    %v1828 = vsub.f32 %v1539, %v1756
    %v1829 = vsub.f32 %v1540, %v1765
    %v1830 = vsub.f32 %v1541, %v1774
    %v1831 = vsub.f32 %v1542, %v1783
    %v1832 = vsub.f32 %v1543, %v1792
    %v1833 = vsub.f32 %v1544, %v1801
    %v1834 = vsub.f32 %v1545, %v1810
    %v1835 = vsub.f32 %v1546, %v1819
    %v1836 = vmul.f32 %v1820, 1.442695
    %v1837 = vpow.pop %v1836
    %v1838 = vmul.f32 %v1821, 1.442695
    %v1839 = vpow.pop %v1838
    %v1840 = vmul.f32 %v1822, 1.442695
    %v1841 = vpow.pop %v1840
    %v1842 = vmul.f32 %v1823, 1.442695
    %v1843 = vpow.pop %v1842
    %v1844 = vmul.f32 %v1824, 1.442695
    %v1845 = vpow.pop %v1844
    %v1846 = vmul.f32 %v1825, 1.442695
    %v1847 = vpow.pop %v1846
    %v1848 = vmul.f32 %v1826, 1.442695
    %v1849 = vpow.pop %v1848
    %v1850 = vmul.f32 %v1827, 1.442695
    %v1851 = vpow.pop %v1850
    %v1852 = vmul.f32 %v1828, 1.442695
    %v1853 = vpow.pop %v1852
    %v1854 = vmul.f32 %v1829, 1.442695
    %v1855 = vpow.pop %v1854
    %v1856 = vmul.f32 %v1830, 1.442695
    %v1857 = vpow.pop %v1856
    %v1858 = vmul.f32 %v1831, 1.442695
    %v1859 = vpow.pop %v1858
    %v1860 = vmul.f32 %v1832, 1.442695
    %v1861 = vpow.pop %v1860
    %v1862 = vmul.f32 %v1833, 1.442695
    %v1863 = vpow.pop %v1862
    %v1864 = vmul.f32 %v1834, 1.442695
    %v1865 = vpow.pop %v1864
    %v1866 = vmul.f32 %v1835, 1.442695
    %v1867 = vpow.pop %v1866
    %v1868 = vld [vmem:[#allocation3] sm:$0x1]
    %v1869 = vld [vmem:[#allocation3 + $0x1] sm:$0x1]
    %v1870 = vld [vmem:[#allocation3 + $0x2] sm:$0x1]
    %v1871 = vld [vmem:[#allocation3 + $0x3] sm:$0x1]
    %v1872 = vld [vmem:[#allocation3 + $0x4] sm:$0x1]
    %v1873 = vld [vmem:[#allocation3 + $0x5] sm:$0x1]
    %v1874 = vld [vmem:[#allocation3 + $0x6] sm:$0x1]
    %v1875 = vld [vmem:[#allocation3 + $0x7] sm:$0x1]
    %v1876 = vld [vmem:[#allocation3 + $0x8] sm:$0x1]
    %v1877 = vld [vmem:[#allocation3 + $0x9] sm:$0x1]
    %v1878 = vld [vmem:[#allocation3 + $0xa] sm:$0x1]
    %v1879 = vld [vmem:[#allocation3 + $0xb] sm:$0x1]
    %v1880 = vld [vmem:[#allocation3 + $0xc] sm:$0x1]
    %v1881 = vld [vmem:[#allocation3 + $0xd] sm:$0x1]
    %v1882 = vld [vmem:[#allocation3 + $0xe] sm:$0x1]
    %v1883 = vld [vmem:[#allocation3 + $0xf] sm:$0x1]
    %v1884 = vmul.f32 %v1645, %v1868
    %v1885 = vmul.f32 %v1647, %v1869
    %v1886 = vmul.f32 %v1649, %v1870
    %v1887 = vmul.f32 %v1651, %v1871
    %v1888 = vmul.f32 %v1653, %v1872
    %v1889 = vmul.f32 %v1655, %v1873
    %v1890 = vmul.f32 %v1657, %v1874
    %v1891 = vmul.f32 %v1659, %v1875
    %v1892 = vmul.f32 %v1661, %v1876
    %v1893 = vmul.f32 %v1663, %v1877
    %v1894 = vmul.f32 %v1665, %v1878
    %v1895 = vmul.f32 %v1667, %v1879
    %v1896 = vmul.f32 %v1669, %v1880
    %v1897 = vmul.f32 %v1671, %v1881
    %v1898 = vmul.f32 %v1673, %v1882
    %v1899 = vmul.f32 %v1675, %v1883
    %v1900 = vsel %vm1563, %v1837, 0.0
    %1901 = vadd.xlane.f32.xlu0 %v1900
    %v1902 = vpop.xlane.xlu0 %1901
    %v1903 = vsel %vm1563, %v1839, 0.0
    %1904 = vadd.xlane.f32.xlu0 %v1903
    %v1905 = vpop.xlane.xlu0 %1904
    %v1906 = vsel %vm1563, %v1841, 0.0
    %1907 = vadd.xlane.f32.xlu0 %v1906
    %v1908 = vpop.xlane.xlu0 %1907
    %v1909 = vsel %vm1563, %v1843, 0.0
    %1910 = vadd.xlane.f32.xlu0 %v1909
    %v1911 = vpop.xlane.xlu0 %1910
    %v1912 = vsel %vm1563, %v1845, 0.0
    %1913 = vadd.xlane.f32.xlu0 %v1912
    %v1914 = vpop.xlane.xlu0 %1913
    %v1915 = vsel %vm1563, %v1847, 0.0
    %1916 = vadd.xlane.f32.xlu0 %v1915
    %v1917 = vpop.xlane.xlu0 %1916
    %v1918 = vsel %vm1563, %v1849, 0.0
    %1919 = vadd.xlane.f32.xlu0 %v1918
    %v1920 = vpop.xlane.xlu0 %1919
    %v1921 = vsel %vm1563, %v1851, 0.0
    %1922 = vadd.xlane.f32.xlu0 %v1921
    %v1923 = vpop.xlane.xlu0 %1922
    %v1924 = vsel %vm1563, %v1853, 0.0
    %1925 = vadd.xlane.f32.xlu0 %v1924
    %v1926 = vpop.xlane.xlu0 %1925
    %v1927 = vsel %vm1563, %v1855, 0.0
    %1928 = vadd.xlane.f32.xlu0 %v1927
    %v1929 = vpop.xlane.xlu0 %1928
    %v1930 = vsel %vm1563, %v1857, 0.0
    %1931 = vadd.xlane.f32.xlu0 %v1930
    %v1932 = vpop.xlane.xlu0 %1931
    %v1933 = vsel %vm1563, %v1859, 0.0
    %1934 = vadd.xlane.f32.xlu0 %v1933
    %v1935 = vpop.xlane.xlu0 %1934
    %v1936 = vsel %vm1563, %v1861, 0.0
    %1937 = vadd.xlane.f32.xlu0 %v1936
    %v1938 = vpop.xlane.xlu0 %1937
    %v1939 = vsel %vm1563, %v1863, 0.0
    %1940 = vadd.xlane.f32.xlu0 %v1939
    %v1941 = vpop.xlane.xlu0 %1940
    %v1942 = vsel %vm1563, %v1865, 0.0
    %1943 = vadd.xlane.f32.xlu0 %v1942
    %v1944 = vpop.xlane.xlu0 %1943
    %v1945 = vsel %vm1563, %v1867, 0.0
    %1946 = vadd.xlane.f32.xlu0 %v1945
    %v1947 = vpop.xlane.xlu0 %1946
    %v1948 = vadd.f32 %v1884, %v1902
    %v1949 = vadd.f32 %v1885, %v1905
    %v1950 = vadd.f32 %v1886, %v1908
    %v1951 = vadd.f32 %v1887, %v1911
    %v1952 = vadd.f32 %v1888, %v1914
    %v1953 = vadd.f32 %v1889, %v1917
    %v1954 = vadd.f32 %v1890, %v1920
    %v1955 = vadd.f32 %v1891, %v1923
    %v1956 = vadd.f32 %v1892, %v1926
    %v1957 = vadd.f32 %v1893, %v1929
    %v1958 = vadd.f32 %v1894, %v1932
    %v1959 = vadd.f32 %v1895, %v1935
    %v1960 = vadd.f32 %v1896, %v1938
    %v1961 = vadd.f32 %v1897, %v1941
    %v1962 = vadd.f32 %v1898, %v1944
    %v1963 = vadd.f32 %v1899, %v1947
    %vm1964 = vcmask 0
    %1965 = vst.msk [vmem:[#allocation3] sm:$0x1] %vm1964, %v1948
    %1966 = vst.msk [vmem:[#allocation3 + $0x1] sm:$0x1] %vm1964, %v1949
    %1967 = vst.msk [vmem:[#allocation3 + $0x2] sm:$0x1] %vm1964, %v1950
    %1968 = vst.msk [vmem:[#allocation3 + $0x3] sm:$0x1] %vm1964, %v1951
    %1969 = vst.msk [vmem:[#allocation3 + $0x4] sm:$0x1] %vm1964, %v1952
    %1970 = vst.msk [vmem:[#allocation3 + $0x5] sm:$0x1] %vm1964, %v1953
    %1971 = vst.msk [vmem:[#allocation3 + $0x6] sm:$0x1] %vm1964, %v1954
    %1972 = vst.msk [vmem:[#allocation3 + $0x7] sm:$0x1] %vm1964, %v1955
    %1973 = vst.msk [vmem:[#allocation3 + $0x8] sm:$0x1] %vm1964, %v1956
    %1974 = vst.msk [vmem:[#allocation3 + $0x9] sm:$0x1] %vm1964, %v1957
    %1975 = vst.msk [vmem:[#allocation3 + $0xa] sm:$0x1] %vm1964, %v1958
    %1976 = vst.msk [vmem:[#allocation3 + $0xb] sm:$0x1] %vm1964, %v1959
    %1977 = vst.msk [vmem:[#allocation3 + $0xc] sm:$0x1] %vm1964, %v1960
    %1978 = vst.msk [vmem:[#allocation3 + $0xd] sm:$0x1] %vm1964, %v1961
    %1979 = vst.msk [vmem:[#allocation3 + $0xe] sm:$0x1] %vm1964, %v1962
    %1980 = vst.msk [vmem:[#allocation3 + $0xf] sm:$0x1] %vm1964, %v1963
    %v1981 = vld [vmem:[#allocation4] sm:$0x1]
    %v1982 = vld [vmem:[#allocation4 + $0x1] sm:$0x1]
    %v1983 = vld [vmem:[#allocation4 + $0x2] sm:$0x1]
    %v1984 = vld [vmem:[#allocation4 + $0x3] sm:$0x1]
    %v1985 = vld [vmem:[#allocation4 + $0x4] sm:$0x1]
    %v1986 = vld [vmem:[#allocation4 + $0x5] sm:$0x1]
    %v1987 = vld [vmem:[#allocation4 + $0x6] sm:$0x1]
    %v1988 = vld [vmem:[#allocation4 + $0x7] sm:$0x1]
    %v1989 = vld [vmem:[#allocation4 + $0x8] sm:$0x1]
    %v1990 = vld [vmem:[#allocation4 + $0x9] sm:$0x1]
    %v1991 = vld [vmem:[#allocation4 + $0xa] sm:$0x1]
    %v1992 = vld [vmem:[#allocation4 + $0xb] sm:$0x1]
    %v1993 = vld [vmem:[#allocation4 + $0xc] sm:$0x1]
    %v1994 = vld [vmem:[#allocation4 + $0xd] sm:$0x1]
    %v1995 = vld [vmem:[#allocation4 + $0xe] sm:$0x1]
    %v1996 = vld [vmem:[#allocation4 + $0xf] sm:$0x1]
    %1998 = vset.pattern.permute.xlu0 0
    %1999 = vperm.xlu0 %1998, %v1645
    %v2000 = vpop.permute.xlu0 %1999
    %v2002 = vlaneseq
    %v2003 = vshrl.u32 %v2002, 7
    %v2004 = vsub.s32 0, %v2003
    %v2005 = vrot.slane %v2000, %v2004
    %2007 = vset.pattern.permute.xlu0 0
    %2008 = vperm.xlu0 %2007, %v1647
    %v2009 = vpop.permute.xlu0 %2008
    %v2011 = vlaneseq
    %v2012 = vshrl.u32 %v2011, 7
    %v2013 = vsub.s32 0, %v2012
    %v2014 = vrot.slane %v2009, %v2013
    %2016 = vset.pattern.permute.xlu0 0
    %2017 = vperm.xlu0 %2016, %v1649
    %v2018 = vpop.permute.xlu0 %2017
    %v2020 = vlaneseq
    %v2021 = vshrl.u32 %v2020, 7
    %v2022 = vsub.s32 0, %v2021
    %v2023 = vrot.slane %v2018, %v2022
    %2025 = vset.pattern.permute.xlu0 0
    %2026 = vperm.xlu0 %2025, %v1651
    %v2027 = vpop.permute.xlu0 %2026
    %v2029 = vlaneseq
    %v2030 = vshrl.u32 %v2029, 7
    %v2031 = vsub.s32 0, %v2030
    %v2032 = vrot.slane %v2027, %v2031
    %2034 = vset.pattern.permute.xlu0 0
    %2035 = vperm.xlu0 %2034, %v1653
    %v2036 = vpop.permute.xlu0 %2035
    %v2038 = vlaneseq
    %v2039 = vshrl.u32 %v2038, 7
    %v2040 = vsub.s32 0, %v2039
    %v2041 = vrot.slane %v2036, %v2040
    %2043 = vset.pattern.permute.xlu0 0
    %2044 = vperm.xlu0 %2043, %v1655
    %v2045 = vpop.permute.xlu0 %2044
    %v2047 = vlaneseq
    %v2048 = vshrl.u32 %v2047, 7
    %v2049 = vsub.s32 0, %v2048
    %v2050 = vrot.slane %v2045, %v2049
    %2052 = vset.pattern.permute.xlu0 0
    %2053 = vperm.xlu0 %2052, %v1657
    %v2054 = vpop.permute.xlu0 %2053
    %v2056 = vlaneseq
    %v2057 = vshrl.u32 %v2056, 7
    %v2058 = vsub.s32 0, %v2057
    %v2059 = vrot.slane %v2054, %v2058
    %2061 = vset.pattern.permute.xlu0 0
    %2062 = vperm.xlu0 %2061, %v1659
    %v2063 = vpop.permute.xlu0 %2062
    %v2065 = vlaneseq
    %v2066 = vshrl.u32 %v2065, 7
    %v2067 = vsub.s32 0, %v2066
    %v2068 = vrot.slane %v2063, %v2067
    %2070 = vset.pattern.permute.xlu0 0
    %2071 = vperm.xlu0 %2070, %v1661
    %v2072 = vpop.permute.xlu0 %2071
    %v2074 = vlaneseq
    %v2075 = vshrl.u32 %v2074, 7
    %v2076 = vsub.s32 0, %v2075
    %v2077 = vrot.slane %v2072, %v2076
    %2079 = vset.pattern.permute.xlu0 0
    %2080 = vperm.xlu0 %2079, %v1663
    %v2081 = vpop.permute.xlu0 %2080
    %v2083 = vlaneseq
    %v2084 = vshrl.u32 %v2083, 7
    %v2085 = vsub.s32 0, %v2084
    %v2086 = vrot.slane %v2081, %v2085
    %2088 = vset.pattern.permute.xlu0 0
    %2089 = vperm.xlu0 %2088, %v1665
    %v2090 = vpop.permute.xlu0 %2089
    %v2092 = vlaneseq
    %v2093 = vshrl.u32 %v2092, 7
    %v2094 = vsub.s32 0, %v2093
    %v2095 = vrot.slane %v2090, %v2094
    %2097 = vset.pattern.permute.xlu0 0
    %2098 = vperm.xlu0 %2097, %v1667
    %v2099 = vpop.permute.xlu0 %2098
    %v2101 = vlaneseq
    %v2102 = vshrl.u32 %v2101, 7
    %v2103 = vsub.s32 0, %v2102
    %v2104 = vrot.slane %v2099, %v2103
    %2106 = vset.pattern.permute.xlu0 0
    %2107 = vperm.xlu0 %2106, %v1669
    %v2108 = vpop.permute.xlu0 %2107
    %v2110 = vlaneseq
    %v2111 = vshrl.u32 %v2110, 7
    %v2112 = vsub.s32 0, %v2111
    %v2113 = vrot.slane %v2108, %v2112
    %2115 = vset.pattern.permute.xlu0 0
    %2116 = vperm.xlu0 %2115, %v1671
    %v2117 = vpop.permute.xlu0 %2116
    %v2119 = vlaneseq
    %v2120 = vshrl.u32 %v2119, 7
    %v2121 = vsub.s32 0, %v2120
    %v2122 = vrot.slane %v2117, %v2121
    %2124 = vset.pattern.permute.xlu0 0
    %2125 = vperm.xlu0 %2124, %v1673
    %v2126 = vpop.permute.xlu0 %2125
    %v2128 = vlaneseq
    %v2129 = vshrl.u32 %v2128, 7
    %v2130 = vsub.s32 0, %v2129
    %v2131 = vrot.slane %v2126, %v2130
    %2133 = vset.pattern.permute.xlu0 0
    %2134 = vperm.xlu0 %2133, %v1675
    %v2135 = vpop.permute.xlu0 %2134
    %v2137 = vlaneseq
    %v2138 = vshrl.u32 %v2137, 7
    %v2139 = vsub.s32 0, %v2138
    %v2140 = vrot.slane %v2135, %v2139
    %v2141 = vmul.f32 %v2005, %v1981
    %v2142 = vmul.f32 %v2014, %v1982
    %v2143 = vmul.f32 %v2023, %v1983
    %v2144 = vmul.f32 %v2032, %v1984
    %v2145 = vmul.f32 %v2041, %v1985
    %v2146 = vmul.f32 %v2050, %v1986
    %v2147 = vmul.f32 %v2059, %v1987
    %v2148 = vmul.f32 %v2068, %v1988
    %v2149 = vmul.f32 %v2077, %v1989
    %v2150 = vmul.f32 %v2086, %v1990
    %v2151 = vmul.f32 %v2095, %v1991
    %v2152 = vmul.f32 %v2104, %v1992
    %v2153 = vmul.f32 %v2113, %v1993
    %v2154 = vmul.f32 %v2122, %v1994
    %v2155 = vmul.f32 %v2131, %v1995
    %v2156 = vmul.f32 %v2140, %v1996
    %vm2157 = vcmask 64512
    %v2159 = vsel %vm2157, %v1837, 0
    %2161 = vmatprep.subr.mxu0 0.0
    %2162 = vmatpush1.msra.mxu0 %v89
    %2163 = vmatprep.subr.mxu0 0.0
    %2164 = vmatpush1.msra.mxu0 0.0
    %2165 = vmatprep.subr.mxu0 0.0
    %2166 = vmatpush1.msra.mxu0 0.0
    %2167 = vmatprep.subr.mxu0 0.0
    %2168 = vmatpush1.msra.mxu0 0.0
    %2169 = vmatprep.subr.mxu0 0.0
    %2170 = vmatpush1.msra.mxu0 0.0
    %2171 = vmatprep.subr.mxu0 0.0
    %2172 = vmatpush1.msra.mxu0 0.0
    %2173 = vmatprep.subr.mxu0 0.0
    %2174 = vmatpush1.msra.mxu0 0.0
    %2175 = vmatprep.subr.mxu0 0.0
    %2176 = vmatpush1.msra.mxu0 0.0
    %2177 = vmatprep.subr.mxu0 0.0
    %2178 = vmatpush1.msra.mxu0 0.0
    %2179 = vmatprep.subr.mxu0 0.0
    %2180 = vmatpush1.msra.mxu0 0.0
    %2181 = vmatprep.subr.mxu0 0.0
    %2182 = vmatpush1.msra.mxu0 0.0
    %2183 = vmatprep.subr.mxu0 0.0
    %2184 = vmatpush1.msra.mxu0 0.0
    %2185 = vmatprep.subr.mxu0 0.0
    %2186 = vmatpush1.msra.mxu0 0.0
    %2187 = vmatprep.subr.mxu0 0.0
    %2188 = vmatpush1.msra.mxu0 0.0
    %2189 = vmatprep.subr.mxu0 0.0
    %2190 = vmatpush1.msra.mxu0 0.0
    %2191 = vmatprep.subr.mxu0 0.0
    %2192 = vmatpush1.msra.mxu0 0.0
    %2193 = vmatprep.subr.mxu0 0.0
    %2194 = vmatpush1.msra.mxu0 0.0
    %2195 = vmatprep.subr.mxu0 0.0
    %2196 = vmatpush1.msra.mxu0 0.0
    %2197 = vmatprep.subr.mxu0 0.0
    %2198 = vmatpush1.msra.mxu0 0.0
    %2199 = vmatprep.subr.mxu0 0.0
    %2200 = vmatpush1.msra.mxu0 0.0
    %2201 = vmatprep.subr.mxu0 0.0
    %2202 = vmatpush1.msra.mxu0 0.0
    %2203 = vmatprep.subr.mxu0 0.0
    %2204 = vmatpush1.msra.mxu0 0.0
    %2205 = vmatprep.subr.mxu0 0.0
    %2206 = vmatpush1.msra.mxu0 0.0
    %2207 = vmatprep.subr.mxu0 0.0
    %2208 = vmatpush1.msra.mxu0 0.0
    %2209 = vmatprep.subr.mxu0 0.0
    %2210 = vmatpush1.msra.mxu0 0.0
    %2211 = vmatprep.subr.mxu0 0.0
    %2212 = vmatpush1.msra.mxu0 0.0
    %2213 = vmatprep.subr.mxu0 0.0
    %2214 = vmatpush1.msra.mxu0 0.0
    %2215 = vmatprep.subr.mxu0 0.0
    %2216 = vmatpush1.msra.mxu0 0.0
    %2217 = vmatprep.subr.mxu0 0.0
    %2218 = vmatpush1.msra.mxu0 0.0
    %2219 = vmatprep.subr.mxu0 0.0
    %2220 = vmatpush1.msra.mxu0 0.0
    %2221 = vmatprep.subr.mxu0 0.0
    %2222 = vmatpush1.msra.mxu0 0.0
    %2223 = vmatprep.subr.mxu0 0.0
    %2224 = vmatpush1.msra.mxu0 0.0
    %2225 = vmatprep.mubr.f32.mxu0 0.0
    %2226 = vmatmul.mubr.f32.gmra.mrb[0].mxu0 %v2159
    %v2227 = vpop.f32.mrb[0].mxu0
    %v2228 = vadd.f32 0.0, %v2227
    %v2229 = vpop.f32.mrb[0].mxu0
    %2230 = vdwg.mxu0
    %v2232 = vsel %vm2157, %v1839, 0
    %2234 = vmatprep.subr.mxu0 0.0
    %2235 = vmatpush1.msra.mxu0 %v90
    %2236 = vmatprep.subr.mxu0 0.0
    %2237 = vmatpush1.msra.mxu0 0.0
    %2238 = vmatprep.subr.mxu0 0.0
    %2239 = vmatpush1.msra.mxu0 0.0
    %2240 = vmatprep.subr.mxu0 0.0
    %2241 = vmatpush1.msra.mxu0 0.0
    %2242 = vmatprep.subr.mxu0 0.0
    %2243 = vmatpush1.msra.mxu0 0.0
    %2244 = vmatprep.subr.mxu0 0.0
    %2245 = vmatpush1.msra.mxu0 0.0
    %2246 = vmatprep.subr.mxu0 0.0
    %2247 = vmatpush1.msra.mxu0 0.0
    %2248 = vmatprep.subr.mxu0 0.0
    %2249 = vmatpush1.msra.mxu0 0.0
    %2250 = vmatprep.subr.mxu0 0.0
    %2251 = vmatpush1.msra.mxu0 0.0
    %2252 = vmatprep.subr.mxu0 0.0
    %2253 = vmatpush1.msra.mxu0 0.0
    %2254 = vmatprep.subr.mxu0 0.0
    %2255 = vmatpush1.msra.mxu0 0.0
    %2256 = vmatprep.subr.mxu0 0.0
    %2257 = vmatpush1.msra.mxu0 0.0
    %2258 = vmatprep.subr.mxu0 0.0
    %2259 = vmatpush1.msra.mxu0 0.0
    %2260 = vmatprep.subr.mxu0 0.0
    %2261 = vmatpush1.msra.mxu0 0.0
    %2262 = vmatprep.subr.mxu0 0.0
    %2263 = vmatpush1.msra.mxu0 0.0
    %2264 = vmatprep.subr.mxu0 0.0
    %2265 = vmatpush1.msra.mxu0 0.0
    %2266 = vmatprep.subr.mxu0 0.0
    %2267 = vmatpush1.msra.mxu0 0.0
    %2268 = vmatprep.subr.mxu0 0.0
    %2269 = vmatpush1.msra.mxu0 0.0
    %2270 = vmatprep.subr.mxu0 0.0
    %2271 = vmatpush1.msra.mxu0 0.0
    %2272 = vmatprep.subr.mxu0 0.0
    %2273 = vmatpush1.msra.mxu0 0.0
    %2274 = vmatprep.subr.mxu0 0.0
    %2275 = vmatpush1.msra.mxu0 0.0
    %2276 = vmatprep.subr.mxu0 0.0
    %2277 = vmatpush1.msra.mxu0 0.0
    %2278 = vmatprep.subr.mxu0 0.0
    %2279 = vmatpush1.msra.mxu0 0.0
    %2280 = vmatprep.subr.mxu0 0.0
    %2281 = vmatpush1.msra.mxu0 0.0
    %2282 = vmatprep.subr.mxu0 0.0
    %2283 = vmatpush1.msra.mxu0 0.0
    %2284 = vmatprep.subr.mxu0 0.0
    %2285 = vmatpush1.msra.mxu0 0.0
    %2286 = vmatprep.subr.mxu0 0.0
    %2287 = vmatpush1.msra.mxu0 0.0
    %2288 = vmatprep.subr.mxu0 0.0
    %2289 = vmatpush1.msra.mxu0 0.0
    %2290 = vmatprep.subr.mxu0 0.0
    %2291 = vmatpush1.msra.mxu0 0.0
    %2292 = vmatprep.subr.mxu0 0.0
    %2293 = vmatpush1.msra.mxu0 0.0
    %2294 = vmatprep.subr.mxu0 0.0
    %2295 = vmatpush1.msra.mxu0 0.0
    %2296 = vmatprep.subr.mxu0 0.0
    %2297 = vmatpush1.msra.mxu0 0.0
    %2298 = vmatprep.mubr.f32.mxu0 0.0
    %2299 = vmatmul.mubr.f32.gmra.mrb[0].mxu0 %v2232
    %v2300 = vpop.f32.mrb[0].mxu0
    %v2301 = vadd.f32 0.0, %v2300
    %v2302 = vpop.f32.mrb[0].mxu0
    %2303 = vdwg.mxu0
    %v2305 = vsel %vm2157, %v1841, 0
    %2307 = vmatprep.subr.mxu0 0.0
    %2308 = vmatpush1.msra.mxu0 %v91
    %2309 = vmatprep.subr.mxu0 0.0
    %2310 = vmatpush1.msra.mxu0 0.0
    %2311 = vmatprep.subr.mxu0 0.0
    %2312 = vmatpush1.msra.mxu0 0.0
    %2313 = vmatprep.subr.mxu0 0.0
    %2314 = vmatpush1.msra.mxu0 0.0
    %2315 = vmatprep.subr.mxu0 0.0
    %2316 = vmatpush1.msra.mxu0 0.0
    %2317 = vmatprep.subr.mxu0 0.0
    %2318 = vmatpush1.msra.mxu0 0.0
    %2319 = vmatprep.subr.mxu0 0.0
    %2320 = vmatpush1.msra.mxu0 0.0
    %2321 = vmatprep.subr.mxu0 0.0
    %2322 = vmatpush1.msra.mxu0 0.0
    %2323 = vmatprep.subr.mxu0 0.0
    %2324 = vmatpush1.msra.mxu0 0.0
    %2325 = vmatprep.subr.mxu0 0.0
    %2326 = vmatpush1.msra.mxu0 0.0
    %2327 = vmatprep.subr.mxu0 0.0
    %2328 = vmatpush1.msra.mxu0 0.0
    %2329 = vmatprep.subr.mxu0 0.0
    %2330 = vmatpush1.msra.mxu0 0.0
    %2331 = vmatprep.subr.mxu0 0.0
    %2332 = vmatpush1.msra.mxu0 0.0
    %2333 = vmatprep.subr.mxu0 0.0
    %2334 = vmatpush1.msra.mxu0 0.0
    %2335 = vmatprep.subr.mxu0 0.0
    %2336 = vmatpush1.msra.mxu0 0.0
    %2337 = vmatprep.subr.mxu0 0.0
    %2338 = vmatpush1.msra.mxu0 0.0
    %2339 = vmatprep.subr.mxu0 0.0
    %2340 = vmatpush1.msra.mxu0 0.0
    %2341 = vmatprep.subr.mxu0 0.0
    %2342 = vmatpush1.msra.mxu0 0.0
    %2343 = vmatprep.subr.mxu0 0.0
    %2344 = vmatpush1.msra.mxu0 0.0
    %2345 = vmatprep.subr.mxu0 0.0
    %2346 = vmatpush1.msra.mxu0 0.0
    %2347 = vmatprep.subr.mxu0 0.0
    %2348 = vmatpush1.msra.mxu0 0.0
    %2349 = vmatprep.subr.mxu0 0.0
    %2350 = vmatpush1.msra.mxu0 0.0
    %2351 = vmatprep.subr.mxu0 0.0
    %2352 = vmatpush1.msra.mxu0 0.0
    %2353 = vmatprep.subr.mxu0 0.0
    %2354 = vmatpush1.msra.mxu0 0.0
    %2355 = vmatprep.subr.mxu0 0.0
    %2356 = vmatpush1.msra.mxu0 0.0
    %2357 = vmatprep.subr.mxu0 0.0
    %2358 = vmatpush1.msra.mxu0 0.0
    %2359 = vmatprep.subr.mxu0 0.0
    %2360 = vmatpush1.msra.mxu0 0.0
    %2361 = vmatprep.subr.mxu0 0.0
    %2362 = vmatpush1.msra.mxu0 0.0
    %2363 = vmatprep.subr.mxu0 0.0
    %2364 = vmatpush1.msra.mxu0 0.0
    %2365 = vmatprep.subr.mxu0 0.0
    %2366 = vmatpush1.msra.mxu0 0.0
    %2367 = vmatprep.subr.mxu0 0.0
    %2368 = vmatpush1.msra.mxu0 0.0
    %2369 = vmatprep.subr.mxu0 0.0
    %2370 = vmatpush1.msra.mxu0 0.0
    %2371 = vmatprep.mubr.f32.mxu0 0.0
    %2372 = vmatmul.mubr.f32.gmra.mrb[0].mxu0 %v2305
    %v2373 = vpop.f32.mrb[0].mxu0
    %v2374 = vadd.f32 0.0, %v2373
    %v2375 = vpop.f32.mrb[0].mxu0
    %2376 = vdwg.mxu0
    %v2378 = vsel %vm2157, %v1843, 0
    %2380 = vmatprep.subr.mxu0 0.0
    %2381 = vmatpush1.msra.mxu0 %v92
    %2382 = vmatprep.subr.mxu0 0.0
    %2383 = vmatpush1.msra.mxu0 0.0
    %2384 = vmatprep.subr.mxu0 0.0
    %2385 = vmatpush1.msra.mxu0 0.0
    %2386 = vmatprep.subr.mxu0 0.0
    %2387 = vmatpush1.msra.mxu0 0.0
    %2388 = vmatprep.subr.mxu0 0.0
    %2389 = vmatpush1.msra.mxu0 0.0
    %2390 = vmatprep.subr.mxu0 0.0
    %2391 = vmatpush1.msra.mxu0 0.0
    %2392 = vmatprep.subr.mxu0 0.0
    %2393 = vmatpush1.msra.mxu0 0.0
    %2394 = vmatprep.subr.mxu0 0.0
    %2395 = vmatpush1.msra.mxu0 0.0
    %2396 = vmatprep.subr.mxu0 0.0
    %2397 = vmatpush1.msra.mxu0 0.0
    %2398 = vmatprep.subr.mxu0 0.0
    %2399 = vmatpush1.msra.mxu0 0.0
    %2400 = vmatprep.subr.mxu0 0.0
    %2401 = vmatpush1.msra.mxu0 0.0
    %2402 = vmatprep.subr.mxu0 0.0
    %2403 = vmatpush1.msra.mxu0 0.0
    %2404 = vmatprep.subr.mxu0 0.0
    %2405 = vmatpush1.msra.mxu0 0.0
    %2406 = vmatprep.subr.mxu0 0.0
    %2407 = vmatpush1.msra.mxu0 0.0
    %2408 = vmatprep.subr.mxu0 0.0
    %2409 = vmatpush1.msra.mxu0 0.0
    %2410 = vmatprep.subr.mxu0 0.0
    %2411 = vmatpush1.msra.mxu0 0.0
    %2412 = vmatprep.subr.mxu0 0.0
    %2413 = vmatpush1.msra.mxu0 0.0
    %2414 = vmatprep.subr.mxu0 0.0
    %2415 = vmatpush1.msra.mxu0 0.0
    %2416 = vmatprep.subr.mxu0 0.0
    %2417 = vmatpush1.msra.mxu0 0.0
    %2418 = vmatprep.subr.mxu0 0.0
    %2419 = vmatpush1.msra.mxu0 0.0
    %2420 = vmatprep.subr.mxu0 0.0
    %2421 = vmatpush1.msra.mxu0 0.0
    %2422 = vmatprep.subr.mxu0 0.0
    %2423 = vmatpush1.msra.mxu0 0.0
    %2424 = vmatprep.subr.mxu0 0.0
    %2425 = vmatpush1.msra.mxu0 0.0
    %2426 = vmatprep.subr.mxu0 0.0
    %2427 = vmatpush1.msra.mxu0 0.0
    %2428 = vmatprep.subr.mxu0 0.0
    %2429 = vmatpush1.msra.mxu0 0.0
    %2430 = vmatprep.subr.mxu0 0.0
    %2431 = vmatpush1.msra.mxu0 0.0
    %2432 = vmatprep.subr.mxu0 0.0
    %2433 = vmatpush1.msra.mxu0 0.0
    %2434 = vmatprep.subr.mxu0 0.0
    %2435 = vmatpush1.msra.mxu0 0.0
    %2436 = vmatprep.subr.mxu0 0.0
    %2437 = vmatpush1.msra.mxu0 0.0
    %2438 = vmatprep.subr.mxu0 0.0
    %2439 = vmatpush1.msra.mxu0 0.0
    %2440 = vmatprep.subr.mxu0 0.0
    %2441 = vmatpush1.msra.mxu0 0.0
    %2442 = vmatprep.subr.mxu0 0.0
    %2443 = vmatpush1.msra.mxu0 0.0
    %2444 = vmatprep.mubr.f32.mxu0 0.0
    %2445 = vmatmul.mubr.f32.gmra.mrb[0].mxu0 %v2378
    %v2446 = vpop.f32.mrb[0].mxu0
    %v2447 = vadd.f32 0.0, %v2446
    %v2448 = vpop.f32.mrb[0].mxu0
    %2449 = vdwg.mxu0
    %v2451 = vsel %vm2157, %v1845, 0
    %2453 = vmatprep.subr.mxu0 0.0
    %2454 = vmatpush1.msra.mxu0 %v93
    %2455 = vmatprep.subr.mxu0 0.0
    %2456 = vmatpush1.msra.mxu0 0.0
    %2457 = vmatprep.subr.mxu0 0.0
    %2458 = vmatpush1.msra.mxu0 0.0
    %2459 = vmatprep.subr.mxu0 0.0
    %2460 = vmatpush1.msra.mxu0 0.0
    %2461 = vmatprep.subr.mxu0 0.0
    %2462 = vmatpush1.msra.mxu0 0.0
    %2463 = vmatprep.subr.mxu0 0.0
    %2464 = vmatpush1.msra.mxu0 0.0
    %2465 = vmatprep.subr.mxu0 0.0
    %2466 = vmatpush1.msra.mxu0 0.0
    %2467 = vmatprep.subr.mxu0 0.0
    %2468 = vmatpush1.msra.mxu0 0.0
    %2469 = vmatprep.subr.mxu0 0.0
    %2470 = vmatpush1.msra.mxu0 0.0
    %2471 = vmatprep.subr.mxu0 0.0
    %2472 = vmatpush1.msra.mxu0 0.0
    %2473 = vmatprep.subr.mxu0 0.0
    %2474 = vmatpush1.msra.mxu0 0.0
    %2475 = vmatprep.subr.mxu0 0.0
    %2476 = vmatpush1.msra.mxu0 0.0
    %2477 = vmatprep.subr.mxu0 0.0
    %2478 = vmatpush1.msra.mxu0 0.0
    %2479 = vmatprep.subr.mxu0 0.0
    %2480 = vmatpush1.msra.mxu0 0.0
    %2481 = vmatprep.subr.mxu0 0.0
    %2482 = vmatpush1.msra.mxu0 0.0
    %2483 = vmatprep.subr.mxu0 0.0
    %2484 = vmatpush1.msra.mxu0 0.0
    %2485 = vmatprep.subr.mxu0 0.0
    %2486 = vmatpush1.msra.mxu0 0.0
    %2487 = vmatprep.subr.mxu0 0.0
    %2488 = vmatpush1.msra.mxu0 0.0
    %2489 = vmatprep.subr.mxu0 0.0
    %2490 = vmatpush1.msra.mxu0 0.0
    %2491 = vmatprep.subr.mxu0 0.0
    %2492 = vmatpush1.msra.mxu0 0.0
    %2493 = vmatprep.subr.mxu0 0.0
    %2494 = vmatpush1.msra.mxu0 0.0
    %2495 = vmatprep.subr.mxu0 0.0
    %2496 = vmatpush1.msra.mxu0 0.0
    %2497 = vmatprep.subr.mxu0 0.0
    %2498 = vmatpush1.msra.mxu0 0.0
    %2499 = vmatprep.subr.mxu0 0.0
    %2500 = vmatpush1.msra.mxu0 0.0
    %2501 = vmatprep.subr.mxu0 0.0
    %2502 = vmatpush1.msra.mxu0 0.0
    %2503 = vmatprep.subr.mxu0 0.0
    %2504 = vmatpush1.msra.mxu0 0.0
    %2505 = vmatprep.subr.mxu0 0.0
    %2506 = vmatpush1.msra.mxu0 0.0
    %2507 = vmatprep.subr.mxu0 0.0
    %2508 = vmatpush1.msra.mxu0 0.0
    %2509 = vmatprep.subr.mxu0 0.0
    %2510 = vmatpush1.msra.mxu0 0.0
    %2511 = vmatprep.subr.mxu0 0.0
    %2512 = vmatpush1.msra.mxu0 0.0
    %2513 = vmatprep.subr.mxu0 0.0
    %2514 = vmatpush1.msra.mxu0 0.0
    %2515 = vmatprep.subr.mxu0 0.0
    %2516 = vmatpush1.msra.mxu0 0.0
    %2517 = vmatprep.mubr.f32.mxu0 0.0
    %2518 = vmatmul.mubr.f32.gmra.mrb[0].mxu0 %v2451
    %v2519 = vpop.f32.mrb[0].mxu0
    %v2520 = vadd.f32 0.0, %v2519
    %v2521 = vpop.f32.mrb[0].mxu0
    %2522 = vdwg.mxu0
    %v2524 = vsel %vm2157, %v1847, 0
    %2526 = vmatprep.subr.mxu0 0.0
    %2527 = vmatpush1.msra.mxu0 %v94
    %2528 = vmatprep.subr.mxu0 0.0
    %2529 = vmatpush1.msra.mxu0 0.0
    %2530 = vmatprep.subr.mxu0 0.0
    %2531 = vmatpush1.msra.mxu0 0.0
    %2532 = vmatprep.subr.mxu0 0.0
    %2533 = vmatpush1.msra.mxu0 0.0
    %2534 = vmatprep.subr.mxu0 0.0
    %2535 = vmatpush1.msra.mxu0 0.0
    %2536 = vmatprep.subr.mxu0 0.0
    %2537 = vmatpush1.msra.mxu0 0.0
    %2538 = vmatprep.subr.mxu0 0.0
    %2539 = vmatpush1.msra.mxu0 0.0
    %2540 = vmatprep.subr.mxu0 0.0
    %2541 = vmatpush1.msra.mxu0 0.0
    %2542 = vmatprep.subr.mxu0 0.0
    %2543 = vmatpush1.msra.mxu0 0.0
    %2544 = vmatprep.subr.mxu0 0.0
    %2545 = vmatpush1.msra.mxu0 0.0
    %2546 = vmatprep.subr.mxu0 0.0
    %2547 = vmatpush1.msra.mxu0 0.0
    %2548 = vmatprep.subr.mxu0 0.0
    %2549 = vmatpush1.msra.mxu0 0.0
    %2550 = vmatprep.subr.mxu0 0.0
    %2551 = vmatpush1.msra.mxu0 0.0
    %2552 = vmatprep.subr.mxu0 0.0
    %2553 = vmatpush1.msra.mxu0 0.0
    %2554 = vmatprep.subr.mxu0 0.0
    %2555 = vmatpush1.msra.mxu0 0.0
    %2556 = vmatprep.subr.mxu0 0.0
    %2557 = vmatpush1.msra.mxu0 0.0
    %2558 = vmatprep.subr.mxu0 0.0
    %2559 = vmatpush1.msra.mxu0 0.0
    %2560 = vmatprep.subr.mxu0 0.0
    %2561 = vmatpush1.msra.mxu0 0.0
    %2562 = vmatprep.subr.mxu0 0.0
    %2563 = vmatpush1.msra.mxu0 0.0
    %2564 = vmatprep.subr.mxu0 0.0
    %2565 = vmatpush1.msra.mxu0 0.0
    %2566 = vmatprep.subr.mxu0 0.0
    %2567 = vmatpush1.msra.mxu0 0.0
    %2568 = vmatprep.subr.mxu0 0.0
    %2569 = vmatpush1.msra.mxu0 0.0
    %2570 = vmatprep.subr.mxu0 0.0
    %2571 = vmatpush1.msra.mxu0 0.0
    %2572 = vmatprep.subr.mxu0 0.0
    %2573 = vmatpush1.msra.mxu0 0.0
    %2574 = vmatprep.subr.mxu0 0.0
    %2575 = vmatpush1.msra.mxu0 0.0
    %2576 = vmatprep.subr.mxu0 0.0
    %2577 = vmatpush1.msra.mxu0 0.0
    %2578 = vmatprep.subr.mxu0 0.0
    %2579 = vmatpush1.msra.mxu0 0.0
    %2580 = vmatprep.subr.mxu0 0.0
    %2581 = vmatpush1.msra.mxu0 0.0
    %2582 = vmatprep.subr.mxu0 0.0
    %2583 = vmatpush1.msra.mxu0 0.0
    %2584 = vmatprep.subr.mxu0 0.0
    %2585 = vmatpush1.msra.mxu0 0.0
    %2586 = vmatprep.subr.mxu0 0.0
    %2587 = vmatpush1.msra.mxu0 0.0
    %2588 = vmatprep.subr.mxu0 0.0
    %2589 = vmatpush1.msra.mxu0 0.0
    %2590 = vmatprep.mubr.f32.mxu0 0.0
    %2591 = vmatmul.mubr.f32.gmra.mrb[0].mxu0 %v2524
    %v2592 = vpop.f32.mrb[0].mxu0
    %v2593 = vadd.f32 0.0, %v2592
    %v2594 = vpop.f32.mrb[0].mxu0
    %2595 = vdwg.mxu0
    %v2597 = vsel %vm2157, %v1849, 0
    %2599 = vmatprep.subr.mxu0 0.0
    %2600 = vmatpush1.msra.mxu0 %v95
    %2601 = vmatprep.subr.mxu0 0.0
    %2602 = vmatpush1.msra.mxu0 0.0
    %2603 = vmatprep.subr.mxu0 0.0
    %2604 = vmatpush1.msra.mxu0 0.0
    %2605 = vmatprep.subr.mxu0 0.0
    %2606 = vmatpush1.msra.mxu0 0.0
    %2607 = vmatprep.subr.mxu0 0.0
    %2608 = vmatpush1.msra.mxu0 0.0
    %2609 = vmatprep.subr.mxu0 0.0
    %2610 = vmatpush1.msra.mxu0 0.0
    %2611 = vmatprep.subr.mxu0 0.0
    %2612 = vmatpush1.msra.mxu0 0.0
    %2613 = vmatprep.subr.mxu0 0.0
    %2614 = vmatpush1.msra.mxu0 0.0
    %2615 = vmatprep.subr.mxu0 0.0
    %2616 = vmatpush1.msra.mxu0 0.0
    %2617 = vmatprep.subr.mxu0 0.0
    %2618 = vmatpush1.msra.mxu0 0.0
    %2619 = vmatprep.subr.mxu0 0.0
    %2620 = vmatpush1.msra.mxu0 0.0
    %2621 = vmatprep.subr.mxu0 0.0
    %2622 = vmatpush1.msra.mxu0 0.0
    %2623 = vmatprep.subr.mxu0 0.0
    %2624 = vmatpush1.msra.mxu0 0.0
    %2625 = vmatprep.subr.mxu0 0.0
    %2626 = vmatpush1.msra.mxu0 0.0
    %2627 = vmatprep.subr.mxu0 0.0
    %2628 = vmatpush1.msra.mxu0 0.0
    %2629 = vmatprep.subr.mxu0 0.0
    %2630 = vmatpush1.msra.mxu0 0.0
    %2631 = vmatprep.subr.mxu0 0.0
    %2632 = vmatpush1.msra.mxu0 0.0
    %2633 = vmatprep.subr.mxu0 0.0
    %2634 = vmatpush1.msra.mxu0 0.0
    %2635 = vmatprep.subr.mxu0 0.0
    %2636 = vmatpush1.msra.mxu0 0.0
    %2637 = vmatprep.subr.mxu0 0.0
    %2638 = vmatpush1.msra.mxu0 0.0
    %2639 = vmatprep.subr.mxu0 0.0
    %2640 = vmatpush1.msra.mxu0 0.0
    %2641 = vmatprep.subr.mxu0 0.0
    %2642 = vmatpush1.msra.mxu0 0.0
    %2643 = vmatprep.subr.mxu0 0.0
    %2644 = vmatpush1.msra.mxu0 0.0
    %2645 = vmatprep.subr.mxu0 0.0
    %2646 = vmatpush1.msra.mxu0 0.0
    %2647 = vmatprep.subr.mxu0 0.0
    %2648 = vmatpush1.msra.mxu0 0.0
    %2649 = vmatprep.subr.mxu0 0.0
    %2650 = vmatpush1.msra.mxu0 0.0
    %2651 = vmatprep.subr.mxu0 0.0
    %2652 = vmatpush1.msra.mxu0 0.0
    %2653 = vmatprep.subr.mxu0 0.0
    %2654 = vmatpush1.msra.mxu0 0.0
    %2655 = vmatprep.subr.mxu0 0.0
    %2656 = vmatpush1.msra.mxu0 0.0
    %2657 = vmatprep.subr.mxu0 0.0
    %2658 = vmatpush1.msra.mxu0 0.0
    %2659 = vmatprep.subr.mxu0 0.0
    %2660 = vmatpush1.msra.mxu0 0.0
    %2661 = vmatprep.subr.mxu0 0.0
    %2662 = vmatpush1.msra.mxu0 0.0
    %2663 = vmatprep.mubr.f32.mxu0 0.0
    %2664 = vmatmul.mubr.f32.gmra.mrb[0].mxu0 %v2597
    %v2665 = vpop.f32.mrb[0].mxu0
    %v2666 = vadd.f32 0.0, %v2665
    %v2667 = vpop.f32.mrb[0].mxu0
    %2668 = vdwg.mxu0
    %v2670 = vsel %vm2157, %v1851, 0
    %2672 = vmatprep.subr.mxu0 0.0
    %2673 = vmatpush1.msra.mxu0 %v96
    %2674 = vmatprep.subr.mxu0 0.0
    %2675 = vmatpush1.msra.mxu0 0.0
    %2676 = vmatprep.subr.mxu0 0.0
    %2677 = vmatpush1.msra.mxu0 0.0
    %2678 = vmatprep.subr.mxu0 0.0
    %2679 = vmatpush1.msra.mxu0 0.0
    %2680 = vmatprep.subr.mxu0 0.0
    %2681 = vmatpush1.msra.mxu0 0.0
    %2682 = vmatprep.subr.mxu0 0.0
    %2683 = vmatpush1.msra.mxu0 0.0
    %2684 = vmatprep.subr.mxu0 0.0
    %2685 = vmatpush1.msra.mxu0 0.0
    %2686 = vmatprep.subr.mxu0 0.0
    %2687 = vmatpush1.msra.mxu0 0.0
    %2688 = vmatprep.subr.mxu0 0.0
    %2689 = vmatpush1.msra.mxu0 0.0
    %2690 = vmatprep.subr.mxu0 0.0
    %2691 = vmatpush1.msra.mxu0 0.0
    %2692 = vmatprep.subr.mxu0 0.0
    %2693 = vmatpush1.msra.mxu0 0.0
    %2694 = vmatprep.subr.mxu0 0.0
    %2695 = vmatpush1.msra.mxu0 0.0
    %2696 = vmatprep.subr.mxu0 0.0
    %2697 = vmatpush1.msra.mxu0 0.0
    %2698 = vmatprep.subr.mxu0 0.0
    %2699 = vmatpush1.msra.mxu0 0.0
    %2700 = vmatprep.subr.mxu0 0.0
    %2701 = vmatpush1.msra.mxu0 0.0
    %2702 = vmatprep.subr.mxu0 0.0
    %2703 = vmatpush1.msra.mxu0 0.0
    %2704 = vmatprep.subr.mxu0 0.0
    %2705 = vmatpush1.msra.mxu0 0.0
    %2706 = vmatprep.subr.mxu0 0.0
    %2707 = vmatpush1.msra.mxu0 0.0
    %2708 = vmatprep.subr.mxu0 0.0
    %2709 = vmatpush1.msra.mxu0 0.0
    %2710 = vmatprep.subr.mxu0 0.0
    %2711 = vmatpush1.msra.mxu0 0.0
    %2712 = vmatprep.subr.mxu0 0.0
    %2713 = vmatpush1.msra.mxu0 0.0
    %2714 = vmatprep.subr.mxu0 0.0
    %2715 = vmatpush1.msra.mxu0 0.0
    %2716 = vmatprep.subr.mxu0 0.0
    %2717 = vmatpush1.msra.mxu0 0.0
    %2718 = vmatprep.subr.mxu0 0.0
    %2719 = vmatpush1.msra.mxu0 0.0
    %2720 = vmatprep.subr.mxu0 0.0
    %2721 = vmatpush1.msra.mxu0 0.0
    %2722 = vmatprep.subr.mxu0 0.0
    %2723 = vmatpush1.msra.mxu0 0.0
    %2724 = vmatprep.subr.mxu0 0.0
    %2725 = vmatpush1.msra.mxu0 0.0
    %2726 = vmatprep.subr.mxu0 0.0
    %2727 = vmatpush1.msra.mxu0 0.0
    %2728 = vmatprep.subr.mxu0 0.0
    %2729 = vmatpush1.msra.mxu0 0.0
    %2730 = vmatprep.subr.mxu0 0.0
    %2731 = vmatpush1.msra.mxu0 0.0
    %2732 = vmatprep.subr.mxu0 0.0
    %2733 = vmatpush1.msra.mxu0 0.0
    %2734 = vmatprep.subr.mxu0 0.0
    %2735 = vmatpush1.msra.mxu0 0.0
    %2736 = vmatprep.mubr.f32.mxu0 0.0
    %2737 = vmatmul.mubr.f32.gmra.mrb[0].mxu0 %v2670
    %v2738 = vpop.f32.mrb[0].mxu0
    %v2739 = vadd.f32 0.0, %v2738
    %v2740 = vpop.f32.mrb[0].mxu0
    %2741 = vdwg.mxu0
    %v2743 = vsel %vm2157, %v1853, 0
    %2745 = vmatprep.subr.mxu0 0.0
    %2746 = vmatpush1.msra.mxu0 %v97
    %2747 = vmatprep.subr.mxu0 0.0
    %2748 = vmatpush1.msra.mxu0 0.0
    %2749 = vmatprep.subr.mxu0 0.0
    %2750 = vmatpush1.msra.mxu0 0.0
    %2751 = vmatprep.subr.mxu0 0.0
    %2752 = vmatpush1.msra.mxu0 0.0
    %2753 = vmatprep.subr.mxu0 0.0
    %2754 = vmatpush1.msra.mxu0 0.0
    %2755 = vmatprep.subr.mxu0 0.0
    %2756 = vmatpush1.msra.mxu0 0.0
    %2757 = vmatprep.subr.mxu0 0.0
    %2758 = vmatpush1.msra.mxu0 0.0
    %2759 = vmatprep.subr.mxu0 0.0
    %2760 = vmatpush1.msra.mxu0 0.0
    %2761 = vmatprep.subr.mxu0 0.0
    %2762 = vmatpush1.msra.mxu0 0.0
    %2763 = vmatprep.subr.mxu0 0.0
    %2764 = vmatpush1.msra.mxu0 0.0
    %2765 = vmatprep.subr.mxu0 0.0
    %2766 = vmatpush1.msra.mxu0 0.0
    %2767 = vmatprep.subr.mxu0 0.0
    %2768 = vmatpush1.msra.mxu0 0.0
    %2769 = vmatprep.subr.mxu0 0.0
    %2770 = vmatpush1.msra.mxu0 0.0
    %2771 = vmatprep.subr.mxu0 0.0
    %2772 = vmatpush1.msra.mxu0 0.0
    %2773 = vmatprep.subr.mxu0 0.0
    %2774 = vmatpush1.msra.mxu0 0.0
    %2775 = vmatprep.subr.mxu0 0.0
    %2776 = vmatpush1.msra.mxu0 0.0
    %2777 = vmatprep.subr.mxu0 0.0
    %2778 = vmatpush1.msra.mxu0 0.0
    %2779 = vmatprep.subr.mxu0 0.0
    %2780 = vmatpush1.msra.mxu0 0.0
    %2781 = vmatprep.subr.mxu0 0.0
    %2782 = vmatpush1.msra.mxu0 0.0
    %2783 = vmatprep.subr.mxu0 0.0
    %2784 = vmatpush1.msra.mxu0 0.0
    %2785 = vmatprep.subr.mxu0 0.0
    %2786 = vmatpush1.msra.mxu0 0.0
    %2787 = vmatprep.subr.mxu0 0.0
    %2788 = vmatpush1.msra.mxu0 0.0
    %2789 = vmatprep.subr.mxu0 0.0
    %2790 = vmatpush1.msra.mxu0 0.0
    %2791 = vmatprep.subr.mxu0 0.0
    %2792 = vmatpush1.msra.mxu0 0.0
    %2793 = vmatprep.subr.mxu0 0.0
    %2794 = vmatpush1.msra.mxu0 0.0
    %2795 = vmatprep.subr.mxu0 0.0
    %2796 = vmatpush1.msra.mxu0 0.0
    %2797 = vmatprep.subr.mxu0 0.0
    %2798 = vmatpush1.msra.mxu0 0.0
    %2799 = vmatprep.subr.mxu0 0.0
    %2800 = vmatpush1.msra.mxu0 0.0
    %2801 = vmatprep.subr.mxu0 0.0
    %2802 = vmatpush1.msra.mxu0 0.0
    %2803 = vmatprep.subr.mxu0 0.0
    %2804 = vmatpush1.msra.mxu0 0.0
    %2805 = vmatprep.subr.mxu0 0.0
    %2806 = vmatpush1.msra.mxu0 0.0
    %2807 = vmatprep.subr.mxu0 0.0
    %2808 = vmatpush1.msra.mxu0 0.0
    %2809 = vmatprep.mubr.f32.mxu0 0.0
    %2810 = vmatmul.mubr.f32.gmra.mrb[0].mxu0 %v2743
    %v2811 = vpop.f32.mrb[0].mxu0
    %v2812 = vadd.f32 0.0, %v2811
    %v2813 = vpop.f32.mrb[0].mxu0
    %2814 = vdwg.mxu0
    %v2816 = vsel %vm2157, %v1855, 0
    %2818 = vmatprep.subr.mxu0 0.0
    %2819 = vmatpush1.msra.mxu0 %v98
    %2820 = vmatprep.subr.mxu0 0.0
    %2821 = vmatpush1.msra.mxu0 0.0
    %2822 = vmatprep.subr.mxu0 0.0
    %2823 = vmatpush1.msra.mxu0 0.0
    %2824 = vmatprep.subr.mxu0 0.0
    %2825 = vmatpush1.msra.mxu0 0.0
    %2826 = vmatprep.subr.mxu0 0.0
    %2827 = vmatpush1.msra.mxu0 0.0
    %2828 = vmatprep.subr.mxu0 0.0
    %2829 = vmatpush1.msra.mxu0 0.0
    %2830 = vmatprep.subr.mxu0 0.0
    %2831 = vmatpush1.msra.mxu0 0.0
    %2832 = vmatprep.subr.mxu0 0.0
    %2833 = vmatpush1.msra.mxu0 0.0
    %2834 = vmatprep.subr.mxu0 0.0
    %2835 = vmatpush1.msra.mxu0 0.0
    %2836 = vmatprep.subr.mxu0 0.0
    %2837 = vmatpush1.msra.mxu0 0.0
    %2838 = vmatprep.subr.mxu0 0.0
    %2839 = vmatpush1.msra.mxu0 0.0
    %2840 = vmatprep.subr.mxu0 0.0
    %2841 = vmatpush1.msra.mxu0 0.0
    %2842 = vmatprep.subr.mxu0 0.0
    %2843 = vmatpush1.msra.mxu0 0.0
    %2844 = vmatprep.subr.mxu0 0.0
    %2845 = vmatpush1.msra.mxu0 0.0
    %2846 = vmatprep.subr.mxu0 0.0
    %2847 = vmatpush1.msra.mxu0 0.0
    %2848 = vmatprep.subr.mxu0 0.0
    %2849 = vmatpush1.msra.mxu0 0.0
    %2850 = vmatprep.subr.mxu0 0.0
    %2851 = vmatpush1.msra.mxu0 0.0
    %2852 = vmatprep.subr.mxu0 0.0
    %2853 = vmatpush1.msra.mxu0 0.0
    %2854 = vmatprep.subr.mxu0 0.0
    %2855 = vmatpush1.msra.mxu0 0.0
    %2856 = vmatprep.subr.mxu0 0.0
    %2857 = vmatpush1.msra.mxu0 0.0
    %2858 = vmatprep.subr.mxu0 0.0
    %2859 = vmatpush1.msra.mxu0 0.0
    %2860 = vmatprep.subr.mxu0 0.0
    %2861 = vmatpush1.msra.mxu0 0.0
    %2862 = vmatprep.subr.mxu0 0.0
    %2863 = vmatpush1.msra.mxu0 0.0
    %2864 = vmatprep.subr.mxu0 0.0
    %2865 = vmatpush1.msra.mxu0 0.0
    %2866 = vmatprep.subr.mxu0 0.0
    %2867 = vmatpush1.msra.mxu0 0.0
    %2868 = vmatprep.subr.mxu0 0.0
    %2869 = vmatpush1.msra.mxu0 0.0
    %2870 = vmatprep.subr.mxu0 0.0
    %2871 = vmatpush1.msra.mxu0 0.0
    %2872 = vmatprep.subr.mxu0 0.0
    %2873 = vmatpush1.msra.mxu0 0.0
    %2874 = vmatprep.subr.mxu0 0.0
    %2875 = vmatpush1.msra.mxu0 0.0
    %2876 = vmatprep.subr.mxu0 0.0
    %2877 = vmatpush1.msra.mxu0 0.0
    %2878 = vmatprep.subr.mxu0 0.0
    %2879 = vmatpush1.msra.mxu0 0.0
    %2880 = vmatprep.subr.mxu0 0.0
    %2881 = vmatpush1.msra.mxu0 0.0
    %2882 = vmatprep.mubr.f32.mxu0 0.0
    %2883 = vmatmul.mubr.f32.gmra.mrb[0].mxu0 %v2816
    %v2884 = vpop.f32.mrb[0].mxu0
    %v2885 = vadd.f32 0.0, %v2884
    %v2886 = vpop.f32.mrb[0].mxu0
    %2887 = vdwg.mxu0
    %v2889 = vsel %vm2157, %v1857, 0
    %2891 = vmatprep.subr.mxu0 0.0
    %2892 = vmatpush1.msra.mxu0 %v99
    %2893 = vmatprep.subr.mxu0 0.0
    %2894 = vmatpush1.msra.mxu0 0.0
    %2895 = vmatprep.subr.mxu0 0.0
    %2896 = vmatpush1.msra.mxu0 0.0
    %2897 = vmatprep.subr.mxu0 0.0
    %2898 = vmatpush1.msra.mxu0 0.0
    %2899 = vmatprep.subr.mxu0 0.0
    %2900 = vmatpush1.msra.mxu0 0.0
    %2901 = vmatprep.subr.mxu0 0.0
    %2902 = vmatpush1.msra.mxu0 0.0
    %2903 = vmatprep.subr.mxu0 0.0
    %2904 = vmatpush1.msra.mxu0 0.0
    %2905 = vmatprep.subr.mxu0 0.0
    %2906 = vmatpush1.msra.mxu0 0.0
    %2907 = vmatprep.subr.mxu0 0.0
    %2908 = vmatpush1.msra.mxu0 0.0
    %2909 = vmatprep.subr.mxu0 0.0
    %2910 = vmatpush1.msra.mxu0 0.0
    %2911 = vmatprep.subr.mxu0 0.0
    %2912 = vmatpush1.msra.mxu0 0.0
    %2913 = vmatprep.subr.mxu0 0.0
    %2914 = vmatpush1.msra.mxu0 0.0
    %2915 = vmatprep.subr.mxu0 0.0
    %2916 = vmatpush1.msra.mxu0 0.0
    %2917 = vmatprep.subr.mxu0 0.0
    %2918 = vmatpush1.msra.mxu0 0.0
    %2919 = vmatprep.subr.mxu0 0.0
    %2920 = vmatpush1.msra.mxu0 0.0
    %2921 = vmatprep.subr.mxu0 0.0
    %2922 = vmatpush1.msra.mxu0 0.0
    %2923 = vmatprep.subr.mxu0 0.0
    %2924 = vmatpush1.msra.mxu0 0.0
    %2925 = vmatprep.subr.mxu0 0.0
    %2926 = vmatpush1.msra.mxu0 0.0
    %2927 = vmatprep.subr.mxu0 0.0
    %2928 = vmatpush1.msra.mxu0 0.0
    %2929 = vmatprep.subr.mxu0 0.0
    %2930 = vmatpush1.msra.mxu0 0.0
    %2931 = vmatprep.subr.mxu0 0.0
    %2932 = vmatpush1.msra.mxu0 0.0
    %2933 = vmatprep.subr.mxu0 0.0
    %2934 = vmatpush1.msra.mxu0 0.0
    %2935 = vmatprep.subr.mxu0 0.0
    %2936 = vmatpush1.msra.mxu0 0.0
    %2937 = vmatprep.subr.mxu0 0.0
    %2938 = vmatpush1.msra.mxu0 0.0
    %2939 = vmatprep.subr.mxu0 0.0
    %2940 = vmatpush1.msra.mxu0 0.0
    %2941 = vmatprep.subr.mxu0 0.0
    %2942 = vmatpush1.msra.mxu0 0.0
    %2943 = vmatprep.subr.mxu0 0.0
    %2944 = vmatpush1.msra.mxu0 0.0
    %2945 = vmatprep.subr.mxu0 0.0
    %2946 = vmatpush1.msra.mxu0 0.0
    %2947 = vmatprep.subr.mxu0 0.0
    %2948 = vmatpush1.msra.mxu0 0.0
    %2949 = vmatprep.subr.mxu0 0.0
    %2950 = vmatpush1.msra.mxu0 0.0
    %2951 = vmatprep.subr.mxu0 0.0
    %2952 = vmatpush1.msra.mxu0 0.0
    %2953 = vmatprep.subr.mxu0 0.0
    %2954 = vmatpush1.msra.mxu0 0.0
    %2955 = vmatprep.mubr.f32.mxu0 0.0
    %2956 = vmatmul.mubr.f32.gmra.mrb[0].mxu0 %v2889
    %v2957 = vpop.f32.mrb[0].mxu0
    %v2958 = vadd.f32 0.0, %v2957
    %v2959 = vpop.f32.mrb[0].mxu0
    %2960 = vdwg.mxu0
    %v2962 = vsel %vm2157, %v1859, 0
    %2964 = vmatprep.subr.mxu0 0.0
    %2965 = vmatpush1.msra.mxu0 %v100
    %2966 = vmatprep.subr.mxu0 0.0
    %2967 = vmatpush1.msra.mxu0 0.0
    %2968 = vmatprep.subr.mxu0 0.0
    %2969 = vmatpush1.msra.mxu0 0.0
    %2970 = vmatprep.subr.mxu0 0.0
    %2971 = vmatpush1.msra.mxu0 0.0
    %2972 = vmatprep.subr.mxu0 0.0
    %2973 = vmatpush1.msra.mxu0 0.0
    %2974 = vmatprep.subr.mxu0 0.0
    %2975 = vmatpush1.msra.mxu0 0.0
    %2976 = vmatprep.subr.mxu0 0.0
    %2977 = vmatpush1.msra.mxu0 0.0
    %2978 = vmatprep.subr.mxu0 0.0
    %2979 = vmatpush1.msra.mxu0 0.0
    %2980 = vmatprep.subr.mxu0 0.0
    %2981 = vmatpush1.msra.mxu0 0.0
    %2982 = vmatprep.subr.mxu0 0.0
    %2983 = vmatpush1.msra.mxu0 0.0
    %2984 = vmatprep.subr.mxu0 0.0
    %2985 = vmatpush1.msra.mxu0 0.0
    %2986 = vmatprep.subr.mxu0 0.0
    %2987 = vmatpush1.msra.mxu0 0.0
    %2988 = vmatprep.subr.mxu0 0.0
    %2989 = vmatpush1.msra.mxu0 0.0
    %2990 = vmatprep.subr.mxu0 0.0
    %2991 = vmatpush1.msra.mxu0 0.0
    %2992 = vmatprep.subr.mxu0 0.0
    %2993 = vmatpush1.msra.mxu0 0.0
    %2994 = vmatprep.subr.mxu0 0.0
    %2995 = vmatpush1.msra.mxu0 0.0
    %2996 = vmatprep.subr.mxu0 0.0
    %2997 = vmatpush1.msra.mxu0 0.0
    %2998 = vmatprep.subr.mxu0 0.0
    %2999 = vmatpush1.msra.mxu0 0.0
    %3000 = vmatprep.subr.mxu0 0.0
    %3001 = vmatpush1.msra.mxu0 0.0
    %3002 = vmatprep.subr.mxu0 0.0
    %3003 = vmatpush1.msra.mxu0 0.0
    %3004 = vmatprep.subr.mxu0 0.0
    %3005 = vmatpush1.msra.mxu0 0.0
    %3006 = vmatprep.subr.mxu0 0.0
    %3007 = vmatpush1.msra.mxu0 0.0
    %3008 = vmatprep.subr.mxu0 0.0
    %3009 = vmatpush1.msra.mxu0 0.0
    %3010 = vmatprep.subr.mxu0 0.0
    %3011 = vmatpush1.msra.mxu0 0.0
    %3012 = vmatprep.subr.mxu0 0.0
    %3013 = vmatpush1.msra.mxu0 0.0
    %3014 = vmatprep.subr.mxu0 0.0
    %3015 = vmatpush1.msra.mxu0 0.0
    %3016 = vmatprep.subr.mxu0 0.0
    %3017 = vmatpush1.msra.mxu0 0.0
    %3018 = vmatprep.subr.mxu0 0.0
    %3019 = vmatpush1.msra.mxu0 0.0
    %3020 = vmatprep.subr.mxu0 0.0
    %3021 = vmatpush1.msra.mxu0 0.0
    %3022 = vmatprep.subr.mxu0 0.0
    %3023 = vmatpush1.msra.mxu0 0.0
    %3024 = vmatprep.subr.mxu0 0.0
    %3025 = vmatpush1.msra.mxu0 0.0
    %3026 = vmatprep.subr.mxu0 0.0
    %3027 = vmatpush1.msra.mxu0 0.0
    %3028 = vmatprep.mubr.f32.mxu0 0.0
    %3029 = vmatmul.mubr.f32.gmra.mrb[0].mxu0 %v2962
    %v3030 = vpop.f32.mrb[0].mxu0
    %v3031 = vadd.f32 0.0, %v3030
    %v3032 = vpop.f32.mrb[0].mxu0
    %3033 = vdwg.mxu0
    %v3035 = vsel %vm2157, %v1861, 0
    %3037 = vmatprep.subr.mxu0 0.0
    %3038 = vmatpush1.msra.mxu0 %v101
    %3039 = vmatprep.subr.mxu0 0.0
    %3040 = vmatpush1.msra.mxu0 0.0
    %3041 = vmatprep.subr.mxu0 0.0
    %3042 = vmatpush1.msra.mxu0 0.0
    %3043 = vmatprep.subr.mxu0 0.0
    %3044 = vmatpush1.msra.mxu0 0.0
    %3045 = vmatprep.subr.mxu0 0.0
    %3046 = vmatpush1.msra.mxu0 0.0
    %3047 = vmatprep.subr.mxu0 0.0
    %3048 = vmatpush1.msra.mxu0 0.0
    %3049 = vmatprep.subr.mxu0 0.0
    %3050 = vmatpush1.msra.mxu0 0.0
    %3051 = vmatprep.subr.mxu0 0.0
    %3052 = vmatpush1.msra.mxu0 0.0
    %3053 = vmatprep.subr.mxu0 0.0
    %3054 = vmatpush1.msra.mxu0 0.0
    %3055 = vmatprep.subr.mxu0 0.0
    %3056 = vmatpush1.msra.mxu0 0.0
    %3057 = vmatprep.subr.mxu0 0.0
    %3058 = vmatpush1.msra.mxu0 0.0
    %3059 = vmatprep.subr.mxu0 0.0
    %3060 = vmatpush1.msra.mxu0 0.0
    %3061 = vmatprep.subr.mxu0 0.0
    %3062 = vmatpush1.msra.mxu0 0.0
    %3063 = vmatprep.subr.mxu0 0.0
    %3064 = vmatpush1.msra.mxu0 0.0
    %3065 = vmatprep.subr.mxu0 0.0
    %3066 = vmatpush1.msra.mxu0 0.0
    %3067 = vmatprep.subr.mxu0 0.0
    %3068 = vmatpush1.msra.mxu0 0.0
    %3069 = vmatprep.subr.mxu0 0.0
    %3070 = vmatpush1.msra.mxu0 0.0
    %3071 = vmatprep.subr.mxu0 0.0
    %3072 = vmatpush1.msra.mxu0 0.0
    %3073 = vmatprep.subr.mxu0 0.0
    %3074 = vmatpush1.msra.mxu0 0.0
    %3075 = vmatprep.subr.mxu0 0.0
    %3076 = vmatpush1.msra.mxu0 0.0
    %3077 = vmatprep.subr.mxu0 0.0
    %3078 = vmatpush1.msra.mxu0 0.0
    %3079 = vmatprep.subr.mxu0 0.0
    %3080 = vmatpush1.msra.mxu0 0.0
    %3081 = vmatprep.subr.mxu0 0.0
    %3082 = vmatpush1.msra.mxu0 0.0
    %3083 = vmatprep.subr.mxu0 0.0
    %3084 = vmatpush1.msra.mxu0 0.0
    %3085 = vmatprep.subr.mxu0 0.0
    %3086 = vmatpush1.msra.mxu0 0.0
    %3087 = vmatprep.subr.mxu0 0.0
    %3088 = vmatpush1.msra.mxu0 0.0
    %3089 = vmatprep.subr.mxu0 0.0
    %3090 = vmatpush1.msra.mxu0 0.0
    %3091 = vmatprep.subr.mxu0 0.0
    %3092 = vmatpush1.msra.mxu0 0.0
    %3093 = vmatprep.subr.mxu0 0.0
    %3094 = vmatpush1.msra.mxu0 0.0
    %3095 = vmatprep.subr.mxu0 0.0
    %3096 = vmatpush1.msra.mxu0 0.0
    %3097 = vmatprep.subr.mxu0 0.0
    %3098 = vmatpush1.msra.mxu0 0.0
    %3099 = vmatprep.subr.mxu0 0.0
    %3100 = vmatpush1.msra.mxu0 0.0
    %3101 = vmatprep.mubr.f32.mxu0 0.0
    %3102 = vmatmul.mubr.f32.gmra.mrb[0].mxu0 %v3035
    %v3103 = vpop.f32.mrb[0].mxu0
    %v3104 = vadd.f32 0.0, %v3103
    %v3105 = vpop.f32.mrb[0].mxu0
    %3106 = vdwg.mxu0
    %v3108 = vsel %vm2157, %v1863, 0
    %3110 = vmatprep.subr.mxu0 0.0
    %3111 = vmatpush1.msra.mxu0 %v102
    %3112 = vmatprep.subr.mxu0 0.0
    %3113 = vmatpush1.msra.mxu0 0.0
    %3114 = vmatprep.subr.mxu0 0.0
    %3115 = vmatpush1.msra.mxu0 0.0
    %3116 = vmatprep.subr.mxu0 0.0
    %3117 = vmatpush1.msra.mxu0 0.0
    %3118 = vmatprep.subr.mxu0 0.0
    %3119 = vmatpush1.msra.mxu0 0.0
    %3120 = vmatprep.subr.mxu0 0.0
    %3121 = vmatpush1.msra.mxu0 0.0
    %3122 = vmatprep.subr.mxu0 0.0
    %3123 = vmatpush1.msra.mxu0 0.0
    %3124 = vmatprep.subr.mxu0 0.0
    %3125 = vmatpush1.msra.mxu0 0.0
    %3126 = vmatprep.subr.mxu0 0.0
    %3127 = vmatpush1.msra.mxu0 0.0
    %3128 = vmatprep.subr.mxu0 0.0
    %3129 = vmatpush1.msra.mxu0 0.0
    %3130 = vmatprep.subr.mxu0 0.0
    %3131 = vmatpush1.msra.mxu0 0.0
    %3132 = vmatprep.subr.mxu0 0.0
    %3133 = vmatpush1.msra.mxu0 0.0
    %3134 = vmatprep.subr.mxu0 0.0
    %3135 = vmatpush1.msra.mxu0 0.0
    %3136 = vmatprep.subr.mxu0 0.0
    %3137 = vmatpush1.msra.mxu0 0.0
    %3138 = vmatprep.subr.mxu0 0.0
    %3139 = vmatpush1.msra.mxu0 0.0
    %3140 = vmatprep.subr.mxu0 0.0
    %3141 = vmatpush1.msra.mxu0 0.0
    %3142 = vmatprep.subr.mxu0 0.0
    %3143 = vmatpush1.msra.mxu0 0.0
    %3144 = vmatprep.subr.mxu0 0.0
    %3145 = vmatpush1.msra.mxu0 0.0
    %3146 = vmatprep.subr.mxu0 0.0
    %3147 = vmatpush1.msra.mxu0 0.0
    %3148 = vmatprep.subr.mxu0 0.0
    %3149 = vmatpush1.msra.mxu0 0.0
    %3150 = vmatprep.subr.mxu0 0.0
    %3151 = vmatpush1.msra.mxu0 0.0
    %3152 = vmatprep.subr.mxu0 0.0
    %3153 = vmatpush1.msra.mxu0 0.0
    %3154 = vmatprep.subr.mxu0 0.0
    %3155 = vmatpush1.msra.mxu0 0.0
    %3156 = vmatprep.subr.mxu0 0.0
    %3157 = vmatpush1.msra.mxu0 0.0
    %3158 = vmatprep.subr.mxu0 0.0
    %3159 = vmatpush1.msra.mxu0 0.0
    %3160 = vmatprep.subr.mxu0 0.0
    %3161 = vmatpush1.msra.mxu0 0.0
    %3162 = vmatprep.subr.mxu0 0.0
    %3163 = vmatpush1.msra.mxu0 0.0
    %3164 = vmatprep.subr.mxu0 0.0
    %3165 = vmatpush1.msra.mxu0 0.0
    %3166 = vmatprep.subr.mxu0 0.0
    %3167 = vmatpush1.msra.mxu0 0.0
    %3168 = vmatprep.subr.mxu0 0.0
    %3169 = vmatpush1.msra.mxu0 0.0
    %3170 = vmatprep.subr.mxu0 0.0
    %3171 = vmatpush1.msra.mxu0 0.0
    %3172 = vmatprep.subr.mxu0 0.0
    %3173 = vmatpush1.msra.mxu0 0.0
    %3174 = vmatprep.mubr.f32.mxu0 0.0
    %3175 = vmatmul.mubr.f32.gmra.mrb[0].mxu0 %v3108
    %v3176 = vpop.f32.mrb[0].mxu0
    %v3177 = vadd.f32 0.0, %v3176
    %v3178 = vpop.f32.mrb[0].mxu0
    %3179 = vdwg.mxu0
    %v3181 = vsel %vm2157, %v1865, 0
    %3183 = vmatprep.subr.mxu0 0.0
    %3184 = vmatpush1.msra.mxu0 %v103
    %3185 = vmatprep.subr.mxu0 0.0
    %3186 = vmatpush1.msra.mxu0 0.0
    %3187 = vmatprep.subr.mxu0 0.0
    %3188 = vmatpush1.msra.mxu0 0.0
    %3189 = vmatprep.subr.mxu0 0.0
    %3190 = vmatpush1.msra.mxu0 0.0
    %3191 = vmatprep.subr.mxu0 0.0
    %3192 = vmatpush1.msra.mxu0 0.0
    %3193 = vmatprep.subr.mxu0 0.0
    %3194 = vmatpush1.msra.mxu0 0.0
    %3195 = vmatprep.subr.mxu0 0.0
    %3196 = vmatpush1.msra.mxu0 0.0
    %3197 = vmatprep.subr.mxu0 0.0
    %3198 = vmatpush1.msra.mxu0 0.0
    %3199 = vmatprep.subr.mxu0 0.0
    %3200 = vmatpush1.msra.mxu0 0.0
    %3201 = vmatprep.subr.mxu0 0.0
    %3202 = vmatpush1.msra.mxu0 0.0
    %3203 = vmatprep.subr.mxu0 0.0
    %3204 = vmatpush1.msra.mxu0 0.0
    %3205 = vmatprep.subr.mxu0 0.0
    %3206 = vmatpush1.msra.mxu0 0.0
    %3207 = vmatprep.subr.mxu0 0.0
    %3208 = vmatpush1.msra.mxu0 0.0
    %3209 = vmatprep.subr.mxu0 0.0
    %3210 = vmatpush1.msra.mxu0 0.0
    %3211 = vmatprep.subr.mxu0 0.0
    %3212 = vmatpush1.msra.mxu0 0.0
    %3213 = vmatprep.subr.mxu0 0.0
    %3214 = vmatpush1.msra.mxu0 0.0
    %3215 = vmatprep.subr.mxu0 0.0
    %3216 = vmatpush1.msra.mxu0 0.0
    %3217 = vmatprep.subr.mxu0 0.0
    %3218 = vmatpush1.msra.mxu0 0.0
    %3219 = vmatprep.subr.mxu0 0.0
    %3220 = vmatpush1.msra.mxu0 0.0
    %3221 = vmatprep.subr.mxu0 0.0
    %3222 = vmatpush1.msra.mxu0 0.0
    %3223 = vmatprep.subr.mxu0 0.0
    %3224 = vmatpush1.msra.mxu0 0.0
    %3225 = vmatprep.subr.mxu0 0.0
    %3226 = vmatpush1.msra.mxu0 0.0
    %3227 = vmatprep.subr.mxu0 0.0
    %3228 = vmatpush1.msra.mxu0 0.0
    %3229 = vmatprep.subr.mxu0 0.0
    %3230 = vmatpush1.msra.mxu0 0.0
    %3231 = vmatprep.subr.mxu0 0.0
    %3232 = vmatpush1.msra.mxu0 0.0
    %3233 = vmatprep.subr.mxu0 0.0
    %3234 = vmatpush1.msra.mxu0 0.0
    %3235 = vmatprep.subr.mxu0 0.0
    %3236 = vmatpush1.msra.mxu0 0.0
    %3237 = vmatprep.subr.mxu0 0.0
    %3238 = vmatpush1.msra.mxu0 0.0
    %3239 = vmatprep.subr.mxu0 0.0
    %3240 = vmatpush1.msra.mxu0 0.0
    %3241 = vmatprep.subr.mxu0 0.0
    %3242 = vmatpush1.msra.mxu0 0.0
    %3243 = vmatprep.subr.mxu0 0.0
    %3244 = vmatpush1.msra.mxu0 0.0
    %3245 = vmatprep.subr.mxu0 0.0
    %3246 = vmatpush1.msra.mxu0 0.0
    %3247 = vmatprep.mubr.f32.mxu0 0.0
    %3248 = vmatmul.mubr.f32.gmra.mrb[0].mxu0 %v3181
    %v3249 = vpop.f32.mrb[0].mxu0
    %v3250 = vadd.f32 0.0, %v3249
    %v3251 = vpop.f32.mrb[0].mxu0
    %3252 = vdwg.mxu0
    %v3254 = vsel %vm2157, %v1867, 0
    %3256 = vmatprep.subr.mxu0 0.0
    %3257 = vmatpush1.msra.mxu0 %v104
    %3258 = vmatprep.subr.mxu0 0.0
    %3259 = vmatpush1.msra.mxu0 0.0
    %3260 = vmatprep.subr.mxu0 0.0
    %3261 = vmatpush1.msra.mxu0 0.0
    %3262 = vmatprep.subr.mxu0 0.0
    %3263 = vmatpush1.msra.mxu0 0.0
    %3264 = vmatprep.subr.mxu0 0.0
    %3265 = vmatpush1.msra.mxu0 0.0
    %3266 = vmatprep.subr.mxu0 0.0
    %3267 = vmatpush1.msra.mxu0 0.0
    %3268 = vmatprep.subr.mxu0 0.0
    %3269 = vmatpush1.msra.mxu0 0.0
    %3270 = vmatprep.subr.mxu0 0.0
    %3271 = vmatpush1.msra.mxu0 0.0
    %3272 = vmatprep.subr.mxu0 0.0
    %3273 = vmatpush1.msra.mxu0 0.0
    %3274 = vmatprep.subr.mxu0 0.0
    %3275 = vmatpush1.msra.mxu0 0.0
    %3276 = vmatprep.subr.mxu0 0.0
    %3277 = vmatpush1.msra.mxu0 0.0
    %3278 = vmatprep.subr.mxu0 0.0
    %3279 = vmatpush1.msra.mxu0 0.0
    %3280 = vmatprep.subr.mxu0 0.0
    %3281 = vmatpush1.msra.mxu0 0.0
    %3282 = vmatprep.subr.mxu0 0.0
    %3283 = vmatpush1.msra.mxu0 0.0
    %3284 = vmatprep.subr.mxu0 0.0
    %3285 = vmatpush1.msra.mxu0 0.0
    %3286 = vmatprep.subr.mxu0 0.0
    %3287 = vmatpush1.msra.mxu0 0.0
    %3288 = vmatprep.subr.mxu0 0.0
    %3289 = vmatpush1.msra.mxu0 0.0
    %3290 = vmatprep.subr.mxu0 0.0
    %3291 = vmatpush1.msra.mxu0 0.0
    %3292 = vmatprep.subr.mxu0 0.0
    %3293 = vmatpush1.msra.mxu0 0.0
    %3294 = vmatprep.subr.mxu0 0.0
    %3295 = vmatpush1.msra.mxu0 0.0
    %3296 = vmatprep.subr.mxu0 0.0
    %3297 = vmatpush1.msra.mxu0 0.0
    %3298 = vmatprep.subr.mxu0 0.0
    %3299 = vmatpush1.msra.mxu0 0.0
    %3300 = vmatprep.subr.mxu0 0.0
    %3301 = vmatpush1.msra.mxu0 0.0
    %3302 = vmatprep.subr.mxu0 0.0
    %3303 = vmatpush1.msra.mxu0 0.0
    %3304 = vmatprep.subr.mxu0 0.0
    %3305 = vmatpush1.msra.mxu0 0.0
    %3306 = vmatprep.subr.mxu0 0.0
    %3307 = vmatpush1.msra.mxu0 0.0
    %3308 = vmatprep.subr.mxu0 0.0
    %3309 = vmatpush1.msra.mxu0 0.0
    %3310 = vmatprep.subr.mxu0 0.0
    %3311 = vmatpush1.msra.mxu0 0.0
    %3312 = vmatprep.subr.mxu0 0.0
    %3313 = vmatpush1.msra.mxu0 0.0
    %3314 = vmatprep.subr.mxu0 0.0
    %3315 = vmatpush1.msra.mxu0 0.0
    %3316 = vmatprep.subr.mxu0 0.0
    %3317 = vmatpush1.msra.mxu0 0.0
    %3318 = vmatprep.subr.mxu0 0.0
    %3319 = vmatpush1.msra.mxu0 0.0
    %3320 = vmatprep.mubr.f32.mxu0 0.0
    %3321 = vmatmul.mubr.f32.gmra.mrb[0].mxu0 %v3254
    %v3322 = vpop.f32.mrb[0].mxu0
    %v3323 = vadd.f32 0.0, %v3322
    %v3324 = vpop.f32.mrb[0].mxu0
    %3325 = vdwg.mxu0
    %v3326 = vadd.f32 %v2141, %v2228
    %v3327 = vadd.f32 %v2142, %v2301
    %v3328 = vadd.f32 %v2143, %v2374
    %v3329 = vadd.f32 %v2144, %v2447
    %v3330 = vadd.f32 %v2145, %v2520
    %v3331 = vadd.f32 %v2146, %v2593
    %v3332 = vadd.f32 %v2147, %v2666
    %v3333 = vadd.f32 %v2148, %v2739
    %v3334 = vadd.f32 %v2149, %v2812
    %v3335 = vadd.f32 %v2150, %v2885
    %v3336 = vadd.f32 %v2151, %v2958
    %v3337 = vadd.f32 %v2152, %v3031
    %v3338 = vadd.f32 %v2153, %v3104
    %v3339 = vadd.f32 %v2154, %v3177
    %v3340 = vadd.f32 %v2155, %v3250
    %v3341 = vadd.f32 %v2156, %v3323
    %vm3342 = vcmask 253952
    %3343 = vst.msk [vmem:[#allocation4] sm:$0x1] %vm3342, %v3326
    %3344 = vst.msk [vmem:[#allocation4 + $0x1] sm:$0x1] %vm3342, %v3327
    %3345 = vst.msk [vmem:[#allocation4 + $0x2] sm:$0x1] %vm3342, %v3328
    %3346 = vst.msk [vmem:[#allocation4 + $0x3] sm:$0x1] %vm3342, %v3329
    %3347 = vst.msk [vmem:[#allocation4 + $0x4] sm:$0x1] %vm3342, %v3330
    %3348 = vst.msk [vmem:[#allocation4 + $0x5] sm:$0x1] %vm3342, %v3331
    %3349 = vst.msk [vmem:[#allocation4 + $0x6] sm:$0x1] %vm3342, %v3332
    %3350 = vst.msk [vmem:[#allocation4 + $0x7] sm:$0x1] %vm3342, %v3333
    %3351 = vst.msk [vmem:[#allocation4 + $0x8] sm:$0x1] %vm3342, %v3334
    %3352 = vst.msk [vmem:[#allocation4 + $0x9] sm:$0x1] %vm3342, %v3335
    %3353 = vst.msk [vmem:[#allocation4 + $0xa] sm:$0x1] %vm3342, %v3336
    %3354 = vst.msk [vmem:[#allocation4 + $0xb] sm:$0x1] %vm3342, %v3337
    %3355 = vst.msk [vmem:[#allocation4 + $0xc] sm:$0x1] %vm3342, %v3338
    %3356 = vst.msk [vmem:[#allocation4 + $0xd] sm:$0x1] %vm3342, %v3339
    %3357 = vst.msk [vmem:[#allocation4 + $0xe] sm:$0x1] %vm3342, %v3340
    %3358 = vst.msk [vmem:[#allocation4 + $0xf] sm:$0x1] %vm3342, %v3341
    %3359 = vst.msk [vmem:[#allocation2] sm:$0x1] %vm1964, %v1612
    %3360 = vst.msk [vmem:[#allocation2 + $0x1] sm:$0x1] %vm1964, %v1613
    %3361 = vst.msk [vmem:[#allocation2 + $0x2] sm:$0x1] %vm1964, %v1614
    %3362 = vst.msk [vmem:[#allocation2 + $0x3] sm:$0x1] %vm1964, %v1615
    %3363 = vst.msk [vmem:[#allocation2 + $0x4] sm:$0x1] %vm1964, %v1616
    %3364 = vst.msk [vmem:[#allocation2 + $0x5] sm:$0x1] %vm1964, %v1617
    %3365 = vst.msk [vmem:[#allocation2 + $0x6] sm:$0x1] %vm1964, %v1618
    %3366 = vst.msk [vmem:[#allocation2 + $0x7] sm:$0x1] %vm1964, %v1619
    %3367 = vst.msk [vmem:[#allocation2 + $0x8] sm:$0x1] %vm1964, %v1620
    %3368 = vst.msk [vmem:[#allocation2 + $0x9] sm:$0x1] %vm1964, %v1621
    %3369 = vst.msk [vmem:[#allocation2 + $0xa] sm:$0x1] %vm1964, %v1622
    %3370 = vst.msk [vmem:[#allocation2 + $0xb] sm:$0x1] %vm1964, %v1623
    %3371 = vst.msk [vmem:[#allocation2 + $0xc] sm:$0x1] %vm1964, %v1624
    %3372 = vst.msk [vmem:[#allocation2 + $0xd] sm:$0x1] %vm1964, %v1625
    %3373 = vst.msk [vmem:[#allocation2 + $0xe] sm:$0x1] %vm1964, %v1626
    %3374 = vst.msk [vmem:[#allocation2 + $0xf] sm:$0x1] %vm1964, %v1627
    // Predicated region
    $region30: #{tpu_custom_call.1} parent=1 // pred_check
      %p3375 = pneg %p35
    $region31: #{tpu_custom_call.1} parent=1 // pred_check_branch
      %3377 = sbr.rel (%p3375) target = $region33
    $region32: #{tpu_custom_call.1} parent=1 // pred_region
      %v3378 = vld [vmem:[#allocation3] sm:$0x1]
      %v3379 = vld [vmem:[#allocation3 + $0x1] sm:$0x1]
      %v3380 = vld [vmem:[#allocation3 + $0x2] sm:$0x1]
      %v3381 = vld [vmem:[#allocation3 + $0x3] sm:$0x1]
      %v3382 = vld [vmem:[#allocation3 + $0x4] sm:$0x1]
      %v3383 = vld [vmem:[#allocation3 + $0x5] sm:$0x1]
      %v3384 = vld [vmem:[#allocation3 + $0x6] sm:$0x1]
      %v3385 = vld [vmem:[#allocation3 + $0x7] sm:$0x1]
      %v3386 = vld [vmem:[#allocation3 + $0x8] sm:$0x1]
      %v3387 = vld [vmem:[#allocation3 + $0x9] sm:$0x1]
      %v3388 = vld [vmem:[#allocation3 + $0xa] sm:$0x1]
      %v3389 = vld [vmem:[#allocation3 + $0xb] sm:$0x1]
      %v3390 = vld [vmem:[#allocation3 + $0xc] sm:$0x1]
      %v3391 = vld [vmem:[#allocation3 + $0xd] sm:$0x1]
      %v3392 = vld [vmem:[#allocation3 + $0xe] sm:$0x1]
      %v3393 = vld [vmem:[#allocation3 + $0xf] sm:$0x1]
      %v3394 = vrcp.pop %v3378
      %v3395 = vrcp.pop %v3379
      %v3396 = vrcp.pop %v3380
      %v3397 = vrcp.pop %v3381
      %v3398 = vrcp.pop %v3382
      %v3399 = vrcp.pop %v3383
      %v3400 = vrcp.pop %v3384
      %v3401 = vrcp.pop %v3385
      %v3402 = vrcp.pop %v3386
      %v3403 = vrcp.pop %v3387
      %v3404 = vrcp.pop %v3388
      %v3405 = vrcp.pop %v3389
      %v3406 = vrcp.pop %v3390
      %v3407 = vrcp.pop %v3391
      %v3408 = vrcp.pop %v3392
      %v3409 = vrcp.pop %v3393
      %v3410 = vmul.f32 %v3378, %v3394
      %v3411 = vmul.f32 %v3379, %v3395
      %v3412 = vmul.f32 %v3380, %v3396
      %v3413 = vmul.f32 %v3381, %v3397
      %v3414 = vmul.f32 %v3382, %v3398
      %v3415 = vmul.f32 %v3383, %v3399
      %v3416 = vmul.f32 %v3384, %v3400
      %v3417 = vmul.f32 %v3385, %v3401
      %v3418 = vmul.f32 %v3386, %v3402
      %v3419 = vmul.f32 %v3387, %v3403
      %v3420 = vmul.f32 %v3388, %v3404
      %v3421 = vmul.f32 %v3389, %v3405
      %v3422 = vmul.f32 %v3390, %v3406
      %v3423 = vmul.f32 %v3391, %v3407
      %v3424 = vmul.f32 %v3392, %v3408
      %v3425 = vmul.f32 %v3393, %v3409
      %v3426 = vsub.f32 2.0, %v3410
      %v3427 = vsub.f32 2.0, %v3411
      %v3428 = vsub.f32 2.0, %v3412
      %v3429 = vsub.f32 2.0, %v3413
      %v3430 = vsub.f32 2.0, %v3414
      %v3431 = vsub.f32 2.0, %v3415
      %v3432 = vsub.f32 2.0, %v3416
      %v3433 = vsub.f32 2.0, %v3417
      %v3434 = vsub.f32 2.0, %v3418
      %v3435 = vsub.f32 2.0, %v3419
      %v3436 = vsub.f32 2.0, %v3420
      %v3437 = vsub.f32 2.0, %v3421
      %v3438 = vsub.f32 2.0, %v3422
      %v3439 = vsub.f32 2.0, %v3423
      %v3440 = vsub.f32 2.0, %v3424
      %v3441 = vsub.f32 2.0, %v3425
      %v3442 = vmul.f32 %v3394, %v3426
      %v3443 = vmul.f32 %v3395, %v3427
      %v3444 = vmul.f32 %v3396, %v3428
      %v3445 = vmul.f32 %v3397, %v3429
      %v3446 = vmul.f32 %v3398, %v3430
      %v3447 = vmul.f32 %v3399, %v3431
      %v3448 = vmul.f32 %v3400, %v3432
      %v3449 = vmul.f32 %v3401, %v3433
      %v3450 = vmul.f32 %v3402, %v3434
      %v3451 = vmul.f32 %v3403, %v3435
      %v3452 = vmul.f32 %v3404, %v3436
      %v3453 = vmul.f32 %v3405, %v3437
      %v3454 = vmul.f32 %v3406, %v3438
      %v3455 = vmul.f32 %v3407, %v3439
      %v3456 = vmul.f32 %v3408, %v3440
      %v3457 = vmul.f32 %v3409, %v3441
      %v3458 = vld [vmem:[#allocation4] sm:$0x1]
      %v3459 = vld [vmem:[#allocation4 + $0x1] sm:$0x1]
      %v3460 = vld [vmem:[#allocation4 + $0x2] sm:$0x1]
      %v3461 = vld [vmem:[#allocation4 + $0x3] sm:$0x1]
      %v3462 = vld [vmem:[#allocation4 + $0x4] sm:$0x1]
      %v3463 = vld [vmem:[#allocation4 + $0x5] sm:$0x1]
      %v3464 = vld [vmem:[#allocation4 + $0x6] sm:$0x1]
      %v3465 = vld [vmem:[#allocation4 + $0x7] sm:$0x1]
      %v3466 = vld [vmem:[#allocation4 + $0x8] sm:$0x1]
      %v3467 = vld [vmem:[#allocation4 + $0x9] sm:$0x1]
      %v3468 = vld [vmem:[#allocation4 + $0xa] sm:$0x1]
      %v3469 = vld [vmem:[#allocation4 + $0xb] sm:$0x1]
      %v3470 = vld [vmem:[#allocation4 + $0xc] sm:$0x1]
      %v3471 = vld [vmem:[#allocation4 + $0xd] sm:$0x1]
      %v3472 = vld [vmem:[#allocation4 + $0xe] sm:$0x1]
      %v3473 = vld [vmem:[#allocation4 + $0xf] sm:$0x1]
      %3475 = vset.pattern.permute.xlu0 0
      %3476 = vperm.xlu0 %3475, %v3442
      %v3477 = vpop.permute.xlu0 %3476
      %v3479 = vlaneseq
      %v3480 = vshrl.u32 %v3479, 7
      %v3481 = vsub.s32 0, %v3480
      %v3482 = vrot.slane %v3477, %v3481
      %3484 = vset.pattern.permute.xlu0 0
      %3485 = vperm.xlu0 %3484, %v3443
      %v3486 = vpop.permute.xlu0 %3485
      %v3488 = vlaneseq
      %v3489 = vshrl.u32 %v3488, 7
      %v3490 = vsub.s32 0, %v3489
      %v3491 = vrot.slane %v3486, %v3490
      %3493 = vset.pattern.permute.xlu0 0
      %3494 = vperm.xlu0 %3493, %v3444
      %v3495 = vpop.permute.xlu0 %3494
      %v3497 = vlaneseq
      %v3498 = vshrl.u32 %v3497, 7
      %v3499 = vsub.s32 0, %v3498
      %v3500 = vrot.slane %v3495, %v3499
      %3502 = vset.pattern.permute.xlu0 0
      %3503 = vperm.xlu0 %3502, %v3445
      %v3504 = vpop.permute.xlu0 %3503
      %v3506 = vlaneseq
      %v3507 = vshrl.u32 %v3506, 7
      %v3508 = vsub.s32 0, %v3507
      %v3509 = vrot.slane %v3504, %v3508
      %3511 = vset.pattern.permute.xlu0 0
      %3512 = vperm.xlu0 %3511, %v3446
      %v3513 = vpop.permute.xlu0 %3512
      %v3515 = vlaneseq
      %v3516 = vshrl.u32 %v3515, 7
      %v3517 = vsub.s32 0, %v3516
      %v3518 = vrot.slane %v3513, %v3517
      %3520 = vset.pattern.permute.xlu0 0
      %3521 = vperm.xlu0 %3520, %v3447
      %v3522 = vpop.permute.xlu0 %3521
      %v3524 = vlaneseq
      %v3525 = vshrl.u32 %v3524, 7
      %v3526 = vsub.s32 0, %v3525
      %v3527 = vrot.slane %v3522, %v3526
      %3529 = vset.pattern.permute.xlu0 0
      %3530 = vperm.xlu0 %3529, %v3448
      %v3531 = vpop.permute.xlu0 %3530
      %v3533 = vlaneseq
      %v3534 = vshrl.u32 %v3533, 7
      %v3535 = vsub.s32 0, %v3534
      %v3536 = vrot.slane %v3531, %v3535
      %3538 = vset.pattern.permute.xlu0 0
      %3539 = vperm.xlu0 %3538, %v3449
      %v3540 = vpop.permute.xlu0 %3539
      %v3542 = vlaneseq
      %v3543 = vshrl.u32 %v3542, 7
      %v3544 = vsub.s32 0, %v3543
      %v3545 = vrot.slane %v3540, %v3544
      %3547 = vset.pattern.permute.xlu0 0
      %3548 = vperm.xlu0 %3547, %v3450
      %v3549 = vpop.permute.xlu0 %3548
      %v3551 = vlaneseq
      %v3552 = vshrl.u32 %v3551, 7
      %v3553 = vsub.s32 0, %v3552
      %v3554 = vrot.slane %v3549, %v3553
      %3556 = vset.pattern.permute.xlu0 0
      %3557 = vperm.xlu0 %3556, %v3451
      %v3558 = vpop.permute.xlu0 %3557
      %v3560 = vlaneseq
      %v3561 = vshrl.u32 %v3560, 7
      %v3562 = vsub.s32 0, %v3561
      %v3563 = vrot.slane %v3558, %v3562
      %3565 = vset.pattern.permute.xlu0 0
      %3566 = vperm.xlu0 %3565, %v3452
      %v3567 = vpop.permute.xlu0 %3566
      %v3569 = vlaneseq
      %v3570 = vshrl.u32 %v3569, 7
      %v3571 = vsub.s32 0, %v3570
      %v3572 = vrot.slane %v3567, %v3571
      %3574 = vset.pattern.permute.xlu0 0
      %3575 = vperm.xlu0 %3574, %v3453
      %v3576 = vpop.permute.xlu0 %3575
      %v3578 = vlaneseq
      %v3579 = vshrl.u32 %v3578, 7
      %v3580 = vsub.s32 0, %v3579
      %v3581 = vrot.slane %v3576, %v3580
      %3583 = vset.pattern.permute.xlu0 0
      %3584 = vperm.xlu0 %3583, %v3454
      %v3585 = vpop.permute.xlu0 %3584
      %v3587 = vlaneseq
      %v3588 = vshrl.u32 %v3587, 7
      %v3589 = vsub.s32 0, %v3588
      %v3590 = vrot.slane %v3585, %v3589
      %3592 = vset.pattern.permute.xlu0 0
      %3593 = vperm.xlu0 %3592, %v3455
      %v3594 = vpop.permute.xlu0 %3593
      %v3596 = vlaneseq
      %v3597 = vshrl.u32 %v3596, 7
      %v3598 = vsub.s32 0, %v3597
      %v3599 = vrot.slane %v3594, %v3598
      %3601 = vset.pattern.permute.xlu0 0
      %3602 = vperm.xlu0 %3601, %v3456
      %v3603 = vpop.permute.xlu0 %3602
      %v3605 = vlaneseq
      %v3606 = vshrl.u32 %v3605, 7
      %v3607 = vsub.s32 0, %v3606
      %v3608 = vrot.slane %v3603, %v3607
      %3610 = vset.pattern.permute.xlu0 0
      %3611 = vperm.xlu0 %3610, %v3457
      %v3612 = vpop.permute.xlu0 %3611
      %v3614 = vlaneseq
      %v3615 = vshrl.u32 %v3614, 7
      %v3616 = vsub.s32 0, %v3615
      %v3617 = vrot.slane %v3612, %v3616
      %v3618 = vmul.f32 %v3458, %v3482
      %v3619 = vmul.f32 %v3459, %v3491
      %v3620 = vmul.f32 %v3460, %v3500
      %v3621 = vmul.f32 %v3461, %v3509
      %v3622 = vmul.f32 %v3462, %v3518
      %v3623 = vmul.f32 %v3463, %v3527
      %v3624 = vmul.f32 %v3464, %v3536
      %v3625 = vmul.f32 %v3465, %v3545
      %v3626 = vmul.f32 %v3466, %v3554
      %v3627 = vmul.f32 %v3467, %v3563
      %v3628 = vmul.f32 %v3468, %v3572
      %v3629 = vmul.f32 %v3469, %v3581
      %v3630 = vmul.f32 %v3470, %v3590
      %v3631 = vmul.f32 %v3471, %v3599
      %v3632 = vmul.f32 %v3472, %v3608
      %v3633 = vmul.f32 %v3473, %v3617
      %v3634 = vld [vmem:[#allocation2] sm:$0x1]
      %v3635 = vld [vmem:[#allocation2 + $0x1] sm:$0x1]
      %v3636 = vld [vmem:[#allocation2 + $0x2] sm:$0x1]
      %v3637 = vld [vmem:[#allocation2 + $0x3] sm:$0x1]
      %v3638 = vld [vmem:[#allocation2 + $0x4] sm:$0x1]
      %v3639 = vld [vmem:[#allocation2 + $0x5] sm:$0x1]
      %v3640 = vld [vmem:[#allocation2 + $0x6] sm:$0x1]
      %v3641 = vld [vmem:[#allocation2 + $0x7] sm:$0x1]
      %v3642 = vld [vmem:[#allocation2 + $0x8] sm:$0x1]
      %v3643 = vld [vmem:[#allocation2 + $0x9] sm:$0x1]
      %v3644 = vld [vmem:[#allocation2 + $0xa] sm:$0x1]
      %v3645 = vld [vmem:[#allocation2 + $0xb] sm:$0x1]
      %v3646 = vld [vmem:[#allocation2 + $0xc] sm:$0x1]
      %v3647 = vld [vmem:[#allocation2 + $0xd] sm:$0x1]
      %v3648 = vld [vmem:[#allocation2 + $0xe] sm:$0x1]
      %v3649 = vld [vmem:[#allocation2 + $0xf] sm:$0x1]
      %vm3650 = vcmp.le.f32.partialorder %v3634, -1e+30
      %vm3651 = vcmp.le.f32.partialorder %v3635, -1e+30
      %vm3652 = vcmp.le.f32.partialorder %v3636, -1e+30
      %vm3653 = vcmp.le.f32.partialorder %v3637, -1e+30
      %vm3654 = vcmp.le.f32.partialorder %v3638, -1e+30
      %vm3655 = vcmp.le.f32.partialorder %v3639, -1e+30
      %vm3656 = vcmp.le.f32.partialorder %v3640, -1e+30
      %vm3657 = vcmp.le.f32.partialorder %v3641, -1e+30
      %vm3658 = vcmp.le.f32.partialorder %v3642, -1e+30
      %vm3659 = vcmp.le.f32.partialorder %v3643, -1e+30
      %vm3660 = vcmp.le.f32.partialorder %v3644, -1e+30
      %vm3661 = vcmp.le.f32.partialorder %v3645, -1e+30
      %vm3662 = vcmp.le.f32.partialorder %v3646, -1e+30
      %vm3663 = vcmp.le.f32.partialorder %v3647, -1e+30
      %vm3664 = vcmp.le.f32.partialorder %v3648, -1e+30
      %vm3665 = vcmp.le.f32.partialorder %v3649, -1e+30
      %v3666 = vsel %vm3650, 1, 0
      %v3667 = vsel %vm3651, 1, 0
      %v3668 = vsel %vm3652, 1, 0
      %v3669 = vsel %vm3653, 1, 0
      %v3670 = vsel %vm3654, 1, 0
      %v3671 = vsel %vm3655, 1, 0
      %v3672 = vsel %vm3656, 1, 0
      %v3673 = vsel %vm3657, 1, 0
      %v3674 = vsel %vm3658, 1, 0
      %v3675 = vsel %vm3659, 1, 0
      %v3676 = vsel %vm3660, 1, 0
      %v3677 = vsel %vm3661, 1, 0
      %v3678 = vsel %vm3662, 1, 0
      %v3679 = vsel %vm3663, 1, 0
      %v3680 = vsel %vm3664, 1, 0
      %v3681 = vsel %vm3665, 1, 0
      %3682 = vset.pattern.permute.xlu0 0
      %3683 = vperm.xlu0 %3682, %v3666
      %v3684 = vpop.permute.xlu0 %3683
      %v3685 = vlaneseq
      %v3686 = vshrl.u32 %v3685, 7
      %v3687 = vsub.s32 0, %v3686
      %v3688 = vrot.slane %v3684, %v3687
      %3689 = vset.pattern.permute.xlu0 0
      %3690 = vperm.xlu0 %3689, %v3667
      %v3691 = vpop.permute.xlu0 %3690
      %v3692 = vlaneseq
      %v3693 = vshrl.u32 %v3692, 7
      %v3694 = vsub.s32 0, %v3693
      %v3695 = vrot.slane %v3691, %v3694
      %3696 = vset.pattern.permute.xlu0 0
      %3697 = vperm.xlu0 %3696, %v3668
      %v3698 = vpop.permute.xlu0 %3697
      %v3699 = vlaneseq
      %v3700 = vshrl.u32 %v3699, 7
      %v3701 = vsub.s32 0, %v3700
      %v3702 = vrot.slane %v3698, %v3701
      %3703 = vset.pattern.permute.xlu0 0
      %3704 = vperm.xlu0 %3703, %v3669
      %v3705 = vpop.permute.xlu0 %3704
      %v3706 = vlaneseq
      %v3707 = vshrl.u32 %v3706, 7
      %v3708 = vsub.s32 0, %v3707
      %v3709 = vrot.slane %v3705, %v3708
      %3710 = vset.pattern.permute.xlu0 0
      %3711 = vperm.xlu0 %3710, %v3670
      %v3712 = vpop.permute.xlu0 %3711
      %v3713 = vlaneseq
      %v3714 = vshrl.u32 %v3713, 7
      %v3715 = vsub.s32 0, %v3714
      %v3716 = vrot.slane %v3712, %v3715
      %3717 = vset.pattern.permute.xlu0 0
      %3718 = vperm.xlu0 %3717, %v3671
      %v3719 = vpop.permute.xlu0 %3718
      %v3720 = vlaneseq
      %v3721 = vshrl.u32 %v3720, 7
      %v3722 = vsub.s32 0, %v3721
      %v3723 = vrot.slane %v3719, %v3722
      %3724 = vset.pattern.permute.xlu0 0
      %3725 = vperm.xlu0 %3724, %v3672
      %v3726 = vpop.permute.xlu0 %3725
      %v3727 = vlaneseq
      %v3728 = vshrl.u32 %v3727, 7
      %v3729 = vsub.s32 0, %v3728
      %v3730 = vrot.slane %v3726, %v3729
      %3731 = vset.pattern.permute.xlu0 0
      %3732 = vperm.xlu0 %3731, %v3673
      %v3733 = vpop.permute.xlu0 %3732
      %v3734 = vlaneseq
      %v3735 = vshrl.u32 %v3734, 7
      %v3736 = vsub.s32 0, %v3735
      %v3737 = vrot.slane %v3733, %v3736
      %3738 = vset.pattern.permute.xlu0 0
      %3739 = vperm.xlu0 %3738, %v3674
      %v3740 = vpop.permute.xlu0 %3739
      %v3741 = vlaneseq
      %v3742 = vshrl.u32 %v3741, 7
      %v3743 = vsub.s32 0, %v3742
      %v3744 = vrot.slane %v3740, %v3743
      %3745 = vset.pattern.permute.xlu0 0
      %3746 = vperm.xlu0 %3745, %v3675
      %v3747 = vpop.permute.xlu0 %3746
      %v3748 = vlaneseq
      %v3749 = vshrl.u32 %v3748, 7
      %v3750 = vsub.s32 0, %v3749
      %v3751 = vrot.slane %v3747, %v3750
      %3752 = vset.pattern.permute.xlu0 0
      %3753 = vperm.xlu0 %3752, %v3676
      %v3754 = vpop.permute.xlu0 %3753
      %v3755 = vlaneseq
      %v3756 = vshrl.u32 %v3755, 7
      %v3757 = vsub.s32 0, %v3756
      %v3758 = vrot.slane %v3754, %v3757
      %3759 = vset.pattern.permute.xlu0 0
      %3760 = vperm.xlu0 %3759, %v3677
      %v3761 = vpop.permute.xlu0 %3760
      %v3762 = vlaneseq
      %v3763 = vshrl.u32 %v3762, 7
      %v3764 = vsub.s32 0, %v3763
      %v3765 = vrot.slane %v3761, %v3764
      %3766 = vset.pattern.permute.xlu0 0
      %3767 = vperm.xlu0 %3766, %v3678
      %v3768 = vpop.permute.xlu0 %3767
      %v3769 = vlaneseq
      %v3770 = vshrl.u32 %v3769, 7
      %v3771 = vsub.s32 0, %v3770
      %v3772 = vrot.slane %v3768, %v3771
      %3773 = vset.pattern.permute.xlu0 0
      %3774 = vperm.xlu0 %3773, %v3679
      %v3775 = vpop.permute.xlu0 %3774
      %v3776 = vlaneseq
      %v3777 = vshrl.u32 %v3776, 7
      %v3778 = vsub.s32 0, %v3777
      %v3779 = vrot.slane %v3775, %v3778
      %3780 = vset.pattern.permute.xlu0 0
      %3781 = vperm.xlu0 %3780, %v3680
      %v3782 = vpop.permute.xlu0 %3781
      %v3783 = vlaneseq
      %v3784 = vshrl.u32 %v3783, 7
      %v3785 = vsub.s32 0, %v3784
      %v3786 = vrot.slane %v3782, %v3785
      %3787 = vset.pattern.permute.xlu0 0
      %3788 = vperm.xlu0 %3787, %v3681
      %v3789 = vpop.permute.xlu0 %3788
      %v3790 = vlaneseq
      %v3791 = vshrl.u32 %v3790, 7
      %v3792 = vsub.s32 0, %v3791
      %v3793 = vrot.slane %v3789, %v3792
      %vm3794 = vcmp.eq.s32.totalorder %v3688, 1
      %vm3795 = vcmp.eq.s32.totalorder %v3695, 1
      %vm3796 = vcmp.eq.s32.totalorder %v3702, 1
      %vm3797 = vcmp.eq.s32.totalorder %v3709, 1
      %vm3798 = vcmp.eq.s32.totalorder %v3716, 1
      %vm3799 = vcmp.eq.s32.totalorder %v3723, 1
      %vm3800 = vcmp.eq.s32.totalorder %v3730, 1
      %vm3801 = vcmp.eq.s32.totalorder %v3737, 1
      %vm3802 = vcmp.eq.s32.totalorder %v3744, 1
      %vm3803 = vcmp.eq.s32.totalorder %v3751, 1
      %vm3804 = vcmp.eq.s32.totalorder %v3758, 1
      %vm3805 = vcmp.eq.s32.totalorder %v3765, 1
      %vm3806 = vcmp.eq.s32.totalorder %v3772, 1
      %vm3807 = vcmp.eq.s32.totalorder %v3779, 1
      %vm3808 = vcmp.eq.s32.totalorder %v3786, 1
      %vm3809 = vcmp.eq.s32.totalorder %v3793, 1
      %v3810 = vsel %vm3794, nan, %v3618
      %v3811 = vsel %vm3795, nan, %v3619
      %v3812 = vsel %vm3796, nan, %v3620
      %v3813 = vsel %vm3797, nan, %v3621
      %v3814 = vsel %vm3798, nan, %v3622
      %v3815 = vsel %vm3799, nan, %v3623
      %v3816 = vsel %vm3800, nan, %v3624
      %v3817 = vsel %vm3801, nan, %v3625
      %v3818 = vsel %vm3802, nan, %v3626
      %v3819 = vsel %vm3803, nan, %v3627
      %v3820 = vsel %vm3804, nan, %v3628
      %v3821 = vsel %vm3805, nan, %v3629
      %v3822 = vsel %vm3806, nan, %v3630
      %v3823 = vsel %vm3807, nan, %v3631
      %v3824 = vsel %vm3808, nan, %v3632
      %v3825 = vsel %vm3809, nan, %v3633
      %3826 = vst.msk [vmem:[#allocation8] sm:$0x1] %vm3342, %v3810
      %3827 = vst.msk [vmem:[#allocation8 + $0x1] sm:$0x1] %vm3342, %v3811
      %3828 = vst.msk [vmem:[#allocation8 + $0x2] sm:$0x1] %vm3342, %v3812
      %3829 = vst.msk [vmem:[#allocation8 + $0x3] sm:$0x1] %vm3342, %v3813
      %3830 = vst.msk [vmem:[#allocation8 + $0x4] sm:$0x1] %vm3342, %v3814
      %3831 = vst.msk [vmem:[#allocation8 + $0x5] sm:$0x1] %vm3342, %v3815
      %3832 = vst.msk [vmem:[#allocation8 + $0x6] sm:$0x1] %vm3342, %v3816
      %3833 = vst.msk [vmem:[#allocation8 + $0x7] sm:$0x1] %vm3342, %v3817
      %3834 = vst.msk [vmem:[#allocation8 + $0x8] sm:$0x1] %vm3342, %v3818
      %3835 = vst.msk [vmem:[#allocation8 + $0x9] sm:$0x1] %vm3342, %v3819
      %3836 = vst.msk [vmem:[#allocation8 + $0xa] sm:$0x1] %vm3342, %v3820
      %3837 = vst.msk [vmem:[#allocation8 + $0xb] sm:$0x1] %vm3342, %v3821
      %3838 = vst.msk [vmem:[#allocation8 + $0xc] sm:$0x1] %vm3342, %v3822
      %3839 = vst.msk [vmem:[#allocation8 + $0xd] sm:$0x1] %vm3342, %v3823
      %3840 = vst.msk [vmem:[#allocation8 + $0xe] sm:$0x1] %vm3342, %v3824
      %3841 = vst.msk [vmem:[#allocation8 + $0xf] sm:$0x1] %vm3342, %v3825
    $region33: #{tpu_custom_call.1} parent=1 // pred_fallthru
      _
    // Predicated region
    $region34: #{tpu_custom_call.1} parent=1 // pred_check
      _
    $region35: #{tpu_custom_call.1} parent=1 // pred_check_branch
      %3843 = sbr.rel (0) target = $region37
    $region36: #{tpu_custom_call.1} parent=1 // pred_region
      %s3845 = ssub.s32 256, 256
      %3846 = vsyncadd [#allocation7], %s3845
      %s3847 = sshll.u32 [#allocation8], 4
      %s3848 = int_to_ptr.vmem [resolvable:$true] %s3847
      %3853 = dma.vmem_to_hbm [thread:$0]  %s3848, 256, %s5, [#allocation7], 16, 16, 1
    $region37: #{tpu_custom_call.1} parent=1 // pred_fallthru
      _
    // Predicated region
    $region38: #{tpu_custom_call.1} parent=1 // pred_check
      _
    $region39: #{tpu_custom_call.1} parent=1 // pred_check_branch
      %3855 = sbr.rel (0) target = $region41
    $region40: #{tpu_custom_call.1} parent=1 // pred_region
      %3856 = dma.done [#allocation7], 256
    $region41: #{tpu_custom_call.1} parent=1 // pred_fallthru
      _
    %3857 = vsyncpa [#allocation6], 1
    %3858 = vsyncpa [#allocation7], 1

// kernel: tpu_custom_call.1
$region0: #{tpu_custom_call.1}
  #allocation0 [shape = 'u32[]', space=smem, size = 0x4, offset = 0x4, fixed_abs, tag = 'smem constant byte address 0x4 - core index']
  #allocation1 [shape = 'u32[144,128]{1,0:T(1,128)}', space=vmem, size = 0x12000, scoped, tag = 'internal scratch']
  #allocation2 [shape = 'f32[16,1,1]{2,1,0:T(1,128)}', space=vmem, size = 0x2000, scoped, tag = 'scratch operand']
  #allocation3 [shape = 'f32[16,1,1]{2,1,0:T(1,128)}', space=vmem, size = 0x2000, scoped, tag = 'scratch operand']
  #allocation4 [shape = 'f32[16,1,32]{2,1,0:T(1,128)}', space=vmem, size = 0x2000, scoped, tag = 'scratch operand']
  %s0 = inlined_call_operand.hbm [shape: f32[16,8,32], index: 0, kind: input, shape index: {}]
  %s1 = inlined_call_operand.vmem [shape: f32[32,16], index: 1, kind: input, shape index: {}]
  %s2 = inlined_call_operand.vmem [shape: f32[1,16], index: 2, kind: input, shape index: {}]
  %s3 = inlined_call_operand.vmem [shape: f32[1,1,16], index: 3, kind: input, shape index: {}]
  %s4 = inlined_call_operand.vmem [shape: s32[16,1,8], index: 4, kind: input, shape index: {}]
  %s5 = inlined_call_operand.hbm [shape: f32[16,1,32], index: 5, kind: output, shape index: {}]
  %s6 = sld [smem:[#allocation0]]
  $region42: #{tpu_custom_call.1} parent=0
    _
  %s8 = ssub.s32 1, %s6
  %s9 = scalar_select 0, %s8, %s6
  $region1: #{tpu_custom_call.1} parent=0
    #allocation5 [shape = 'u8[65536]{0}', space=vmem, size = 0x10000, scoped, tag = 'input window, operand 0, single buffered']
    #allocation6 [shape = 's32[1]{0}', space=sflag, size = 0x4, scoped, tag = 'scoped memory for tpu_custom_call.1']
    #allocation7 [shape = 's32[1]{0}', space=sflag, size = 0x4, scoped, tag = 'scoped memory for tpu_custom_call.1']
    #allocation8 [shape = 'u8[8192]{0}', space=vmem, size = 0x2000, scoped, tag = 'output window, operand 0, single buffered']
    %10 = vsyncpa [#allocation6], 0
    %11 = vsyncpa [#allocation7], 0
    // Predicated region
    $region2: #{tpu_custom_call.1} parent=1 // pred_check
      _
    $region3: #{tpu_custom_call.1} parent=1 // pred_check_branch
      %13 = sbr.rel (0) target = $region5
    $region4: #{tpu_custom_call.1} parent=1 // pred_region
      %s15 = ssub.s32 2048, 2048
      %16 = vsyncadd [#allocation6], %s15
      %s17 = sshll.u32 [#allocation5], 4
      %s18 = int_to_ptr.vmem [resolvable:$true] %s17
      %23 = dma.hbm_to_vmem [thread:$0]  %s0, 2048, %s18, [#allocation6], 128, 128, 8
    $region5: #{tpu_custom_call.1} parent=1 // pred_fallthru
      _
    // Predicated region
    $region6: #{tpu_custom_call.1} parent=1 // pred_check
      _
    $region7: #{tpu_custom_call.1} parent=1 // pred_check_branch
      %25 = sbr.rel (0) target = $region9
    $region8: #{tpu_custom_call.1} parent=1 // pred_region
      _
    $region9: #{tpu_custom_call.1} parent=1 // pred_fallthru
      _
    // Predicated region
    $region10: #{tpu_custom_call.1} parent=1 // pred_check
      _
    $region11: #{tpu_custom_call.1} parent=1 // pred_check_branch
      %27 = sbr.rel (0) target = $region13
    $region12: #{tpu_custom_call.1} parent=1 // pred_region
      _
    $region13: #{tpu_custom_call.1} parent=1 // pred_fallthru
      _
    // Predicated region
    $region14: #{tpu_custom_call.1} parent=1 // pred_check
      _
    $region15: #{tpu_custom_call.1} parent=1 // pred_check_branch
      %29 = sbr.rel (0) target = $region17
    $region16: #{tpu_custom_call.1} parent=1 // pred_region
      _
    $region17: #{tpu_custom_call.1} parent=1 // pred_fallthru
      _
    // Predicated region
    $region18: #{tpu_custom_call.1} parent=1 // pred_check
      _
    $region19: #{tpu_custom_call.1} parent=1 // pred_check_branch
      %31 = sbr.rel (0) target = $region21
    $region20: #{tpu_custom_call.1} parent=1 // pred_region
      _
    $region21: #{tpu_custom_call.1} parent=1 // pred_fallthru
      _
    // Predicated region
    $region22: #{tpu_custom_call.1} parent=1 // pred_check
      _
    $region23: #{tpu_custom_call.1} parent=1 // pred_check_branch
      %33 = sbr.rel (0) target = $region25
    $region24: #{tpu_custom_call.1} parent=1 // pred_region
      %34 = dma.done [#allocation6], 2048
    $region25: #{tpu_custom_call.1} parent=1 // pred_fallthru
      _
    %p35 = scmp.eq.s32.totalorder 0, 0
    // Predicated region
    $region26: #{tpu_custom_call.1} parent=1 // pred_check
      %p36 = pneg %p35
    $region27: #{tpu_custom_call.1} parent=1 // pred_check_branch
      %38 = sbr.rel (%p36) target = $region29
    $region28: #{tpu_custom_call.1} parent=1 // pred_region
      %vm39 = vcmask 0
      %40 = vst.msk [vmem:[#allocation2] sm:$0x1] %vm39, -1e+30
      %41 = vst.msk [vmem:[#allocation2 + $0x1] sm:$0x1] %vm39, -1e+30
      %42 = vst.msk [vmem:[#allocation2 + $0x2] sm:$0x1] %vm39, -1e+30
      %43 = vst.msk [vmem:[#allocation2 + $0x3] sm:$0x1] %vm39, -1e+30
      %44 = vst.msk [vmem:[#allocation2 + $0x4] sm:$0x1] %vm39, -1e+30
      %45 = vst.msk [vmem:[#allocation2 + $0x5] sm:$0x1] %vm39, -1e+30
      %46 = vst.msk [vmem:[#allocation2 + $0x6] sm:$0x1] %vm39, -1e+30
      %47 = vst.msk [vmem:[#allocation2 + $0x7] sm:$0x1] %vm39, -1e+30
      %48 = vst.msk [vmem:[#allocation2 + $0x8] sm:$0x1] %vm39, -1e+30
      %49 = vst.msk [vmem:[#allocation2 + $0x9] sm:$0x1] %vm39, -1e+30
      %50 = vst.msk [vmem:[#allocation2 + $0xa] sm:$0x1] %vm39, -1e+30
      %51 = vst.msk [vmem:[#allocation2 + $0xb] sm:$0x1] %vm39, -1e+30
      %52 = vst.msk [vmem:[#allocation2 + $0xc] sm:$0x1] %vm39, -1e+30
      %53 = vst.msk [vmem:[#allocation2 + $0xd] sm:$0x1] %vm39, -1e+30
      %54 = vst.msk [vmem:[#allocation2 + $0xe] sm:$0x1] %vm39, -1e+30
      %55 = vst.msk [vmem:[#allocation2 + $0xf] sm:$0x1] %vm39, -1e+30
      %56 = vst.msk [vmem:[#allocation3] sm:$0x1] %vm39, 0.0
      %57 = vst.msk [vmem:[#allocation3 + $0x1] sm:$0x1] %vm39, 0.0
      %58 = vst.msk [vmem:[#allocation3 + $0x2] sm:$0x1] %vm39, 0.0
      %59 = vst.msk [vmem:[#allocation3 + $0x3] sm:$0x1] %vm39, 0.0
      %60 = vst.msk [vmem:[#allocation3 + $0x4] sm:$0x1] %vm39, 0.0
      %61 = vst.msk [vmem:[#allocation3 + $0x5] sm:$0x1] %vm39, 0.0
      %62 = vst.msk [vmem:[#allocation3 + $0x6] sm:$0x1] %vm39, 0.0
      %63 = vst.msk [vmem:[#allocation3 + $0x7] sm:$0x1] %vm39, 0.0
      %64 = vst.msk [vmem:[#allocation3 + $0x8] sm:$0x1] %vm39, 0.0
      %65 = vst.msk [vmem:[#allocation3 + $0x9] sm:$0x1] %vm39, 0.0
      %66 = vst.msk [vmem:[#allocation3 + $0xa] sm:$0x1] %vm39, 0.0
      %67 = vst.msk [vmem:[#allocation3 + $0xb] sm:$0x1] %vm39, 0.0
      %68 = vst.msk [vmem:[#allocation3 + $0xc] sm:$0x1] %vm39, 0.0
      %69 = vst.msk [vmem:[#allocation3 + $0xd] sm:$0x1] %vm39, 0.0
      %70 = vst.msk [vmem:[#allocation3 + $0xe] sm:$0x1] %vm39, 0.0
      %71 = vst.msk [vmem:[#allocation3 + $0xf] sm:$0x1] %vm39, 0.0
      %vm72 = vcmask 253952
      %73 = vst.msk [vmem:[#allocation4] sm:$0x1] %vm72, 0.0
      %74 = vst.msk [vmem:[#allocation4 + $0x1] sm:$0x1] %vm72, 0.0
      %75 = vst.msk [vmem:[#allocation4 + $0x2] sm:$0x1] %vm72, 0.0
      %76 = vst.msk [vmem:[#allocation4 + $0x3] sm:$0x1] %vm72, 0.0
      %77 = vst.msk [vmem:[#allocation4 + $0x4] sm:$0x1] %vm72, 0.0
      %78 = vst.msk [vmem:[#allocation4 + $0x5] sm:$0x1] %vm72, 0.0
      %79 = vst.msk [vmem:[#allocation4 + $0x6] sm:$0x1] %vm72, 0.0
      %80 = vst.msk [vmem:[#allocation4 + $0x7] sm:$0x1] %vm72, 0.0
      %81 = vst.msk [vmem:[#allocation4 + $0x8] sm:$0x1] %vm72, 0.0
      %82 = vst.msk [vmem:[#allocation4 + $0x9] sm:$0x1] %vm72, 0.0
      %83 = vst.msk [vmem:[#allocation4 + $0xa] sm:$0x1] %vm72, 0.0
      %84 = vst.msk [vmem:[#allocation4 + $0xb] sm:$0x1] %vm72, 0.0
      %85 = vst.msk [vmem:[#allocation4 + $0xc] sm:$0x1] %vm72, 0.0
      %86 = vst.msk [vmem:[#allocation4 + $0xd] sm:$0x1] %vm72, 0.0
      %87 = vst.msk [vmem:[#allocation4 + $0xe] sm:$0x1] %vm72, 0.0
      %88 = vst.msk [vmem:[#allocation4 + $0xf] sm:$0x1] %vm72, 0.0
    $region29: #{tpu_custom_call.1} parent=1 // pred_fallthru
      _
    %v89 = vld [vmem:[#allocation5] sm:$0xff]
    %v90 = vld [vmem:[#allocation5 + $0x8] sm:$0xff]
    %v91 = vld [vmem:[#allocation5 + $0x10] sm:$0xff]
    %v92 = vld [vmem:[#allocation5 + $0x18] sm:$0xff]
    %v93 = vld [vmem:[#allocation5 + $0x20] sm:$0xff]
    %v94 = vld [vmem:[#allocation5 + $0x28] sm:$0xff]
    %v95 = vld [vmem:[#allocation5 + $0x30] sm:$0xff]
    %v96 = vld [vmem:[#allocation5 + $0x38] sm:$0xff]
    %v97 = vld [vmem:[#allocation5 + $0x40] sm:$0xff]
    %v98 = vld [vmem:[#allocation5 + $0x48] sm:$0xff]
    %v99 = vld [vmem:[#allocation5 + $0x50] sm:$0xff]
    %v100 = vld [vmem:[#allocation5 + $0x58] sm:$0xff]
    %v101 = vld [vmem:[#allocation5 + $0x60] sm:$0xff]
    %v102 = vld [vmem:[#allocation5 + $0x68] sm:$0xff]
    %v103 = vld [vmem:[#allocation5 + $0x70] sm:$0xff]
    %v104 = vld [vmem:[#allocation5 + $0x78] sm:$0xff]
    %v105 = vld [vmem:[%s1] sm:$0xff]
    %v106 = vld [vmem:[%s1 + $0x8] sm:$0xff]
    %v107 = vld [vmem:[%s1 + $0x10] sm:$0xff]
    %v108 = vld [vmem:[%s1 + $0x18] sm:$0xff]
    %v109 = vld [vmem:[%s2] sm:$0x1]
    %v111 = vlaneseq
    %v112 = vshrl.u32 %v111, 7
    %v113 = vsub.s32 0, %v112
    %v114 = vrot.slane %v109, %v113
    %vm116 = vcmask 261120
    %v118 = vsel %vm116, %v89, 0
    %v121 = vsel %vm116, %v90, 0
    %v124 = vsel %vm116, %v91, 0
    %v127 = vsel %vm116, %v92, 0
    %v130 = vsel %vm116, %v93, 0
    %v133 = vsel %vm116, %v94, 0
    %v136 = vsel %vm116, %v95, 0
    %v139 = vsel %vm116, %v96, 0
    %v142 = vsel %vm116, %v97, 0
    %v145 = vsel %vm116, %v98, 0
    %v148 = vsel %vm116, %v99, 0
    %v151 = vsel %vm116, %v100, 0
    %v154 = vsel %vm116, %v101, 0
    %v157 = vsel %vm116, %v102, 0
    %v160 = vsel %vm116, %v103, 0
    %v163 = vsel %vm116, %v104, 0
    %165 = vmatprep.subr.mxu0 0.0
    %166 = vmatpush1.msra.mxu0 %v105
    %167 = vmatprep.subr.mxu0 0.0
    %168 = vmatpush1.msra.mxu0 %v106
    %169 = vmatprep.subr.mxu0 0.0
    %170 = vmatpush1.msra.mxu0 %v107
    %171 = vmatprep.subr.mxu0 0.0
    %172 = vmatpush1.msra.mxu0 %v108
    %173 = vmatprep.subr.mxu0 0.0
    %174 = vmatpush1.msra.mxu0 0.0
    %175 = vmatprep.subr.mxu0 0.0
    %176 = vmatpush1.msra.mxu0 0.0
    %177 = vmatprep.subr.mxu0 0.0
    %178 = vmatpush1.msra.mxu0 0.0
    %179 = vmatprep.subr.mxu0 0.0
    %180 = vmatpush1.msra.mxu0 0.0
    %181 = vmatprep.subr.mxu0 0.0
    %182 = vmatpush1.msra.mxu0 0.0
    %183 = vmatprep.subr.mxu0 0.0
    %184 = vmatpush1.msra.mxu0 0.0
    %185 = vmatprep.subr.mxu0 0.0
    %186 = vmatpush1.msra.mxu0 0.0
    %187 = vmatprep.subr.mxu0 0.0
    %188 = vmatpush1.msra.mxu0 0.0
    %189 = vmatprep.subr.mxu0 0.0
    %190 = vmatpush1.msra.mxu0 0.0
    %191 = vmatprep.subr.mxu0 0.0
    %192 = vmatpush1.msra.mxu0 0.0
    %193 = vmatprep.subr.mxu0 0.0
    %194 = vmatpush1.msra.mxu0 0.0
    %195 = vmatprep.subr.mxu0 0.0
    %196 = vmatpush1.msra.mxu0 0.0
    %197 = vmatprep.subr.mxu0 0.0
    %198 = vmatpush1.msra.mxu0 0.0
    %199 = vmatprep.subr.mxu0 0.0
    %200 = vmatpush1.msra.mxu0 0.0
    %201 = vmatprep.subr.mxu0 0.0
    %202 = vmatpush1.msra.mxu0 0.0
    %203 = vmatprep.subr.mxu0 0.0
    %204 = vmatpush1.msra.mxu0 0.0
    %205 = vmatprep.subr.mxu0 0.0
    %206 = vmatpush1.msra.mxu0 0.0
    %207 = vmatprep.subr.mxu0 0.0
    %208 = vmatpush1.msra.mxu0 0.0
    %209 = vmatprep.subr.mxu0 0.0
    %210 = vmatpush1.msra.mxu0 0.0
    %211 = vmatprep.subr.mxu0 0.0
    %212 = vmatpush1.msra.mxu0 0.0
    %213 = vmatprep.subr.mxu0 0.0
    %214 = vmatpush1.msra.mxu0 0.0
    %215 = vmatprep.subr.mxu0 0.0
    %216 = vmatpush1.msra.mxu0 0.0
    %217 = vmatprep.subr.mxu0 0.0
    %218 = vmatpush1.msra.mxu0 0.0
    %219 = vmatprep.subr.mxu0 0.0
    %220 = vmatpush1.msra.mxu0 0.0
    %221 = vmatprep.subr.mxu0 0.0
    %222 = vmatpush1.msra.mxu0 0.0
    %223 = vmatprep.subr.mxu0 0.0
    %224 = vmatpush1.msra.mxu0 0.0
    %225 = vmatprep.subr.mxu0 0.0
    %226 = vmatpush1.msra.mxu0 0.0
    %227 = vmatprep.subr.mxu0 0.0
    %228 = vmatpush1.msra.mxu0 0.0
    %229 = vmatprep.mubr.f32.mxu0 0.0
    %230 = vmatmul.mubr.f32.gmra.mrb[0].mxu0 %v118
    %v231 = vpop.f32.mrb[0].mxu0
    %v232 = vadd.f32 %v114, %v231
    %v233 = vpop.f32.mrb[0].mxu0
    %234 = vmatprep.mubr.f32.mxu0 0.0
    %235 = vmatmul.mubr.f32.gmra.mrb[0].mxu0 %v121
    %v236 = vpop.f32.mrb[0].mxu0
    %v237 = vadd.f32 %v114, %v236
    %v238 = vpop.f32.mrb[0].mxu0
    %239 = vmatprep.mubr.f32.mxu0 0.0
    %240 = vmatmul.mubr.f32.gmra.mrb[0].mxu0 %v124
    %v241 = vpop.f32.mrb[0].mxu0
    %v242 = vadd.f32 %v114, %v241
    %v243 = vpop.f32.mrb[0].mxu0
    %244 = vmatprep.mubr.f32.mxu0 0.0
    %245 = vmatmul.mubr.f32.gmra.mrb[0].mxu0 %v127
    %v246 = vpop.f32.mrb[0].mxu0
    %v247 = vadd.f32 %v114, %v246
    %v248 = vpop.f32.mrb[0].mxu0
    %249 = vmatprep.mubr.f32.mxu0 0.0
    %250 = vmatmul.mubr.f32.gmra.mrb[0].mxu0 %v130
    %v251 = vpop.f32.mrb[0].mxu0
    %v252 = vadd.f32 %v114, %v251
    %v253 = vpop.f32.mrb[0].mxu0
    %254 = vmatprep.mubr.f32.mxu0 0.0
    %255 = vmatmul.mubr.f32.gmra.mrb[0].mxu0 %v133
    %v256 = vpop.f32.mrb[0].mxu0
    %v257 = vadd.f32 %v114, %v256
    %v258 = vpop.f32.mrb[0].mxu0
    %259 = vmatprep.mubr.f32.mxu0 0.0
    %260 = vmatmul.mubr.f32.gmra.mrb[0].mxu0 %v136
    %v261 = vpop.f32.mrb[0].mxu0
    %v262 = vadd.f32 %v114, %v261
    %v263 = vpop.f32.mrb[0].mxu0
    %264 = vmatprep.mubr.f32.mxu0 0.0
    %265 = vmatmul.mubr.f32.gmra.mrb[0].mxu0 %v139
    %v266 = vpop.f32.mrb[0].mxu0
    %v267 = vadd.f32 %v114, %v266
    %v268 = vpop.f32.mrb[0].mxu0
    %269 = vmatprep.mubr.f32.mxu0 0.0
    %270 = vmatmul.mubr.f32.gmra.mrb[0].mxu0 %v142
    %v271 = vpop.f32.mrb[0].mxu0
    %v272 = vadd.f32 %v114, %v271
    %v273 = vpop.f32.mrb[0].mxu0
    %274 = vmatprep.mubr.f32.mxu0 0.0
    %275 = vmatmul.mubr.f32.gmra.mrb[0].mxu0 %v145
    %v276 = vpop.f32.mrb[0].mxu0
    %v277 = vadd.f32 %v114, %v276
    %v278 = vpop.f32.mrb[0].mxu0
    %279 = vmatprep.mubr.f32.mxu0 0.0
    %280 = vmatmul.mubr.f32.gmra.mrb[0].mxu0 %v148
    %v281 = vpop.f32.mrb[0].mxu0
    %v282 = vadd.f32 %v114, %v281
    %v283 = vpop.f32.mrb[0].mxu0
    %284 = vmatprep.mubr.f32.mxu0 0.0
    %285 = vmatmul.mubr.f32.gmra.mrb[0].mxu0 %v151
    %v286 = vpop.f32.mrb[0].mxu0
    %v287 = vadd.f32 %v114, %v286
    %v288 = vpop.f32.mrb[0].mxu0
    %289 = vmatprep.mubr.f32.mxu0 0.0
    %290 = vmatmul.mubr.f32.gmra.mrb[0].mxu0 %v154
    %v291 = vpop.f32.mrb[0].mxu0
    %v292 = vadd.f32 %v114, %v291
    %v293 = vpop.f32.mrb[0].mxu0
    %294 = vmatprep.mubr.f32.mxu0 0.0
    %295 = vmatmul.mubr.f32.gmra.mrb[0].mxu0 %v157
    %v296 = vpop.f32.mrb[0].mxu0
    %v297 = vadd.f32 %v114, %v296
    %v298 = vpop.f32.mrb[0].mxu0
    %299 = vmatprep.mubr.f32.mxu0 0.0
    %300 = vmatmul.mubr.f32.gmra.mrb[0].mxu0 %v160
    %v301 = vpop.f32.mrb[0].mxu0
    %v302 = vadd.f32 %v114, %v301
    %v303 = vpop.f32.mrb[0].mxu0
    %304 = vmatprep.mubr.f32.mxu0 0.0
    %305 = vmatmul.mubr.f32.gmra.mrb[0].mxu0 %v163
    %v306 = vpop.f32.mrb[0].mxu0
    %v307 = vadd.f32 %v114, %v306
    %v308 = vpop.f32.mrb[0].mxu0
    %309 = vdwg.mxu0
    %v310 = vtanh.pop %v232
    %v311 = vtanh.pop %v237
    %v312 = vtanh.pop %v242
    %v313 = vtanh.pop %v247
    %v314 = vtanh.pop %v252
    %v315 = vtanh.pop %v257
    %v316 = vtanh.pop %v262
    %v317 = vtanh.pop %v267
    %v318 = vtanh.pop %v272
    %v319 = vtanh.pop %v277
    %v320 = vtanh.pop %v282
    %v321 = vtanh.pop %v287
    %v322 = vtanh.pop %v292
    %v323 = vtanh.pop %v297
    %v324 = vtanh.pop %v302
    %v325 = vtanh.pop %v307
    %v326 = vld [vmem:[%s3] sm:$0x1]
    %vm327 = vcmask 130048
    %v329 = vsel %vm327, %v326, 0
    %v332 = vsel %vm327, %v310, 0
    %334 = vmatprep.subr.mxu0 0.0
    %335 = vmatpush1.xpose.msra.mxu0 %v332
    %336 = vmatprep.subr.mxu0 0.0
    %337 = vmatpush1.xpose.msra.mxu0 0.0
    %338 = vmatprep.subr.mxu0 0.0
    %339 = vmatpush1.xpose.msra.mxu0 0.0
    %340 = vmatprep.subr.mxu0 0.0
    %341 = vmatpush1.xpose.msra.mxu0 0.0
    %342 = vmatprep.subr.mxu0 0.0
    %343 = vmatpush1.xpose.msra.mxu0 0.0
    %344 = vmatprep.subr.mxu0 0.0
    %345 = vmatpush1.xpose.msra.mxu0 0.0
    %346 = vmatprep.subr.mxu0 0.0
    %347 = vmatpush1.xpose.msra.mxu0 0.0
    %348 = vmatprep.subr.mxu0 0.0
    %349 = vmatpush1.xpose.msra.mxu0 0.0
    %350 = vmatprep.subr.mxu0 0.0
    %351 = vmatpush1.xpose.msra.mxu0 0.0
    %352 = vmatprep.subr.mxu0 0.0
    %353 = vmatpush1.xpose.msra.mxu0 0.0
    %354 = vmatprep.subr.mxu0 0.0
    %355 = vmatpush1.xpose.msra.mxu0 0.0
    %356 = vmatprep.subr.mxu0 0.0
    %357 = vmatpush1.xpose.msra.mxu0 0.0
    %358 = vmatprep.subr.mxu0 0.0
    %359 = vmatpush1.xpose.msra.mxu0 0.0
    %360 = vmatprep.subr.mxu0 0.0
    %361 = vmatpush1.xpose.msra.mxu0 0.0
    %362 = vmatprep.subr.mxu0 0.0
    %363 = vmatpush1.xpose.msra.mxu0 0.0
    %364 = vmatprep.subr.mxu0 0.0
    %365 = vmatpush1.xpose.msra.mxu0 0.0
    %366 = vmatprep.subr.mxu0 0.0
    %367 = vmatpush1.xpose.msra.mxu0 0.0
    %368 = vmatprep.subr.mxu0 0.0
    %369 = vmatpush1.xpose.msra.mxu0 0.0
    %370 = vmatprep.subr.mxu0 0.0
    %371 = vmatpush1.xpose.msra.mxu0 0.0
    %372 = vmatprep.subr.mxu0 0.0
    %373 = vmatpush1.xpose.msra.mxu0 0.0
    %374 = vmatprep.subr.mxu0 0.0
    %375 = vmatpush1.xpose.msra.mxu0 0.0
    %376 = vmatprep.subr.mxu0 0.0
    %377 = vmatpush1.xpose.msra.mxu0 0.0
    %378 = vmatprep.subr.mxu0 0.0
    %379 = vmatpush1.xpose.msra.mxu0 0.0
    %380 = vmatprep.subr.mxu0 0.0
    %381 = vmatpush1.xpose.msra.mxu0 0.0
    %382 = vmatprep.subr.mxu0 0.0
    %383 = vmatpush1.xpose.msra.mxu0 0.0
    %384 = vmatprep.subr.mxu0 0.0
    %385 = vmatpush1.xpose.msra.mxu0 0.0
    %386 = vmatprep.subr.mxu0 0.0
    %387 = vmatpush1.xpose.msra.mxu0 0.0
    %388 = vmatprep.subr.mxu0 0.0
    %389 = vmatpush1.xpose.msra.mxu0 0.0
    %390 = vmatprep.subr.mxu0 0.0
    %391 = vmatpush1.xpose.msra.mxu0 0.0
    %392 = vmatprep.subr.mxu0 0.0
    %393 = vmatpush1.xpose.msra.mxu0 0.0
    %394 = vmatprep.subr.mxu0 0.0
    %395 = vmatpush1.xpose.msra.mxu0 0.0
    %396 = vmatprep.subr.mxu0 0.0
    %397 = vmatpush1.xpose.msra.mxu0 0.0
    %398 = vmatprep.mubr.f32.mxu0 0.0
    %399 = vmatmul.mubr.f32.gmra.mrb[0].mxu0 %v329
    %v400 = vpop.f32.mrb[0].mxu0
    %v401 = vadd.f32 0.0, %v400
    %v402 = vpop.f32.mrb[0].mxu0
    %403 = vdwg.mxu0
    %v405 = vsel %vm327, %v311, 0
    %407 = vmatprep.subr.mxu0 0.0
    %408 = vmatpush1.xpose.msra.mxu0 %v405
    %409 = vmatprep.subr.mxu0 0.0
    %410 = vmatpush1.xpose.msra.mxu0 0.0
    %411 = vmatprep.subr.mxu0 0.0
    %412 = vmatpush1.xpose.msra.mxu0 0.0
    %413 = vmatprep.subr.mxu0 0.0
    %414 = vmatpush1.xpose.msra.mxu0 0.0
    %415 = vmatprep.subr.mxu0 0.0
    %416 = vmatpush1.xpose.msra.mxu0 0.0
    %417 = vmatprep.subr.mxu0 0.0
    %418 = vmatpush1.xpose.msra.mxu0 0.0
    %419 = vmatprep.subr.mxu0 0.0
    %420 = vmatpush1.xpose.msra.mxu0 0.0
    %421 = vmatprep.subr.mxu0 0.0
    %422 = vmatpush1.xpose.msra.mxu0 0.0
    %423 = vmatprep.subr.mxu0 0.0
    %424 = vmatpush1.xpose.msra.mxu0 0.0
    %425 = vmatprep.subr.mxu0 0.0
    %426 = vmatpush1.xpose.msra.mxu0 0.0
    %427 = vmatprep.subr.mxu0 0.0
    %428 = vmatpush1.xpose.msra.mxu0 0.0
    %429 = vmatprep.subr.mxu0 0.0
    %430 = vmatpush1.xpose.msra.mxu0 0.0
    %431 = vmatprep.subr.mxu0 0.0
    %432 = vmatpush1.xpose.msra.mxu0 0.0
    %433 = vmatprep.subr.mxu0 0.0
    %434 = vmatpush1.xpose.msra.mxu0 0.0
    %435 = vmatprep.subr.mxu0 0.0
    %436 = vmatpush1.xpose.msra.mxu0 0.0
    %437 = vmatprep.subr.mxu0 0.0
    %438 = vmatpush1.xpose.msra.mxu0 0.0
    %439 = vmatprep.subr.mxu0 0.0
    %440 = vmatpush1.xpose.msra.mxu0 0.0
    %441 = vmatprep.subr.mxu0 0.0
    %442 = vmatpush1.xpose.msra.mxu0 0.0
    %443 = vmatprep.subr.mxu0 0.0
    %444 = vmatpush1.xpose.msra.mxu0 0.0
    %445 = vmatprep.subr.mxu0 0.0
    %446 = vmatpush1.xpose.msra.mxu0 0.0
    %447 = vmatprep.subr.mxu0 0.0
    %448 = vmatpush1.xpose.msra.mxu0 0.0
    %449 = vmatprep.subr.mxu0 0.0
    %450 = vmatpush1.xpose.msra.mxu0 0.0
    %451 = vmatprep.subr.mxu0 0.0
    %452 = vmatpush1.xpose.msra.mxu0 0.0
    %453 = vmatprep.subr.mxu0 0.0
    %454 = vmatpush1.xpose.msra.mxu0 0.0
    %455 = vmatprep.subr.mxu0 0.0
    %456 = vmatpush1.xpose.msra.mxu0 0.0
    %457 = vmatprep.subr.mxu0 0.0
    %458 = vmatpush1.xpose.msra.mxu0 0.0
    %459 = vmatprep.subr.mxu0 0.0
    %460 = vmatpush1.xpose.msra.mxu0 0.0
    %461 = vmatprep.subr.mxu0 0.0
    %462 = vmatpush1.xpose.msra.mxu0 0.0
    %463 = vmatprep.subr.mxu0 0.0
    %464 = vmatpush1.xpose.msra.mxu0 0.0
    %465 = vmatprep.subr.mxu0 0.0
    %466 = vmatpush1.xpose.msra.mxu0 0.0
    %467 = vmatprep.subr.mxu0 0.0
    %468 = vmatpush1.xpose.msra.mxu0 0.0
    %469 = vmatprep.subr.mxu0 0.0
    %470 = vmatpush1.xpose.msra.mxu0 0.0
    %471 = vmatprep.mubr.f32.mxu0 0.0
    %472 = vmatmul.mubr.f32.gmra.mrb[0].mxu0 %v329
    %v473 = vpop.f32.mrb[0].mxu0
    %v474 = vadd.f32 0.0, %v473
    %v475 = vpop.f32.mrb[0].mxu0
    %476 = vdwg.mxu0
    %v478 = vsel %vm327, %v312, 0
    %480 = vmatprep.subr.mxu0 0.0
    %481 = vmatpush1.xpose.msra.mxu0 %v478
    %482 = vmatprep.subr.mxu0 0.0
    %483 = vmatpush1.xpose.msra.mxu0 0.0
    %484 = vmatprep.subr.mxu0 0.0
    %485 = vmatpush1.xpose.msra.mxu0 0.0
    %486 = vmatprep.subr.mxu0 0.0
    %487 = vmatpush1.xpose.msra.mxu0 0.0
    %488 = vmatprep.subr.mxu0 0.0
    %489 = vmatpush1.xpose.msra.mxu0 0.0
    %490 = vmatprep.subr.mxu0 0.0
    %491 = vmatpush1.xpose.msra.mxu0 0.0
    %492 = vmatprep.subr.mxu0 0.0
    %493 = vmatpush1.xpose.msra.mxu0 0.0
    %494 = vmatprep.subr.mxu0 0.0
    %495 = vmatpush1.xpose.msra.mxu0 0.0
    %496 = vmatprep.subr.mxu0 0.0
    %497 = vmatpush1.xpose.msra.mxu0 0.0
    %498 = vmatprep.subr.mxu0 0.0
    %499 = vmatpush1.xpose.msra.mxu0 0.0
    %500 = vmatprep.subr.mxu0 0.0
    %501 = vmatpush1.xpose.msra.mxu0 0.0
    %502 = vmatprep.subr.mxu0 0.0
    %503 = vmatpush1.xpose.msra.mxu0 0.0
    %504 = vmatprep.subr.mxu0 0.0
    %505 = vmatpush1.xpose.msra.mxu0 0.0
    %506 = vmatprep.subr.mxu0 0.0
    %507 = vmatpush1.xpose.msra.mxu0 0.0
    %508 = vmatprep.subr.mxu0 0.0
    %509 = vmatpush1.xpose.msra.mxu0 0.0
    %510 = vmatprep.subr.mxu0 0.0
    %511 = vmatpush1.xpose.msra.mxu0 0.0
    %512 = vmatprep.subr.mxu0 0.0
    %513 = vmatpush1.xpose.msra.mxu0 0.0
    %514 = vmatprep.subr.mxu0 0.0
    %515 = vmatpush1.xpose.msra.mxu0 0.0
    %516 = vmatprep.subr.mxu0 0.0
    %517 = vmatpush1.xpose.msra.mxu0 0.0
    %518 = vmatprep.subr.mxu0 0.0
    %519 = vmatpush1.xpose.msra.mxu0 0.0
    %520 = vmatprep.subr.mxu0 0.0
    %521 = vmatpush1.xpose.msra.mxu0 0.0
    %522 = vmatprep.subr.mxu0 0.0
    %523 = vmatpush1.xpose.msra.mxu0 0.0
    %524 = vmatprep.subr.mxu0 0.0
    %525 = vmatpush1.xpose.msra.mxu0 0.0
    %526 = vmatprep.subr.mxu0 0.0
    %527 = vmatpush1.xpose.msra.mxu0 0.0
    %528 = vmatprep.subr.mxu0 0.0
    %529 = vmatpush1.xpose.msra.mxu0 0.0
    %530 = vmatprep.subr.mxu0 0.0
    %531 = vmatpush1.xpose.msra.mxu0 0.0
    %532 = vmatprep.subr.mxu0 0.0
    %533 = vmatpush1.xpose.msra.mxu0 0.0
    %534 = vmatprep.subr.mxu0 0.0
    %535 = vmatpush1.xpose.msra.mxu0 0.0
    %536 = vmatprep.subr.mxu0 0.0
    %537 = vmatpush1.xpose.msra.mxu0 0.0
    %538 = vmatprep.subr.mxu0 0.0
    %539 = vmatpush1.xpose.msra.mxu0 0.0
    %540 = vmatprep.subr.mxu0 0.0
    %541 = vmatpush1.xpose.msra.mxu0 0.0
    %542 = vmatprep.subr.mxu0 0.0
    %543 = vmatpush1.xpose.msra.mxu0 0.0
    %544 = vmatprep.mubr.f32.mxu0 0.0
    %545 = vmatmul.mubr.f32.gmra.mrb[0].mxu0 %v329
    %v546 = vpop.f32.mrb[0].mxu0
    %v547 = vadd.f32 0.0, %v546
    %v548 = vpop.f32.mrb[0].mxu0
    %549 = vdwg.mxu0
    %v551 = vsel %vm327, %v313, 0
    %553 = vmatprep.subr.mxu0 0.0
    %554 = vmatpush1.xpose.msra.mxu0 %v551
    %555 = vmatprep.subr.mxu0 0.0
    %556 = vmatpush1.xpose.msra.mxu0 0.0
    %557 = vmatprep.subr.mxu0 0.0
    %558 = vmatpush1.xpose.msra.mxu0 0.0
    %559 = vmatprep.subr.mxu0 0.0
    %560 = vmatpush1.xpose.msra.mxu0 0.0
    %561 = vmatprep.subr.mxu0 0.0
    %562 = vmatpush1.xpose.msra.mxu0 0.0
    %563 = vmatprep.subr.mxu0 0.0
    %564 = vmatpush1.xpose.msra.mxu0 0.0
    %565 = vmatprep.subr.mxu0 0.0
    %566 = vmatpush1.xpose.msra.mxu0 0.0
    %567 = vmatprep.subr.mxu0 0.0
    %568 = vmatpush1.xpose.msra.mxu0 0.0
    %569 = vmatprep.subr.mxu0 0.0
    %570 = vmatpush1.xpose.msra.mxu0 0.0
    %571 = vmatprep.subr.mxu0 0.0
    %572 = vmatpush1.xpose.msra.mxu0 0.0
    %573 = vmatprep.subr.mxu0 0.0
    %574 = vmatpush1.xpose.msra.mxu0 0.0
    %575 = vmatprep.subr.mxu0 0.0
    %576 = vmatpush1.xpose.msra.mxu0 0.0
    %577 = vmatprep.subr.mxu0 0.0
    %578 = vmatpush1.xpose.msra.mxu0 0.0
    %579 = vmatprep.subr.mxu0 0.0
    %580 = vmatpush1.xpose.msra.mxu0 0.0
    %581 = vmatprep.subr.mxu0 0.0
    %582 = vmatpush1.xpose.msra.mxu0 0.0
    %583 = vmatprep.subr.mxu0 0.0
    %584 = vmatpush1.xpose.msra.mxu0 0.0
    %585 = vmatprep.subr.mxu0 0.0
    %586 = vmatpush1.xpose.msra.mxu0 0.0
    %587 = vmatprep.subr.mxu0 0.0
    %588 = vmatpush1.xpose.msra.mxu0 0.0
    %589 = vmatprep.subr.mxu0 0.0
    %590 = vmatpush1.xpose.msra.mxu0 0.0
    %591 = vmatprep.subr.mxu0 0.0
    %592 = vmatpush1.xpose.msra.mxu0 0.0
    %593 = vmatprep.subr.mxu0 0.0
    %594 = vmatpush1.xpose.msra.mxu0 0.0
    %595 = vmatprep.subr.mxu0 0.0
    %596 = vmatpush1.xpose.msra.mxu0 0.0
    %597 = vmatprep.subr.mxu0 0.0
    %598 = vmatpush1.xpose.msra.mxu0 0.0
    %599 = vmatprep.subr.mxu0 0.0
    %600 = vmatpush1.xpose.msra.mxu0 0.0
    %601 = vmatprep.subr.mxu0 0.0
    %602 = vmatpush1.xpose.msra.mxu0 0.0
    %603 = vmatprep.subr.mxu0 0.0
    %604 = vmatpush1.xpose.msra.mxu0 0.0
    %605 = vmatprep.subr.mxu0 0.0
    %606 = vmatpush1.xpose.msra.mxu0 0.0
    %607 = vmatprep.subr.mxu0 0.0
    %608 = vmatpush1.xpose.msra.mxu0 0.0
    %609 = vmatprep.subr.mxu0 0.0
    %610 = vmatpush1.xpose.msra.mxu0 0.0
    %611 = vmatprep.subr.mxu0 0.0
    %612 = vmatpush1.xpose.msra.mxu0 0.0
    %613 = vmatprep.subr.mxu0 0.0
    %614 = vmatpush1.xpose.msra.mxu0 0.0
    %615 = vmatprep.subr.mxu0 0.0
    %616 = vmatpush1.xpose.msra.mxu0 0.0
    %617 = vmatprep.mubr.f32.mxu0 0.0
    %618 = vmatmul.mubr.f32.gmra.mrb[0].mxu0 %v329
    %v619 = vpop.f32.mrb[0].mxu0
    %v620 = vadd.f32 0.0, %v619
    %v621 = vpop.f32.mrb[0].mxu0
    %622 = vdwg.mxu0
    %v624 = vsel %vm327, %v314, 0
    %626 = vmatprep.subr.mxu0 0.0
    %627 = vmatpush1.xpose.msra.mxu0 %v624
    %628 = vmatprep.subr.mxu0 0.0
    %629 = vmatpush1.xpose.msra.mxu0 0.0
    %630 = vmatprep.subr.mxu0 0.0
    %631 = vmatpush1.xpose.msra.mxu0 0.0
    %632 = vmatprep.subr.mxu0 0.0
    %633 = vmatpush1.xpose.msra.mxu0 0.0
    %634 = vmatprep.subr.mxu0 0.0
    %635 = vmatpush1.xpose.msra.mxu0 0.0
    %636 = vmatprep.subr.mxu0 0.0
    %637 = vmatpush1.xpose.msra.mxu0 0.0
    %638 = vmatprep.subr.mxu0 0.0
    %639 = vmatpush1.xpose.msra.mxu0 0.0
    %640 = vmatprep.subr.mxu0 0.0
    %641 = vmatpush1.xpose.msra.mxu0 0.0
    %642 = vmatprep.subr.mxu0 0.0
    %643 = vmatpush1.xpose.msra.mxu0 0.0
    %644 = vmatprep.subr.mxu0 0.0
    %645 = vmatpush1.xpose.msra.mxu0 0.0
    %646 = vmatprep.subr.mxu0 0.0
    %647 = vmatpush1.xpose.msra.mxu0 0.0
    %648 = vmatprep.subr.mxu0 0.0
    %649 = vmatpush1.xpose.msra.mxu0 0.0
    %650 = vmatprep.subr.mxu0 0.0
    %651 = vmatpush1.xpose.msra.mxu0 0.0
    %652 = vmatprep.subr.mxu0 0.0
    %653 = vmatpush1.xpose.msra.mxu0 0.0
    %654 = vmatprep.subr.mxu0 0.0
    %655 = vmatpush1.xpose.msra.mxu0 0.0
    %656 = vmatprep.subr.mxu0 0.0
    %657 = vmatpush1.xpose.msra.mxu0 0.0
    %658 = vmatprep.subr.mxu0 0.0
    %659 = vmatpush1.xpose.msra.mxu0 0.0
    %660 = vmatprep.subr.mxu0 0.0
    %661 = vmatpush1.xpose.msra.mxu0 0.0
    %662 = vmatprep.subr.mxu0 0.0
    %663 = vmatpush1.xpose.msra.mxu0 0.0
    %664 = vmatprep.subr.mxu0 0.0
    %665 = vmatpush1.xpose.msra.mxu0 0.0
    %666 = vmatprep.subr.mxu0 0.0
    %667 = vmatpush1.xpose.msra.mxu0 0.0
    %668 = vmatprep.subr.mxu0 0.0
    %669 = vmatpush1.xpose.msra.mxu0 0.0
    %670 = vmatprep.subr.mxu0 0.0
    %671 = vmatpush1.xpose.msra.mxu0 0.0
    %672 = vmatprep.subr.mxu0 0.0
    %673 = vmatpush1.xpose.msra.mxu0 0.0
    %674 = vmatprep.subr.mxu0 0.0
    %675 = vmatpush1.xpose.msra.mxu0 0.0
    %676 = vmatprep.subr.mxu0 0.0
    %677 = vmatpush1.xpose.msra.mxu0 0.0
    %678 = vmatprep.subr.mxu0 0.0
    %679 = vmatpush1.xpose.msra.mxu0 0.0
    %680 = vmatprep.subr.mxu0 0.0
    %681 = vmatpush1.xpose.msra.mxu0 0.0
    %682 = vmatprep.subr.mxu0 0.0
    %683 = vmatpush1.xpose.msra.mxu0 0.0
    %684 = vmatprep.subr.mxu0 0.0
    %685 = vmatpush1.xpose.msra.mxu0 0.0
    %686 = vmatprep.subr.mxu0 0.0
    %687 = vmatpush1.xpose.msra.mxu0 0.0
    %688 = vmatprep.subr.mxu0 0.0
    %689 = vmatpush1.xpose.msra.mxu0 0.0
    %690 = vmatprep.mubr.f32.mxu0 0.0
    %691 = vmatmul.mubr.f32.gmra.mrb[0].mxu0 %v329
    %v692 = vpop.f32.mrb[0].mxu0
    %v693 = vadd.f32 0.0, %v692
    %v694 = vpop.f32.mrb[0].mxu0
    %695 = vdwg.mxu0
    %v697 = vsel %vm327, %v315, 0
    %699 = vmatprep.subr.mxu0 0.0
    %700 = vmatpush1.xpose.msra.mxu0 %v697
    %701 = vmatprep.subr.mxu0 0.0
    %702 = vmatpush1.xpose.msra.mxu0 0.0
    %703 = vmatprep.subr.mxu0 0.0
    %704 = vmatpush1.xpose.msra.mxu0 0.0
    %705 = vmatprep.subr.mxu0 0.0
    %706 = vmatpush1.xpose.msra.mxu0 0.0
    %707 = vmatprep.subr.mxu0 0.0
    %708 = vmatpush1.xpose.msra.mxu0 0.0
    %709 = vmatprep.subr.mxu0 0.0
    %710 = vmatpush1.xpose.msra.mxu0 0.0
    %711 = vmatprep.subr.mxu0 0.0
    %712 = vmatpush1.xpose.msra.mxu0 0.0
    %713 = vmatprep.subr.mxu0 0.0
    %714 = vmatpush1.xpose.msra.mxu0 0.0
    %715 = vmatprep.subr.mxu0 0.0
    %716 = vmatpush1.xpose.msra.mxu0 0.0
    %717 = vmatprep.subr.mxu0 0.0
    %718 = vmatpush1.xpose.msra.mxu0 0.0
    %719 = vmatprep.subr.mxu0 0.0
    %720 = vmatpush1.xpose.msra.mxu0 0.0
    %721 = vmatprep.subr.mxu0 0.0
    %722 = vmatpush1.xpose.msra.mxu0 0.0
    %723 = vmatprep.subr.mxu0 0.0
    %724 = vmatpush1.xpose.msra.mxu0 0.0
    %725 = vmatprep.subr.mxu0 0.0
    %726 = vmatpush1.xpose.msra.mxu0 0.0
    %727 = vmatprep.subr.mxu0 0.0
    %728 = vmatpush1.xpose.msra.mxu0 0.0
    %729 = vmatprep.subr.mxu0 0.0
    %730 = vmatpush1.xpose.msra.mxu0 0.0
    %731 = vmatprep.subr.mxu0 0.0
    %732 = vmatpush1.xpose.msra.mxu0 0.0
    %733 = vmatprep.subr.mxu0 0.0
    %734 = vmatpush1.xpose.msra.mxu0 0.0
    %735 = vmatprep.subr.mxu0 0.0
    %736 = vmatpush1.xpose.msra.mxu0 0.0
    %737 = vmatprep.subr.mxu0 0.0
    %738 = vmatpush1.xpose.msra.mxu0 0.0
    %739 = vmatprep.subr.mxu0 0.0
    %740 = vmatpush1.xpose.msra.mxu0 0.0
    %741 = vmatprep.subr.mxu0 0.0
    %742 = vmatpush1.xpose.msra.mxu0 0.0
    %743 = vmatprep.subr.mxu0 0.0
    %744 = vmatpush1.xpose.msra.mxu0 0.0
    %745 = vmatprep.subr.mxu0 0.0
    %746 = vmatpush1.xpose.msra.mxu0 0.0
    %747 = vmatprep.subr.mxu0 0.0
    %748 = vmatpush1.xpose.msra.mxu0 0.0
    %749 = vmatprep.subr.mxu0 0.0
    %750 = vmatpush1.xpose.msra.mxu0 0.0
    %751 = vmatprep.subr.mxu0 0.0
    %752 = vmatpush1.xpose.msra.mxu0 0.0
    %753 = vmatprep.subr.mxu0 0.0
    %754 = vmatpush1.xpose.msra.mxu0 0.0
    %755 = vmatprep.subr.mxu0 0.0
    %756 = vmatpush1.xpose.msra.mxu0 0.0
    %757 = vmatprep.subr.mxu0 0.0
    %758 = vmatpush1.xpose.msra.mxu0 0.0
    %759 = vmatprep.subr.mxu0 0.0
    %760 = vmatpush1.xpose.msra.mxu0 0.0
    %761 = vmatprep.subr.mxu0 0.0
    %762 = vmatpush1.xpose.msra.mxu0 0.0
    %763 = vmatprep.mubr.f32.mxu0 0.0
    %764 = vmatmul.mubr.f32.gmra.mrb[0].mxu0 %v329
    %v765 = vpop.f32.mrb[0].mxu0
    %v766 = vadd.f32 0.0, %v765
    %v767 = vpop.f32.mrb[0].mxu0
    %768 = vdwg.mxu0
    %v770 = vsel %vm327, %v316, 0
    %772 = vmatprep.subr.mxu0 0.0
    %773 = vmatpush1.xpose.msra.mxu0 %v770
    %774 = vmatprep.subr.mxu0 0.0
    %775 = vmatpush1.xpose.msra.mxu0 0.0
    %776 = vmatprep.subr.mxu0 0.0
    %777 = vmatpush1.xpose.msra.mxu0 0.0
    %778 = vmatprep.subr.mxu0 0.0
    %779 = vmatpush1.xpose.msra.mxu0 0.0
    %780 = vmatprep.subr.mxu0 0.0
    %781 = vmatpush1.xpose.msra.mxu0 0.0
    %782 = vmatprep.subr.mxu0 0.0
    %783 = vmatpush1.xpose.msra.mxu0 0.0
    %784 = vmatprep.subr.mxu0 0.0
    %785 = vmatpush1.xpose.msra.mxu0 0.0
    %786 = vmatprep.subr.mxu0 0.0
    %787 = vmatpush1.xpose.msra.mxu0 0.0
    %788 = vmatprep.subr.mxu0 0.0
    %789 = vmatpush1.xpose.msra.mxu0 0.0
    %790 = vmatprep.subr.mxu0 0.0
    %791 = vmatpush1.xpose.msra.mxu0 0.0
    %792 = vmatprep.subr.mxu0 0.0
    %793 = vmatpush1.xpose.msra.mxu0 0.0
    %794 = vmatprep.subr.mxu0 0.0
    %795 = vmatpush1.xpose.msra.mxu0 0.0
    %796 = vmatprep.subr.mxu0 0.0
    %797 = vmatpush1.xpose.msra.mxu0 0.0
    %798 = vmatprep.subr.mxu0 0.0
    %799 = vmatpush1.xpose.msra.mxu0 0.0
    %800 = vmatprep.subr.mxu0 0.0
    %801 = vmatpush1.xpose.msra.mxu0 0.0
    %802 = vmatprep.subr.mxu0 0.0
    %803 = vmatpush1.xpose.msra.mxu0 0.0
    %804 = vmatprep.subr.mxu0 0.0
    %805 = vmatpush1.xpose.msra.mxu0 0.0
    %806 = vmatprep.subr.mxu0 0.0
    %807 = vmatpush1.xpose.msra.mxu0 0.0
    %808 = vmatprep.subr.mxu0 0.0
    %809 = vmatpush1.xpose.msra.mxu0 0.0
    %810 = vmatprep.subr.mxu0 0.0
    %811 = vmatpush1.xpose.msra.mxu0 0.0
    %812 = vmatprep.subr.mxu0 0.0
    %813 = vmatpush1.xpose.msra.mxu0 0.0
    %814 = vmatprep.subr.mxu0 0.0
    %815 = vmatpush1.xpose.msra.mxu0 0.0
    %816 = vmatprep.subr.mxu0 0.0
    %817 = vmatpush1.xpose.msra.mxu0 0.0
    %818 = vmatprep.subr.mxu0 0.0
    %819 = vmatpush1.xpose.msra.mxu0 0.0
    %820 = vmatprep.subr.mxu0 0.0
    %821 = vmatpush1.xpose.msra.mxu0 0.0
    %822 = vmatprep.subr.mxu0 0.0
    %823 = vmatpush1.xpose.msra.mxu0 0.0
    %824 = vmatprep.subr.mxu0 0.0
    %825 = vmatpush1.xpose.msra.mxu0 0.0
    %826 = vmatprep.subr.mxu0 0.0
    %827 = vmatpush1.xpose.msra.mxu0 0.0
    %828 = vmatprep.subr.mxu0 0.0
    %829 = vmatpush1.xpose.msra.mxu0 0.0
    %830 = vmatprep.subr.mxu0 0.0
    %831 = vmatpush1.xpose.msra.mxu0 0.0
    %832 = vmatprep.subr.mxu0 0.0
    %833 = vmatpush1.xpose.msra.mxu0 0.0
    %834 = vmatprep.subr.mxu0 0.0
    %835 = vmatpush1.xpose.msra.mxu0 0.0
    %836 = vmatprep.mubr.f32.mxu0 0.0
    %837 = vmatmul.mubr.f32.gmra.mrb[0].mxu0 %v329
    %v838 = vpop.f32.mrb[0].mxu0
    %v839 = vadd.f32 0.0, %v838
    %v840 = vpop.f32.mrb[0].mxu0
    %841 = vdwg.mxu0
    %v843 = vsel %vm327, %v317, 0
    %845 = vmatprep.subr.mxu0 0.0
    %846 = vmatpush1.xpose.msra.mxu0 %v843
    %847 = vmatprep.subr.mxu0 0.0
    %848 = vmatpush1.xpose.msra.mxu0 0.0
    %849 = vmatprep.subr.mxu0 0.0
    %850 = vmatpush1.xpose.msra.mxu0 0.0
    %851 = vmatprep.subr.mxu0 0.0
    %852 = vmatpush1.xpose.msra.mxu0 0.0
    %853 = vmatprep.subr.mxu0 0.0
    %854 = vmatpush1.xpose.msra.mxu0 0.0
    %855 = vmatprep.subr.mxu0 0.0
    %856 = vmatpush1.xpose.msra.mxu0 0.0
    %857 = vmatprep.subr.mxu0 0.0
    %858 = vmatpush1.xpose.msra.mxu0 0.0
    %859 = vmatprep.subr.mxu0 0.0
    %860 = vmatpush1.xpose.msra.mxu0 0.0
    %861 = vmatprep.subr.mxu0 0.0
    %862 = vmatpush1.xpose.msra.mxu0 0.0
    %863 = vmatprep.subr.mxu0 0.0
    %864 = vmatpush1.xpose.msra.mxu0 0.0
    %865 = vmatprep.subr.mxu0 0.0
    %866 = vmatpush1.xpose.msra.mxu0 0.0
    %867 = vmatprep.subr.mxu0 0.0
    %868 = vmatpush1.xpose.msra.mxu0 0.0
    %869 = vmatprep.subr.mxu0 0.0
    %870 = vmatpush1.xpose.msra.mxu0 0.0
    %871 = vmatprep.subr.mxu0 0.0
    %872 = vmatpush1.xpose.msra.mxu0 0.0
    %873 = vmatprep.subr.mxu0 0.0
    %874 = vmatpush1.xpose.msra.mxu0 0.0
    %875 = vmatprep.subr.mxu0 0.0
    %876 = vmatpush1.xpose.msra.mxu0 0.0
    %877 = vmatprep.subr.mxu0 0.0
    %878 = vmatpush1.xpose.msra.mxu0 0.0
    %879 = vmatprep.subr.mxu0 0.0
    %880 = vmatpush1.xpose.msra.mxu0 0.0
    %881 = vmatprep.subr.mxu0 0.0
    %882 = vmatpush1.xpose.msra.mxu0 0.0
    %883 = vmatprep.subr.mxu0 0.0
    %884 = vmatpush1.xpose.msra.mxu0 0.0
    %885 = vmatprep.subr.mxu0 0.0
    %886 = vmatpush1.xpose.msra.mxu0 0.0
    %887 = vmatprep.subr.mxu0 0.0
    %888 = vmatpush1.xpose.msra.mxu0 0.0
    %889 = vmatprep.subr.mxu0 0.0
    %890 = vmatpush1.xpose.msra.mxu0 0.0
    %891 = vmatprep.subr.mxu0 0.0
    %892 = vmatpush1.xpose.msra.mxu0 0.0
    %893 = vmatprep.subr.mxu0 0.0
    %894 = vmatpush1.xpose.msra.mxu0 0.0
    %895 = vmatprep.subr.mxu0 0.0
    %896 = vmatpush1.xpose.msra.mxu0 0.0
    %897 = vmatprep.subr.mxu0 0.0
    %898 = vmatpush1.xpose.msra.mxu0 0.0
    %899 = vmatprep.subr.mxu0 0.0
    %900 = vmatpush1.xpose.msra.mxu0 0.0
    %901 = vmatprep.subr.mxu0 0.0
    %902 = vmatpush1.xpose.msra.mxu0 0.0
    %903 = vmatprep.subr.mxu0 0.0
    %904 = vmatpush1.xpose.msra.mxu0 0.0
    %905 = vmatprep.subr.mxu0 0.0
    %906 = vmatpush1.xpose.msra.mxu0 0.0
    %907 = vmatprep.subr.mxu0 0.0
    %908 = vmatpush1.xpose.msra.mxu0 0.0
    %909 = vmatprep.mubr.f32.mxu0 0.0
    %910 = vmatmul.mubr.f32.gmra.mrb[0].mxu0 %v329
    %v911 = vpop.f32.mrb[0].mxu0
    %v912 = vadd.f32 0.0, %v911
    %v913 = vpop.f32.mrb[0].mxu0
    %914 = vdwg.mxu0
    %v916 = vsel %vm327, %v318, 0
    %918 = vmatprep.subr.mxu0 0.0
    %919 = vmatpush1.xpose.msra.mxu0 %v916
    %920 = vmatprep.subr.mxu0 0.0
    %921 = vmatpush1.xpose.msra.mxu0 0.0
    %922 = vmatprep.subr.mxu0 0.0
    %923 = vmatpush1.xpose.msra.mxu0 0.0
    %924 = vmatprep.subr.mxu0 0.0
    %925 = vmatpush1.xpose.msra.mxu0 0.0
    %926 = vmatprep.subr.mxu0 0.0
    %927 = vmatpush1.xpose.msra.mxu0 0.0
    %928 = vmatprep.subr.mxu0 0.0
    %929 = vmatpush1.xpose.msra.mxu0 0.0
    %930 = vmatprep.subr.mxu0 0.0
    %931 = vmatpush1.xpose.msra.mxu0 0.0
    %932 = vmatprep.subr.mxu0 0.0
    %933 = vmatpush1.xpose.msra.mxu0 0.0
    %934 = vmatprep.subr.mxu0 0.0
    %935 = vmatpush1.xpose.msra.mxu0 0.0
    %936 = vmatprep.subr.mxu0 0.0
    %937 = vmatpush1.xpose.msra.mxu0 0.0
    %938 = vmatprep.subr.mxu0 0.0
    %939 = vmatpush1.xpose.msra.mxu0 0.0
    %940 = vmatprep.subr.mxu0 0.0
    %941 = vmatpush1.xpose.msra.mxu0 0.0
    %942 = vmatprep.subr.mxu0 0.0
    %943 = vmatpush1.xpose.msra.mxu0 0.0
    %944 = vmatprep.subr.mxu0 0.0
    %945 = vmatpush1.xpose.msra.mxu0 0.0
    %946 = vmatprep.subr.mxu0 0.0
    %947 = vmatpush1.xpose.msra.mxu0 0.0
    %948 = vmatprep.subr.mxu0 0.0
    %949 = vmatpush1.xpose.msra.mxu0 0.0
    %950 = vmatprep.subr.mxu0 0.0
    %951 = vmatpush1.xpose.msra.mxu0 0.0
    %952 = vmatprep.subr.mxu0 0.0
    %953 = vmatpush1.xpose.msra.mxu0 0.0
    %954 = vmatprep.subr.mxu0 0.0
    %955 = vmatpush1.xpose.msra.mxu0 0.0
    %956 = vmatprep.subr.mxu0 0.0
    %957 = vmatpush1.xpose.msra.mxu0 0.0
    %958 = vmatprep.subr.mxu0 0.0
    %959 = vmatpush1.xpose.msra.mxu0 0.0
    %960 = vmatprep.subr.mxu0 0.0
    %961 = vmatpush1.xpose.msra.mxu0 0.0
    %962 = vmatprep.subr.mxu0 0.0
    %963 = vmatpush1.xpose.msra.mxu0 0.0
    %964 = vmatprep.subr.mxu0 0.0
    %965 = vmatpush1.xpose.msra.mxu0 0.0
    %966 = vmatprep.subr.mxu0 0.0
    %967 = vmatpush1.xpose.msra.mxu0 0.0
    %968 = vmatprep.subr.mxu0 0.0
    %969 = vmatpush1.xpose.msra.mxu0 0.0
    %970 = vmatprep.subr.mxu0 0.0
    %971 = vmatpush1.xpose.msra.mxu0 0.0
    %972 = vmatprep.subr.mxu0 0.0
    %973 = vmatpush1.xpose.msra.mxu0 0.0
    %974 = vmatprep.subr.mxu0 0.0
    %975 = vmatpush1.xpose.msra.mxu0 0.0
    %976 = vmatprep.subr.mxu0 0.0
    %977 = vmatpush1.xpose.msra.mxu0 0.0
    %978 = vmatprep.subr.mxu0 0.0
    %979 = vmatpush1.xpose.msra.mxu0 0.0
    %980 = vmatprep.subr.mxu0 0.0
    %981 = vmatpush1.xpose.msra.mxu0 0.0
    %982 = vmatprep.mubr.f32.mxu0 0.0
    %983 = vmatmul.mubr.f32.gmra.mrb[0].mxu0 %v329
    %v984 = vpop.f32.mrb[0].mxu0
    %v985 = vadd.f32 0.0, %v984
    %v986 = vpop.f32.mrb[0].mxu0
    %987 = vdwg.mxu0
    %v989 = vsel %vm327, %v319, 0
    %991 = vmatprep.subr.mxu0 0.0
    %992 = vmatpush1.xpose.msra.mxu0 %v989
    %993 = vmatprep.subr.mxu0 0.0
    %994 = vmatpush1.xpose.msra.mxu0 0.0
    %995 = vmatprep.subr.mxu0 0.0
    %996 = vmatpush1.xpose.msra.mxu0 0.0
    %997 = vmatprep.subr.mxu0 0.0
    %998 = vmatpush1.xpose.msra.mxu0 0.0
    %999 = vmatprep.subr.mxu0 0.0
    %1000 = vmatpush1.xpose.msra.mxu0 0.0
    %1001 = vmatprep.subr.mxu0 0.0
    %1002 = vmatpush1.xpose.msra.mxu0 0.0
    %1003 = vmatprep.subr.mxu0 0.0
    %1004 = vmatpush1.xpose.msra.mxu0 0.0
    %1005 = vmatprep.subr.mxu0 0.0
    %1006 = vmatpush1.xpose.msra.mxu0 0.0
    %1007 = vmatprep.subr.mxu0 0.0
    %1008 = vmatpush1.xpose.msra.mxu0 0.0
    %1009 = vmatprep.subr.mxu0 0.0
    %1010 = vmatpush1.xpose.msra.mxu0 0.0
    %1011 = vmatprep.subr.mxu0 0.0
    %1012 = vmatpush1.xpose.msra.mxu0 0.0
    %1013 = vmatprep.subr.mxu0 0.0
    %1014 = vmatpush1.xpose.msra.mxu0 0.0
    %1015 = vmatprep.subr.mxu0 0.0
    %1016 = vmatpush1.xpose.msra.mxu0 0.0
    %1017 = vmatprep.subr.mxu0 0.0
    %1018 = vmatpush1.xpose.msra.mxu0 0.0
    %1019 = vmatprep.subr.mxu0 0.0
    %1020 = vmatpush1.xpose.msra.mxu0 0.0
    %1021 = vmatprep.subr.mxu0 0.0
    %1022 = vmatpush1.xpose.msra.mxu0 0.0
    %1023 = vmatprep.subr.mxu0 0.0
    %1024 = vmatpush1.xpose.msra.mxu0 0.0
    %1025 = vmatprep.subr.mxu0 0.0
    %1026 = vmatpush1.xpose.msra.mxu0 0.0
    %1027 = vmatprep.subr.mxu0 0.0
    %1028 = vmatpush1.xpose.msra.mxu0 0.0
    %1029 = vmatprep.subr.mxu0 0.0
    %1030 = vmatpush1.xpose.msra.mxu0 0.0
    %1031 = vmatprep.subr.mxu0 0.0
    %1032 = vmatpush1.xpose.msra.mxu0 0.0
    %1033 = vmatprep.subr.mxu0 0.0
    %1034 = vmatpush1.xpose.msra.mxu0 0.0
    %1035 = vmatprep.subr.mxu0 0.0
    %1036 = vmatpush1.xpose.msra.mxu0 0.0
    %1037 = vmatprep.subr.mxu0 0.0
    %1038 = vmatpush1.xpose.msra.mxu0 0.0
    %1039 = vmatprep.subr.mxu0 0.0
    %1040 = vmatpush1.xpose.msra.mxu0 0.0
    %1041 = vmatprep.subr.mxu0 0.0
    %1042 = vmatpush1.xpose.msra.mxu0 0.0
    %1043 = vmatprep.subr.mxu0 0.0
    %1044 = vmatpush1.xpose.msra.mxu0 0.0
    %1045 = vmatprep.subr.mxu0 0.0
    %1046 = vmatpush1.xpose.msra.mxu0 0.0
    %1047 = vmatprep.subr.mxu0 0.0
    %1048 = vmatpush1.xpose.msra.mxu0 0.0
    %1049 = vmatprep.subr.mxu0 0.0
    %1050 = vmatpush1.xpose.msra.mxu0 0.0
    %1051 = vmatprep.subr.mxu0 0.0
    %1052 = vmatpush1.xpose.msra.mxu0 0.0
    %1053 = vmatprep.subr.mxu0 0.0
    %1054 = vmatpush1.xpose.msra.mxu0 0.0
    %1055 = vmatprep.mubr.f32.mxu0 0.0
    %1056 = vmatmul.mubr.f32.gmra.mrb[0].mxu0 %v329
    %v1057 = vpop.f32.mrb[0].mxu0
    %v1058 = vadd.f32 0.0, %v1057
    %v1059 = vpop.f32.mrb[0].mxu0
    %1060 = vdwg.mxu0
    %v1062 = vsel %vm327, %v320, 0
    %1064 = vmatprep.subr.mxu0 0.0
    %1065 = vmatpush1.xpose.msra.mxu0 %v1062
    %1066 = vmatprep.subr.mxu0 0.0
    %1067 = vmatpush1.xpose.msra.mxu0 0.0
    %1068 = vmatprep.subr.mxu0 0.0
    %1069 = vmatpush1.xpose.msra.mxu0 0.0
    %1070 = vmatprep.subr.mxu0 0.0
    %1071 = vmatpush1.xpose.msra.mxu0 0.0
    %1072 = vmatprep.subr.mxu0 0.0
    %1073 = vmatpush1.xpose.msra.mxu0 0.0
    %1074 = vmatprep.subr.mxu0 0.0
    %1075 = vmatpush1.xpose.msra.mxu0 0.0
    %1076 = vmatprep.subr.mxu0 0.0
    %1077 = vmatpush1.xpose.msra.mxu0 0.0
    %1078 = vmatprep.subr.mxu0 0.0
    %1079 = vmatpush1.xpose.msra.mxu0 0.0
    %1080 = vmatprep.subr.mxu0 0.0
    %1081 = vmatpush1.xpose.msra.mxu0 0.0
    %1082 = vmatprep.subr.mxu0 0.0
    %1083 = vmatpush1.xpose.msra.mxu0 0.0
    %1084 = vmatprep.subr.mxu0 0.0
    %1085 = vmatpush1.xpose.msra.mxu0 0.0
    %1086 = vmatprep.subr.mxu0 0.0
    %1087 = vmatpush1.xpose.msra.mxu0 0.0
    %1088 = vmatprep.subr.mxu0 0.0
    %1089 = vmatpush1.xpose.msra.mxu0 0.0
    %1090 = vmatprep.subr.mxu0 0.0
    %1091 = vmatpush1.xpose.msra.mxu0 0.0
    %1092 = vmatprep.subr.mxu0 0.0
    %1093 = vmatpush1.xpose.msra.mxu0 0.0
    %1094 = vmatprep.subr.mxu0 0.0
    %1095 = vmatpush1.xpose.msra.mxu0 0.0
    %1096 = vmatprep.subr.mxu0 0.0
    %1097 = vmatpush1.xpose.msra.mxu0 0.0
    %1098 = vmatprep.subr.mxu0 0.0
    %1099 = vmatpush1.xpose.msra.mxu0 0.0
    %1100 = vmatprep.subr.mxu0 0.0
    %1101 = vmatpush1.xpose.msra.mxu0 0.0
    %1102 = vmatprep.subr.mxu0 0.0
    %1103 = vmatpush1.xpose.msra.mxu0 0.0
    %1104 = vmatprep.subr.mxu0 0.0
    %1105 = vmatpush1.xpose.msra.mxu0 0.0
    %1106 = vmatprep.subr.mxu0 0.0
    %1107 = vmatpush1.xpose.msra.mxu0 0.0
    %1108 = vmatprep.subr.mxu0 0.0
    %1109 = vmatpush1.xpose.msra.mxu0 0.0
    %1110 = vmatprep.subr.mxu0 0.0
    %1111 = vmatpush1.xpose.msra.mxu0 0.0
    %1112 = vmatprep.subr.mxu0 0.0
    %1113 = vmatpush1.xpose.msra.mxu0 0.0
    %1114 = vmatprep.subr.mxu0 0.0
    %1115 = vmatpush1.xpose.msra.mxu0 0.0
    %1116 = vmatprep.subr.mxu0 0.0
    %1117 = vmatpush1.xpose.msra.mxu0 0.0
    %1118 = vmatprep.subr.mxu0 0.0
    %1119 = vmatpush1.xpose.msra.mxu0 0.0
    %1120 = vmatprep.subr.mxu0 0.0
    %1121 = vmatpush1.xpose.msra.mxu0 0.0
    %1122 = vmatprep.subr.mxu0 0.0
    %1123 = vmatpush1.xpose.msra.mxu0 0.0
    %1124 = vmatprep.subr.mxu0 0.0
    %1125 = vmatpush1.xpose.msra.mxu0 0.0
    %1126 = vmatprep.subr.mxu0 0.0
    %1127 = vmatpush1.xpose.msra.mxu0 0.0
    %1128 = vmatprep.mubr.f32.mxu0 0.0
    %1129 = vmatmul.mubr.f32.gmra.mrb[0].mxu0 %v329
    %v1130 = vpop.f32.mrb[0].mxu0
    %v1131 = vadd.f32 0.0, %v1130
    %v1132 = vpop.f32.mrb[0].mxu0
    %1133 = vdwg.mxu0
    %v1135 = vsel %vm327, %v321, 0
    %1137 = vmatprep.subr.mxu0 0.0
    %1138 = vmatpush1.xpose.msra.mxu0 %v1135
    %1139 = vmatprep.subr.mxu0 0.0
    %1140 = vmatpush1.xpose.msra.mxu0 0.0
    %1141 = vmatprep.subr.mxu0 0.0
    %1142 = vmatpush1.xpose.msra.mxu0 0.0
    %1143 = vmatprep.subr.mxu0 0.0
    %1144 = vmatpush1.xpose.msra.mxu0 0.0
    %1145 = vmatprep.subr.mxu0 0.0
    %1146 = vmatpush1.xpose.msra.mxu0 0.0
    %1147 = vmatprep.subr.mxu0 0.0
    %1148 = vmatpush1.xpose.msra.mxu0 0.0
    %1149 = vmatprep.subr.mxu0 0.0
    %1150 = vmatpush1.xpose.msra.mxu0 0.0
    %1151 = vmatprep.subr.mxu0 0.0
    %1152 = vmatpush1.xpose.msra.mxu0 0.0
    %1153 = vmatprep.subr.mxu0 0.0
    %1154 = vmatpush1.xpose.msra.mxu0 0.0
    %1155 = vmatprep.subr.mxu0 0.0
    %1156 = vmatpush1.xpose.msra.mxu0 0.0
    %1157 = vmatprep.subr.mxu0 0.0
    %1158 = vmatpush1.xpose.msra.mxu0 0.0
    %1159 = vmatprep.subr.mxu0 0.0
    %1160 = vmatpush1.xpose.msra.mxu0 0.0
    %1161 = vmatprep.subr.mxu0 0.0
    %1162 = vmatpush1.xpose.msra.mxu0 0.0
    %1163 = vmatprep.subr.mxu0 0.0
    %1164 = vmatpush1.xpose.msra.mxu0 0.0
    %1165 = vmatprep.subr.mxu0 0.0
    %1166 = vmatpush1.xpose.msra.mxu0 0.0
    %1167 = vmatprep.subr.mxu0 0.0
    %1168 = vmatpush1.xpose.msra.mxu0 0.0
    %1169 = vmatprep.subr.mxu0 0.0
    %1170 = vmatpush1.xpose.msra.mxu0 0.0
    %1171 = vmatprep.subr.mxu0 0.0
    %1172 = vmatpush1.xpose.msra.mxu0 0.0
    %1173 = vmatprep.subr.mxu0 0.0
    %1174 = vmatpush1.xpose.msra.mxu0 0.0
    %1175 = vmatprep.subr.mxu0 0.0
    %1176 = vmatpush1.xpose.msra.mxu0 0.0
    %1177 = vmatprep.subr.mxu0 0.0
    %1178 = vmatpush1.xpose.msra.mxu0 0.0
    %1179 = vmatprep.subr.mxu0 0.0
    %1180 = vmatpush1.xpose.msra.mxu0 0.0
    %1181 = vmatprep.subr.mxu0 0.0
    %1182 = vmatpush1.xpose.msra.mxu0 0.0
    %1183 = vmatprep.subr.mxu0 0.0
    %1184 = vmatpush1.xpose.msra.mxu0 0.0
    %1185 = vmatprep.subr.mxu0 0.0
    %1186 = vmatpush1.xpose.msra.mxu0 0.0
    %1187 = vmatprep.subr.mxu0 0.0
    %1188 = vmatpush1.xpose.msra.mxu0 0.0
    %1189 = vmatprep.subr.mxu0 0.0
    %1190 = vmatpush1.xpose.msra.mxu0 0.0
    %1191 = vmatprep.subr.mxu0 0.0
    %1192 = vmatpush1.xpose.msra.mxu0 0.0
    %1193 = vmatprep.subr.mxu0 0.0
    %1194 = vmatpush1.xpose.msra.mxu0 0.0
    %1195 = vmatprep.subr.mxu0 0.0
    %1196 = vmatpush1.xpose.msra.mxu0 0.0
    %1197 = vmatprep.subr.mxu0 0.0
    %1198 = vmatpush1.xpose.msra.mxu0 0.0
    %1199 = vmatprep.subr.mxu0 0.0
    %1200 = vmatpush1.xpose.msra.mxu0 0.0
    %1201 = vmatprep.mubr.f32.mxu0 0.0
    %1202 = vmatmul.mubr.f32.gmra.mrb[0].mxu0 %v329
    %v1203 = vpop.f32.mrb[0].mxu0
    %v1204 = vadd.f32 0.0, %v1203
    %v1205 = vpop.f32.mrb[0].mxu0
    %1206 = vdwg.mxu0
    %v1208 = vsel %vm327, %v322, 0
    %1210 = vmatprep.subr.mxu0 0.0
    %1211 = vmatpush1.xpose.msra.mxu0 %v1208
    %1212 = vmatprep.subr.mxu0 0.0
    %1213 = vmatpush1.xpose.msra.mxu0 0.0
    %1214 = vmatprep.subr.mxu0 0.0
    %1215 = vmatpush1.xpose.msra.mxu0 0.0
    %1216 = vmatprep.subr.mxu0 0.0
    %1217 = vmatpush1.xpose.msra.mxu0 0.0
    %1218 = vmatprep.subr.mxu0 0.0
    %1219 = vmatpush1.xpose.msra.mxu0 0.0
    %1220 = vmatprep.subr.mxu0 0.0
    %1221 = vmatpush1.xpose.msra.mxu0 0.0
    %1222 = vmatprep.subr.mxu0 0.0
    %1223 = vmatpush1.xpose.msra.mxu0 0.0
    %1224 = vmatprep.subr.mxu0 0.0
    %1225 = vmatpush1.xpose.msra.mxu0 0.0
    %1226 = vmatprep.subr.mxu0 0.0
    %1227 = vmatpush1.xpose.msra.mxu0 0.0
    %1228 = vmatprep.subr.mxu0 0.0
    %1229 = vmatpush1.xpose.msra.mxu0 0.0
    %1230 = vmatprep.subr.mxu0 0.0
    %1231 = vmatpush1.xpose.msra.mxu0 0.0
    %1232 = vmatprep.subr.mxu0 0.0
    %1233 = vmatpush1.xpose.msra.mxu0 0.0
    %1234 = vmatprep.subr.mxu0 0.0
    %1235 = vmatpush1.xpose.msra.mxu0 0.0
    %1236 = vmatprep.subr.mxu0 0.0
    %1237 = vmatpush1.xpose.msra.mxu0 0.0
    %1238 = vmatprep.subr.mxu0 0.0
    %1239 = vmatpush1.xpose.msra.mxu0 0.0
    %1240 = vmatprep.subr.mxu0 0.0
    %1241 = vmatpush1.xpose.msra.mxu0 0.0
    %1242 = vmatprep.subr.mxu0 0.0
    %1243 = vmatpush1.xpose.msra.mxu0 0.0
    %1244 = vmatprep.subr.mxu0 0.0
    %1245 = vmatpush1.xpose.msra.mxu0 0.0
    %1246 = vmatprep.subr.mxu0 0.0
    %1247 = vmatpush1.xpose.msra.mxu0 0.0
    %1248 = vmatprep.subr.mxu0 0.0
    %1249 = vmatpush1.xpose.msra.mxu0 0.0
    %1250 = vmatprep.subr.mxu0 0.0
    %1251 = vmatpush1.xpose.msra.mxu0 0.0
    %1252 = vmatprep.subr.mxu0 0.0
    %1253 = vmatpush1.xpose.msra.mxu0 0.0
    %1254 = vmatprep.subr.mxu0 0.0
    %1255 = vmatpush1.xpose.msra.mxu0 0.0
    %1256 = vmatprep.subr.mxu0 0.0
    %1257 = vmatpush1.xpose.msra.mxu0 0.0
    %1258 = vmatprep.subr.mxu0 0.0
    %1259 = vmatpush1.xpose.msra.mxu0 0.0
    %1260 = vmatprep.subr.mxu0 0.0
    %1261 = vmatpush1.xpose.msra.mxu0 0.0
    %1262 = vmatprep.subr.mxu0 0.0
    %1263 = vmatpush1.xpose.msra.mxu0 0.0
    %1264 = vmatprep.subr.mxu0 0.0
    %1265 = vmatpush1.xpose.msra.mxu0 0.0
    %1266 = vmatprep.subr.mxu0 0.0
    %1267 = vmatpush1.xpose.msra.mxu0 0.0
    %1268 = vmatprep.subr.mxu0 0.0
    %1269 = vmatpush1.xpose.msra.mxu0 0.0
    %1270 = vmatprep.subr.mxu0 0.0
    %1271 = vmatpush1.xpose.msra.mxu0 0.0
    %1272 = vmatprep.subr.mxu0 0.0
    %1273 = vmatpush1.xpose.msra.mxu0 0.0
    %1274 = vmatprep.mubr.f32.mxu0 0.0
    %1275 = vmatmul.mubr.f32.gmra.mrb[0].mxu0 %v329
    %v1276 = vpop.f32.mrb[0].mxu0
    %v1277 = vadd.f32 0.0, %v1276
    %v1278 = vpop.f32.mrb[0].mxu0
    %1279 = vdwg.mxu0
    %v1281 = vsel %vm327, %v323, 0
    %1283 = vmatprep.subr.mxu0 0.0
    %1284 = vmatpush1.xpose.msra.mxu0 %v1281
    %1285 = vmatprep.subr.mxu0 0.0
    %1286 = vmatpush1.xpose.msra.mxu0 0.0
    %1287 = vmatprep.subr.mxu0 0.0
    %1288 = vmatpush1.xpose.msra.mxu0 0.0
    %1289 = vmatprep.subr.mxu0 0.0
    %1290 = vmatpush1.xpose.msra.mxu0 0.0
    %1291 = vmatprep.subr.mxu0 0.0
    %1292 = vmatpush1.xpose.msra.mxu0 0.0
    %1293 = vmatprep.subr.mxu0 0.0
    %1294 = vmatpush1.xpose.msra.mxu0 0.0
    %1295 = vmatprep.subr.mxu0 0.0
    %1296 = vmatpush1.xpose.msra.mxu0 0.0
    %1297 = vmatprep.subr.mxu0 0.0
    %1298 = vmatpush1.xpose.msra.mxu0 0.0
    %1299 = vmatprep.subr.mxu0 0.0
    %1300 = vmatpush1.xpose.msra.mxu0 0.0
    %1301 = vmatprep.subr.mxu0 0.0
    %1302 = vmatpush1.xpose.msra.mxu0 0.0
    %1303 = vmatprep.subr.mxu0 0.0
    %1304 = vmatpush1.xpose.msra.mxu0 0.0
    %1305 = vmatprep.subr.mxu0 0.0
    %1306 = vmatpush1.xpose.msra.mxu0 0.0
    %1307 = vmatprep.subr.mxu0 0.0
    %1308 = vmatpush1.xpose.msra.mxu0 0.0
    %1309 = vmatprep.subr.mxu0 0.0
    %1310 = vmatpush1.xpose.msra.mxu0 0.0
    %1311 = vmatprep.subr.mxu0 0.0
    %1312 = vmatpush1.xpose.msra.mxu0 0.0
    %1313 = vmatprep.subr.mxu0 0.0
    %1314 = vmatpush1.xpose.msra.mxu0 0.0
    %1315 = vmatprep.subr.mxu0 0.0
    %1316 = vmatpush1.xpose.msra.mxu0 0.0
    %1317 = vmatprep.subr.mxu0 0.0
    %1318 = vmatpush1.xpose.msra.mxu0 0.0
    %1319 = vmatprep.subr.mxu0 0.0
    %1320 = vmatpush1.xpose.msra.mxu0 0.0
    %1321 = vmatprep.subr.mxu0 0.0
    %1322 = vmatpush1.xpose.msra.mxu0 0.0
    %1323 = vmatprep.subr.mxu0 0.0
    %1324 = vmatpush1.xpose.msra.mxu0 0.0
    %1325 = vmatprep.subr.mxu0 0.0
    %1326 = vmatpush1.xpose.msra.mxu0 0.0
    %1327 = vmatprep.subr.mxu0 0.0
    %1328 = vmatpush1.xpose.msra.mxu0 0.0
    %1329 = vmatprep.subr.mxu0 0.0
    %1330 = vmatpush1.xpose.msra.mxu0 0.0
    %1331 = vmatprep.subr.mxu0 0.0
    %1332 = vmatpush1.xpose.msra.mxu0 0.0
    %1333 = vmatprep.subr.mxu0 0.0
    %1334 = vmatpush1.xpose.msra.mxu0 0.0
    %1335 = vmatprep.subr.mxu0 0.0
    %1336 = vmatpush1.xpose.msra.mxu0 0.0
    %1337 = vmatprep.subr.mxu0 0.0
    %1338 = vmatpush1.xpose.msra.mxu0 0.0
    %1339 = vmatprep.subr.mxu0 0.0
    %1340 = vmatpush1.xpose.msra.mxu0 0.0
    %1341 = vmatprep.subr.mxu0 0.0
    %1342 = vmatpush1.xpose.msra.mxu0 0.0
    %1343 = vmatprep.subr.mxu0 0.0
    %1344 = vmatpush1.xpose.msra.mxu0 0.0
    %1345 = vmatprep.subr.mxu0 0.0
    %1346 = vmatpush1.xpose.msra.mxu0 0.0
    %1347 = vmatprep.mubr.f32.mxu0 0.0
    %1348 = vmatmul.mubr.f32.gmra.mrb[0].mxu0 %v329
    %v1349 = vpop.f32.mrb[0].mxu0
    %v1350 = vadd.f32 0.0, %v1349
    %v1351 = vpop.f32.mrb[0].mxu0
    %1352 = vdwg.mxu0
    %v1354 = vsel %vm327, %v324, 0
    %1356 = vmatprep.subr.mxu0 0.0
    %1357 = vmatpush1.xpose.msra.mxu0 %v1354
    %1358 = vmatprep.subr.mxu0 0.0
    %1359 = vmatpush1.xpose.msra.mxu0 0.0
    %1360 = vmatprep.subr.mxu0 0.0
    %1361 = vmatpush1.xpose.msra.mxu0 0.0
    %1362 = vmatprep.subr.mxu0 0.0
    %1363 = vmatpush1.xpose.msra.mxu0 0.0
    %1364 = vmatprep.subr.mxu0 0.0
    %1365 = vmatpush1.xpose.msra.mxu0 0.0
    %1366 = vmatprep.subr.mxu0 0.0
    %1367 = vmatpush1.xpose.msra.mxu0 0.0
    %1368 = vmatprep.subr.mxu0 0.0
    %1369 = vmatpush1.xpose.msra.mxu0 0.0
    %1370 = vmatprep.subr.mxu0 0.0
    %1371 = vmatpush1.xpose.msra.mxu0 0.0
    %1372 = vmatprep.subr.mxu0 0.0
    %1373 = vmatpush1.xpose.msra.mxu0 0.0
    %1374 = vmatprep.subr.mxu0 0.0
    %1375 = vmatpush1.xpose.msra.mxu0 0.0
    %1376 = vmatprep.subr.mxu0 0.0
    %1377 = vmatpush1.xpose.msra.mxu0 0.0
    %1378 = vmatprep.subr.mxu0 0.0
    %1379 = vmatpush1.xpose.msra.mxu0 0.0
    %1380 = vmatprep.subr.mxu0 0.0
    %1381 = vmatpush1.xpose.msra.mxu0 0.0
    %1382 = vmatprep.subr.mxu0 0.0
    %1383 = vmatpush1.xpose.msra.mxu0 0.0
    %1384 = vmatprep.subr.mxu0 0.0
    %1385 = vmatpush1.xpose.msra.mxu0 0.0
    %1386 = vmatprep.subr.mxu0 0.0
    %1387 = vmatpush1.xpose.msra.mxu0 0.0
    %1388 = vmatprep.subr.mxu0 0.0
    %1389 = vmatpush1.xpose.msra.mxu0 0.0
    %1390 = vmatprep.subr.mxu0 0.0
    %1391 = vmatpush1.xpose.msra.mxu0 0.0
    %1392 = vmatprep.subr.mxu0 0.0
    %1393 = vmatpush1.xpose.msra.mxu0 0.0
    %1394 = vmatprep.subr.mxu0 0.0
    %1395 = vmatpush1.xpose.msra.mxu0 0.0
    %1396 = vmatprep.subr.mxu0 0.0
    %1397 = vmatpush1.xpose.msra.mxu0 0.0
    %1398 = vmatprep.subr.mxu0 0.0
    %1399 = vmatpush1.xpose.msra.mxu0 0.0
    %1400 = vmatprep.subr.mxu0 0.0
    %1401 = vmatpush1.xpose.msra.mxu0 0.0
    %1402 = vmatprep.subr.mxu0 0.0
    %1403 = vmatpush1.xpose.msra.mxu0 0.0
    %1404 = vmatprep.subr.mxu0 0.0
    %1405 = vmatpush1.xpose.msra.mxu0 0.0
    %1406 = vmatprep.subr.mxu0 0.0
    %1407 = vmatpush1.xpose.msra.mxu0 0.0
    %1408 = vmatprep.subr.mxu0 0.0
    %1409 = vmatpush1.xpose.msra.mxu0 0.0
    %1410 = vmatprep.subr.mxu0 0.0
    %1411 = vmatpush1.xpose.msra.mxu0 0.0
    %1412 = vmatprep.subr.mxu0 0.0
    %1413 = vmatpush1.xpose.msra.mxu0 0.0
    %1414 = vmatprep.subr.mxu0 0.0
    %1415 = vmatpush1.xpose.msra.mxu0 0.0
    %1416 = vmatprep.subr.mxu0 0.0
    %1417 = vmatpush1.xpose.msra.mxu0 0.0
    %1418 = vmatprep.subr.mxu0 0.0
    %1419 = vmatpush1.xpose.msra.mxu0 0.0
    %1420 = vmatprep.mubr.f32.mxu0 0.0
    %1421 = vmatmul.mubr.f32.gmra.mrb[0].mxu0 %v329
    %v1422 = vpop.f32.mrb[0].mxu0
    %v1423 = vadd.f32 0.0, %v1422
    %v1424 = vpop.f32.mrb[0].mxu0
    %1425 = vdwg.mxu0
    %v1427 = vsel %vm327, %v325, 0
    %1429 = vmatprep.subr.mxu0 0.0
    %1430 = vmatpush1.xpose.msra.mxu0 %v1427
    %1431 = vmatprep.subr.mxu0 0.0
    %1432 = vmatpush1.xpose.msra.mxu0 0.0
    %1433 = vmatprep.subr.mxu0 0.0
    %1434 = vmatpush1.xpose.msra.mxu0 0.0
    %1435 = vmatprep.subr.mxu0 0.0
    %1436 = vmatpush1.xpose.msra.mxu0 0.0
    %1437 = vmatprep.subr.mxu0 0.0
    %1438 = vmatpush1.xpose.msra.mxu0 0.0
    %1439 = vmatprep.subr.mxu0 0.0
    %1440 = vmatpush1.xpose.msra.mxu0 0.0
    %1441 = vmatprep.subr.mxu0 0.0
    %1442 = vmatpush1.xpose.msra.mxu0 0.0
    %1443 = vmatprep.subr.mxu0 0.0
    %1444 = vmatpush1.xpose.msra.mxu0 0.0
    %1445 = vmatprep.subr.mxu0 0.0
    %1446 = vmatpush1.xpose.msra.mxu0 0.0
    %1447 = vmatprep.subr.mxu0 0.0
    %1448 = vmatpush1.xpose.msra.mxu0 0.0
    %1449 = vmatprep.subr.mxu0 0.0
    %1450 = vmatpush1.xpose.msra.mxu0 0.0
    %1451 = vmatprep.subr.mxu0 0.0
    %1452 = vmatpush1.xpose.msra.mxu0 0.0
    %1453 = vmatprep.subr.mxu0 0.0
    %1454 = vmatpush1.xpose.msra.mxu0 0.0
    %1455 = vmatprep.subr.mxu0 0.0
    %1456 = vmatpush1.xpose.msra.mxu0 0.0
    %1457 = vmatprep.subr.mxu0 0.0
    %1458 = vmatpush1.xpose.msra.mxu0 0.0
    %1459 = vmatprep.subr.mxu0 0.0
    %1460 = vmatpush1.xpose.msra.mxu0 0.0
    %1461 = vmatprep.subr.mxu0 0.0
    %1462 = vmatpush1.xpose.msra.mxu0 0.0
    %1463 = vmatprep.subr.mxu0 0.0
    %1464 = vmatpush1.xpose.msra.mxu0 0.0
    %1465 = vmatprep.subr.mxu0 0.0
    %1466 = vmatpush1.xpose.msra.mxu0 0.0
    %1467 = vmatprep.subr.mxu0 0.0
    %1468 = vmatpush1.xpose.msra.mxu0 0.0
    %1469 = vmatprep.subr.mxu0 0.0
    %1470 = vmatpush1.xpose.msra.mxu0 0.0
    %1471 = vmatprep.subr.mxu0 0.0
    %1472 = vmatpush1.xpose.msra.mxu0 0.0
    %1473 = vmatprep.subr.mxu0 0.0
    %1474 = vmatpush1.xpose.msra.mxu0 0.0
    %1475 = vmatprep.subr.mxu0 0.0
    %1476 = vmatpush1.xpose.msra.mxu0 0.0
    %1477 = vmatprep.subr.mxu0 0.0
    %1478 = vmatpush1.xpose.msra.mxu0 0.0
    %1479 = vmatprep.subr.mxu0 0.0
    %1480 = vmatpush1.xpose.msra.mxu0 0.0
    %1481 = vmatprep.subr.mxu0 0.0
    %1482 = vmatpush1.xpose.msra.mxu0 0.0
    %1483 = vmatprep.subr.mxu0 0.0
    %1484 = vmatpush1.xpose.msra.mxu0 0.0
    %1485 = vmatprep.subr.mxu0 0.0
    %1486 = vmatpush1.xpose.msra.mxu0 0.0
    %1487 = vmatprep.subr.mxu0 0.0
    %1488 = vmatpush1.xpose.msra.mxu0 0.0
    %1489 = vmatprep.subr.mxu0 0.0
    %1490 = vmatpush1.xpose.msra.mxu0 0.0
    %1491 = vmatprep.subr.mxu0 0.0
    %1492 = vmatpush1.xpose.msra.mxu0 0.0
    %1493 = vmatprep.mubr.f32.mxu0 0.0
    %1494 = vmatmul.mubr.f32.gmra.mrb[0].mxu0 %v329
    %v1495 = vpop.f32.mrb[0].mxu0
    %v1496 = vadd.f32 0.0, %v1495
    %v1497 = vpop.f32.mrb[0].mxu0
    %1498 = vdwg.mxu0
    %v1499 = vld [vmem:[%s4] sm:$0x1]
    %v1500 = vld [vmem:[%s4 + $0x1] sm:$0x1]
    %v1501 = vld [vmem:[%s4 + $0x2] sm:$0x1]
    %v1502 = vld [vmem:[%s4 + $0x3] sm:$0x1]
    %v1503 = vld [vmem:[%s4 + $0x4] sm:$0x1]
    %v1504 = vld [vmem:[%s4 + $0x5] sm:$0x1]
    %v1505 = vld [vmem:[%s4 + $0x6] sm:$0x1]
    %v1506 = vld [vmem:[%s4 + $0x7] sm:$0x1]
    %v1507 = vld [vmem:[%s4 + $0x8] sm:$0x1]
    %v1508 = vld [vmem:[%s4 + $0x9] sm:$0x1]
    %v1509 = vld [vmem:[%s4 + $0xa] sm:$0x1]
    %v1510 = vld [vmem:[%s4 + $0xb] sm:$0x1]
    %v1511 = vld [vmem:[%s4 + $0xc] sm:$0x1]
    %v1512 = vld [vmem:[%s4 + $0xd] sm:$0x1]
    %v1513 = vld [vmem:[%s4 + $0xe] sm:$0x1]
    %v1514 = vld [vmem:[%s4 + $0xf] sm:$0x1]
    %vm1515 = vcmp.eq.s32.totalorder %v1499, 0
    %vm1516 = vcmp.eq.s32.totalorder %v1500, 0
    %vm1517 = vcmp.eq.s32.totalorder %v1501, 0
    %vm1518 = vcmp.eq.s32.totalorder %v1502, 0
    %vm1519 = vcmp.eq.s32.totalorder %v1503, 0
    %vm1520 = vcmp.eq.s32.totalorder %v1504, 0
    %vm1521 = vcmp.eq.s32.totalorder %v1505, 0
    %vm1522 = vcmp.eq.s32.totalorder %v1506, 0
    %vm1523 = vcmp.eq.s32.totalorder %v1507, 0
    %vm1524 = vcmp.eq.s32.totalorder %v1508, 0
    %vm1525 = vcmp.eq.s32.totalorder %v1509, 0
    %vm1526 = vcmp.eq.s32.totalorder %v1510, 0
    %vm1527 = vcmp.eq.s32.totalorder %v1511, 0
    %vm1528 = vcmp.eq.s32.totalorder %v1512, 0
    %vm1529 = vcmp.eq.s32.totalorder %v1513, 0
    %vm1530 = vcmp.eq.s32.totalorder %v1514, 0
    %v1531 = vsel %vm1515, -1e+30, %v401
    %v1532 = vsel %vm1516, -1e+30, %v474
    %v1533 = vsel %vm1517, -1e+30, %v547
    %v1534 = vsel %vm1518, -1e+30, %v620
    %v1535 = vsel %vm1519, -1e+30, %v693
    %v1536 = vsel %vm1520, -1e+30, %v766
    %v1537 = vsel %vm1521, -1e+30, %v839
    %v1538 = vsel %vm1522, -1e+30, %v912
    %v1539 = vsel %vm1523, -1e+30, %v985
    %v1540 = vsel %vm1524, -1e+30, %v1058
    %v1541 = vsel %vm1525, -1e+30, %v1131
    %v1542 = vsel %vm1526, -1e+30, %v1204
    %v1543 = vsel %vm1527, -1e+30, %v1277
    %v1544 = vsel %vm1528, -1e+30, %v1350
    %v1545 = vsel %vm1529, -1e+30, %v1423
    %v1546 = vsel %vm1530, -1e+30, %v1496
    %v1547 = vld [vmem:[#allocation2] sm:$0x1]
    %v1548 = vld [vmem:[#allocation2 + $0x1] sm:$0x1]
    %v1549 = vld [vmem:[#allocation2 + $0x2] sm:$0x1]
    %v1550 = vld [vmem:[#allocation2 + $0x3] sm:$0x1]
    %v1551 = vld [vmem:[#allocation2 + $0x4] sm:$0x1]
    %v1552 = vld [vmem:[#allocation2 + $0x5] sm:$0x1]
    %v1553 = vld [vmem:[#allocation2 + $0x6] sm:$0x1]
    %v1554 = vld [vmem:[#allocation2 + $0x7] sm:$0x1]
    %v1555 = vld [vmem:[#allocation2 + $0x8] sm:$0x1]
    %v1556 = vld [vmem:[#allocation2 + $0x9] sm:$0x1]
    %v1557 = vld [vmem:[#allocation2 + $0xa] sm:$0x1]
    %v1558 = vld [vmem:[#allocation2 + $0xb] sm:$0x1]
    %v1559 = vld [vmem:[#allocation2 + $0xc] sm:$0x1]
    %v1560 = vld [vmem:[#allocation2 + $0xd] sm:$0x1]
    %v1561 = vld [vmem:[#allocation2 + $0xe] sm:$0x1]
    %v1562 = vld [vmem:[#allocation2 + $0xf] sm:$0x1]
    %vm1563 = vcmask 57344
    %v1564 = vsel %vm1563, %v1531, -inf
    %1565 = vmax.xlane.f32.xlu0 %v1564
    %v1566 = vpop.xlane.xlu0 %1565
    %v1567 = vsel %vm1563, %v1532, -inf
    %1568 = vmax.xlane.f32.xlu0 %v1567
    %v1569 = vpop.xlane.xlu0 %1568
    %v1570 = vsel %vm1563, %v1533, -inf
    %1571 = vmax.xlane.f32.xlu0 %v1570
    %v1572 = vpop.xlane.xlu0 %1571
    %v1573 = vsel %vm1563, %v1534, -inf
    %1574 = vmax.xlane.f32.xlu0 %v1573
    %v1575 = vpop.xlane.xlu0 %1574
    %v1576 = vsel %vm1563, %v1535, -inf
    %1577 = vmax.xlane.f32.xlu0 %v1576
    %v1578 = vpop.xlane.xlu0 %1577
    %v1579 = vsel %vm1563, %v1536, -inf
    %1580 = vmax.xlane.f32.xlu0 %v1579
    %v1581 = vpop.xlane.xlu0 %1580
    %v1582 = vsel %vm1563, %v1537, -inf
    %1583 = vmax.xlane.f32.xlu0 %v1582
    %v1584 = vpop.xlane.xlu0 %1583
    %v1585 = vsel %vm1563, %v1538, -inf
    %1586 = vmax.xlane.f32.xlu0 %v1585
    %v1587 = vpop.xlane.xlu0 %1586
    %v1588 = vsel %vm1563, %v1539, -inf
    %1589 = vmax.xlane.f32.xlu0 %v1588
    %v1590 = vpop.xlane.xlu0 %1589
    %v1591 = vsel %vm1563, %v1540, -inf
    %1592 = vmax.xlane.f32.xlu0 %v1591
    %v1593 = vpop.xlane.xlu0 %1592
    %v1594 = vsel %vm1563, %v1541, -inf
    %1595 = vmax.xlane.f32.xlu0 %v1594
    %v1596 = vpop.xlane.xlu0 %1595
    %v1597 = vsel %vm1563, %v1542, -inf
    %1598 = vmax.xlane.f32.xlu0 %v1597
    %v1599 = vpop.xlane.xlu0 %1598
    %v1600 = vsel %vm1563, %v1543, -inf
    %1601 = vmax.xlane.f32.xlu0 %v1600
    %v1602 = vpop.xlane.xlu0 %1601
    %v1603 = vsel %vm1563, %v1544, -inf
    %1604 = vmax.xlane.f32.xlu0 %v1603
    %v1605 = vpop.xlane.xlu0 %1604
    %v1606 = vsel %vm1563, %v1545, -inf
    %1607 = vmax.xlane.f32.xlu0 %v1606
    %v1608 = vpop.xlane.xlu0 %1607
    %v1609 = vsel %vm1563, %v1546, -inf
    %1610 = vmax.xlane.f32.xlu0 %v1609
    %v1611 = vpop.xlane.xlu0 %1610
    %v1612 = vmax.f32 %v1547, %v1566
    %v1613 = vmax.f32 %v1548, %v1569
    %v1614 = vmax.f32 %v1549, %v1572
    %v1615 = vmax.f32 %v1550, %v1575
    %v1616 = vmax.f32 %v1551, %v1578
    %v1617 = vmax.f32 %v1552, %v1581
    %v1618 = vmax.f32 %v1553, %v1584
    %v1619 = vmax.f32 %v1554, %v1587
    %v1620 = vmax.f32 %v1555, %v1590
    %v1621 = vmax.f32 %v1556, %v1593
    %v1622 = vmax.f32 %v1557, %v1596
    %v1623 = vmax.f32 %v1558, %v1599
    %v1624 = vmax.f32 %v1559, %v1602
    %v1625 = vmax.f32 %v1560, %v1605
    %v1626 = vmax.f32 %v1561, %v1608
    %v1627 = vmax.f32 %v1562, %v1611
    %v1628 = vsub.f32 %v1547, %v1612
    %v1629 = vsub.f32 %v1548, %v1613
    %v1630 = vsub.f32 %v1549, %v1614
    %v1631 = vsub.f32 %v1550, %v1615
    %v1632 = vsub.f32 %v1551, %v1616
    %v1633 = vsub.f32 %v1552, %v1617
    %v1634 = vsub.f32 %v1553, %v1618
    %v1635 = vsub.f32 %v1554, %v1619
    %v1636 = vsub.f32 %v1555, %v1620
    %v1637 = vsub.f32 %v1556, %v1621
    %v1638 = vsub.f32 %v1557, %v1622
    %v1639 = vsub.f32 %v1558, %v1623
    %v1640 = vsub.f32 %v1559, %v1624
    %v1641 = vsub.f32 %v1560, %v1625
    %v1642 = vsub.f32 %v1561, %v1626
    %v1643 = vsub.f32 %v1562, %v1627
    %v1644 = vmul.f32 %v1628, 1.442695
    %v1645 = vpow.pop %v1644
    %v1646 = vmul.f32 %v1629, 1.442695
    %v1647 = vpow.pop %v1646
    %v1648 = vmul.f32 %v1630, 1.442695
    %v1649 = vpow.pop %v1648
    %v1650 = vmul.f32 %v1631, 1.442695
    %v1651 = vpow.pop %v1650
    %v1652 = vmul.f32 %v1632, 1.442695
    %v1653 = vpow.pop %v1652
    %v1654 = vmul.f32 %v1633, 1.442695
    %v1655 = vpow.pop %v1654
    %v1656 = vmul.f32 %v1634, 1.442695
    %v1657 = vpow.pop %v1656
    %v1658 = vmul.f32 %v1635, 1.442695
    %v1659 = vpow.pop %v1658
    %v1660 = vmul.f32 %v1636, 1.442695
    %v1661 = vpow.pop %v1660
    %v1662 = vmul.f32 %v1637, 1.442695
    %v1663 = vpow.pop %v1662
    %v1664 = vmul.f32 %v1638, 1.442695
    %v1665 = vpow.pop %v1664
    %v1666 = vmul.f32 %v1639, 1.442695
    %v1667 = vpow.pop %v1666
    %v1668 = vmul.f32 %v1640, 1.442695
    %v1669 = vpow.pop %v1668
    %v1670 = vmul.f32 %v1641, 1.442695
    %v1671 = vpow.pop %v1670
    %v1672 = vmul.f32 %v1642, 1.442695
    %v1673 = vpow.pop %v1672
    %v1674 = vmul.f32 %v1643, 1.442695
    %v1675 = vpow.pop %v1674
    %1677 = vset.pattern.permute.xlu0 0
    %1678 = vperm.xlu0 %1677, %v1612
    %v1679 = vpop.permute.xlu0 %1678
    %v1681 = vlaneseq
    %v1682 = vshrl.u32 %v1681, 7
    %v1683 = vsub.s32 0, %v1682
    %v1684 = vrot.slane %v1679, %v1683
    %1686 = vset.pattern.permute.xlu0 0
    %1687 = vperm.xlu0 %1686, %v1613
    %v1688 = vpop.permute.xlu0 %1687
    %v1690 = vlaneseq
    %v1691 = vshrl.u32 %v1690, 7
    %v1692 = vsub.s32 0, %v1691
    %v1693 = vrot.slane %v1688, %v1692
    %1695 = vset.pattern.permute.xlu0 0
    %1696 = vperm.xlu0 %1695, %v1614
    %v1697 = vpop.permute.xlu0 %1696
    %v1699 = vlaneseq
    %v1700 = vshrl.u32 %v1699, 7
    %v1701 = vsub.s32 0, %v1700
    %v1702 = vrot.slane %v1697, %v1701
    %1704 = vset.pattern.permute.xlu0 0
    %1705 = vperm.xlu0 %1704, %v1615
    %v1706 = vpop.permute.xlu0 %1705
    %v1708 = vlaneseq
    %v1709 = vshrl.u32 %v1708, 7
    %v1710 = vsub.s32 0, %v1709
    %v1711 = vrot.slane %v1706, %v1710
    %1713 = vset.pattern.permute.xlu0 0
    %1714 = vperm.xlu0 %1713, %v1616
    %v1715 = vpop.permute.xlu0 %1714
    %v1717 = vlaneseq
    %v1718 = vshrl.u32 %v1717, 7
    %v1719 = vsub.s32 0, %v1718
    %v1720 = vrot.slane %v1715, %v1719
    %1722 = vset.pattern.permute.xlu0 0
    %1723 = vperm.xlu0 %1722, %v1617
    %v1724 = vpop.permute.xlu0 %1723
    %v1726 = vlaneseq
    %v1727 = vshrl.u32 %v1726, 7
    %v1728 = vsub.s32 0, %v1727
    %v1729 = vrot.slane %v1724, %v1728
    %1731 = vset.pattern.permute.xlu0 0
    %1732 = vperm.xlu0 %1731, %v1618
    %v1733 = vpop.permute.xlu0 %1732
    %v1735 = vlaneseq
    %v1736 = vshrl.u32 %v1735, 7
    %v1737 = vsub.s32 0, %v1736
    %v1738 = vrot.slane %v1733, %v1737
    %1740 = vset.pattern.permute.xlu0 0
    %1741 = vperm.xlu0 %1740, %v1619
    %v1742 = vpop.permute.xlu0 %1741
    %v1744 = vlaneseq
    %v1745 = vshrl.u32 %v1744, 7
    %v1746 = vsub.s32 0, %v1745
    %v1747 = vrot.slane %v1742, %v1746
    %1749 = vset.pattern.permute.xlu0 0
    %1750 = vperm.xlu0 %1749, %v1620
    %v1751 = vpop.permute.xlu0 %1750
    %v1753 = vlaneseq
    %v1754 = vshrl.u32 %v1753, 7
    %v1755 = vsub.s32 0, %v1754
    %v1756 = vrot.slane %v1751, %v1755
    %1758 = vset.pattern.permute.xlu0 0
    %1759 = vperm.xlu0 %1758, %v1621
    %v1760 = vpop.permute.xlu0 %1759
    %v1762 = vlaneseq
    %v1763 = vshrl.u32 %v1762, 7
    %v1764 = vsub.s32 0, %v1763
    %v1765 = vrot.slane %v1760, %v1764
    %1767 = vset.pattern.permute.xlu0 0
    %1768 = vperm.xlu0 %1767, %v1622
    %v1769 = vpop.permute.xlu0 %1768
    %v1771 = vlaneseq
    %v1772 = vshrl.u32 %v1771, 7
    %v1773 = vsub.s32 0, %v1772
    %v1774 = vrot.slane %v1769, %v1773
    %1776 = vset.pattern.permute.xlu0 0
    %1777 = vperm.xlu0 %1776, %v1623
    %v1778 = vpop.permute.xlu0 %1777
    %v1780 = vlaneseq
    %v1781 = vshrl.u32 %v1780, 7
    %v1782 = vsub.s32 0, %v1781
    %v1783 = vrot.slane %v1778, %v1782
    %1785 = vset.pattern.permute.xlu0 0
    %1786 = vperm.xlu0 %1785, %v1624
    %v1787 = vpop.permute.xlu0 %1786
    %v1789 = vlaneseq
    %v1790 = vshrl.u32 %v1789, 7
    %v1791 = vsub.s32 0, %v1790
    %v1792 = vrot.slane %v1787, %v1791
    %1794 = vset.pattern.permute.xlu0 0
    %1795 = vperm.xlu0 %1794, %v1625
    %v1796 = vpop.permute.xlu0 %1795
    %v1798 = vlaneseq
    %v1799 = vshrl.u32 %v1798, 7
    %v1800 = vsub.s32 0, %v1799
    %v1801 = vrot.slane %v1796, %v1800
    %1803 = vset.pattern.permute.xlu0 0
    %1804 = vperm.xlu0 %1803, %v1626
    %v1805 = vpop.permute.xlu0 %1804
    %v1807 = vlaneseq
    %v1808 = vshrl.u32 %v1807, 7
    %v1809 = vsub.s32 0, %v1808
    %v1810 = vrot.slane %v1805, %v1809
    %1812 = vset.pattern.permute.xlu0 0
    %1813 = vperm.xlu0 %1812, %v1627
    %v1814 = vpop.permute.xlu0 %1813
    %v1816 = vlaneseq
    %v1817 = vshrl.u32 %v1816, 7
    %v1818 = vsub.s32 0, %v1817
    %v1819 = vrot.slane %v1814, %v1818
    %v1820 = vsub.f32 %v1531, %v1684
    %v1821 = vsub.f32 %v1532, %v1693
    %v1822 = vsub.f32 %v1533, %v1702
    %v1823 = vsub.f32 %v1534, %v1711
    %v1824 = vsub.f32 %v1535, %v1720
    %v1825 = vsub.f32 %v1536, %v1729
    %v1826 = vsub.f32 %v1537, %v1738
    %v1827 = vsub.f32 %v1538, %v1747
    %v1828 = vsub.f32 %v1539, %v1756
    %v1829 = vsub.f32 %v1540, %v1765
    %v1830 = vsub.f32 %v1541, %v1774
    %v1831 = vsub.f32 %v1542, %v1783
    %v1832 = vsub.f32 %v1543, %v1792
    %v1833 = vsub.f32 %v1544, %v1801
    %v1834 = vsub.f32 %v1545, %v1810
    %v1835 = vsub.f32 %v1546, %v1819
    %v1836 = vmul.f32 %v1820, 1.442695
    %v1837 = vpow.pop %v1836
    %v1838 = vmul.f32 %v1821, 1.442695
    %v1839 = vpow.pop %v1838
    %v1840 = vmul.f32 %v1822, 1.442695
    %v1841 = vpow.pop %v1840
    %v1842 = vmul.f32 %v1823, 1.442695
    %v1843 = vpow.pop %v1842
    %v1844 = vmul.f32 %v1824, 1.442695
    %v1845 = vpow.pop %v1844
    %v1846 = vmul.f32 %v1825, 1.442695
    %v1847 = vpow.pop %v1846
    %v1848 = vmul.f32 %v1826, 1.442695
    %v1849 = vpow.pop %v1848
    %v1850 = vmul.f32 %v1827, 1.442695
    %v1851 = vpow.pop %v1850
    %v1852 = vmul.f32 %v1828, 1.442695
    %v1853 = vpow.pop %v1852
    %v1854 = vmul.f32 %v1829, 1.442695
    %v1855 = vpow.pop %v1854
    %v1856 = vmul.f32 %v1830, 1.442695
    %v1857 = vpow.pop %v1856
    %v1858 = vmul.f32 %v1831, 1.442695
    %v1859 = vpow.pop %v1858
    %v1860 = vmul.f32 %v1832, 1.442695
    %v1861 = vpow.pop %v1860
    %v1862 = vmul.f32 %v1833, 1.442695
    %v1863 = vpow.pop %v1862
    %v1864 = vmul.f32 %v1834, 1.442695
    %v1865 = vpow.pop %v1864
    %v1866 = vmul.f32 %v1835, 1.442695
    %v1867 = vpow.pop %v1866
    %v1868 = vld [vmem:[#allocation3] sm:$0x1]
    %v1869 = vld [vmem:[#allocation3 + $0x1] sm:$0x1]
    %v1870 = vld [vmem:[#allocation3 + $0x2] sm:$0x1]
    %v1871 = vld [vmem:[#allocation3 + $0x3] sm:$0x1]
    %v1872 = vld [vmem:[#allocation3 + $0x4] sm:$0x1]
    %v1873 = vld [vmem:[#allocation3 + $0x5] sm:$0x1]
    %v1874 = vld [vmem:[#allocation3 + $0x6] sm:$0x1]
    %v1875 = vld [vmem:[#allocation3 + $0x7] sm:$0x1]
    %v1876 = vld [vmem:[#allocation3 + $0x8] sm:$0x1]
    %v1877 = vld [vmem:[#allocation3 + $0x9] sm:$0x1]
    %v1878 = vld [vmem:[#allocation3 + $0xa] sm:$0x1]
    %v1879 = vld [vmem:[#allocation3 + $0xb] sm:$0x1]
    %v1880 = vld [vmem:[#allocation3 + $0xc] sm:$0x1]
    %v1881 = vld [vmem:[#allocation3 + $0xd] sm:$0x1]
    %v1882 = vld [vmem:[#allocation3 + $0xe] sm:$0x1]
    %v1883 = vld [vmem:[#allocation3 + $0xf] sm:$0x1]
    %v1884 = vmul.f32 %v1645, %v1868
    %v1885 = vmul.f32 %v1647, %v1869
    %v1886 = vmul.f32 %v1649, %v1870
    %v1887 = vmul.f32 %v1651, %v1871
    %v1888 = vmul.f32 %v1653, %v1872
    %v1889 = vmul.f32 %v1655, %v1873
    %v1890 = vmul.f32 %v1657, %v1874
    %v1891 = vmul.f32 %v1659, %v1875
    %v1892 = vmul.f32 %v1661, %v1876
    %v1893 = vmul.f32 %v1663, %v1877
    %v1894 = vmul.f32 %v1665, %v1878
    %v1895 = vmul.f32 %v1667, %v1879
    %v1896 = vmul.f32 %v1669, %v1880
    %v1897 = vmul.f32 %v1671, %v1881
    %v1898 = vmul.f32 %v1673, %v1882
    %v1899 = vmul.f32 %v1675, %v1883
    %v1900 = vsel %vm1563, %v1837, 0.0
    %1901 = vadd.xlane.f32.xlu0 %v1900
    %v1902 = vpop.xlane.xlu0 %1901
    %v1903 = vsel %vm1563, %v1839, 0.0
    %1904 = vadd.xlane.f32.xlu0 %v1903
    %v1905 = vpop.xlane.xlu0 %1904
    %v1906 = vsel %vm1563, %v1841, 0.0
    %1907 = vadd.xlane.f32.xlu0 %v1906
    %v1908 = vpop.xlane.xlu0 %1907
    %v1909 = vsel %vm1563, %v1843, 0.0
    %1910 = vadd.xlane.f32.xlu0 %v1909
    %v1911 = vpop.xlane.xlu0 %1910
    %v1912 = vsel %vm1563, %v1845, 0.0
    %1913 = vadd.xlane.f32.xlu0 %v1912
    %v1914 = vpop.xlane.xlu0 %1913
    %v1915 = vsel %vm1563, %v1847, 0.0
    %1916 = vadd.xlane.f32.xlu0 %v1915
    %v1917 = vpop.xlane.xlu0 %1916
    %v1918 = vsel %vm1563, %v1849, 0.0
    %1919 = vadd.xlane.f32.xlu0 %v1918
    %v1920 = vpop.xlane.xlu0 %1919
    %v1921 = vsel %vm1563, %v1851, 0.0
    %1922 = vadd.xlane.f32.xlu0 %v1921
    %v1923 = vpop.xlane.xlu0 %1922
    %v1924 = vsel %vm1563, %v1853, 0.0
    %1925 = vadd.xlane.f32.xlu0 %v1924
    %v1926 = vpop.xlane.xlu0 %1925
    %v1927 = vsel %vm1563, %v1855, 0.0
    %1928 = vadd.xlane.f32.xlu0 %v1927
    %v1929 = vpop.xlane.xlu0 %1928
    %v1930 = vsel %vm1563, %v1857, 0.0
    %1931 = vadd.xlane.f32.xlu0 %v1930
    %v1932 = vpop.xlane.xlu0 %1931
    %v1933 = vsel %vm1563, %v1859, 0.0
    %1934 = vadd.xlane.f32.xlu0 %v1933
    %v1935 = vpop.xlane.xlu0 %1934
    %v1936 = vsel %vm1563, %v1861, 0.0
    %1937 = vadd.xlane.f32.xlu0 %v1936
    %v1938 = vpop.xlane.xlu0 %1937
    %v1939 = vsel %vm1563, %v1863, 0.0
    %1940 = vadd.xlane.f32.xlu0 %v1939
    %v1941 = vpop.xlane.xlu0 %1940
    %v1942 = vsel %vm1563, %v1865, 0.0
    %1943 = vadd.xlane.f32.xlu0 %v1942
    %v1944 = vpop.xlane.xlu0 %1943
    %v1945 = vsel %vm1563, %v1867, 0.0
    %1946 = vadd.xlane.f32.xlu0 %v1945
    %v1947 = vpop.xlane.xlu0 %1946
    %v1948 = vadd.f32 %v1884, %v1902
    %v1949 = vadd.f32 %v1885, %v1905
    %v1950 = vadd.f32 %v1886, %v1908
    %v1951 = vadd.f32 %v1887, %v1911
    %v1952 = vadd.f32 %v1888, %v1914
    %v1953 = vadd.f32 %v1889, %v1917
    %v1954 = vadd.f32 %v1890, %v1920
    %v1955 = vadd.f32 %v1891, %v1923
    %v1956 = vadd.f32 %v1892, %v1926
    %v1957 = vadd.f32 %v1893, %v1929
    %v1958 = vadd.f32 %v1894, %v1932
    %v1959 = vadd.f32 %v1895, %v1935
    %v1960 = vadd.f32 %v1896, %v1938
    %v1961 = vadd.f32 %v1897, %v1941
    %v1962 = vadd.f32 %v1898, %v1944
    %v1963 = vadd.f32 %v1899, %v1947
    %vm1964 = vcmask 0
    %1965 = vst.msk [vmem:[#allocation3] sm:$0x1] %vm1964, %v1948
    %1966 = vst.msk [vmem:[#allocation3 + $0x1] sm:$0x1] %vm1964, %v1949
    %1967 = vst.msk [vmem:[#allocation3 + $0x2] sm:$0x1] %vm1964, %v1950
    %1968 = vst.msk [vmem:[#allocation3 + $0x3] sm:$0x1] %vm1964, %v1951
    %1969 = vst.msk [vmem:[#allocation3 + $0x4] sm:$0x1] %vm1964, %v1952
    %1970 = vst.msk [vmem:[#allocation3 + $0x5] sm:$0x1] %vm1964, %v1953
    %1971 = vst.msk [vmem:[#allocation3 + $0x6] sm:$0x1] %vm1964, %v1954
    %1972 = vst.msk [vmem:[#allocation3 + $0x7] sm:$0x1] %vm1964, %v1955
    %1973 = vst.msk [vmem:[#allocation3 + $0x8] sm:$0x1] %vm1964, %v1956
    %1974 = vst.msk [vmem:[#allocation3 + $0x9] sm:$0x1] %vm1964, %v1957
    %1975 = vst.msk [vmem:[#allocation3 + $0xa] sm:$0x1] %vm1964, %v1958
    %1976 = vst.msk [vmem:[#allocation3 + $0xb] sm:$0x1] %vm1964, %v1959
    %1977 = vst.msk [vmem:[#allocation3 + $0xc] sm:$0x1] %vm1964, %v1960
    %1978 = vst.msk [vmem:[#allocation3 + $0xd] sm:$0x1] %vm1964, %v1961
    %1979 = vst.msk [vmem:[#allocation3 + $0xe] sm:$0x1] %vm1964, %v1962
    %1980 = vst.msk [vmem:[#allocation3 + $0xf] sm:$0x1] %vm1964, %v1963
    %v1981 = vld [vmem:[#allocation4] sm:$0x1]
    %v1982 = vld [vmem:[#allocation4 + $0x1] sm:$0x1]
    %v1983 = vld [vmem:[#allocation4 + $0x2] sm:$0x1]
    %v1984 = vld [vmem:[#allocation4 + $0x3] sm:$0x1]
    %v1985 = vld [vmem:[#allocation4 + $0x4] sm:$0x1]
    %v1986 = vld [vmem:[#allocation4 + $0x5] sm:$0x1]
    %v1987 = vld [vmem:[#allocation4 + $0x6] sm:$0x1]
    %v1988 = vld [vmem:[#allocation4 + $0x7] sm:$0x1]
    %v1989 = vld [vmem:[#allocation4 + $0x8] sm:$0x1]
    %v1990 = vld [vmem:[#allocation4 + $0x9] sm:$0x1]
    %v1991 = vld [vmem:[#allocation4 + $0xa] sm:$0x1]
    %v1992 = vld [vmem:[#allocation4 + $0xb] sm:$0x1]
    %v1993 = vld [vmem:[#allocation4 + $0xc] sm:$0x1]
    %v1994 = vld [vmem:[#allocation4 + $0xd] sm:$0x1]
    %v1995 = vld [vmem:[#allocation4 + $0xe] sm:$0x1]
    %v1996 = vld [vmem:[#allocation4 + $0xf] sm:$0x1]
    %1998 = vset.pattern.permute.xlu0 0
    %1999 = vperm.xlu0 %1998, %v1645
    %v2000 = vpop.permute.xlu0 %1999
    %v2002 = vlaneseq
    %v2003 = vshrl.u32 %v2002, 7
    %v2004 = vsub.s32 0, %v2003
    %v2005 = vrot.slane %v2000, %v2004
    %2007 = vset.pattern.permute.xlu0 0
    %2008 = vperm.xlu0 %2007, %v1647
    %v2009 = vpop.permute.xlu0 %2008
    %v2011 = vlaneseq
    %v2012 = vshrl.u32 %v2011, 7
    %v2013 = vsub.s32 0, %v2012
    %v2014 = vrot.slane %v2009, %v2013
    %2016 = vset.pattern.permute.xlu0 0
    %2017 = vperm.xlu0 %2016, %v1649
    %v2018 = vpop.permute.xlu0 %2017
    %v2020 = vlaneseq
    %v2021 = vshrl.u32 %v2020, 7
    %v2022 = vsub.s32 0, %v2021
    %v2023 = vrot.slane %v2018, %v2022
    %2025 = vset.pattern.permute.xlu0 0
    %2026 = vperm.xlu0 %2025, %v1651
    %v2027 = vpop.permute.xlu0 %2026
    %v2029 = vlaneseq
    %v2030 = vshrl.u32 %v2029, 7
    %v2031 = vsub.s32 0, %v2030
    %v2032 = vrot.slane %v2027, %v2031
    %2034 = vset.pattern.permute.xlu0 0
    %2035 = vperm.xlu0 %2034, %v1653
    %v2036 = vpop.permute.xlu0 %2035
    %v2038 = vlaneseq
    %v2039 = vshrl.u32 %v2038, 7
    %v2040 = vsub.s32 0, %v2039
    %v2041 = vrot.slane %v2036, %v2040
    %2043 = vset.pattern.permute.xlu0 0
    %2044 = vperm.xlu0 %2043, %v1655
    %v2045 = vpop.permute.xlu0 %2044
    %v2047 = vlaneseq
    %v2048 = vshrl.u32 %v2047, 7
    %v2049 = vsub.s32 0, %v2048
    %v2050 = vrot.slane %v2045, %v2049
    %2052 = vset.pattern.permute.xlu0 0
    %2053 = vperm.xlu0 %2052, %v1657
    %v2054 = vpop.permute.xlu0 %2053
    %v2056 = vlaneseq
    %v2057 = vshrl.u32 %v2056, 7
    %v2058 = vsub.s32 0, %v2057
    %v2059 = vrot.slane %v2054, %v2058
    %2061 = vset.pattern.permute.xlu0 0
    %2062 = vperm.xlu0 %2061, %v1659
    %v2063 = vpop.permute.xlu0 %2062
    %v2065 = vlaneseq
    %v2066 = vshrl.u32 %v2065, 7
    %v2067 = vsub.s32 0, %v2066
    %v2068 = vrot.slane %v2063, %v2067
    %2070 = vset.pattern.permute.xlu0 0
    %2071 = vperm.xlu0 %2070, %v1661
    %v2072 = vpop.permute.xlu0 %2071
    %v2074 = vlaneseq
    %v2075 = vshrl.u32 %v2074, 7
    %v2076 = vsub.s32 0, %v2075
    %v2077 = vrot.slane %v2072, %v2076
    %2079 = vset.pattern.permute.xlu0 0
    %2080 = vperm.xlu0 %2079, %v1663
    %v2081 = vpop.permute.xlu0 %2080
    %v2083 = vlaneseq
    %v2084 = vshrl.u32 %v2083, 7
    %v2085 = vsub.s32 0, %v2084
    %v2086 = vrot.slane %v2081, %v2085
    %2088 = vset.pattern.permute.xlu0 0
    %2089 = vperm.xlu0 %2088, %v1665
    %v2090 = vpop.permute.xlu0 %2089
    %v2092 = vlaneseq
    %v2093 = vshrl.u32 %v2092, 7
    %v2094 = vsub.s32 0, %v2093
    %v2095 = vrot.slane %v2090, %v2094
    %2097 = vset.pattern.permute.xlu0 0
    %2098 = vperm.xlu0 %2097, %v1667
    %v2099 = vpop.permute.xlu0 %2098
    %v2101 = vlaneseq
    %v2102 = vshrl.u32 %v2101, 7
    %v2103 = vsub.s32 0, %v2102
    %v2104 = vrot.slane %v2099, %v2103
    %2106 = vset.pattern.permute.xlu0 0
    %2107 = vperm.xlu0 %2106, %v1669
    %v2108 = vpop.permute.xlu0 %2107
    %v2110 = vlaneseq
    %v2111 = vshrl.u32 %v2110, 7
    %v2112 = vsub.s32 0, %v2111
    %v2113 = vrot.slane %v2108, %v2112
    %2115 = vset.pattern.permute.xlu0 0
    %2116 = vperm.xlu0 %2115, %v1671
    %v2117 = vpop.permute.xlu0 %2116
    %v2119 = vlaneseq
    %v2120 = vshrl.u32 %v2119, 7
    %v2121 = vsub.s32 0, %v2120
    %v2122 = vrot.slane %v2117, %v2121
    %2124 = vset.pattern.permute.xlu0 0
    %2125 = vperm.xlu0 %2124, %v1673
    %v2126 = vpop.permute.xlu0 %2125
    %v2128 = vlaneseq
    %v2129 = vshrl.u32 %v2128, 7
    %v2130 = vsub.s32 0, %v2129
    %v2131 = vrot.slane %v2126, %v2130
    %2133 = vset.pattern.permute.xlu0 0
    %2134 = vperm.xlu0 %2133, %v1675
    %v2135 = vpop.permute.xlu0 %2134
    %v2137 = vlaneseq
    %v2138 = vshrl.u32 %v2137, 7
    %v2139 = vsub.s32 0, %v2138
    %v2140 = vrot.slane %v2135, %v2139
    %v2141 = vmul.f32 %v2005, %v1981
    %v2142 = vmul.f32 %v2014, %v1982
    %v2143 = vmul.f32 %v2023, %v1983
    %v2144 = vmul.f32 %v2032, %v1984
    %v2145 = vmul.f32 %v2041, %v1985
    %v2146 = vmul.f32 %v2050, %v1986
    %v2147 = vmul.f32 %v2059, %v1987
    %v2148 = vmul.f32 %v2068, %v1988
    %v2149 = vmul.f32 %v2077, %v1989
    %v2150 = vmul.f32 %v2086, %v1990
    %v2151 = vmul.f32 %v2095, %v1991
    %v2152 = vmul.f32 %v2104, %v1992
    %v2153 = vmul.f32 %v2113, %v1993
    %v2154 = vmul.f32 %v2122, %v1994
    %v2155 = vmul.f32 %v2131, %v1995
    %v2156 = vmul.f32 %v2140, %v1996
    %vm2157 = vcmask 64512
    %v2159 = vsel %vm2157, %v1837, 0
    %2161 = vmatprep.subr.mxu0 0.0
    %2162 = vmatpush1.msra.mxu0 %v89
    %2163 = vmatprep.subr.mxu0 0.0
    %2164 = vmatpush1.msra.mxu0 0.0
    %2165 = vmatprep.subr.mxu0 0.0
    %2166 = vmatpush1.msra.mxu0 0.0
    %2167 = vmatprep.subr.mxu0 0.0
    %2168 = vmatpush1.msra.mxu0 0.0
    %2169 = vmatprep.subr.mxu0 0.0
    %2170 = vmatpush1.msra.mxu0 0.0
    %2171 = vmatprep.subr.mxu0 0.0
    %2172 = vmatpush1.msra.mxu0 0.0
    %2173 = vmatprep.subr.mxu0 0.0
    %2174 = vmatpush1.msra.mxu0 0.0
    %2175 = vmatprep.subr.mxu0 0.0
    %2176 = vmatpush1.msra.mxu0 0.0
    %2177 = vmatprep.subr.mxu0 0.0
    %2178 = vmatpush1.msra.mxu0 0.0
    %2179 = vmatprep.subr.mxu0 0.0
    %2180 = vmatpush1.msra.mxu0 0.0
    %2181 = vmatprep.subr.mxu0 0.0
    %2182 = vmatpush1.msra.mxu0 0.0
    %2183 = vmatprep.subr.mxu0 0.0
    %2184 = vmatpush1.msra.mxu0 0.0
    %2185 = vmatprep.subr.mxu0 0.0
    %2186 = vmatpush1.msra.mxu0 0.0
    %2187 = vmatprep.subr.mxu0 0.0
    %2188 = vmatpush1.msra.mxu0 0.0
    %2189 = vmatprep.subr.mxu0 0.0
    %2190 = vmatpush1.msra.mxu0 0.0
    %2191 = vmatprep.subr.mxu0 0.0
    %2192 = vmatpush1.msra.mxu0 0.0
    %2193 = vmatprep.subr.mxu0 0.0
    %2194 = vmatpush1.msra.mxu0 0.0
    %2195 = vmatprep.subr.mxu0 0.0
    %2196 = vmatpush1.msra.mxu0 0.0
    %2197 = vmatprep.subr.mxu0 0.0
    %2198 = vmatpush1.msra.mxu0 0.0
    %2199 = vmatprep.subr.mxu0 0.0
    %2200 = vmatpush1.msra.mxu0 0.0
    %2201 = vmatprep.subr.mxu0 0.0
    %2202 = vmatpush1.msra.mxu0 0.0
    %2203 = vmatprep.subr.mxu0 0.0
    %2204 = vmatpush1.msra.mxu0 0.0
    %2205 = vmatprep.subr.mxu0 0.0
    %2206 = vmatpush1.msra.mxu0 0.0
    %2207 = vmatprep.subr.mxu0 0.0
    %2208 = vmatpush1.msra.mxu0 0.0
    %2209 = vmatprep.subr.mxu0 0.0
    %2210 = vmatpush1.msra.mxu0 0.0
    %2211 = vmatprep.subr.mxu0 0.0
    %2212 = vmatpush1.msra.mxu0 0.0
    %2213 = vmatprep.subr.mxu0 0.0
    %2214 = vmatpush1.msra.mxu0 0.0
    %2215 = vmatprep.subr.mxu0 0.0
    %2216 = vmatpush1.msra.mxu0 0.0
    %2217 = vmatprep.subr.mxu0 0.0
    %2218 = vmatpush1.msra.mxu0 0.0
    %2219 = vmatprep.subr.mxu0 0.0
    %2220 = vmatpush1.msra.mxu0 0.0
    %2221 = vmatprep.subr.mxu0 0.0
    %2222 = vmatpush1.msra.mxu0 0.0
    %2223 = vmatprep.subr.mxu0 0.0
    %2224 = vmatpush1.msra.mxu0 0.0
    %2225 = vmatprep.mubr.f32.mxu0 0.0
    %2226 = vmatmul.mubr.f32.gmra.mrb[0].mxu0 %v2159
    %v2227 = vpop.f32.mrb[0].mxu0
    %v2228 = vadd.f32 0.0, %v2227
    %v2229 = vpop.f32.mrb[0].mxu0
    %2230 = vdwg.mxu0
    %v2232 = vsel %vm2157, %v1839, 0
    %2234 = vmatprep.subr.mxu0 0.0
    %2235 = vmatpush1.msra.mxu0 %v90
    %2236 = vmatprep.subr.mxu0 0.0
    %2237 = vmatpush1.msra.mxu0 0.0
    %2238 = vmatprep.subr.mxu0 0.0
    %2239 = vmatpush1.msra.mxu0 0.0
    %2240 = vmatprep.subr.mxu0 0.0
    %2241 = vmatpush1.msra.mxu0 0.0
    %2242 = vmatprep.subr.mxu0 0.0
    %2243 = vmatpush1.msra.mxu0 0.0
    %2244 = vmatprep.subr.mxu0 0.0
    %2245 = vmatpush1.msra.mxu0 0.0
    %2246 = vmatprep.subr.mxu0 0.0
    %2247 = vmatpush1.msra.mxu0 0.0
    %2248 = vmatprep.subr.mxu0 0.0
    %2249 = vmatpush1.msra.mxu0 0.0
    %2250 = vmatprep.subr.mxu0 0.0
    %2251 = vmatpush1.msra.mxu0 0.0
    %2252 = vmatprep.subr.mxu0 0.0
    %2253 = vmatpush1.msra.mxu0 0.0
    %2254 = vmatprep.subr.mxu0 0.0
    %2255 = vmatpush1.msra.mxu0 0.0
    %2256 = vmatprep.subr.mxu0 0.0
    %2257 = vmatpush1.msra.mxu0 0.0
    %2258 = vmatprep.subr.mxu0 0.0
    %2259 = vmatpush1.msra.mxu0 0.0
    %2260 = vmatprep.subr.mxu0 0.0
    %2261 = vmatpush1.msra.mxu0 0.0
    %2262 = vmatprep.subr.mxu0 0.0
    %2263 = vmatpush1.msra.mxu0 0.0
    %2264 = vmatprep.subr.mxu0 0.0
    %2265 = vmatpush1.msra.mxu0 0.0
    %2266 = vmatprep.subr.mxu0 0.0
    %2267 = vmatpush1.msra.mxu0 0.0
    %2268 = vmatprep.subr.mxu0 0.0
    %2269 = vmatpush1.msra.mxu0 0.0
    %2270 = vmatprep.subr.mxu0 0.0
    %2271 = vmatpush1.msra.mxu0 0.0
    %2272 = vmatprep.subr.mxu0 0.0
    %2273 = vmatpush1.msra.mxu0 0.0
    %2274 = vmatprep.subr.mxu0 0.0
    %2275 = vmatpush1.msra.mxu0 0.0
    %2276 = vmatprep.subr.mxu0 0.0
    %2277 = vmatpush1.msra.mxu0 0.0
    %2278 = vmatprep.subr.mxu0 0.0
    %2279 = vmatpush1.msra.mxu0 0.0
    %2280 = vmatprep.subr.mxu0 0.0
    %2281 = vmatpush1.msra.mxu0 0.0
    %2282 = vmatprep.subr.mxu0 0.0
    %2283 = vmatpush1.msra.mxu0 0.0
    %2284 = vmatprep.subr.mxu0 0.0
    %2285 = vmatpush1.msra.mxu0 0.0
    %2286 = vmatprep.subr.mxu0 0.0
    %2287 = vmatpush1.msra.mxu0 0.0
    %2288 = vmatprep.subr.mxu0 0.0
    %2289 = vmatpush1.msra.mxu0 0.0
    %2290 = vmatprep.subr.mxu0 0.0
    %2291 = vmatpush1.msra.mxu0 0.0
    %2292 = vmatprep.subr.mxu0 0.0
    %2293 = vmatpush1.msra.mxu0 0.0
    %2294 = vmatprep.subr.mxu0 0.0
    %2295 = vmatpush1.msra.mxu0 0.0
    %2296 = vmatprep.subr.mxu0 0.0
    %2297 = vmatpush1.msra.mxu0 0.0
    %2298 = vmatprep.mubr.f32.mxu0 0.0
    %2299 = vmatmul.mubr.f32.gmra.mrb[0].mxu0 %v2232
    %v2300 = vpop.f32.mrb[0].mxu0
    %v2301 = vadd.f32 0.0, %v2300
    %v2302 = vpop.f32.mrb[0].mxu0
    %2303 = vdwg.mxu0
    %v2305 = vsel %vm2157, %v1841, 0
    %2307 = vmatprep.subr.mxu0 0.0
    %2308 = vmatpush1.msra.mxu0 %v91
    %2309 = vmatprep.subr.mxu0 0.0
    %2310 = vmatpush1.msra.mxu0 0.0
    %2311 = vmatprep.subr.mxu0 0.0
    %2312 = vmatpush1.msra.mxu0 0.0
    %2313 = vmatprep.subr.mxu0 0.0
    %2314 = vmatpush1.msra.mxu0 0.0
    %2315 = vmatprep.subr.mxu0 0.0
    %2316 = vmatpush1.msra.mxu0 0.0
    %2317 = vmatprep.subr.mxu0 0.0
    %2318 = vmatpush1.msra.mxu0 0.0
    %2319 = vmatprep.subr.mxu0 0.0
    %2320 = vmatpush1.msra.mxu0 0.0
    %2321 = vmatprep.subr.mxu0 0.0
    %2322 = vmatpush1.msra.mxu0 0.0
    %2323 = vmatprep.subr.mxu0 0.0
    %2324 = vmatpush1.msra.mxu0 0.0
    %2325 = vmatprep.subr.mxu0 0.0
    %2326 = vmatpush1.msra.mxu0 0.0
    %2327 = vmatprep.subr.mxu0 0.0
    %2328 = vmatpush1.msra.mxu0 0.0
    %2329 = vmatprep.subr.mxu0 0.0
    %2330 = vmatpush1.msra.mxu0 0.0
    %2331 = vmatprep.subr.mxu0 0.0
    %2332 = vmatpush1.msra.mxu0 0.0
    %2333 = vmatprep.subr.mxu0 0.0
    %2334 = vmatpush1.msra.mxu0 0.0
    %2335 = vmatprep.subr.mxu0 0.0
    %2336 = vmatpush1.msra.mxu0 0.0
    %2337 = vmatprep.subr.mxu0 0.0
    %2338 = vmatpush1.msra.mxu0 0.0
    %2339 = vmatprep.subr.mxu0 0.0
    %2340 = vmatpush1.msra.mxu0 0.0
    %2341 = vmatprep.subr.mxu0 0.0
    %2342 = vmatpush1.msra.mxu0 0.0
    %2343 = vmatprep.subr.mxu0 0.0
    %2344 = vmatpush1.msra.mxu0 0.0
    %2345 = vmatprep.subr.mxu0 0.0
    %2346 = vmatpush1.msra.mxu0 0.0
    %2347 = vmatprep.subr.mxu0 0.0
    %2348 = vmatpush1.msra.mxu0 0.0
    %2349 = vmatprep.subr.mxu0 0.0
    %2350 = vmatpush1.msra.mxu0 0.0
    %2351 = vmatprep.subr.mxu0 0.0
    %2352 = vmatpush1.msra.mxu0 0.0
    %2353 = vmatprep.subr.mxu0 0.0
    %2354 = vmatpush1.msra.mxu0 0.0
    %2355 = vmatprep.subr.mxu0 0.0
    %2356 = vmatpush1.msra.mxu0 0.0
    %2357 = vmatprep.subr.mxu0 0.0
    %2358 = vmatpush1.msra.mxu0 0.0
    %2359 = vmatprep.subr.mxu0 0.0
    %2360 = vmatpush1.msra.mxu0 0.0
    %2361 = vmatprep.subr.mxu0 0.0
    %2362 = vmatpush1.msra.mxu0 0.0
    %2363 = vmatprep.subr.mxu0 0.0
    %2364 = vmatpush1.msra.mxu0 0.0
    %2365 = vmatprep.subr.mxu0 0.0
    %2366 = vmatpush1.msra.mxu0 0.0
    %2367 = vmatprep.subr.mxu0 0.0
    %2368 = vmatpush1.msra.mxu0 0.0
    %2369 = vmatprep.subr.mxu0 0.0
    %2370 = vmatpush1.msra.mxu0 0.0
    %2371 = vmatprep.mubr.f32.mxu0 0.0
    %2372 = vmatmul.mubr.f32.gmra.mrb[0].mxu0 %v2305
    %v2373 = vpop.f32.mrb[0].mxu0
    %v2374 = vadd.f32 0.0, %v2373
    %v2375 = vpop.f32.mrb[0].mxu0
    %2376 = vdwg.mxu0
    %v2378 = vsel %vm2157, %v1843, 0
    %2380 = vmatprep.subr.mxu0 0.0
    %2381 = vmatpush1.msra.mxu0 %v92
    %2382 = vmatprep.subr.mxu0 0.0
    %2383 = vmatpush1.msra.mxu0 0.0
    %2384 = vmatprep.subr.mxu0 0.0
    %2385 = vmatpush1.msra.mxu0 0.0
    %2386 = vmatprep.subr.mxu0 0.0
    %2387 = vmatpush1.msra.mxu0 0.0
    %2388 = vmatprep.subr.mxu0 0.0
    %2389 = vmatpush1.msra.mxu0 0.0
    %2390 = vmatprep.subr.mxu0 0.0
    %2391 = vmatpush1.msra.mxu0 0.0
    %2392 = vmatprep.subr.mxu0 0.0
    %2393 = vmatpush1.msra.mxu0 0.0
    %2394 = vmatprep.subr.mxu0 0.0
    %2395 = vmatpush1.msra.mxu0 0.0
    %2396 = vmatprep.subr.mxu0 0.0
    %2397 = vmatpush1.msra.mxu0 0.0
    %2398 = vmatprep.subr.mxu0 0.0
    %2399 = vmatpush1.msra.mxu0 0.0
    %2400 = vmatprep.subr.mxu0 0.0
    %2401 = vmatpush1.msra.mxu0 0.0
    %2402 = vmatprep.subr.mxu0 0.0
    %2403 = vmatpush1.msra.mxu0 0.0
    %2404 = vmatprep.subr.mxu0 0.0
    %2405 = vmatpush1.msra.mxu0 0.0
    %2406 = vmatprep.subr.mxu0 0.0
    %2407 = vmatpush1.msra.mxu0 0.0
    %2408 = vmatprep.subr.mxu0 0.0
    %2409 = vmatpush1.msra.mxu0 0.0
    %2410 = vmatprep.subr.mxu0 0.0
    %2411 = vmatpush1.msra.mxu0 0.0
    %2412 = vmatprep.subr.mxu0 0.0
    %2413 = vmatpush1.msra.mxu0 0.0
    %2414 = vmatprep.subr.mxu0 0.0
    %2415 = vmatpush1.msra.mxu0 0.0
    %2416 = vmatprep.subr.mxu0 0.0
    %2417 = vmatpush1.msra.mxu0 0.0
    %2418 = vmatprep.subr.mxu0 0.0
    %2419 = vmatpush1.msra.mxu0 0.0
    %2420 = vmatprep.subr.mxu0 0.0
    %2421 = vmatpush1.msra.mxu0 0.0
    %2422 = vmatprep.subr.mxu0 0.0
    %2423 = vmatpush1.msra.mxu0 0.0
    %2424 = vmatprep.subr.mxu0 0.0
    %2425 = vmatpush1.msra.mxu0 0.0
    %2426 = vmatprep.subr.mxu0 0.0
    %2427 = vmatpush1.msra.mxu0 0.0
    %2428 = vmatprep.subr.mxu0 0.0
    %2429 = vmatpush1.msra.mxu0 0.0
    %2430 = vmatprep.subr.mxu0 0.0
    %2431 = vmatpush1.msra.mxu0 0.0
    %2432 = vmatprep.subr.mxu0 0.0
    %2433 = vmatpush1.msra.mxu0 0.0
    %2434 = vmatprep.subr.mxu0 0.0
    %2435 = vmatpush1.msra.mxu0 0.0
    %2436 = vmatprep.subr.mxu0 0.0
    %2437 = vmatpush1.msra.mxu0 0.0
    %2438 = vmatprep.subr.mxu0 0.0
    %2439 = vmatpush1.msra.mxu0 0.0
    %2440 = vmatprep.subr.mxu0 0.0
    %2441 = vmatpush1.msra.mxu0 0.0
    %2442 = vmatprep.subr.mxu0 0.0
    %2443 = vmatpush1.msra.mxu0 0.0
    %2444 = vmatprep.mubr.f32.mxu0 0.0
    %2445 = vmatmul.mubr.f32.gmra.mrb[0].mxu0 %v2378
    %v2446 = vpop.f32.mrb[0].mxu0
    %v2447 = vadd.f32 0.0, %v2446
    %v2448 = vpop.f32.mrb[0].mxu0
    %2449 = vdwg.mxu0
    %v2451 = vsel %vm2157, %v1845, 0
    %2453 = vmatprep.subr.mxu0 0.0
    %2454 = vmatpush1.msra.mxu0 %v93
    %2455 = vmatprep.subr.mxu0 0.0
    %2456 = vmatpush1.msra.mxu0 0.0
    %2457 = vmatprep.subr.mxu0 0.0
    %2458 = vmatpush1.msra.mxu0 0.0
    %2459 = vmatprep.subr.mxu0 0.0
    %2460 = vmatpush1.msra.mxu0 0.0
    %2461 = vmatprep.subr.mxu0 0.0
    %2462 = vmatpush1.msra.mxu0 0.0
    %2463 = vmatprep.subr.mxu0 0.0
    %2464 = vmatpush1.msra.mxu0 0.0
    %2465 = vmatprep.subr.mxu0 0.0
    %2466 = vmatpush1.msra.mxu0 0.0
    %2467 = vmatprep.subr.mxu0 0.0
    %2468 = vmatpush1.msra.mxu0 0.0
    %2469 = vmatprep.subr.mxu0 0.0
    %2470 = vmatpush1.msra.mxu0 0.0
    %2471 = vmatprep.subr.mxu0 0.0
    %2472 = vmatpush1.msra.mxu0 0.0
    %2473 = vmatprep.subr.mxu0 0.0
    %2474 = vmatpush1.msra.mxu0 0.0
    %2475 = vmatprep.subr.mxu0 0.0
    %2476 = vmatpush1.msra.mxu0 0.0
    %2477 = vmatprep.subr.mxu0 0.0
    %2478 = vmatpush1.msra.mxu0 0.0
    %2479 = vmatprep.subr.mxu0 0.0
    %2480 = vmatpush1.msra.mxu0 0.0
    %2481 = vmatprep.subr.mxu0 0.0
    %2482 = vmatpush1.msra.mxu0 0.0
    %2483 = vmatprep.subr.mxu0 0.0
    %2484 = vmatpush1.msra.mxu0 0.0
    %2485 = vmatprep.subr.mxu0 0.0
    %2486 = vmatpush1.msra.mxu0 0.0
    %2487 = vmatprep.subr.mxu0 0.0
    %2488 = vmatpush1.msra.mxu0 0.0
    %2489 = vmatprep.subr.mxu0 0.0
    %2490 = vmatpush1.msra.mxu0 0.0
    %2491 = vmatprep.subr.mxu0 0.0
    %2492 = vmatpush1.msra.mxu0 0.0
    %2493 = vmatprep.subr.mxu0 0.0
    %2494 = vmatpush1.msra.mxu0 0.0
    %2495 = vmatprep.subr.mxu0 0.0
    %2496 = vmatpush1.msra.mxu0 0.0
    %2497 = vmatprep.subr.mxu0 0.0
    %2498 = vmatpush1.msra.mxu0 0.0
    %2499 = vmatprep.subr.mxu0 0.0
    %2500 = vmatpush1.msra.mxu0 0.0
    %2501 = vmatprep.subr.mxu0 0.0
    %2502 = vmatpush1.msra.mxu0 0.0
    %2503 = vmatprep.subr.mxu0 0.0
    %2504 = vmatpush1.msra.mxu0 0.0
    %2505 = vmatprep.subr.mxu0 0.0
    %2506 = vmatpush1.msra.mxu0 0.0
    %2507 = vmatprep.subr.mxu0 0.0
    %2508 = vmatpush1.msra.mxu0 0.0
    %2509 = vmatprep.subr.mxu0 0.0
    %2510 = vmatpush1.msra.mxu0 0.0
    %2511 = vmatprep.subr.mxu0 0.0
    %2512 = vmatpush1.msra.mxu0 0.0
    %2513 = vmatprep.subr.mxu0 0.0
    %2514 = vmatpush1.msra.mxu0 0.0
    %2515 = vmatprep.subr.mxu0 0.0
    %2516 = vmatpush1.msra.mxu0 0.0
    %2517 = vmatprep.mubr.f32.mxu0 0.0
    %2518 = vmatmul.mubr.f32.gmra.mrb[0].mxu0 %v2451
    %v2519 = vpop.f32.mrb[0].mxu0
    %v2520 = vadd.f32 0.0, %v2519
    %v2521 = vpop.f32.mrb[0].mxu0
    %2522 = vdwg.mxu0
    %v2524 = vsel %vm2157, %v1847, 0
    %2526 = vmatprep.subr.mxu0 0.0
    %2527 = vmatpush1.msra.mxu0 %v94
    %2528 = vmatprep.subr.mxu0 0.0
    %2529 = vmatpush1.msra.mxu0 0.0
    %2530 = vmatprep.subr.mxu0 0.0
    %2531 = vmatpush1.msra.mxu0 0.0
    %2532 = vmatprep.subr.mxu0 0.0
    %2533 = vmatpush1.msra.mxu0 0.0
    %2534 = vmatprep.subr.mxu0 0.0
    %2535 = vmatpush1.msra.mxu0 0.0
    %2536 = vmatprep.subr.mxu0 0.0
    %2537 = vmatpush1.msra.mxu0 0.0
    %2538 = vmatprep.subr.mxu0 0.0
    %2539 = vmatpush1.msra.mxu0 0.0
    %2540 = vmatprep.subr.mxu0 0.0
    %2541 = vmatpush1.msra.mxu0 0.0
    %2542 = vmatprep.subr.mxu0 0.0
    %2543 = vmatpush1.msra.mxu0 0.0
    %2544 = vmatprep.subr.mxu0 0.0
    %2545 = vmatpush1.msra.mxu0 0.0
    %2546 = vmatprep.subr.mxu0 0.0
    %2547 = vmatpush1.msra.mxu0 0.0
    %2548 = vmatprep.subr.mxu0 0.0
    %2549 = vmatpush1.msra.mxu0 0.0
    %2550 = vmatprep.subr.mxu0 0.0
    %2551 = vmatpush1.msra.mxu0 0.0
    %2552 = vmatprep.subr.mxu0 0.0
    %2553 = vmatpush1.msra.mxu0 0.0
    %2554 = vmatprep.subr.mxu0 0.0
    %2555 = vmatpush1.msra.mxu0 0.0
    %2556 = vmatprep.subr.mxu0 0.0
    %2557 = vmatpush1.msra.mxu0 0.0
    %2558 = vmatprep.subr.mxu0 0.0
    %2559 = vmatpush1.msra.mxu0 0.0
    %2560 = vmatprep.subr.mxu0 0.0
    %2561 = vmatpush1.msra.mxu0 0.0
    %2562 = vmatprep.subr.mxu0 0.0
    %2563 = vmatpush1.msra.mxu0 0.0
    %2564 = vmatprep.subr.mxu0 0.0
    %2565 = vmatpush1.msra.mxu0 0.0
    %2566 = vmatprep.subr.mxu0 0.0
    %2567 = vmatpush1.msra.mxu0 0.0
    %2568 = vmatprep.subr.mxu0 0.0
    %2569 = vmatpush1.msra.mxu0 0.0
    %2570 = vmatprep.subr.mxu0 0.0
    %2571 = vmatpush1.msra.mxu0 0.0
    %2572 = vmatprep.subr.mxu0 0.0
    %2573 = vmatpush1.msra.mxu0 0.0
    %2574 = vmatprep.subr.mxu0 0.0
    %2575 = vmatpush1.msra.mxu0 0.0
    %2576 = vmatprep.subr.mxu0 0.0
    %2577 = vmatpush1.msra.mxu0 0.0
    %2578 = vmatprep.subr.mxu0 0.0
    %2579 = vmatpush1.msra.mxu0 0.0
    %2580 = vmatprep.subr.mxu0 0.0
    %2581 = vmatpush1.msra.mxu0 0.0
    %2582 = vmatprep.subr.mxu0 0.0
    %2583 = vmatpush1.msra.mxu0 0.0
    %2584 = vmatprep.subr.mxu0 0.0
    %2585 = vmatpush1.msra.mxu0 0.0
    %2586 = vmatprep.subr.mxu0 0.0
    %2587 = vmatpush1.msra.mxu0 0.0
    %2588 = vmatprep.subr.mxu0 0.0
    %2589 = vmatpush1.msra.mxu0 0.0
    %2590 = vmatprep.mubr.f32.mxu0 0.0
    %2591 = vmatmul.mubr.f32.gmra.mrb[0].mxu0 %v2524
    %v2592 = vpop.f32.mrb[0].mxu0
    %v2593 = vadd.f32 0.0, %v2592
    %v2594 = vpop.f32.mrb[0].mxu0
    %2595 = vdwg.mxu0
    %v2597 = vsel %vm2157, %v1849, 0
    %2599 = vmatprep.subr.mxu0 0.0
    %2600 = vmatpush1.msra.mxu0 %v95
    %2601 = vmatprep.subr.mxu0 0.0
    %2602 = vmatpush1.msra.mxu0 0.0
    %2603 = vmatprep.subr.mxu0 0.0
    %2604 = vmatpush1.msra.mxu0 0.0
    %2605 = vmatprep.subr.mxu0 0.0
    %2606 = vmatpush1.msra.mxu0 0.0
    %2607 = vmatprep.subr.mxu0 0.0
    %2608 = vmatpush1.msra.mxu0 0.0
    %2609 = vmatprep.subr.mxu0 0.0
    %2610 = vmatpush1.msra.mxu0 0.0
    %2611 = vmatprep.subr.mxu0 0.0
    %2612 = vmatpush1.msra.mxu0 0.0
    %2613 = vmatprep.subr.mxu0 0.0
    %2614 = vmatpush1.msra.mxu0 0.0
    %2615 = vmatprep.subr.mxu0 0.0
    %2616 = vmatpush1.msra.mxu0 0.0
    %2617 = vmatprep.subr.mxu0 0.0
    %2618 = vmatpush1.msra.mxu0 0.0
    %2619 = vmatprep.subr.mxu0 0.0
    %2620 = vmatpush1.msra.mxu0 0.0
    %2621 = vmatprep.subr.mxu0 0.0
    %2622 = vmatpush1.msra.mxu0 0.0
    %2623 = vmatprep.subr.mxu0 0.0
    %2624 = vmatpush1.msra.mxu0 0.0
    %2625 = vmatprep.subr.mxu0 0.0
    %2626 = vmatpush1.msra.mxu0 0.0
    %2627 = vmatprep.subr.mxu0 0.0
    %2628 = vmatpush1.msra.mxu0 0.0
    %2629 = vmatprep.subr.mxu0 0.0
    %2630 = vmatpush1.msra.mxu0 0.0
    %2631 = vmatprep.subr.mxu0 0.0
    %2632 = vmatpush1.msra.mxu0 0.0
    %2633 = vmatprep.subr.mxu0 0.0
    %2634 = vmatpush1.msra.mxu0 0.0
    %2635 = vmatprep.subr.mxu0 0.0
    %2636 = vmatpush1.msra.mxu0 0.0
    %2637 = vmatprep.subr.mxu0 0.0
    %2638 = vmatpush1.msra.mxu0 0.0
    %2639 = vmatprep.subr.mxu0 0.0
    %2640 = vmatpush1.msra.mxu0 0.0
    %2641 = vmatprep.subr.mxu0 0.0
    %2642 = vmatpush1.msra.mxu0 0.0
    %2643 = vmatprep.subr.mxu0 0.0
    %2644 = vmatpush1.msra.mxu0 0.0
    %2645 = vmatprep.subr.mxu0 0.0
    %2646 = vmatpush1.msra.mxu0 0.0
    %2647 = vmatprep.subr.mxu0 0.0
    %2648 = vmatpush1.msra.mxu0 0.0
    %2649 = vmatprep.subr.mxu0 0.0
    %2650 = vmatpush1.msra.mxu0 0.0
    %2651 = vmatprep.subr.mxu0 0.0
    %2652 = vmatpush1.msra.mxu0 0.0
    %2653 = vmatprep.subr.mxu0 0.0
    %2654 = vmatpush1.msra.mxu0 0.0
    %2655 = vmatprep.subr.mxu0 0.0
    %2656 = vmatpush1.msra.mxu0 0.0
    %2657 = vmatprep.subr.mxu0 0.0
    %2658 = vmatpush1.msra.mxu0 0.0
    %2659 = vmatprep.subr.mxu0 0.0
    %2660 = vmatpush1.msra.mxu0 0.0
    %2661 = vmatprep.subr.mxu0 0.0
    %2662 = vmatpush1.msra.mxu0 0.0
    %2663 = vmatprep.mubr.f32.mxu0 0.0
    %2664 = vmatmul.mubr.f32.gmra.mrb[0].mxu0 %v2597
    %v2665 = vpop.f32.mrb[0].mxu0
    %v2666 = vadd.f32 0.0, %v2665
    %v2667 = vpop.f32.mrb[0].mxu0
    %2668 = vdwg.mxu0
    %v2670 = vsel %vm2157, %v1851, 0
    %2672 = vmatprep.subr.mxu0 0.0
    %2673 = vmatpush1.msra.mxu0 %v96
    %2674 = vmatprep.subr.mxu0 0.0
    %2675 = vmatpush1.msra.mxu0 0.0
    %2676 = vmatprep.subr.mxu0 0.0
    %2677 = vmatpush1.msra.mxu0 0.0
    %2678 = vmatprep.subr.mxu0 0.0
    %2679 = vmatpush1.msra.mxu0 0.0
    %2680 = vmatprep.subr.mxu0 0.0
    %2681 = vmatpush1.msra.mxu0 0.0
    %2682 = vmatprep.subr.mxu0 0.0
    %2683 = vmatpush1.msra.mxu0 0.0
    %2684 = vmatprep.subr.mxu0 0.0
    %2685 = vmatpush1.msra.mxu0 0.0
    %2686 = vmatprep.subr.mxu0 0.0
    %2687 = vmatpush1.msra.mxu0 0.0
    %2688 = vmatprep.subr.mxu0 0.0
    %2689 = vmatpush1.msra.mxu0 0.0
    %2690 = vmatprep.subr.mxu0 0.0
    %2691 = vmatpush1.msra.mxu0 0.0
    %2692 = vmatprep.subr.mxu0 0.0
    %2693 = vmatpush1.msra.mxu0 0.0
    %2694 = vmatprep.subr.mxu0 0.0
    %2695 = vmatpush1.msra.mxu0 0.0
    %2696 = vmatprep.subr.mxu0 0.0
    %2697 = vmatpush1.msra.mxu0 0.0
    %2698 = vmatprep.subr.mxu0 0.0
    %2699 = vmatpush1.msra.mxu0 0.0
    %2700 = vmatprep.subr.mxu0 0.0
    %2701 = vmatpush1.msra.mxu0 0.0
    %2702 = vmatprep.subr.mxu0 0.0
    %2703 = vmatpush1.msra.mxu0 0.0
    %2704 = vmatprep.subr.mxu0 0.0
    %2705 = vmatpush1.msra.mxu0 0.0
    %2706 = vmatprep.subr.mxu0 0.0
    %2707 = vmatpush1.msra.mxu0 0.0
    %2708 = vmatprep.subr.mxu0 0.0
    %2709 = vmatpush1.msra.mxu0 0.0
    %2710 = vmatprep.subr.mxu0 0.0
    %2711 = vmatpush1.msra.mxu0 0.0
    %2712 = vmatprep.subr.mxu0 0.0
    %2713 = vmatpush1.msra.mxu0 0.0
    %2714 = vmatprep.subr.mxu0 0.0
    %2715 = vmatpush1.msra.mxu0 0.0
    %2716 = vmatprep.subr.mxu0 0.0
    %2717 = vmatpush1.msra.mxu0 0.0
    %2718 = vmatprep.subr.mxu0 0.0
    %2719 = vmatpush1.msra.mxu0 0.0
    %2720 = vmatprep.subr.mxu0 0.0
    %2721 = vmatpush1.msra.mxu0 0.0
    %2722 = vmatprep.subr.mxu0 0.0
    %2723 = vmatpush1.msra.mxu0 0.0
    %2724 = vmatprep.subr.mxu0 0.0
    %2725 = vmatpush1.msra.mxu0 0.0
    %2726 = vmatprep.subr.mxu0 0.0
    %2727 = vmatpush1.msra.mxu0 0.0
    %2728 = vmatprep.subr.mxu0 0.0
    %2729 = vmatpush1.msra.mxu0 0.0
    %2730 = vmatprep.subr.mxu0 0.0
    %2731 = vmatpush1.msra.mxu0 0.0
    %2732 = vmatprep.subr.mxu0 0.0
    %2733 = vmatpush1.msra.mxu0 0.0
    %2734 = vmatprep.subr.mxu0 0.0
    %2735 = vmatpush1.msra.mxu0 0.0
    %2736 = vmatprep.mubr.f32.mxu0 0.0
    %2737 = vmatmul.mubr.f32.gmra.mrb[0].mxu0 %v2670
    %v2738 = vpop.f32.mrb[0].mxu0
    %v2739 = vadd.f32 0.0, %v2738
    %v2740 = vpop.f32.mrb[0].mxu0
    %2741 = vdwg.mxu0
    %v2743 = vsel %vm2157, %v1853, 0
    %2745 = vmatprep.subr.mxu0 0.0
    %2746 = vmatpush1.msra.mxu0 %v97
    %2747 = vmatprep.subr.mxu0 0.0
    %2748 = vmatpush1.msra.mxu0 0.0
    %2749 = vmatprep.subr.mxu0 0.0
    %2750 = vmatpush1.msra.mxu0 0.0
    %2751 = vmatprep.subr.mxu0 0.0
    %2752 = vmatpush1.msra.mxu0 0.0
    %2753 = vmatprep.subr.mxu0 0.0
    %2754 = vmatpush1.msra.mxu0 0.0
    %2755 = vmatprep.subr.mxu0 0.0
    %2756 = vmatpush1.msra.mxu0 0.0
    %2757 = vmatprep.subr.mxu0 0.0
    %2758 = vmatpush1.msra.mxu0 0.0
    %2759 = vmatprep.subr.mxu0 0.0
    %2760 = vmatpush1.msra.mxu0 0.0
    %2761 = vmatprep.subr.mxu0 0.0
    %2762 = vmatpush1.msra.mxu0 0.0
    %2763 = vmatprep.subr.mxu0 0.0
    %2764 = vmatpush1.msra.mxu0 0.0
    %2765 = vmatprep.subr.mxu0 0.0
    %2766 = vmatpush1.msra.mxu0 0.0
    %2767 = vmatprep.subr.mxu0 0.0
    %2768 = vmatpush1.msra.mxu0 0.0
    %2769 = vmatprep.subr.mxu0 0.0
    %2770 = vmatpush1.msra.mxu0 0.0
    %2771 = vmatprep.subr.mxu0 0.0
    %2772 = vmatpush1.msra.mxu0 0.0
    %2773 = vmatprep.subr.mxu0 0.0
    %2774 = vmatpush1.msra.mxu0 0.0
    %2775 = vmatprep.subr.mxu0 0.0
    %2776 = vmatpush1.msra.mxu0 0.0
    %2777 = vmatprep.subr.mxu0 0.0
    %2778 = vmatpush1.msra.mxu0 0.0
    %2779 = vmatprep.subr.mxu0 0.0
    %2780 = vmatpush1.msra.mxu0 0.0
    %2781 = vmatprep.subr.mxu0 0.0
    %2782 = vmatpush1.msra.mxu0 0.0
    %2783 = vmatprep.subr.mxu0 0.0
    %2784 = vmatpush1.msra.mxu0 0.0
    %2785 = vmatprep.subr.mxu0 0.0
    %2786 = vmatpush1.msra.mxu0 0.0
    %2787 = vmatprep.subr.mxu0 0.0
    %2788 = vmatpush1.msra.mxu0 0.0
    %2789 = vmatprep.subr.mxu0 0.0
    %2790 = vmatpush1.msra.mxu0 0.0
    %2791 = vmatprep.subr.mxu0 0.0
    %2792 = vmatpush1.msra.mxu0 0.0
    %2793 = vmatprep.subr.mxu0 0.0
    %2794 = vmatpush1.msra.mxu0 0.0
    %2795 = vmatprep.subr.mxu0 0.0
    %2796 = vmatpush1.msra.mxu0 0.0
    %2797 = vmatprep.subr.mxu0 0.0
    %2798 = vmatpush1.msra.mxu0 0.0
    %2799 = vmatprep.subr.mxu0 0.0
    %2800 = vmatpush1.msra.mxu0 0.0
    %2801 = vmatprep.subr.mxu0 0.0
    %2802 = vmatpush1.msra.mxu0 0.0
    %2803 = vmatprep.subr.mxu0 0.0
    %2804 = vmatpush1.msra.mxu0 0.0
    %2805 = vmatprep.subr.mxu0 0.0
    %2806 = vmatpush1.msra.mxu0 0.0
    %2807 = vmatprep.subr.mxu0 0.0
    %2808 = vmatpush1.msra.mxu0 0.0
    %2809 = vmatprep.mubr.f32.mxu0 0.0
    %2810 = vmatmul.mubr.f32.gmra.mrb[0].mxu0 %v2743
    %v2811 = vpop.f32.mrb[0].mxu0
    %v2812 = vadd.f32 0.0, %v2811
    %v2813 = vpop.f32.mrb[0].mxu0
    %2814 = vdwg.mxu0
    %v2816 = vsel %vm2157, %v1855, 0
    %2818 = vmatprep.subr.mxu0 0.0
    %2819 = vmatpush1.msra.mxu0 %v98
    %2820 = vmatprep.subr.mxu0 0.0
    %2821 = vmatpush1.msra.mxu0 0.0
    %2822 = vmatprep.subr.mxu0 0.0
    %2823 = vmatpush1.msra.mxu0 0.0
    %2824 = vmatprep.subr.mxu0 0.0
    %2825 = vmatpush1.msra.mxu0 0.0
    %2826 = vmatprep.subr.mxu0 0.0
    %2827 = vmatpush1.msra.mxu0 0.0
    %2828 = vmatprep.subr.mxu0 0.0
    %2829 = vmatpush1.msra.mxu0 0.0
    %2830 = vmatprep.subr.mxu0 0.0
    %2831 = vmatpush1.msra.mxu0 0.0
    %2832 = vmatprep.subr.mxu0 0.0
    %2833 = vmatpush1.msra.mxu0 0.0
    %2834 = vmatprep.subr.mxu0 0.0
    %2835 = vmatpush1.msra.mxu0 0.0
    %2836 = vmatprep.subr.mxu0 0.0
    %2837 = vmatpush1.msra.mxu0 0.0
    %2838 = vmatprep.subr.mxu0 0.0
    %2839 = vmatpush1.msra.mxu0 0.0
    %2840 = vmatprep.subr.mxu0 0.0
    %2841 = vmatpush1.msra.mxu0 0.0
    %2842 = vmatprep.subr.mxu0 0.0
    %2843 = vmatpush1.msra.mxu0 0.0
    %2844 = vmatprep.subr.mxu0 0.0
    %2845 = vmatpush1.msra.mxu0 0.0
    %2846 = vmatprep.subr.mxu0 0.0
    %2847 = vmatpush1.msra.mxu0 0.0
    %2848 = vmatprep.subr.mxu0 0.0
    %2849 = vmatpush1.msra.mxu0 0.0
    %2850 = vmatprep.subr.mxu0 0.0
    %2851 = vmatpush1.msra.mxu0 0.0
    %2852 = vmatprep.subr.mxu0 0.0
    %2853 = vmatpush1.msra.mxu0 0.0
    %2854 = vmatprep.subr.mxu0 0.0
    %2855 = vmatpush1.msra.mxu0 0.0
    %2856 = vmatprep.subr.mxu0 0.0
    %2857 = vmatpush1.msra.mxu0 0.0
    %2858 = vmatprep.subr.mxu0 0.0
    %2859 = vmatpush1.msra.mxu0 0.0
    %2860 = vmatprep.subr.mxu0 0.0
    %2861 = vmatpush1.msra.mxu0 0.0
    %2862 = vmatprep.subr.mxu0 0.0
    %2863 = vmatpush1.msra.mxu0 0.0
    %2864 = vmatprep.subr.mxu0 0.0
    %2865 = vmatpush1.msra.mxu0 0.0
    %2866 = vmatprep.subr.mxu0 0.0
    %2867 = vmatpush1.msra.mxu0 0.0
    %2868 = vmatprep.subr.mxu0 0.0
    %2869 = vmatpush1.msra.mxu0 0.0
    %2870 = vmatprep.subr.mxu0 0.0
    %2871 = vmatpush1.msra.mxu0 0.0
    %2872 = vmatprep.subr.mxu0 0.0
    %2873 = vmatpush1.msra.mxu0 0.0
    %2874 = vmatprep.subr.mxu0 0.0
    %2875 = vmatpush1.msra.mxu0 0.0
    %2876 = vmatprep.subr.mxu0 0.0
    %2877 = vmatpush1.msra.mxu0 0.0
    %2878 = vmatprep.subr.mxu0 0.0
    %2879 = vmatpush1.msra.mxu0 0.0
    %2880 = vmatprep.subr.mxu0 0.0
    %2881 = vmatpush1.msra.mxu0 0.0
    %2882 = vmatprep.mubr.f32.mxu0 0.0
    %2883 = vmatmul.mubr.f32.gmra.mrb[0].mxu0 %v2816
    %v2884 = vpop.f32.mrb[0].mxu0
    %v2885 = vadd.f32 0.0, %v2884
    %v2886 = vpop.f32.mrb[0].mxu0
    %2887 = vdwg.mxu0
    %v2889 = vsel %vm2157, %v1857, 0
    %2891 = vmatprep.subr.mxu0 0.0
    %2892 = vmatpush1.msra.mxu0 %v99
    %2893 = vmatprep.subr.mxu0 0.0
    %2894 = vmatpush1.msra.mxu0 0.0
    %2895 = vmatprep.subr.mxu0 0.0
    %2896 = vmatpush1.msra.mxu0 0.0
    %2897 = vmatprep.subr.mxu0 0.0
    %2898 = vmatpush1.msra.mxu0 0.0
    %2899 = vmatprep.subr.mxu0 0.0
    %2900 = vmatpush1.msra.mxu0 0.0
    %2901 = vmatprep.subr.mxu0 0.0
    %2902 = vmatpush1.msra.mxu0 0.0
    %2903 = vmatprep.subr.mxu0 0.0
    %2904 = vmatpush1.msra.mxu0 0.0
    %2905 = vmatprep.subr.mxu0 0.0
    %2906 = vmatpush1.msra.mxu0 0.0
    %2907 = vmatprep.subr.mxu0 0.0
    %2908 = vmatpush1.msra.mxu0 0.0
    %2909 = vmatprep.subr.mxu0 0.0
    %2910 = vmatpush1.msra.mxu0 0.0
    %2911 = vmatprep.subr.mxu0 0.0
    %2912 = vmatpush1.msra.mxu0 0.0
    %2913 = vmatprep.subr.mxu0 0.0
    %2914 = vmatpush1.msra.mxu0 0.0
    %2915 = vmatprep.subr.mxu0 0.0
    %2916 = vmatpush1.msra.mxu0 0.0
    %2917 = vmatprep.subr.mxu0 0.0
    %2918 = vmatpush1.msra.mxu0 0.0
    %2919 = vmatprep.subr.mxu0 0.0
    %2920 = vmatpush1.msra.mxu0 0.0
    %2921 = vmatprep.subr.mxu0 0.0
    %2922 = vmatpush1.msra.mxu0 0.0
    %2923 = vmatprep.subr.mxu0 0.0
    %2924 = vmatpush1.msra.mxu0 0.0
    %2925 = vmatprep.subr.mxu0 0.0
    %2926 = vmatpush1.msra.mxu0 0.0
    %2927 = vmatprep.subr.mxu0 0.0
    %2928 = vmatpush1.msra.mxu0 0.0
    %2929 = vmatprep.subr.mxu0 0.0
    %2930 = vmatpush1.msra.mxu0 0.0
    %2931 = vmatprep.subr.mxu0 0.0
    %2932 = vmatpush1.msra.mxu0 0.0
    %2933 = vmatprep.subr.mxu0 0.0
    %2934 = vmatpush1.msra.mxu0 0.0
    %2935 = vmatprep.subr.mxu0 0.0
    %2936 = vmatpush1.msra.mxu0 0.0
    %2937 = vmatprep.subr.mxu0 0.0
    %2938 = vmatpush1.msra.mxu0 0.0
    %2939 = vmatprep.subr.mxu0 0.0
    %2940 = vmatpush1.msra.mxu0 0.0
    %2941 = vmatprep.subr.mxu0 0.0
    %2942 = vmatpush1.msra.mxu0 0.0
    %2943 = vmatprep.subr.mxu0 0.0
    %2944 = vmatpush1.msra.mxu0 0.0
    %2945 = vmatprep.subr.mxu0 0.0
    %2946 = vmatpush1.msra.mxu0 0.0
    %2947 = vmatprep.subr.mxu0 0.0
    %2948 = vmatpush1.msra.mxu0 0.0
    %2949 = vmatprep.subr.mxu0 0.0
    %2950 = vmatpush1.msra.mxu0 0.0
    %2951 = vmatprep.subr.mxu0 0.0
    %2952 = vmatpush1.msra.mxu0 0.0
    %2953 = vmatprep.subr.mxu0 0.0
    %2954 = vmatpush1.msra.mxu0 0.0
    %2955 = vmatprep.mubr.f32.mxu0 0.0
    %2956 = vmatmul.mubr.f32.gmra.mrb[0].mxu0 %v2889
    %v2957 = vpop.f32.mrb[0].mxu0
    %v2958 = vadd.f32 0.0, %v2957
    %v2959 = vpop.f32.mrb[0].mxu0
    %2960 = vdwg.mxu0
    %v2962 = vsel %vm2157, %v1859, 0
    %2964 = vmatprep.subr.mxu0 0.0
    %2965 = vmatpush1.msra.mxu0 %v100
    %2966 = vmatprep.subr.mxu0 0.0
    %2967 = vmatpush1.msra.mxu0 0.0
    %2968 = vmatprep.subr.mxu0 0.0
    %2969 = vmatpush1.msra.mxu0 0.0
    %2970 = vmatprep.subr.mxu0 0.0
    %2971 = vmatpush1.msra.mxu0 0.0
    %2972 = vmatprep.subr.mxu0 0.0
    %2973 = vmatpush1.msra.mxu0 0.0
    %2974 = vmatprep.subr.mxu0 0.0
    %2975 = vmatpush1.msra.mxu0 0.0
    %2976 = vmatprep.subr.mxu0 0.0
    %2977 = vmatpush1.msra.mxu0 0.0
    %2978 = vmatprep.subr.mxu0 0.0
    %2979 = vmatpush1.msra.mxu0 0.0
    %2980 = vmatprep.subr.mxu0 0.0
    %2981 = vmatpush1.msra.mxu0 0.0
    %2982 = vmatprep.subr.mxu0 0.0
    %2983 = vmatpush1.msra.mxu0 0.0
    %2984 = vmatprep.subr.mxu0 0.0
    %2985 = vmatpush1.msra.mxu0 0.0
    %2986 = vmatprep.subr.mxu0 0.0
    %2987 = vmatpush1.msra.mxu0 0.0
    %2988 = vmatprep.subr.mxu0 0.0
    %2989 = vmatpush1.msra.mxu0 0.0
    %2990 = vmatprep.subr.mxu0 0.0
    %2991 = vmatpush1.msra.mxu0 0.0
    %2992 = vmatprep.subr.mxu0 0.0
    %2993 = vmatpush1.msra.mxu0 0.0
    %2994 = vmatprep.subr.mxu0 0.0
    %2995 = vmatpush1.msra.mxu0 0.0
    %2996 = vmatprep.subr.mxu0 0.0
    %2997 = vmatpush1.msra.mxu0 0.0
    %2998 = vmatprep.subr.mxu0 0.0
    %2999 = vmatpush1.msra.mxu0 0.0
    %3000 = vmatprep.subr.mxu0 0.0
    %3001 = vmatpush1.msra.mxu0 0.0
    %3002 = vmatprep.subr.mxu0 0.0
    %3003 = vmatpush1.msra.mxu0 0.0
    %3004 = vmatprep.subr.mxu0 0.0
    %3005 = vmatpush1.msra.mxu0 0.0
    %3006 = vmatprep.subr.mxu0 0.0
    %3007 = vmatpush1.msra.mxu0 0.0
    %3008 = vmatprep.subr.mxu0 0.0
    %3009 = vmatpush1.msra.mxu0 0.0
    %3010 = vmatprep.subr.mxu0 0.0
    %3011 = vmatpush1.msra.mxu0 0.0
    %3012 = vmatprep.subr.mxu0 0.0
    %3013 = vmatpush1.msra.mxu0 0.0
    %3014 = vmatprep.subr.mxu0 0.0
    %3015 = vmatpush1.msra.mxu0 0.0
    %3016 = vmatprep.subr.mxu0 0.0
    %3017 = vmatpush1.msra.mxu0 0.0
    %3018 = vmatprep.subr.mxu0 0.0
    %3019 = vmatpush1.msra.mxu0 0.0
    %3020 = vmatprep.subr.mxu0 0.0
    %3021 = vmatpush1.msra.mxu0 0.0
    %3022 = vmatprep.subr.mxu0 0.0
    %3023 = vmatpush1.msra.mxu0 0.0
    %3024 = vmatprep.subr.mxu0 0.0
    %3025 = vmatpush1.msra.mxu0 0.0
    %3026 = vmatprep.subr.mxu0 0.0
    %3027 = vmatpush1.msra.mxu0 0.0
    %3028 = vmatprep.mubr.f32.mxu0 0.0
    %3029 = vmatmul.mubr.f32.gmra.mrb[0].mxu0 %v2962
    %v3030 = vpop.f32.mrb[0].mxu0
    %v3031 = vadd.f32 0.0, %v3030
    %v3032 = vpop.f32.mrb[0].mxu0
    %3033 = vdwg.mxu0
    %v3035 = vsel %vm2157, %v1861, 0
    %3037 = vmatprep.subr.mxu0 0.0
    %3038 = vmatpush1.msra.mxu0 %v101
    %3039 = vmatprep.subr.mxu0 0.0
    %3040 = vmatpush1.msra.mxu0 0.0
    %3041 = vmatprep.subr.mxu0 0.0
    %3042 = vmatpush1.msra.mxu0 0.0
    %3043 = vmatprep.subr.mxu0 0.0
    %3044 = vmatpush1.msra.mxu0 0.0
    %3045 = vmatprep.subr.mxu0 0.0
    %3046 = vmatpush1.msra.mxu0 0.0
    %3047 = vmatprep.subr.mxu0 0.0
    %3048 = vmatpush1.msra.mxu0 0.0
    %3049 = vmatprep.subr.mxu0 0.0
    %3050 = vmatpush1.msra.mxu0 0.0
    %3051 = vmatprep.subr.mxu0 0.0
    %3052 = vmatpush1.msra.mxu0 0.0
    %3053 = vmatprep.subr.mxu0 0.0
    %3054 = vmatpush1.msra.mxu0 0.0
    %3055 = vmatprep.subr.mxu0 0.0
    %3056 = vmatpush1.msra.mxu0 0.0
    %3057 = vmatprep.subr.mxu0 0.0
    %3058 = vmatpush1.msra.mxu0 0.0
    %3059 = vmatprep.subr.mxu0 0.0
    %3060 = vmatpush1.msra.mxu0 0.0
    %3061 = vmatprep.subr.mxu0 0.0
    %3062 = vmatpush1.msra.mxu0 0.0
    %3063 = vmatprep.subr.mxu0 0.0
    %3064 = vmatpush1.msra.mxu0 0.0
    %3065 = vmatprep.subr.mxu0 0.0
    %3066 = vmatpush1.msra.mxu0 0.0
    %3067 = vmatprep.subr.mxu0 0.0
    %3068 = vmatpush1.msra.mxu0 0.0
    %3069 = vmatprep.subr.mxu0 0.0
    %3070 = vmatpush1.msra.mxu0 0.0
    %3071 = vmatprep.subr.mxu0 0.0
    %3072 = vmatpush1.msra.mxu0 0.0
    %3073 = vmatprep.subr.mxu0 0.0
    %3074 = vmatpush1.msra.mxu0 0.0
    %3075 = vmatprep.subr.mxu0 0.0
    %3076 = vmatpush1.msra.mxu0 0.0
    %3077 = vmatprep.subr.mxu0 0.0
    %3078 = vmatpush1.msra.mxu0 0.0
    %3079 = vmatprep.subr.mxu0 0.0
    %3080 = vmatpush1.msra.mxu0 0.0
    %3081 = vmatprep.subr.mxu0 0.0
    %3082 = vmatpush1.msra.mxu0 0.0
    %3083 = vmatprep.subr.mxu0 0.0
    %3084 = vmatpush1.msra.mxu0 0.0
    %3085 = vmatprep.subr.mxu0 0.0
    %3086 = vmatpush1.msra.mxu0 0.0
    %3087 = vmatprep.subr.mxu0 0.0
    %3088 = vmatpush1.msra.mxu0 0.0
    %3089 = vmatprep.subr.mxu0 0.0
    %3090 = vmatpush1.msra.mxu0 0.0
    %3091 = vmatprep.subr.mxu0 0.0
    %3092 = vmatpush1.msra.mxu0 0.0
    %3093 = vmatprep.subr.mxu0 0.0
    %3094 = vmatpush1.msra.mxu0 0.0
    %3095 = vmatprep.subr.mxu0 0.0
    %3096 = vmatpush1.msra.mxu0 0.0
    %3097 = vmatprep.subr.mxu0 0.0
    %3098 = vmatpush1.msra.mxu0 0.0
    %3099 = vmatprep.subr.mxu0 0.0
    %3100 = vmatpush1.msra.mxu0 0.0
    %3101 = vmatprep.mubr.f32.mxu0 0.0
    %3102 = vmatmul.mubr.f32.gmra.mrb[0].mxu0 %v3035
    %v3103 = vpop.f32.mrb[0].mxu0
    %v3104 = vadd.f32 0.0, %v3103
    %v3105 = vpop.f32.mrb[0].mxu0
    %3106 = vdwg.mxu0
    %v3108 = vsel %vm2157, %v1863, 0
    %3110 = vmatprep.subr.mxu0 0.0
    %3111 = vmatpush1.msra.mxu0 %v102
    %3112 = vmatprep.subr.mxu0 0.0
    %3113 = vmatpush1.msra.mxu0 0.0
    %3114 = vmatprep.subr.mxu0 0.0
    %3115 = vmatpush1.msra.mxu0 0.0
    %3116 = vmatprep.subr.mxu0 0.0
    %3117 = vmatpush1.msra.mxu0 0.0
    %3118 = vmatprep.subr.mxu0 0.0
    %3119 = vmatpush1.msra.mxu0 0.0
    %3120 = vmatprep.subr.mxu0 0.0
    %3121 = vmatpush1.msra.mxu0 0.0
    %3122 = vmatprep.subr.mxu0 0.0
    %3123 = vmatpush1.msra.mxu0 0.0
    %3124 = vmatprep.subr.mxu0 0.0
    %3125 = vmatpush1.msra.mxu0 0.0
    %3126 = vmatprep.subr.mxu0 0.0
    %3127 = vmatpush1.msra.mxu0 0.0
    %3128 = vmatprep.subr.mxu0 0.0
    %3129 = vmatpush1.msra.mxu0 0.0
    %3130 = vmatprep.subr.mxu0 0.0
    %3131 = vmatpush1.msra.mxu0 0.0
    %3132 = vmatprep.subr.mxu0 0.0
    %3133 = vmatpush1.msra.mxu0 0.0
    %3134 = vmatprep.subr.mxu0 0.0
    %3135 = vmatpush1.msra.mxu0 0.0
    %3136 = vmatprep.subr.mxu0 0.0
    %3137 = vmatpush1.msra.mxu0 0.0
    %3138 = vmatprep.subr.mxu0 0.0
    %3139 = vmatpush1.msra.mxu0 0.0
    %3140 = vmatprep.subr.mxu0 0.0
    %3141 = vmatpush1.msra.mxu0 0.0
    %3142 = vmatprep.subr.mxu0 0.0
    %3143 = vmatpush1.msra.mxu0 0.0
    %3144 = vmatprep.subr.mxu0 0.0
    %3145 = vmatpush1.msra.mxu0 0.0
    %3146 = vmatprep.subr.mxu0 0.0
    %3147 = vmatpush1.msra.mxu0 0.0
    %3148 = vmatprep.subr.mxu0 0.0
    %3149 = vmatpush1.msra.mxu0 0.0
    %3150 = vmatprep.subr.mxu0 0.0
    %3151 = vmatpush1.msra.mxu0 0.0
    %3152 = vmatprep.subr.mxu0 0.0
    %3153 = vmatpush1.msra.mxu0 0.0
    %3154 = vmatprep.subr.mxu0 0.0
    %3155 = vmatpush1.msra.mxu0 0.0
    %3156 = vmatprep.subr.mxu0 0.0
    %3157 = vmatpush1.msra.mxu0 0.0
    %3158 = vmatprep.subr.mxu0 0.0
    %3159 = vmatpush1.msra.mxu0 0.0
    %3160 = vmatprep.subr.mxu0 0.0
    %3161 = vmatpush1.msra.mxu0 0.0
    %3162 = vmatprep.subr.mxu0 0.0
    %3163 = vmatpush1.msra.mxu0 0.0
    %3164 = vmatprep.subr.mxu0 0.0
    %3165 = vmatpush1.msra.mxu0 0.0
    %3166 = vmatprep.subr.mxu0 0.0
    %3167 = vmatpush1.msra.mxu0 0.0
    %3168 = vmatprep.subr.mxu0 0.0
    %3169 = vmatpush1.msra.mxu0 0.0
    %3170 = vmatprep.subr.mxu0 0.0
    %3171 = vmatpush1.msra.mxu0 0.0
    %3172 = vmatprep.subr.mxu0 0.0
    %3173 = vmatpush1.msra.mxu0 0.0
    %3174 = vmatprep.mubr.f32.mxu0 0.0
    %3175 = vmatmul.mubr.f32.gmra.mrb[0].mxu0 %v3108
    %v3176 = vpop.f32.mrb[0].mxu0
    %v3177 = vadd.f32 0.0, %v3176
    %v3178 = vpop.f32.mrb[0].mxu0
    %3179 = vdwg.mxu0
    %v3181 = vsel %vm2157, %v1865, 0
    %3183 = vmatprep.subr.mxu0 0.0
    %3184 = vmatpush1.msra.mxu0 %v103
    %3185 = vmatprep.subr.mxu0 0.0
    %3186 = vmatpush1.msra.mxu0 0.0
    %3187 = vmatprep.subr.mxu0 0.0
    %3188 = vmatpush1.msra.mxu0 0.0
    %3189 = vmatprep.subr.mxu0 0.0
    %3190 = vmatpush1.msra.mxu0 0.0
    %3191 = vmatprep.subr.mxu0 0.0
    %3192 = vmatpush1.msra.mxu0 0.0
    %3193 = vmatprep.subr.mxu0 0.0
    %3194 = vmatpush1.msra.mxu0 0.0
    %3195 = vmatprep.subr.mxu0 0.0
    %3196 = vmatpush1.msra.mxu0 0.0
    %3197 = vmatprep.subr.mxu0 0.0
    %3198 = vmatpush1.msra.mxu0 0.0
    %3199 = vmatprep.subr.mxu0 0.0
    %3200 = vmatpush1.msra.mxu0 0.0
    %3201 = vmatprep.subr.mxu0 0.0
    %3202 = vmatpush1.msra.mxu0 0.0
    %3203 = vmatprep.subr.mxu0 0.0
    %3204 = vmatpush1.msra.mxu0 0.0
    %3205 = vmatprep.subr.mxu0 0.0
    %3206 = vmatpush1.msra.mxu0 0.0
    %3207 = vmatprep.subr.mxu0 0.0
    %3208 = vmatpush1.msra.mxu0 0.0
    %3209 = vmatprep.subr.mxu0 0.0
    %3210 = vmatpush1.msra.mxu0 0.0
    %3211 = vmatprep.subr.mxu0 0.0
    %3212 = vmatpush1.msra.mxu0 0.0
    %3213 = vmatprep.subr.mxu0 0.0
    %3214 = vmatpush1.msra.mxu0 0.0
    %3215 = vmatprep.subr.mxu0 0.0
    %3216 = vmatpush1.msra.mxu0 0.0
    %3217 = vmatprep.subr.mxu0 0.0
    %3218 = vmatpush1.msra.mxu0 0.0
    %3219 = vmatprep.subr.mxu0 0.0
    %3220 = vmatpush1.msra.mxu0 0.0
    %3221 = vmatprep.subr.mxu0 0.0
    %3222 = vmatpush1.msra.mxu0 0.0
    %3223 = vmatprep.subr.mxu0 0.0
    %3224 = vmatpush1.msra.mxu0 0.0
    %3225 = vmatprep.subr.mxu0 0.0
    %3226 = vmatpush1.msra.mxu0 0.0
    %3227 = vmatprep.subr.mxu0 0.0
    %3228 = vmatpush1.msra.mxu0 0.0
    %3229 = vmatprep.subr.mxu0 0.0
    %3230 = vmatpush1.msra.mxu0 0.0
    %3231 = vmatprep.subr.mxu0 0.0
    %3232 = vmatpush1.msra.mxu0 0.0
    %3233 = vmatprep.subr.mxu0 0.0
    %3234 = vmatpush1.msra.mxu0 0.0
    %3235 = vmatprep.subr.mxu0 0.0
    %3236 = vmatpush1.msra.mxu0 0.0
    %3237 = vmatprep.subr.mxu0 0.0
    %3238 = vmatpush1.msra.mxu0 0.0
    %3239 = vmatprep.subr.mxu0 0.0
    %3240 = vmatpush1.msra.mxu0 0.0
    %3241 = vmatprep.subr.mxu0 0.0
    %3242 = vmatpush1.msra.mxu0 0.0
    %3243 = vmatprep.subr.mxu0 0.0
    %3244 = vmatpush1.msra.mxu0 0.0
    %3245 = vmatprep.subr.mxu0 0.0
    %3246 = vmatpush1.msra.mxu0 0.0
    %3247 = vmatprep.mubr.f32.mxu0 0.0
    %3248 = vmatmul.mubr.f32.gmra.mrb[0].mxu0 %v3181
    %v3249 = vpop.f32.mrb[0].mxu0
    %v3250 = vadd.f32 0.0, %v3249
    %v3251 = vpop.f32.mrb[0].mxu0
    %3252 = vdwg.mxu0
    %v3254 = vsel %vm2157, %v1867, 0
    %3256 = vmatprep.subr.mxu0 0.0
    %3257 = vmatpush1.msra.mxu0 %v104
    %3258 = vmatprep.subr.mxu0 0.0
    %3259 = vmatpush1.msra.mxu0 0.0
    %3260 = vmatprep.subr.mxu0 0.0
    %3261 = vmatpush1.msra.mxu0 0.0
    %3262 = vmatprep.subr.mxu0 0.0
    %3263 = vmatpush1.msra.mxu0 0.0
    %3264 = vmatprep.subr.mxu0 0.0
    %3265 = vmatpush1.msra.mxu0 0.0
    %3266 = vmatprep.subr.mxu0 0.0
    %3267 = vmatpush1.msra.mxu0 0.0
    %3268 = vmatprep.subr.mxu0 0.0
    %3269 = vmatpush1.msra.mxu0 0.0
    %3270 = vmatprep.subr.mxu0 0.0
    %3271 = vmatpush1.msra.mxu0 0.0
    %3272 = vmatprep.subr.mxu0 0.0
    %3273 = vmatpush1.msra.mxu0 0.0
    %3274 = vmatprep.subr.mxu0 0.0
    %3275 = vmatpush1.msra.mxu0 0.0
    %3276 = vmatprep.subr.mxu0 0.0
    %3277 = vmatpush1.msra.mxu0 0.0
    %3278 = vmatprep.subr.mxu0 0.0
    %3279 = vmatpush1.msra.mxu0 0.0
    %3280 = vmatprep.subr.mxu0 0.0
    %3281 = vmatpush1.msra.mxu0 0.0
    %3282 = vmatprep.subr.mxu0 0.0
    %3283 = vmatpush1.msra.mxu0 0.0
    %3284 = vmatprep.subr.mxu0 0.0
    %3285 = vmatpush1.msra.mxu0 0.0
    %3286 = vmatprep.subr.mxu0 0.0
    %3287 = vmatpush1.msra.mxu0 0.0
    %3288 = vmatprep.subr.mxu0 0.0
    %3289 = vmatpush1.msra.mxu0 0.0
    %3290 = vmatprep.subr.mxu0 0.0
    %3291 = vmatpush1.msra.mxu0 0.0
    %3292 = vmatprep.subr.mxu0 0.0
    %3293 = vmatpush1.msra.mxu0 0.0
    %3294 = vmatprep.subr.mxu0 0.0
    %3295 = vmatpush1.msra.mxu0 0.0
    %3296 = vmatprep.subr.mxu0 0.0
    %3297 = vmatpush1.msra.mxu0 0.0
    %3298 = vmatprep.subr.mxu0 0.0
    %3299 = vmatpush1.msra.mxu0 0.0
    %3300 = vmatprep.subr.mxu0 0.0
    %3301 = vmatpush1.msra.mxu0 0.0
    %3302 = vmatprep.subr.mxu0 0.0
    %3303 = vmatpush1.msra.mxu0 0.0
    %3304 = vmatprep.subr.mxu0 0.0
    %3305 = vmatpush1.msra.mxu0 0.0
    %3306 = vmatprep.subr.mxu0 0.0
    %3307 = vmatpush1.msra.mxu0 0.0
    %3308 = vmatprep.subr.mxu0 0.0
    %3309 = vmatpush1.msra.mxu0 0.0
    %3310 = vmatprep.subr.mxu0 0.0
    %3311 = vmatpush1.msra.mxu0 0.0
    %3312 = vmatprep.subr.mxu0 0.0
    %3313 = vmatpush1.msra.mxu0 0.0
    %3314 = vmatprep.subr.mxu0 0.0
    %3315 = vmatpush1.msra.mxu0 0.0
    %3316 = vmatprep.subr.mxu0 0.0
    %3317 = vmatpush1.msra.mxu0 0.0
    %3318 = vmatprep.subr.mxu0 0.0
    %3319 = vmatpush1.msra.mxu0 0.0
    %3320 = vmatprep.mubr.f32.mxu0 0.0
    %3321 = vmatmul.mubr.f32.gmra.mrb[0].mxu0 %v3254
    %v3322 = vpop.f32.mrb[0].mxu0
    %v3323 = vadd.f32 0.0, %v3322
    %v3324 = vpop.f32.mrb[0].mxu0
    %3325 = vdwg.mxu0
    %v3326 = vadd.f32 %v2141, %v2228
    %v3327 = vadd.f32 %v2142, %v2301
    %v3328 = vadd.f32 %v2143, %v2374
    %v3329 = vadd.f32 %v2144, %v2447
    %v3330 = vadd.f32 %v2145, %v2520
    %v3331 = vadd.f32 %v2146, %v2593
    %v3332 = vadd.f32 %v2147, %v2666
    %v3333 = vadd.f32 %v2148, %v2739
    %v3334 = vadd.f32 %v2149, %v2812
    %v3335 = vadd.f32 %v2150, %v2885
    %v3336 = vadd.f32 %v2151, %v2958
    %v3337 = vadd.f32 %v2152, %v3031
    %v3338 = vadd.f32 %v2153, %v3104
    %v3339 = vadd.f32 %v2154, %v3177
    %v3340 = vadd.f32 %v2155, %v3250
    %v3341 = vadd.f32 %v2156, %v3323
    %vm3342 = vcmask 253952
    %3343 = vst.msk [vmem:[#allocation4] sm:$0x1] %vm3342, %v3326
    %3344 = vst.msk [vmem:[#allocation4 + $0x1] sm:$0x1] %vm3342, %v3327
    %3345 = vst.msk [vmem:[#allocation4 + $0x2] sm:$0x1] %vm3342, %v3328
    %3346 = vst.msk [vmem:[#allocation4 + $0x3] sm:$0x1] %vm3342, %v3329
    %3347 = vst.msk [vmem:[#allocation4 + $0x4] sm:$0x1] %vm3342, %v3330
    %3348 = vst.msk [vmem:[#allocation4 + $0x5] sm:$0x1] %vm3342, %v3331
    %3349 = vst.msk [vmem:[#allocation4 + $0x6] sm:$0x1] %vm3342, %v3332
    %3350 = vst.msk [vmem:[#allocation4 + $0x7] sm:$0x1] %vm3342, %v3333
    %3351 = vst.msk [vmem:[#allocation4 + $0x8] sm:$0x1] %vm3342, %v3334
    %3352 = vst.msk [vmem:[#allocation4 + $0x9] sm:$0x1] %vm3342, %v3335
    %3353 = vst.msk [vmem:[#allocation4 + $0xa] sm:$0x1] %vm3342, %v3336
    %3354 = vst.msk [vmem:[#allocation4 + $0xb] sm:$0x1] %vm3342, %v3337
    %3355 = vst.msk [vmem:[#allocation4 + $0xc] sm:$0x1] %vm3342, %v3338
    %3356 = vst.msk [vmem:[#allocation4 + $0xd] sm:$0x1] %vm3342, %v3339
    %3357 = vst.msk [vmem:[#allocation4 + $0xe] sm:$0x1] %vm3342, %v3340
    %3358 = vst.msk [vmem:[#allocation4 + $0xf] sm:$0x1] %vm3342, %v3341
    %3359 = vst.msk [vmem:[#allocation2] sm:$0x1] %vm1964, %v1612
    %3360 = vst.msk [vmem:[#allocation2 + $0x1] sm:$0x1] %vm1964, %v1613
    %3361 = vst.msk [vmem:[#allocation2 + $0x2] sm:$0x1] %vm1964, %v1614
    %3362 = vst.msk [vmem:[#allocation2 + $0x3] sm:$0x1] %vm1964, %v1615
    %3363 = vst.msk [vmem:[#allocation2 + $0x4] sm:$0x1] %vm1964, %v1616
    %3364 = vst.msk [vmem:[#allocation2 + $0x5] sm:$0x1] %vm1964, %v1617
    %3365 = vst.msk [vmem:[#allocation2 + $0x6] sm:$0x1] %vm1964, %v1618
    %3366 = vst.msk [vmem:[#allocation2 + $0x7] sm:$0x1] %vm1964, %v1619
    %3367 = vst.msk [vmem:[#allocation2 + $0x8] sm:$0x1] %vm1964, %v1620
    %3368 = vst.msk [vmem:[#allocation2 + $0x9] sm:$0x1] %vm1964, %v1621
    %3369 = vst.msk [vmem:[#allocation2 + $0xa] sm:$0x1] %vm1964, %v1622
    %3370 = vst.msk [vmem:[#allocation2 + $0xb] sm:$0x1] %vm1964, %v1623
    %3371 = vst.msk [vmem:[#allocation2 + $0xc] sm:$0x1] %vm1964, %v1624
    %3372 = vst.msk [vmem:[#allocation2 + $0xd] sm:$0x1] %vm1964, %v1625
    %3373 = vst.msk [vmem:[#allocation2 + $0xe] sm:$0x1] %vm1964, %v1626
    %3374 = vst.msk [vmem:[#allocation2 + $0xf] sm:$0x1] %vm1964, %v1627
    // Predicated region
    $region30: #{tpu_custom_call.1} parent=1 // pred_check
      %p3375 = pneg %p35
    $region31: #{tpu_custom_call.1} parent=1 // pred_check_branch
      %3377 = sbr.rel (%p3375) target = $region33
    $region32: #{tpu_custom_call.1} parent=1 // pred_region
      %v3378 = vld [vmem:[#allocation3] sm:$0x1]
      %v3379 = vld [vmem:[#allocation3 + $0x1] sm:$0x1]
      %v3380 = vld [vmem:[#allocation3 + $0x2] sm:$0x1]
      %v3381 = vld [vmem:[#allocation3 + $0x3] sm:$0x1]
      %v3382 = vld [vmem:[#allocation3 + $0x4] sm:$0x1]
      %v3383 = vld [vmem:[#allocation3 + $0x5] sm:$0x1]
      %v3384 = vld [vmem:[#allocation3 + $0x6] sm:$0x1]
      %v3385 = vld [vmem:[#allocation3 + $0x7] sm:$0x1]
      %v3386 = vld [vmem:[#allocation3 + $0x8] sm:$0x1]
      %v3387 = vld [vmem:[#allocation3 + $0x9] sm:$0x1]
      %v3388 = vld [vmem:[#allocation3 + $0xa] sm:$0x1]
      %v3389 = vld [vmem:[#allocation3 + $0xb] sm:$0x1]
      %v3390 = vld [vmem:[#allocation3 + $0xc] sm:$0x1]
      %v3391 = vld [vmem:[#allocation3 + $0xd] sm:$0x1]
      %v3392 = vld [vmem:[#allocation3 + $0xe] sm:$0x1]
      %v3393 = vld [vmem:[#allocation3 + $0xf] sm:$0x1]
      %v3394 = vrcp.pop %v3378
      %v3395 = vrcp.pop %v3379
      %v3396 = vrcp.pop %v3380
      %v3397 = vrcp.pop %v3381
      %v3398 = vrcp.pop %v3382
      %v3399 = vrcp.pop %v3383
      %v3400 = vrcp.pop %v3384
      %v3401 = vrcp.pop %v3385
      %v3402 = vrcp.pop %v3386
      %v3403 = vrcp.pop %v3387
      %v3404 = vrcp.pop %v3388
      %v3405 = vrcp.pop %v3389
      %v3406 = vrcp.pop %v3390
      %v3407 = vrcp.pop %v3391
      %v3408 = vrcp.pop %v3392
      %v3409 = vrcp.pop %v3393
      %v3410 = vmul.f32 %v3378, %v3394
      %v3411 = vmul.f32 %v3379, %v3395
      %v3412 = vmul.f32 %v3380, %v3396
      %v3413 = vmul.f32 %v3381, %v3397
      %v3414 = vmul.f32 %v3382, %v3398
      %v3415 = vmul.f32 %v3383, %v3399
      %v3416 = vmul.f32 %v3384, %v3400
      %v3417 = vmul.f32 %v3385, %v3401
      %v3418 = vmul.f32 %v3386, %v3402
      %v3419 = vmul.f32 %v3387, %v3403
      %v3420 = vmul.f32 %v3388, %v3404
      %v3421 = vmul.f32 %v3389, %v3405
      %v3422 = vmul.f32 %v3390, %v3406
      %v3423 = vmul.f32 %v3391, %v3407
      %v3424 = vmul.f32 %v3392, %v3408
      %v3425 = vmul.f32 %v3393, %v3409
      %v3426 = vsub.f32 2.0, %v3410
      %v3427 = vsub.f32 2.0, %v3411
      %v3428 = vsub.f32 2.0, %v3412
      %v3429 = vsub.f32 2.0, %v3413
      %v3430 = vsub.f32 2.0, %v3414
      %v3431 = vsub.f32 2.0, %v3415
      %v3432 = vsub.f32 2.0, %v3416
      %v3433 = vsub.f32 2.0, %v3417
      %v3434 = vsub.f32 2.0, %v3418
      %v3435 = vsub.f32 2.0, %v3419
      %v3436 = vsub.f32 2.0, %v3420
      %v3437 = vsub.f32 2.0, %v3421
      %v3438 = vsub.f32 2.0, %v3422
      %v3439 = vsub.f32 2.0, %v3423
      %v3440 = vsub.f32 2.0, %v3424
      %v3441 = vsub.f32 2.0, %v3425
      %v3442 = vmul.f32 %v3394, %v3426
      %v3443 = vmul.f32 %v3395, %v3427
      %v3444 = vmul.f32 %v3396, %v3428
      %v3445 = vmul.f32 %v3397, %v3429
      %v3446 = vmul.f32 %v3398, %v3430
      %v3447 = vmul.f32 %v3399, %v3431
      %v3448 = vmul.f32 %v3400, %v3432
      %v3449 = vmul.f32 %v3401, %v3433
      %v3450 = vmul.f32 %v3402, %v3434
      %v3451 = vmul.f32 %v3403, %v3435
      %v3452 = vmul.f32 %v3404, %v3436
      %v3453 = vmul.f32 %v3405, %v3437
      %v3454 = vmul.f32 %v3406, %v3438
      %v3455 = vmul.f32 %v3407, %v3439
      %v3456 = vmul.f32 %v3408, %v3440
      %v3457 = vmul.f32 %v3409, %v3441
      %v3458 = vld [vmem:[#allocation4] sm:$0x1]
      %v3459 = vld [vmem:[#allocation4 + $0x1] sm:$0x1]
      %v3460 = vld [vmem:[#allocation4 + $0x2] sm:$0x1]
      %v3461 = vld [vmem:[#allocation4 + $0x3] sm:$0x1]
      %v3462 = vld [vmem:[#allocation4 + $0x4] sm:$0x1]
      %v3463 = vld [vmem:[#allocation4 + $0x5] sm:$0x1]
      %v3464 = vld [vmem:[#allocation4 + $0x6] sm:$0x1]
      %v3465 = vld [vmem:[#allocation4 + $0x7] sm:$0x1]
      %v3466 = vld [vmem:[#allocation4 + $0x8] sm:$0x1]
      %v3467 = vld [vmem:[#allocation4 + $0x9] sm:$0x1]
      %v3468 = vld [vmem:[#allocation4 + $0xa] sm:$0x1]
      %v3469 = vld [vmem:[#allocation4 + $0xb] sm:$0x1]
      %v3470 = vld [vmem:[#allocation4 + $0xc] sm:$0x1]
      %v3471 = vld [vmem:[#allocation4 + $0xd] sm:$0x1]
      %v3472 = vld [vmem:[#allocation4 + $0xe] sm:$0x1]
      %v3473 = vld [vmem:[#allocation4 + $0xf] sm:$0x1]
      %3475 = vset.pattern.permute.xlu0 0
      %3476 = vperm.xlu0 %3475, %v3442
      %v3477 = vpop.permute.xlu0 %3476
      %v3479 = vlaneseq
      %v3480 = vshrl.u32 %v3479, 7
      %v3481 = vsub.s32 0, %v3480
      %v3482 = vrot.slane %v3477, %v3481
      %3484 = vset.pattern.permute.xlu0 0
      %3485 = vperm.xlu0 %3484, %v3443
      %v3486 = vpop.permute.xlu0 %3485
      %v3488 = vlaneseq
      %v3489 = vshrl.u32 %v3488, 7
      %v3490 = vsub.s32 0, %v3489
      %v3491 = vrot.slane %v3486, %v3490
      %3493 = vset.pattern.permute.xlu0 0
      %3494 = vperm.xlu0 %3493, %v3444
      %v3495 = vpop.permute.xlu0 %3494
      %v3497 = vlaneseq
      %v3498 = vshrl.u32 %v3497, 7
      %v3499 = vsub.s32 0, %v3498
      %v3500 = vrot.slane %v3495, %v3499
      %3502 = vset.pattern.permute.xlu0 0
      %3503 = vperm.xlu0 %3502, %v3445
      %v3504 = vpop.permute.xlu0 %3503
      %v3506 = vlaneseq
      %v3507 = vshrl.u32 %v3506, 7
      %v3508 = vsub.s32 0, %v3507
      %v3509 = vrot.slane %v3504, %v3508
      %3511 = vset.pattern.permute.xlu0 0
      %3512 = vperm.xlu0 %3511, %v3446
      %v3513 = vpop.permute.xlu0 %3512
      %v3515 = vlaneseq
      %v3516 = vshrl.u32 %v3515, 7
      %v3517 = vsub.s32 0, %v3516
      %v3518 = vrot.slane %v3513, %v3517
      %3520 = vset.pattern.permute.xlu0 0
      %3521 = vperm.xlu0 %3520, %v3447
      %v3522 = vpop.permute.xlu0 %3521
      %v3524 = vlaneseq
      %v3525 = vshrl.u32 %v3524, 7
      %v3526 = vsub.s32 0, %v3525
      %v3527 = vrot.slane %v3522, %v3526
      %3529 = vset.pattern.permute.xlu0 0
      %3530 = vperm.xlu0 %3529, %v3448
      %v3531 = vpop.permute.xlu0 %3530
      %v3533 = vlaneseq
      %v3534 = vshrl.u32 %v3533, 7
      %v3535 = vsub.s32 0, %v3534
      %v3536 = vrot.slane %v3531, %v3535
      %3538 = vset.pattern.permute.xlu0 0
      %3539 = vperm.xlu0 %3538, %v3449
      %v3540 = vpop.permute.xlu0 %3539
      %v3542 = vlaneseq
      %v3543 = vshrl.u32 %v3542, 7
      %v3544 = vsub.s32 0, %v3543
      %v3545 = vrot.slane %v3540, %v3544
      %3547 = vset.pattern.permute.xlu0 0
      %3548 = vperm.xlu0 %3547, %v3450
      %v3549 = vpop.permute.xlu0 %3548
      %v3551 = vlaneseq
      %v3552 = vshrl.u32 %v3551, 7
      %v3553 = vsub.s32 0, %v3552
      %v3554 = vrot.slane %v3549, %v3553
      %3556 = vset.pattern.permute.xlu0 0
      %3557 = vperm.xlu0 %3556, %v3451
      %v3558 = vpop.permute.xlu0 %3557
      %v3560 = vlaneseq
      %v3561 = vshrl.u32 %v3560, 7
      %v3562 = vsub.s32 0, %v3561
      %v3563 = vrot.slane %v3558, %v3562
      %3565 = vset.pattern.permute.xlu0 0
      %3566 = vperm.xlu0 %3565, %v3452
      %v3567 = vpop.permute.xlu0 %3566
      %v3569 = vlaneseq
      %v3570 = vshrl.u32 %v3569, 7
      %v3571 = vsub.s32 0, %v3570
      %v3572 = vrot.slane %v3567, %v3571
      %3574 = vset.pattern.permute.xlu0 0
      %3575 = vperm.xlu0 %3574, %v3453
      %v3576 = vpop.permute.xlu0 %3575
      %v3578 = vlaneseq
      %v3579 = vshrl.u32 %v3578, 7
      %v3580 = vsub.s32 0, %v3579
      %v3581 = vrot.slane %v3576, %v3580
      %3583 = vset.pattern.permute.xlu0 0
      %3584 = vperm.xlu0 %3583, %v3454
      %v3585 = vpop.permute.xlu0 %3584
      %v3587 = vlaneseq
      %v3588 = vshrl.u32 %v3587, 7
      %v3589 = vsub.s32 0, %v3588
      %v3590 = vrot.slane %v3585, %v3589
      %3592 = vset.pattern.permute.xlu0 0
      %3593 = vperm.xlu0 %3592, %v3455
      %v3594 = vpop.permute.xlu0 %3593
      %v3596 = vlaneseq
      %v3597 = vshrl.u32 %v3596, 7
      %v3598 = vsub.s32 0, %v3597
      %v3599 = vrot.slane %v3594, %v3598
      %3601 = vset.pattern.permute.xlu0 0
      %3602 = vperm.xlu0 %3601, %v3456
      %v3603 = vpop.permute.xlu0 %3602
      %v3605 = vlaneseq
      %v3606 = vshrl.u32 %v3605, 7
      %v3607 = vsub.s32 0, %v3606
      %v3608 = vrot.slane %v3603, %v3607
      %3610 = vset.pattern.permute.xlu0 0
      %3611 = vperm.xlu0 %3610, %v3457
      %v3612 = vpop.permute.xlu0 %3611
      %v3614 = vlaneseq
      %v3615 = vshrl.u32 %v3614, 7
      %v3616 = vsub.s32 0, %v3615
      %v3617 = vrot.slane %v3612, %v3616
      %v3618 = vmul.f32 %v3458, %v3482
      %v3619 = vmul.f32 %v3459, %v3491
      %v3620 = vmul.f32 %v3460, %v3500
      %v3621 = vmul.f32 %v3461, %v3509
      %v3622 = vmul.f32 %v3462, %v3518
      %v3623 = vmul.f32 %v3463, %v3527
      %v3624 = vmul.f32 %v3464, %v3536
      %v3625 = vmul.f32 %v3465, %v3545
      %v3626 = vmul.f32 %v3466, %v3554
      %v3627 = vmul.f32 %v3467, %v3563
      %v3628 = vmul.f32 %v3468, %v3572
      %v3629 = vmul.f32 %v3469, %v3581
      %v3630 = vmul.f32 %v3470, %v3590
      %v3631 = vmul.f32 %v3471, %v3599
      %v3632 = vmul.f32 %v3472, %v3608
      %v3633 = vmul.f32 %v3473, %v3617
      %v3634 = vld [vmem:[#allocation2] sm:$0x1]
      %v3635 = vld [vmem:[#allocation2 + $0x1] sm:$0x1]
      %v3636 = vld [vmem:[#allocation2 + $0x2] sm:$0x1]
      %v3637 = vld [vmem:[#allocation2 + $0x3] sm:$0x1]
      %v3638 = vld [vmem:[#allocation2 + $0x4] sm:$0x1]
      %v3639 = vld [vmem:[#allocation2 + $0x5] sm:$0x1]
      %v3640 = vld [vmem:[#allocation2 + $0x6] sm:$0x1]
      %v3641 = vld [vmem:[#allocation2 + $0x7] sm:$0x1]
      %v3642 = vld [vmem:[#allocation2 + $0x8] sm:$0x1]
      %v3643 = vld [vmem:[#allocation2 + $0x9] sm:$0x1]
      %v3644 = vld [vmem:[#allocation2 + $0xa] sm:$0x1]
      %v3645 = vld [vmem:[#allocation2 + $0xb] sm:$0x1]
      %v3646 = vld [vmem:[#allocation2 + $0xc] sm:$0x1]
      %v3647 = vld [vmem:[#allocation2 + $0xd] sm:$0x1]
      %v3648 = vld [vmem:[#allocation2 + $0xe] sm:$0x1]
      %v3649 = vld [vmem:[#allocation2 + $0xf] sm:$0x1]
      %vm3650 = vcmp.le.f32.partialorder %v3634, -1e+30
      %vm3651 = vcmp.le.f32.partialorder %v3635, -1e+30
      %vm3652 = vcmp.le.f32.partialorder %v3636, -1e+30
      %vm3653 = vcmp.le.f32.partialorder %v3637, -1e+30
      %vm3654 = vcmp.le.f32.partialorder %v3638, -1e+30
      %vm3655 = vcmp.le.f32.partialorder %v3639, -1e+30
      %vm3656 = vcmp.le.f32.partialorder %v3640, -1e+30
      %vm3657 = vcmp.le.f32.partialorder %v3641, -1e+30
      %vm3658 = vcmp.le.f32.partialorder %v3642, -1e+30
      %vm3659 = vcmp.le.f32.partialorder %v3643, -1e+30
      %vm3660 = vcmp.le.f32.partialorder %v3644, -1e+30
      %vm3661 = vcmp.le.f32.partialorder %v3645, -1e+30
      %vm3662 = vcmp.le.f32.partialorder %v3646, -1e+30
      %vm3663 = vcmp.le.f32.partialorder %v3647, -1e+30
      %vm3664 = vcmp.le.f32.partialorder %v3648, -1e+30
      %vm3665 = vcmp.le.f32.partialorder %v3649, -1e+30
      %v3666 = vsel %vm3650, 1, 0
      %v3667 = vsel %vm3651, 1, 0
      %v3668 = vsel %vm3652, 1, 0
      %v3669 = vsel %vm3653, 1, 0
      %v3670 = vsel %vm3654, 1, 0
      %v3671 = vsel %vm3655, 1, 0
      %v3672 = vsel %vm3656, 1, 0
      %v3673 = vsel %vm3657, 1, 0
      %v3674 = vsel %vm3658, 1, 0
      %v3675 = vsel %vm3659, 1, 0
      %v3676 = vsel %vm3660, 1, 0
      %v3677 = vsel %vm3661, 1, 0
      %v3678 = vsel %vm3662, 1, 0
      %v3679 = vsel %vm3663, 1, 0
      %v3680 = vsel %vm3664, 1, 0
      %v3681 = vsel %vm3665, 1, 0
      %3682 = vset.pattern.permute.xlu0 0
      %3683 = vperm.xlu0 %3682, %v3666
      %v3684 = vpop.permute.xlu0 %3683
      %v3685 = vlaneseq
      %v3686 = vshrl.u32 %v3685, 7
      %v3687 = vsub.s32 0, %v3686
      %v3688 = vrot.slane %v3684, %v3687
      %3689 = vset.pattern.permute.xlu0 0
      %3690 = vperm.xlu0 %3689, %v3667
      %v3691 = vpop.permute.xlu0 %3690
      %v3692 = vlaneseq
      %v3693 = vshrl.u32 %v3692, 7
      %v3694 = vsub.s32 0, %v3693
      %v3695 = vrot.slane %v3691, %v3694
      %3696 = vset.pattern.permute.xlu0 0
      %3697 = vperm.xlu0 %3696, %v3668
      %v3698 = vpop.permute.xlu0 %3697
      %v3699 = vlaneseq
      %v3700 = vshrl.u32 %v3699, 7
      %v3701 = vsub.s32 0, %v3700
      %v3702 = vrot.slane %v3698, %v3701
      %3703 = vset.pattern.permute.xlu0 0
      %3704 = vperm.xlu0 %3703, %v3669
      %v3705 = vpop.permute.xlu0 %3704
      %v3706 = vlaneseq
      %v3707 = vshrl.u32 %v3706, 7
      %v3708 = vsub.s32 0, %v3707
      %v3709 = vrot.slane %v3705, %v3708
      %3710 = vset.pattern.permute.xlu0 0
      %3711 = vperm.xlu0 %3710, %v3670
      %v3712 = vpop.permute.xlu0 %3711
      %v3713 = vlaneseq
      %v3714 = vshrl.u32 %v3713, 7
      %v3715 = vsub.s32 0, %v3714
      %v3716 = vrot.slane %v3712, %v3715
      %3717 = vset.pattern.permute.xlu0 0
      %3718 = vperm.xlu0 %3717, %v3671
      %v3719 = vpop.permute.xlu0 %3718
      %v3720 = vlaneseq
      %v3721 = vshrl.u32 %v3720, 7
      %v3722 = vsub.s32 0, %v3721
      %v3723 = vrot.slane %v3719, %v3722
      %3724 = vset.pattern.permute.xlu0 0
      %3725 = vperm.xlu0 %3724, %v3672
      %v3726 = vpop.permute.xlu0 %3725
      %v3727 = vlaneseq
      %v3728 = vshrl.u32 %v3727, 7
      %v3729 = vsub.s32 0, %v3728
      %v3730 = vrot.slane %v3726, %v3729
      %3731 = vset.pattern.permute.xlu0 0
      %3732 = vperm.xlu0 %3731, %v3673
      %v3733 = vpop.permute.xlu0 %3732
      %v3734 = vlaneseq
      %v3735 = vshrl.u32 %v3734, 7
      %v3736 = vsub.s32 0, %v3735
      %v3737 = vrot.slane %v3733, %v3736
      %3738 = vset.pattern.permute.xlu0 0
      %3739 = vperm.xlu0 %3738, %v3674
      %v3740 = vpop.permute.xlu0 %3739
      %v3741 = vlaneseq
      %v3742 = vshrl.u32 %v3741, 7
      %v3743 = vsub.s32 0, %v3742
      %v3744 = vrot.slane %v3740, %v3743
      %3745 = vset.pattern.permute.xlu0 0
      %3746 = vperm.xlu0 %3745, %v3675
      %v3747 = vpop.permute.xlu0 %3746
      %v3748 = vlaneseq
      %v3749 = vshrl.u32 %v3748, 7
      %v3750 = vsub.s32 0, %v3749
      %v3751 = vrot.slane %v3747, %v3750
      %3752 = vset.pattern.permute.xlu0 0
      %3753 = vperm.xlu0 %3752, %v3676
      %v3754 = vpop.permute.xlu0 %3753
      %v3755 = vlaneseq
      %v3756 = vshrl.u32 %v3755, 7
      %v3757 = vsub.s32 0, %v3756
      %v3758 = vrot.slane %v3754, %v3757
      %3759 = vset.pattern.permute.xlu0 0
      %3760 = vperm.xlu0 %3759, %v3677
      %v3761 = vpop.permute.xlu0 %3760
      %v3762 = vlaneseq
      %v3763 = vshrl.u32 %v3762, 7
      %v3764 = vsub.s32 0, %v3763
      %v3765 = vrot.slane %v3761, %v3764
      %3766 = vset.pattern.permute.xlu0 0
      %3767 = vperm.xlu0 %3766, %v3678
      %v3768 = vpop.permute.xlu0 %3767
      %v3769 = vlaneseq
      %v3770 = vshrl.u32 %v3769, 7
      %v3771 = vsub.s32 0, %v3770
      %v3772 = vrot.slane %v3768, %v3771
      %3773 = vset.pattern.permute.xlu0 0
      %3774 = vperm.xlu0 %3773, %v3679
      %v3775 = vpop.permute.xlu0 %3774
      %v3776 = vlaneseq
      %v3777 = vshrl.u32 %v3776, 7
      %v3778 = vsub.s32 0, %v3777
      %v3779 = vrot.slane %v3775, %v3778
      %3780 = vset.pattern.permute.xlu0 0
      %3781 = vperm.xlu0 %3780, %v3680
      %v3782 = vpop.permute.xlu0 %3781
      %v3783 = vlaneseq
      %v3784 = vshrl.u32 %v3783, 7
      %v3785 = vsub.s32 0, %v3784
      %v3786 = vrot.slane %v3782, %v3785
      %3787 = vset.pattern.permute.xlu0 0
      %3788 = vperm.xlu0 %3787, %v3681
      %v3789 = vpop.permute.xlu0 %3788
      %v3790 = vlaneseq
      %v3791 = vshrl.u32 %v3790, 7
      %v3792 = vsub.s32 0, %v3791
      %v3793 = vrot.slane %v3789, %v3792
      %vm3794 = vcmp.eq.s32.totalorder %v3688, 1
      %vm3795 = vcmp.eq.s32.totalorder %v3695, 1
      %vm3796 = vcmp.eq.s32.totalorder %v3702, 1
      %vm3797 = vcmp.eq.s32.totalorder %v3709, 1
      %vm3798 = vcmp.eq.s32.totalorder %v3716, 1
      %vm3799 = vcmp.eq.s32.totalorder %v3723, 1
      %vm3800 = vcmp.eq.s32.totalorder %v3730, 1
      %vm3801 = vcmp.eq.s32.totalorder %v3737, 1
      %vm3802 = vcmp.eq.s32.totalorder %v3744, 1
      %vm3803 = vcmp.eq.s32.totalorder %v3751, 1
      %vm3804 = vcmp.eq.s32.totalorder %v3758, 1
      %vm3805 = vcmp.eq.s32.totalorder %v3765, 1
      %vm3806 = vcmp.eq.s32.totalorder %v3772, 1
      %vm3807 = vcmp.eq.s32.totalorder %v3779, 1
      %vm3808 = vcmp.eq.s32.totalorder %v3786, 1
      %vm3809 = vcmp.eq.s32.totalorder %v3793, 1
      %v3810 = vsel %vm3794, nan, %v3618
      %v3811 = vsel %vm3795, nan, %v3619
      %v3812 = vsel %vm3796, nan, %v3620
      %v3813 = vsel %vm3797, nan, %v3621
      %v3814 = vsel %vm3798, nan, %v3622
      %v3815 = vsel %vm3799, nan, %v3623
      %v3816 = vsel %vm3800, nan, %v3624
      %v3817 = vsel %vm3801, nan, %v3625
      %v3818 = vsel %vm3802, nan, %v3626
      %v3819 = vsel %vm3803, nan, %v3627
      %v3820 = vsel %vm3804, nan, %v3628
      %v3821 = vsel %vm3805, nan, %v3629
      %v3822 = vsel %vm3806, nan, %v3630
      %v3823 = vsel %vm3807, nan, %v3631
      %v3824 = vsel %vm3808, nan, %v3632
      %v3825 = vsel %vm3809, nan, %v3633
      %3826 = vst.msk [vmem:[#allocation8] sm:$0x1] %vm3342, %v3810
      %3827 = vst.msk [vmem:[#allocation8 + $0x1] sm:$0x1] %vm3342, %v3811
      %3828 = vst.msk [vmem:[#allocation8 + $0x2] sm:$0x1] %vm3342, %v3812
      %3829 = vst.msk [vmem:[#allocation8 + $0x3] sm:$0x1] %vm3342, %v3813
      %3830 = vst.msk [vmem:[#allocation8 + $0x4] sm:$0x1] %vm3342, %v3814
      %3831 = vst.msk [vmem:[#allocation8 + $0x5] sm:$0x1] %vm3342, %v3815
      %3832 = vst.msk [vmem:[#allocation8 + $0x6] sm:$0x1] %vm3342, %v3816
      %3833 = vst.msk [vmem:[#allocation8 + $0x7] sm:$0x1] %vm3342, %v3817
      %3834 = vst.msk [vmem:[#allocation8 + $0x8] sm:$0x1] %vm3342, %v3818
      %3835 = vst.msk [vmem:[#allocation8 + $0x9] sm:$0x1] %vm3342, %v3819
      %3836 = vst.msk [vmem:[#allocation8 + $0xa] sm:$0x1] %vm3342, %v3820
      %3837 = vst.msk [vmem:[#allocation8 + $0xb] sm:$0x1] %vm3342, %v3821
      %3838 = vst.msk [vmem:[#allocation8 + $0xc] sm:$0x1] %vm3342, %v3822
      %3839 = vst.msk [vmem:[#allocation8 + $0xd] sm:$0x1] %vm3342, %v3823
      %3840 = vst.msk [vmem:[#allocation8 + $0xe] sm:$0x1] %vm3342, %v3824
      %3841 = vst.msk [vmem:[#allocation8 + $0xf] sm:$0x1] %vm3342, %v3825
    $region33: #{tpu_custom_call.1} parent=1 // pred_fallthru
      _
    // Predicated region
    $region34: #{tpu_custom_call.1} parent=1 // pred_check
      _
    $region35: #{tpu_custom_call.1} parent=1 // pred_check_branch
      %3843 = sbr.rel (0) target = $region37
    $region36: #{tpu_custom_call.1} parent=1 // pred_region
      %s3845 = ssub.s32 256, 256
      %3846 = vsyncadd [#allocation7], %s3845
      %s3847 = sshll.u32 [#allocation8], 4
      %s3848 = int_to_ptr.vmem [resolvable:$true] %s3847
      %3853 = dma.vmem_to_hbm [thread:$0]  %s3848, 256, %s5, [#allocation7], 16, 16, 1
    $region37: #{tpu_custom_call.1} parent=1 // pred_fallthru
      _
    // Predicated region
    $region38: #{tpu_custom_call.1} parent=1 // pred_check
      _
    $region39: #{tpu_custom_call.1} parent=1 // pred_check_branch
      %3855 = sbr.rel (0) target = $region41
    $region40: #{tpu_custom_call.1} parent=1 // pred_region
      %3856 = dma.done [#allocation7], 256
    $region41: #{tpu_custom_call.1} parent=1 // pred_fallthru
      _
    %3857 = vsyncpa [#allocation6], 1
    %3858 = vsyncpa [#allocation7], 1

</llo_original>
